<compile_context>
chip_gen: v5e
topology: v5e:2x2
jax: 0.10.0
libtpu: 0.0.40
codegen_flags: <defaults>
</compile_context>

<pallas_src>
import jax
import jax.numpy as jnp
from jax.experimental import pallas as pl
from jax.experimental.pallas import tpu as pltpu


# ----------------------------------------------------------------------------
# Compiler params (per-chip VMEM budget; v7x only has 64 MiB per TensorCore)
# ----------------------------------------------------------------------------
def _vmem_limit_bytes():
    cap = 64 * 1024 * 1024
    try:
        cap = int(pltpu.get_tpu_info().vmem_capacity_bytes)
    except Exception:
        pass
    # Largest per-layer resident set is < 2 MiB at batch 2, so 32 MiB (or half
    # the chip's VMEM, whichever is smaller) leaves plenty of headroom.
    return min(32 * 1024 * 1024, cap // 2)


_VMEM_LIMIT = _vmem_limit_bytes()


def _cparams(dimension_semantics):
    return pltpu.CompilerParams(
        dimension_semantics=dimension_semantics,
        vmem_limit_bytes=_VMEM_LIMIT,
    )


# ----------------------------------------------------------------------------
# Pallas kernels
# ----------------------------------------------------------------------------
def matmul_lrelu_kernel(x_ref, w_ref, o_ref):
    """One row-tile of leaky_relu(x @ w, 0.2). x/w bf16, math f32, store bf16."""
    y = jnp.dot(x_ref[...], w_ref[...], preferred_element_type=jnp.float32)
    o_ref[...] = jnp.where(y > 0.0, y, 0.2 * y).astype(o_ref.dtype)


def matmul_bn_lrelu_kernel(x_ref, w_ref, g_ref, b_ref, o_ref, acc_ref):
    """One (OC tile, K tile) step of leaky_relu(batchnorm(x @ w), 0.2).

    Grid = (OC tiles [parallel], K tiles [arbitrary]).  Each OC tile holds ALL
    rows (N*OH*OW), so per-channel batch statistics (PyTorch training mode,
    biased variance) are exact.  The f32 accumulator lives in VMEM scratch; all
    row-wise work is done in <=128-row chunks to keep vreg pressure low.
    """
    k = pl.program_id(1)
    nrows, noc = acc_ref.shape
    chunk = 128 if nrows % 128 == 0 else nrows
    nchunks = nrows // chunk

    @pl.when(k == 0)
    def _init():
        acc_ref[...] = jnp.zeros_like(acc_ref)

    # Row-chunked accumulate: live f32 tile is at most (chunk, oc_tile).
    for r in range(nchunks):
        sl = pl.ds(r * chunk, chunk)
        acc_ref[sl, :] += jnp.dot(
            x_ref[sl, :], w_ref[...], preferred_element_type=jnp.float32
        )

    @pl.when(k == pl.num_programs(1) - 1)
    def _finalize():
        inv_n = 1.0 / nrows
        # Pass 1: mean.
        s = jnp.zeros((1, noc), jnp.float32)
        for r in range(nchunks):
            s = s + jnp.sum(
                acc_ref[pl.ds(r * chunk, chunk), :], axis=0, keepdims=True
            )
        mean = s * inv_n
        # Pass 2: centered (biased) variance — closer to PyTorch's two-pass BN.
        ss = jnp.zeros((1, noc), jnp.float32)
        for r in range(nchunks):
            d = acc_ref[pl.ds(r * chunk, chunk), :] - mean
            ss = ss + jnp.sum(d * d, axis=0, keepdims=True)
        var = ss * inv_n
        scale = g_ref[...] * jax.lax.rsqrt(var + 1e-5)
        bias = b_ref[...] - mean * scale
        # Pass 3: normalize + LeakyReLU + bf16 store (lane-dense, 128 wide).
        for r in range(nchunks):
            sl = pl.ds(r * chunk, chunk)
            z = acc_ref[sl, :] * scale + bias
            o_ref[sl, :] = jnp.where(z > 0.0, z, 0.2 * z).astype(o_ref.dtype)


def rowdot_sigmoid_kernel(x_ref, w_ref, o_ref):
    """sigmoid(sum(x * w, axis=-1)) — final 512->1 conv as a lane reduction."""
    x = x_ref[...].astype(jnp.float32)
    w = w_ref[...].astype(jnp.float32)
    y = jnp.sum(x * w, axis=1, keepdims=True)
    o_ref[...] = 1.0 / (1.0 + jnp.exp(-y))


# ----------------------------------------------------------------------------
# Pallas wrappers
# ----------------------------------------------------------------------------
def conv_lrelu(patches, w_mat, bm=512):
    """patches: (rows, K) bf16, w_mat: (K, OC) bf16 -> (rows, OC) bf16."""
    rows, K = patches.shape
    OC = w_mat.shape[1]
    if rows % bm != 0:
        bm = rows
    cost = pl.CostEstimate(
        flops=2 * rows * K * OC,
        transcendentals=0,
        bytes_accessed=rows * K * 2 + K * OC * 2 + rows * OC * 2,
    )
    return pl.pallas_call(
        matmul_lrelu_kernel,
        out_shape=jax.ShapeDtypeStruct((rows, OC), jnp.bfloat16),
        grid_spec=pltpu.PrefetchScalarGridSpec(
            num_scalar_prefetch=0,
            grid=(rows // bm,),
            in_specs=[
                pl.BlockSpec((bm, K), lambda i: (i, 0)),
                pl.BlockSpec((K, OC), lambda i: (0, 0)),
            ],
            out_specs=pl.BlockSpec((bm, OC), lambda i: (i, 0)),
        ),
        compiler_params=_cparams(("parallel",)),
        cost_estimate=cost,
    )(patches, w_mat)


def conv_bn_lrelu(patches, w_mat, gamma, beta, oc_tile=128, bk=512):
    """Fused Conv (as matmul) + BatchNorm(batch stats) + LeakyReLU(0.2) -> bf16.

    Grid: (OC tiles ["parallel" -> megacore], K tiles ["arbitrary" -> pipelined
    accumulation]).  Each OC tile sees every row so BN statistics are exact.
    """
    rows, K = patches.shape
    OC = w_mat.shape[1]
    oc_tile = min(oc_tile, OC)
    if K % bk != 0:
        bk = K
    n_oc = OC // oc_tile
    n_k = K // bk

    # VMEM guard: the "all rows per OC tile" BN design scales linearly with
    # batch; if it ever trips, switch to row-tiled partial stats (sum/sumsq
    # scratch over an 'arbitrary' row axis + pl.when finalize).
    est = (2 * rows * bk * 2          # double-buffered bf16 patch blocks
           + 2 * bk * oc_tile * 2     # double-buffered bf16 weight blocks
           + rows * oc_tile * 4       # f32 accumulator scratch
           + 2 * rows * oc_tile * 2)  # double-buffered bf16 output block
    if est > _VMEM_LIMIT:
        raise ValueError(
            f"conv_bn_lrelu: estimated VMEM footprint {est} bytes exceeds the "
            f"{_VMEM_LIMIT}-byte limit; use row-tiled partial BN statistics "
            f"for this batch size."
        )

    cost = pl.CostEstimate(
        flops=2 * rows * K * OC + 8 * rows * OC,
        transcendentals=OC,
        bytes_accessed=n_oc * rows * K * 2 + K * OC * 2 + rows * OC * 2 + 2 * OC * 4,
    )
    return pl.pallas_call(
        matmul_bn_lrelu_kernel,
        out_shape=jax.ShapeDtypeStruct((rows, OC), jnp.bfloat16),
        grid_spec=pltpu.PrefetchScalarGridSpec(
            num_scalar_prefetch=0,
            grid=(n_oc, n_k),
            in_specs=[
                pl.BlockSpec((rows, bk), lambda j, k: (0, k)),
                pl.BlockSpec((bk, oc_tile), lambda j, k: (k, j)),
                pl.BlockSpec((1, oc_tile), lambda j, k: (0, j)),
                pl.BlockSpec((1, oc_tile), lambda j, k: (0, j)),
            ],
            out_specs=pl.BlockSpec((rows, oc_tile), lambda j, k: (0, j)),
            scratch_shapes=[pltpu.VMEM((rows, oc_tile), jnp.float32)],
        ),
        compiler_params=_cparams(("parallel", "arbitrary")),
        cost_estimate=cost,
    )(
        patches,
        w_mat,
        gamma.reshape(1, OC).astype(jnp.float32),
        beta.reshape(1, OC).astype(jnp.float32),
    )


def rowdot_sigmoid(x_flat, w_row):
    """x_flat: (N, K) bf16, w_row: (1, K) bf16 -> sigmoid(x @ w^T): (N, 1) f32."""
    N, K = x_flat.shape
    cost = pl.CostEstimate(
        flops=2 * N * K,
        transcendentals=N,
        bytes_accessed=N * K * 2 + K * 2 + N * 4,
    )
    return pl.pallas_call(
        rowdot_sigmoid_kernel,
        out_shape=jax.ShapeDtypeStruct((N, 1), jnp.float32),
        grid_spec=pltpu.PrefetchScalarGridSpec(
            num_scalar_prefetch=0,
            grid=(1,),
            in_specs=[
                pl.BlockSpec((N, K), lambda i: (0, 0)),
                pl.BlockSpec((1, K), lambda i: (0, 0)),
            ],
            out_specs=pl.BlockSpec((N, 1), lambda i: (0, 0)),
        ),
        compiler_params=_cparams(("arbitrary",)),
        cost_estimate=cost,
    )(x_flat, w_row)


# ----------------------------------------------------------------------------
# im2col / weight-layout glue (tiny XLA fusions; inputs are already bf16)
# ----------------------------------------------------------------------------
def im2col(x_nhwc, k, stride, pad, take_c=None):
    """NHWC -> bf16 patch matrix (N*OH*OW, k*k*C); col index = (kh*k+kw)*C + c."""
    if take_c is not None:                       # drop pad channels for free
        x_nhwc = x_nhwc[..., :take_c]
    x = x_nhwc.astype(jnp.bfloat16)              # no-op for bf16 layer outputs
    N, H, W, C = x.shape
    if pad > 0:
        x = jnp.pad(x, ((0, 0), (pad, pad), (pad, pad), (0, 0)))
    Hp, Wp = H + 2 * pad, W + 2 * pad
    OH = (Hp - k) // stride + 1
    OW = (Wp - k) // stride + 1
    cols = [
        x[:, kh:kh + stride * OH:stride, kw:kw + stride * OW:stride, :]
        for kh in range(k) for kw in range(k)
    ]
    patches = jnp.stack(cols, axis=3)            # (N, OH, OW, k*k, C)
    return patches.reshape(N * OH * OW, k * k * C), OH, OW


def weight_to_mat(w_oihw, pad_oc_to=None, dtype=jnp.bfloat16):
    """PyTorch (OC, IC, KH, KW) -> (KH*KW*IC, OC) matching im2col col ordering."""
    OC, IC, KH, KW = w_oihw.shape
    wm = jnp.transpose(w_oihw, (2, 3, 1, 0)).reshape(KH * KW * IC, OC)
    if pad_oc_to is not None and pad_oc_to > OC:
        wm = jnp.pad(wm, ((0, 0), (0, pad_oc_to - OC)))
    return wm.astype(dtype)


# ----------------------------------------------------------------------------
# Model
# ----------------------------------------------------------------------------
def init_params(key):
    ks = jax.random.split(key, 5)

    def conv_w(k, oc, ic):
        return jax.random.normal(k, (oc, ic, 4, 4), jnp.float32) * 0.02

    return {
        "w1": conv_w(ks[0], 64, 3),
        "w2": conv_w(ks[1], 128, 64),
        "w3": conv_w(ks[2], 256, 128),
        "w4": conv_w(ks[3], 512, 256),
        "w5": conv_w(ks[4], 1, 512),
        "gamma2": jnp.ones((128,), jnp.float32), "beta2": jnp.zeros((128,), jnp.float32),
        "gamma3": jnp.ones((256,), jnp.float32), "beta3": jnp.zeros((256,), jnp.float32),
        "gamma4": jnp.ones((512,), jnp.float32), "beta4": jnp.zeros((512,), jnp.float32),
    }


def discriminator_forward(x_nchw, params):
    x = jnp.transpose(x_nchw, (0, 2, 3, 1)).astype(jnp.float32)   # NCHW -> NHWC
    N = x.shape[0]

    # Layer 1: Conv(3->64, 4, s2, p1, bias=False) + LeakyReLU(0.2).
    # OC zero-padded to 128 for lane-dense stores; pad channels are exactly 0
    # and are dropped inside layer 2's im2col fusion (take_c=64).
    # bm=512 -> 4 grid steps (>=2 per v7x TensorCore so weight DMA is hidden).
    p1, oh1, ow1 = im2col(x, 4, 2, 1)
    h = conv_lrelu(p1, weight_to_mat(params["w1"], pad_oc_to=128), bm=512)
    h = h.reshape(N, oh1, ow1, 128)

    # Layer 2: Conv(64->128) + BatchNorm + LeakyReLU.  K=1024 split into 2
    # "arbitrary" steps so the patch/weight DMA overlaps the matmul.
    p2, oh2, ow2 = im2col(h, 4, 2, 1, take_c=64)
    h = conv_bn_lrelu(p2, weight_to_mat(params["w2"]),
                      params["gamma2"], params["beta2"], oc_tile=128)
    h = h.reshape(N, oh2, ow2, 128)

    # Layer 3: Conv(128->256) + BatchNorm + LeakyReLU (grid j=2 parallel, k=4).
    p3, oh3, ow3 = im2col(h, 4, 2, 1)
    h = conv_bn_lrelu(p3, weight_to_mat(params["w3"]),
                      params["gamma3"], params["beta3"], oc_tile=128)
    h = h.reshape(N, oh3, ow3, 256)

    # Layer 4: Conv(256->512) + BatchNorm + LeakyReLU (grid j=4 parallel, k=8;
    # >=2 OC tiles per v7x core, largest pipelined weight block 128 KiB bf16).
    p4, oh4, ow4 = im2col(h, 4, 2, 1)
    h = conv_bn_lrelu(p4, weight_to_mat(params["w4"]),
                      params["gamma4"], params["beta4"], oc_tile=128)
    h = h.reshape(N, oh4, ow4, 512)

    # Layer 5: Conv(512->1, 4, s1, p0) + Sigmoid.  The 4x4 stride-1 conv over a
    # 4x4 feature map is one dot product per batch element: VPU multiply + lane
    # reduction on the bf16 activations/weights (f32 math in-kernel).
    assert oh4 == 4 and ow4 == 4, (oh4, ow4)      # DCGAN expects 64x64 inputs
    x5 = h.reshape(N, oh4 * ow4 * 512)                         # (N, 8192) bf16
    w5 = weight_to_mat(params["w5"], dtype=jnp.bfloat16).reshape(1, -1)
    y = rowdot_sigmoid(x5, w5)                                 # (N, 1) f32
    return y.reshape(N, 1, 1, 1)                               # NCHW (N,1,1,1)


if __name__ == "__main__":
    key = jax.random.PRNGKey(0)
    k_param, k_input = jax.random.split(key)
    params = init_params(k_param)
    # DCGAN discriminator expects 64x64 inputs (4 stride-2 convs + final 4x4 conv -> 1x1).
    x = jax.random.normal(k_input, (2, 3, 64, 64), jnp.float32)

    fwd = jax.jit(discriminator_forward)
    out = jax.block_until_ready(fwd(x, params))

    assert out.shape == (2, 1, 1, 1), out.shape
    assert bool(jnp.all(jnp.isfinite(out)))
    assert bool(jnp.all((out >= 0.0) & (out <= 1.0)))
    print("KERNEL_OK")
</pallas_src>

<mosaic_0001>
module attributes {stable_mosaic.version = 11 : i64} {
  func.func @matmul_lrelu_kernel(%arg0: i32, %arg1: memref<512x48xbf16, #tpu.memory_space<vmem>>, %arg2: memref<48x128xbf16, #tpu.memory_space<vmem>>, %arg3: memref<512x128xbf16, #tpu.memory_space<vmem>>) attributes {dimension_semantics = [#tpu.dimension_semantics<parallel>], iteration_bounds = array<i64: 4>, scalar_prefetch = 0 : i64, scratch_operands = 0 : i64, tpu.core_type = #tpu.core_type<tc>, window_params = [{transform_indices = @transform_0, window_bounds = array<i64: 512, 48>}, {pipeline_mode = #tpu.pipeline_mode<synchronous>, transform_indices = @transform_1, window_bounds = array<i64: 48, 128>}, {transform_indices = @transform_2, window_bounds = array<i64: 512, 128>}]} {
    %c0 = arith.constant 0 : index
    %c0_0 = arith.constant 0 : index
    %0 = vector.load %arg1[%c0, %c0_0] : memref<512x48xbf16, #tpu.memory_space<vmem>>, vector<512x48xbf16>
    %c0_1 = arith.constant 0 : index
    %c0_2 = arith.constant 0 : index
    %1 = vector.load %arg2[%c0_1, %c0_2] : memref<48x128xbf16, #tpu.memory_space<vmem>>, vector<48x128xbf16>
    %cst = arith.constant dense<0.000000e+00> : vector<512x128xf32>
    %2 = tpu.matmul %0, %1, %cst {dimension_numbers = #tpu.dot_dimension_numbers<[1], [0], [0], [1], [0, 0, 1, 1], [], []>} : vector<512x48xbf16>, vector<48x128xbf16>, vector<512x128xf32> -> vector<512x128xf32>
    %cst_3 = arith.constant 0.000000e+00 : f32
    %3 = vector.broadcast %cst_3 : f32 to vector<512x128xf32>
    %4 = arith.cmpf ogt, %2, %3 : vector<512x128xf32>
    %cst_4 = arith.constant 2.000000e-01 : f32
    %5 = vector.broadcast %cst_4 : f32 to vector<512x128xf32>
    %6 = arith.mulf %5, %2 : vector<512x128xf32>
    %7 = arith.select %4, %2, %6 : vector<512x128xi1>, vector<512x128xf32>
    %8 = arith.truncf %7 : vector<512x128xf32> to vector<512x128xbf16>
    %c0_5 = arith.constant 0 : index
    %c0_6 = arith.constant 0 : index
    %9 = vector.load %arg3[%c0_5, %c0_6] : memref<512x128xbf16, #tpu.memory_space<vmem>>, vector<512x128xbf16>
    tpu.vector_store %arg3[%c0_5, %c0_6], %8 {strides = array<i32>} : memref<512x128xbf16, #tpu.memory_space<vmem>>, vector<512x128xbf16>,
    return
  }
  func.func @transform_0(%arg0: i32) -> (i32, i32) {
    %c0_i32 = arith.constant 0 : i32
    %c0_i32_0 = arith.constant 0 : i32
    return %arg0, %c0_i32 : i32, i32
  }
  func.func @transform_1(%arg0: i32) -> (i32, i32) {
    %c0_i32 = arith.constant 0 : i32
    %c0_i32_0 = arith.constant 0 : i32
    %c0_i32_1 = arith.constant 0 : i32
    return %c0_i32, %c0_i32_0 : i32, i32
  }
  func.func @transform_2(%arg0: i32) -> (i32, i32) {
    %c0_i32 = arith.constant 0 : i32
    %c0_i32_0 = arith.constant 0 : i32
    return %arg0, %c0_i32 : i32, i32
  }
}

module attributes {stable_mosaic.version = 11 : i64} {
  func.func @matmul_bn_lrelu_kernel(%arg0: i32, %arg1: i32, %arg2: memref<512x512xbf16, #tpu.memory_space<vmem>>, %arg3: memref<512x128xbf16, #tpu.memory_space<vmem>>, %arg4: memref<1x128xf32, #tpu.memory_space<vmem>>, %arg5: memref<1x128xf32, #tpu.memory_space<vmem>>, %arg6: memref<512x128xbf16, #tpu.memory_space<vmem>>, %arg7: memref<512x128xf32, #tpu.memory_space<vmem>>) attributes {dimension_semantics = [#tpu.dimension_semantics<parallel>, #tpu.dimension_semantics<arbitrary>], iteration_bounds = array<i64: 1, 2>, scalar_prefetch = 0 : i64, scratch_operands = 1 : i64, tpu.core_type = #tpu.core_type<tc>, window_params = [{transform_indices = @transform_0, window_bounds = array<i64: 512, 512>}, {transform_indices = @transform_1, window_bounds = array<i64: 512, 128>}, {transform_indices = @transform_2, window_bounds = array<i64: 1, 128>}, {transform_indices = @transform_3, window_bounds = array<i64: 1, 128>}, {transform_indices = @transform_4, window_bounds = array<i64: 512, 128>}]} {
    %c0_i32 = arith.constant 0 : i32
    %0 = arith.cmpi eq, %arg1, %c0_i32 : i32
    %1 = arith.extui %0 : i1 to i32
    %c0_i32_0 = arith.constant 0 : i32
    %2 = arith.cmpi ne, %1, %c0_i32_0 : i32
    scf.if %2 {
      %cst_33 = arith.constant 0.000000e+00 : f32
      %30 = vector.broadcast %cst_33 : f32 to vector<512x128xf32>
      %c0_34 = arith.constant 0 : index
      %c0_35 = arith.constant 0 : index
      %31 = vector.load %arg7[%c0_34, %c0_35] : memref<512x128xf32, #tpu.memory_space<vmem>>, vector<512x128xf32>
      tpu.vector_store %arg7[%c0_34, %c0_35], %30 {strides = array<i32>} : memref<512x128xf32, #tpu.memory_space<vmem>>, vector<512x128xf32>,
    } else {
    }
    %c0 = arith.constant 0 : index
    %c0_1 = arith.constant 0 : index
    %3 = vector.load %arg7[%c0, %c0_1] : memref<512x128xf32, #tpu.memory_space<vmem>>, vector<128x128xf32>
    %c0_2 = arith.constant 0 : index
    %c0_3 = arith.constant 0 : index
    %4 = vector.load %arg2[%c0_2, %c0_3] : memref<512x512xbf16, #tpu.memory_space<vmem>>, vector<128x512xbf16>
    %c0_4 = arith.constant 0 : index
    %c0_5 = arith.constant 0 : index
    %5 = vector.load %arg3[%c0_4, %c0_5] : memref<512x128xbf16, #tpu.memory_space<vmem>>, vector<512x128xbf16>
    %cst = arith.constant dense<0.000000e+00> : vector<128x128xf32>
    %6 = tpu.matmul %4, %5, %cst {dimension_numbers = #tpu.dot_dimension_numbers<[1], [0], [0], [1], [0, 0, 1, 1], [], []>} : vector<128x512xbf16>, vector<512x128xbf16>, vector<128x128xf32> -> vector<128x128xf32>
    %7 = arith.addf %3, %6 : vector<128x128xf32>
    %c0_6 = arith.constant 0 : index
    %c0_7 = arith.constant 0 : index
    %8 = vector.load %arg7[%c0_6, %c0_7] : memref<512x128xf32, #tpu.memory_space<vmem>>, vector<128x128xf32>
    tpu.vector_store %arg7[%c0_6, %c0_7], %7 {strides = array<i32>} : memref<512x128xf32, #tpu.memory_space<vmem>>, vector<128x128xf32>,
    %c128 = arith.constant 128 : index
    %c0_8 = arith.constant 0 : index
    %9 = vector.load %arg7[%c128, %c0_8] : memref<512x128xf32, #tpu.memory_space<vmem>>, vector<128x128xf32>
    %c128_9 = arith.constant 128 : index
    %c0_10 = arith.constant 0 : index
    %10 = vector.load %arg2[%c128_9, %c0_10] : memref<512x512xbf16, #tpu.memory_space<vmem>>, vector<128x512xbf16>
    %c0_11 = arith.constant 0 : index
    %c0_12 = arith.constant 0 : index
    %11 = vector.load %arg3[%c0_11, %c0_12] : memref<512x128xbf16, #tpu.memory_space<vmem>>, vector<512x128xbf16>
    %cst_13 = arith.constant dense<0.000000e+00> : vector<128x128xf32>
    %12 = tpu.matmul %10, %11, %cst_13 {dimension_numbers = #tpu.dot_dimension_numbers<[1], [0], [0], [1], [0, 0, 1, 1], [], []>} : vector<128x512xbf16>, vector<512x128xbf16>, vector<128x128xf32> -> vector<128x128xf32>
    %13 = arith.addf %9, %12 : vector<128x128xf32>
    %c128_14 = arith.constant 128 : index
    %c0_15 = arith.constant 0 : index
    %14 = vector.load %arg7[%c128_14, %c0_15] : memref<512x128xf32, #tpu.memory_space<vmem>>, vector<128x128xf32>
    tpu.vector_store %arg7[%c128_14, %c0_15], %13 {strides = array<i32>} : memref<512x128xf32, #tpu.memory_space<vmem>>, vector<128x128xf32>,
    %c256 = arith.constant 256 : index
    %c0_16 = arith.constant 0 : index
    %15 = vector.load %arg7[%c256, %c0_16] : memref<512x128xf32, #tpu.memory_space<vmem>>, vector<128x128xf32>
    %c256_17 = arith.constant 256 : index
    %c0_18 = arith.constant 0 : index
    %16 = vector.load %arg2[%c256_17, %c0_18] : memref<512x512xbf16, #tpu.memory_space<vmem>>, vector<128x512xbf16>
    %c0_19 = arith.constant 0 : index
    %c0_20 = arith.constant 0 : index
    %17 = vector.load %arg3[%c0_19, %c0_20] : memref<512x128xbf16, #tpu.memory_space<vmem>>, vector<512x128xbf16>
    %cst_21 = arith.constant dense<0.000000e+00> : vector<128x128xf32>
    %18 = tpu.matmul %16, %17, %cst_21 {dimension_numbers = #tpu.dot_dimension_numbers<[1], [0], [0], [1], [0, 0, 1, 1], [], []>} : vector<128x512xbf16>, vector<512x128xbf16>, vector<128x128xf32> -> vector<128x128xf32>
    %19 = arith.addf %15, %18 : vector<128x128xf32>
    %c256_22 = arith.constant 256 : index
    %c0_23 = arith.constant 0 : index
    %20 = vector.load %arg7[%c256_22, %c0_23] : memref<512x128xf32, #tpu.memory_space<vmem>>, vector<128x128xf32>
    tpu.vector_store %arg7[%c256_22, %c0_23], %19 {strides = array<i32>} : memref<512x128xf32, #tpu.memory_space<vmem>>, vector<128x128xf32>,
    %c384 = arith.constant 384 : index
    %c0_24 = arith.constant 0 : index
    %21 = vector.load %arg7[%c384, %c0_24] : memref<512x128xf32, #tpu.memory_space<vmem>>, vector<128x128xf32>
    %c384_25 = arith.constant 384 : index
    %c0_26 = arith.constant 0 : index
    %22 = vector.load %arg2[%c384_25, %c0_26] : memref<512x512xbf16, #tpu.memory_space<vmem>>, vector<128x512xbf16>
    %c0_27 = arith.constant 0 : index
    %c0_28 = arith.constant 0 : index
    %23 = vector.load %arg3[%c0_27, %c0_28] : memref<512x128xbf16, #tpu.memory_space<vmem>>, vector<512x128xbf16>
    %cst_29 = arith.constant dense<0.000000e+00> : vector<128x128xf32>
    %24 = tpu.matmul %22, %23, %cst_29 {dimension_numbers = #tpu.dot_dimension_numbers<[1], [0], [0], [1], [0, 0, 1, 1], [], []>} : vector<128x512xbf16>, vector<512x128xbf16>, vector<128x128xf32> -> vector<128x128xf32>
    %25 = arith.addf %21, %24 : vector<128x128xf32>
    %c384_30 = arith.constant 384 : index
    %c0_31 = arith.constant 0 : index
    %26 = vector.load %arg7[%c384_30, %c0_31] : memref<512x128xf32, #tpu.memory_space<vmem>>, vector<128x128xf32>
    tpu.vector_store %arg7[%c384_30, %c0_31], %25 {strides = array<i32>} : memref<512x128xf32, #tpu.memory_space<vmem>>, vector<128x128xf32>,
    %c1_i32 = arith.constant 1 : i32
    %27 = arith.cmpi eq, %arg1, %c1_i32 : i32
    %28 = arith.extui %27 : i1 to i32
    %c0_i32_32 = arith.constant 0 : i32
    %29 = arith.cmpi ne, %28, %c0_i32_32 : i32
    scf.if %29 {
      %cst_33 = arith.constant 0.000000e+00 : f32
      %30 = vector.broadcast %cst_33 : f32 to vector<1x128xf32>
      %c0_34 = arith.constant 0 : index
      %c0_35 = arith.constant 0 : index
      %31 = vector.load %arg7[%c0_34, %c0_35] : memref<512x128xf32, #tpu.memory_space<vmem>>, vector<128x128xf32>
      %cst_36 = arith.constant dense<0.000000e+00> : vector<128xf32>
      %32 = vector.multi_reduction <add>, %31, %cst_36 [0] : vector<128x128xf32> to vector<128xf32>
      %33 = vector.shape_cast %32 : vector<128xf32> to vector<1x128xf32>
      %34 = arith.addf %30, %33 : vector<1x128xf32>
      %c128_37 = arith.constant 128 : index
      %c0_38 = arith.constant 0 : index
      %35 = vector.load %arg7[%c128_37, %c0_38] : memref<512x128xf32, #tpu.memory_space<vmem>>, vector<128x128xf32>
      %cst_39 = arith.constant dense<0.000000e+00> : vector<128xf32>
      %36 = vector.multi_reduction <add>, %35, %cst_39 [0] : vector<128x128xf32> to vector<128xf32>
      %37 = vector.shape_cast %36 : vector<128xf32> to vector<1x128xf32>
      %38 = arith.addf %34, %37 : vector<1x128xf32>
      %c256_40 = arith.constant 256 : index
      %c0_41 = arith.constant 0 : index
      %39 = vector.load %arg7[%c256_40, %c0_41] : memref<512x128xf32, #tpu.memory_space<vmem>>, vector<128x128xf32>
      %cst_42 = arith.constant dense<0.000000e+00> : vector<128xf32>
      %40 = vector.multi_reduction <add>, %39, %cst_42 [0] : vector<128x128xf32> to vector<128xf32>
      %41 = vector.shape_cast %40 : vector<128xf32> to vector<1x128xf32>
      %42 = arith.addf %38, %41 : vector<1x128xf32>
      %c384_43 = arith.constant 384 : index
      %c0_44 = arith.constant 0 : index
      %43 = vector.load %arg7[%c384_43, %c0_44] : memref<512x128xf32, #tpu.memory_space<vmem>>, vector<128x128xf32>
      %cst_45 = arith.constant dense<0.000000e+00> : vector<128xf32>
      %44 = vector.multi_reduction <add>, %43, %cst_45 [0] : vector<128x128xf32> to vector<128xf32>
      %45 = vector.shape_cast %44 : vector<128xf32> to vector<1x128xf32>
      %46 = arith.addf %42, %45 : vector<1x128xf32>
      %cst_46 = arith.constant 0.001953125 : f32
      %47 = vector.broadcast %cst_46 : f32 to vector<1x128xf32>
      %48 = arith.mulf %46, %47 : vector<1x128xf32>
      %cst_47 = arith.constant 0.000000e+00 : f32
      %49 = vector.broadcast %cst_47 : f32 to vector<1x128xf32>
      %c0_48 = arith.constant 0 : index
      %c0_49 = arith.constant 0 : index
      %50 = vector.load %arg7[%c0_48, %c0_49] : memref<512x128xf32, #tpu.memory_space<vmem>>, vector<128x128xf32>
      %51 = vector.broadcast %48 : vector<1x128xf32> to vector<128x128xf32>
      %52 = arith.subf %50, %51 : vector<128x128xf32>
      %53 = arith.mulf %52, %52 : vector<128x128xf32>
      %cst_50 = arith.constant dense<0.000000e+00> : vector<128xf32>
      %54 = vector.multi_reduction <add>, %53, %cst_50 [0] : vector<128x128xf32> to vector<128xf32>
      %55 = vector.shape_cast %54 : vector<128xf32> to vector<1x128xf32>
      %56 = arith.addf %49, %55 : vector<1x128xf32>
      %c128_51 = arith.constant 128 : index
      %c0_52 = arith.constant 0 : index
      %57 = vector.load %arg7[%c128_51, %c0_52] : memref<512x128xf32, #tpu.memory_space<vmem>>, vector<128x128xf32>
      %58 = vector.broadcast %48 : vector<1x128xf32> to vector<128x128xf32>
      %59 = arith.subf %57, %58 : vector<128x128xf32>
      %60 = arith.mulf %59, %59 : vector<128x128xf32>
      %cst_53 = arith.constant dense<0.000000e+00> : vector<128xf32>
      %61 = vector.multi_reduction <add>, %60, %cst_53 [0] : vector<128x128xf32> to vector<128xf32>
      %62 = vector.shape_cast %61 : vector<128xf32> to vector<1x128xf32>
      %63 = arith.addf %56, %62 : vector<1x128xf32>
      %c256_54 = arith.constant 256 : index
      %c0_55 = arith.constant 0 : index
      %64 = vector.load %arg7[%c256_54, %c0_55] : memref<512x128xf32, #tpu.memory_space<vmem>>, vector<128x128xf32>
      %65 = vector.broadcast %48 : vector<1x128xf32> to vector<128x128xf32>
      %66 = arith.subf %64, %65 : vector<128x128xf32>
      %67 = arith.mulf %66, %66 : vector<128x128xf32>
      %cst_56 = arith.constant dense<0.000000e+00> : vector<128xf32>
      %68 = vector.multi_reduction <add>, %67, %cst_56 [0] : vector<128x128xf32> to vector<128xf32>
      %69 = vector.shape_cast %68 : vector<128xf32> to vector<1x128xf32>
      %70 = arith.addf %63, %69 : vector<1x128xf32>
      %c384_57 = arith.constant 384 : index
      %c0_58 = arith.constant 0 : index
      %71 = vector.load %arg7[%c384_57, %c0_58] : memref<512x128xf32, #tpu.memory_space<vmem>>, vector<128x128xf32>
      %72 = vector.broadcast %48 : vector<1x128xf32> to vector<128x128xf32>
      %73 = arith.subf %71, %72 : vector<128x128xf32>
      %74 = arith.mulf %73, %73 : vector<128x128xf32>
      %cst_59 = arith.constant dense<0.000000e+00> : vector<128xf32>
      %75 = vector.multi_reduction <add>, %74, %cst_59 [0] : vector<128x128xf32> to vector<128xf32>
      %76 = vector.shape_cast %75 : vector<128xf32> to vector<1x128xf32>
      %77 = arith.addf %70, %76 : vector<1x128xf32>
      %cst_60 = arith.constant 0.001953125 : f32
      %78 = vector.broadcast %cst_60 : f32 to vector<1x128xf32>
      %79 = arith.mulf %77, %78 : vector<1x128xf32>
      %c0_61 = arith.constant 0 : index
      %c0_62 = arith.constant 0 : index
      %80 = vector.load %arg4[%c0_61, %c0_62] : memref<1x128xf32, #tpu.memory_space<vmem>>, vector<1x128xf32>
      %cst_63 = arith.constant 9.99999974E-6 : f32
      %81 = vector.broadcast %cst_63 : f32 to vector<1x128xf32>
      %82 = arith.addf %79, %81 : vector<1x128xf32>
      %83 = math.rsqrt %82 : vector<1x128xf32>
      %84 = arith.mulf %80, %83 : vector<1x128xf32>
      %c0_64 = arith.constant 0 : index
      %c0_65 = arith.constant 0 : index
      %85 = vector.load %arg5[%c0_64, %c0_65] : memref<1x128xf32, #tpu.memory_space<vmem>>, vector<1x128xf32>
      %86 = arith.mulf %48, %84 : vector<1x128xf32>
      %87 = arith.subf %85, %86 : vector<1x128xf32>
      %c0_66 = arith.constant 0 : index
      %c0_67 = arith.constant 0 : index
      %88 = vector.load %arg7[%c0_66, %c0_67] : memref<512x128xf32, #tpu.memory_space<vmem>>, vector<128x128xf32>
      %89 = vector.broadcast %84 : vector<1x128xf32> to vector<128x128xf32>
      %90 = arith.mulf %88, %89 : vector<128x128xf32>
      %91 = vector.broadcast %87 : vector<1x128xf32> to vector<128x128xf32>
      %92 = arith.addf %90, %91 : vector<128x128xf32>
      %cst_68 = arith.constant 0.000000e+00 : f32
      %93 = vector.broadcast %cst_68 : f32 to vector<128x128xf32>
      %94 = arith.cmpf ogt, %92, %93 : vector<128x128xf32>
      %cst_69 = arith.constant 2.000000e-01 : f32
      %95 = vector.broadcast %cst_69 : f32 to vector<128x128xf32>
      %96 = arith.mulf %95, %92 : vector<128x128xf32>
      %97 = arith.select %94, %92, %96 : vector<128x128xi1>, vector<128x128xf32>
      %98 = arith.truncf %97 : vector<128x128xf32> to vector<128x128xbf16>
      %c0_70 = arith.constant 0 : index
      %c0_71 = arith.constant 0 : index
      %99 = vector.load %arg6[%c0_70, %c0_71] : memref<512x128xbf16, #tpu.memory_space<vmem>>, vector<128x128xbf16>
      tpu.vector_store %arg6[%c0_70, %c0_71], %98 {strides = array<i32>} : memref<512x128xbf16, #tpu.memory_space<vmem>>, vector<128x128xbf16>,
      %c128_72 = arith.constant 128 : index
      %c0_73 = arith.constant 0 : index
      %100 = vector.load %arg7[%c128_72, %c0_73] : memref<512x128xf32, #tpu.memory_space<vmem>>, vector<128x128xf32>
      %101 = vector.broadcast %84 : vector<1x128xf32> to vector<128x128xf32>
      %102 = arith.mulf %100, %101 : vector<128x128xf32>
      %103 = vector.broadcast %87 : vector<1x128xf32> to vector<128x128xf32>
      %104 = arith.addf %102, %103 : vector<128x128xf32>
      %cst_74 = arith.constant 0.000000e+00 : f32
      %105 = vector.broadcast %cst_74 : f32 to vector<128x128xf32>
      %106 = arith.cmpf ogt, %104, %105 : vector<128x128xf32>
      %cst_75 = arith.constant 2.000000e-01 : f32
      %107 = vector.broadcast %cst_75 : f32 to vector<128x128xf32>
      %108 = arith.mulf %107, %104 : vector<128x128xf32>
      %109 = arith.select %106, %104, %108 : vector<128x128xi1>, vector<128x128xf32>
      %110 = arith.truncf %109 : vector<128x128xf32> to vector<128x128xbf16>
      %c128_76 = arith.constant 128 : index
      %c0_77 = arith.constant 0 : index
      %111 = vector.load %arg6[%c128_76, %c0_77] : memref<512x128xbf16, #tpu.memory_space<vmem>>, vector<128x128xbf16>
      tpu.vector_store %arg6[%c128_76, %c0_77], %110 {strides = array<i32>} : memref<512x128xbf16, #tpu.memory_space<vmem>>, vector<128x128xbf16>,
      %c256_78 = arith.constant 256 : index
      %c0_79 = arith.constant 0 : index
      %112 = vector.load %arg7[%c256_78, %c0_79] : memref<512x128xf32, #tpu.memory_space<vmem>>, vector<128x128xf32>
      %113 = vector.broadcast %84 : vector<1x128xf32> to vector<128x128xf32>
      %114 = arith.mulf %112, %113 : vector<128x128xf32>
      %115 = vector.broadcast %87 : vector<1x128xf32> to vector<128x128xf32>
      %116 = arith.addf %114, %115 : vector<128x128xf32>
      %cst_80 = arith.constant 0.000000e+00 : f32
      %117 = vector.broadcast %cst_80 : f32 to vector<128x128xf32>
      %118 = arith.cmpf ogt, %116, %117 : vector<128x128xf32>
      %cst_81 = arith.constant 2.000000e-01 : f32
      %119 = vector.broadcast %cst_81 : f32 to vector<128x128xf32>
      %120 = arith.mulf %119, %116 : vector<128x128xf32>
      %121 = arith.select %118, %116, %120 : vector<128x128xi1>, vector<128x128xf32>
      %122 = arith.truncf %121 : vector<128x128xf32> to vector<128x128xbf16>
      %c256_82 = arith.constant 256 : index
      %c0_83 = arith.constant 0 : index
      %123 = vector.load %arg6[%c256_82, %c0_83] : memref<512x128xbf16, #tpu.memory_space<vmem>>, vector<128x128xbf16>
      tpu.vector_store %arg6[%c256_82, %c0_83], %122 {strides = array<i32>} : memref<512x128xbf16, #tpu.memory_space<vmem>>, vector<128x128xbf16>,
      %c384_84 = arith.constant 384 : index
      %c0_85 = arith.constant 0 : index
      %124 = vector.load %arg7[%c384_84, %c0_85] : memref<512x128xf32, #tpu.memory_space<vmem>>, vector<128x128xf32>
      %125 = vector.broadcast %84 : vector<1x128xf32> to vector<128x128xf32>
      %126 = arith.mulf %124, %125 : vector<128x128xf32>
      %127 = vector.broadcast %87 : vector<1x128xf32> to vector<128x128xf32>
      %128 = arith.addf %126, %127 : vector<128x128xf32>
      %cst_86 = arith.constant 0.000000e+00 : f32
      %129 = vector.broadcast %cst_86 : f32 to vector<128x128xf32>
      %130 = arith.cmpf ogt, %128, %129 : vector<128x128xf32>
      %cst_87 = arith.constant 2.000000e-01 : f32
      %131 = vector.broadcast %cst_87 : f32 to vector<128x128xf32>
      %132 = arith.mulf %131, %128 : vector<128x128xf32>
      %133 = arith.select %130, %128, %132 : vector<128x128xi1>, vector<128x128xf32>
      %134 = arith.truncf %133 : vector<128x128xf32> to vector<128x128xbf16>
      %c384_88 = arith.constant 384 : index
      %c0_89 = arith.constant 0 : index
      %135 = vector.load %arg6[%c384_88, %c0_89] : memref<512x128xbf16, #tpu.memory_space<vmem>>, vector<128x128xbf16>
      tpu.vector_store %arg6[%c384_88, %c0_89], %134 {strides = array<i32>} : memref<512x128xbf16, #tpu.memory_space<vmem>>, vector<128x128xbf16>,
    } else {
    }
    return
  }
  func.func @transform_0(%arg0: i32, %arg1: i32) -> (i32, i32) {
    %c0_i32 = arith.constant 0 : i32
    %c0_i32_0 = arith.constant 0 : i32
    return %c0_i32, %arg1 : i32, i32
  }
  func.func @transform_1(%arg0: i32, %arg1: i32) -> (i32, i32) {
    %c0_i32 = arith.constant 0 : i32
    return %arg1, %arg0 : i32, i32
  }
  func.func @transform_2(%arg0: i32, %arg1: i32) -> (i32, i32) {
    %c0_i32 = arith.constant 0 : i32
    %c0_i32_0 = arith.constant 0 : i32
    return %c0_i32, %arg0 : i32, i32
  }
  func.func @transform_3(%arg0: i32, %arg1: i32) -> (i32, i32) {
    %c0_i32 = arith.constant 0 : i32
    %c0_i32_0 = arith.constant 0 : i32
    return %c0_i32, %arg0 : i32, i32
  }
  func.func @transform_4(%arg0: i32, %arg1: i32) -> (i32, i32) {
    %c0_i32 = arith.constant 0 : i32
    %c0_i32_0 = arith.constant 0 : i32
    return %c0_i32, %arg0 : i32, i32
  }
}

module attributes {stable_mosaic.version = 11 : i64} {
  func.func @matmul_bn_lrelu_kernel(%arg0: i32, %arg1: i32, %arg2: memref<128x512xbf16, #tpu.memory_space<vmem>>, %arg3: memref<512x128xbf16, #tpu.memory_space<vmem>>, %arg4: memref<1x128xf32, #tpu.memory_space<vmem>>, %arg5: memref<1x128xf32, #tpu.memory_space<vmem>>, %arg6: memref<128x128xbf16, #tpu.memory_space<vmem>>, %arg7: memref<128x128xf32, #tpu.memory_space<vmem>>) attributes {dimension_semantics = [#tpu.dimension_semantics<parallel>, #tpu.dimension_semantics<arbitrary>], iteration_bounds = array<i64: 2, 4>, scalar_prefetch = 0 : i64, scratch_operands = 1 : i64, tpu.core_type = #tpu.core_type<tc>, window_params = [{transform_indices = @transform_0, window_bounds = array<i64: 128, 512>}, {transform_indices = @transform_1, window_bounds = array<i64: 512, 128>}, {transform_indices = @transform_2, window_bounds = array<i64: 1, 128>}, {transform_indices = @transform_3, window_bounds = array<i64: 1, 128>}, {transform_indices = @transform_4, window_bounds = array<i64: 128, 128>}]} {
    %c0_i32 = arith.constant 0 : i32
    %0 = arith.cmpi eq, %arg1, %c0_i32 : i32
    %1 = arith.extui %0 : i1 to i32
    %c0_i32_0 = arith.constant 0 : i32
    %2 = arith.cmpi ne, %1, %c0_i32_0 : i32
    scf.if %2 {
      %cst_9 = arith.constant 0.000000e+00 : f32
      %12 = vector.broadcast %cst_9 : f32 to vector<128x128xf32>
      %c0_10 = arith.constant 0 : index
      %c0_11 = arith.constant 0 : index
      %13 = vector.load %arg7[%c0_10, %c0_11] : memref<128x128xf32, #tpu.memory_space<vmem>>, vector<128x128xf32>
      tpu.vector_store %arg7[%c0_10, %c0_11], %12 {strides = array<i32>} : memref<128x128xf32, #tpu.memory_space<vmem>>, vector<128x128xf32>,
    } else {
    }
    %c0 = arith.constant 0 : index
    %c0_1 = arith.constant 0 : index
    %3 = vector.load %arg7[%c0, %c0_1] : memref<128x128xf32, #tpu.memory_space<vmem>>, vector<128x128xf32>
    %c0_2 = arith.constant 0 : index
    %c0_3 = arith.constant 0 : index
    %4 = vector.load %arg2[%c0_2, %c0_3] : memref<128x512xbf16, #tpu.memory_space<vmem>>, vector<128x512xbf16>
    %c0_4 = arith.constant 0 : index
    %c0_5 = arith.constant 0 : index
    %5 = vector.load %arg3[%c0_4, %c0_5] : memref<512x128xbf16, #tpu.memory_space<vmem>>, vector<512x128xbf16>
    %cst = arith.constant dense<0.000000e+00> : vector<128x128xf32>
    %6 = tpu.matmul %4, %5, %cst {dimension_numbers = #tpu.dot_dimension_numbers<[1], [0], [0], [1], [0, 0, 1, 1], [], []>} : vector<128x512xbf16>, vector<512x128xbf16>, vector<128x128xf32> -> vector<128x128xf32>
    %7 = arith.addf %3, %6 : vector<128x128xf32>
    %c0_6 = arith.constant 0 : index
    %c0_7 = arith.constant 0 : index
    %8 = vector.load %arg7[%c0_6, %c0_7] : memref<128x128xf32, #tpu.memory_space<vmem>>, vector<128x128xf32>
    tpu.vector_store %arg7[%c0_6, %c0_7], %7 {strides = array<i32>} : memref<128x128xf32, #tpu.memory_space<vmem>>, vector<128x128xf32>,
    %c3_i32 = arith.constant 3 : i32
    %9 = arith.cmpi eq, %arg1, %c3_i32 : i32
    %10 = arith.extui %9 : i1 to i32
    %c0_i32_8 = arith.constant 0 : i32
    %11 = arith.cmpi ne, %10, %c0_i32_8 : i32
    scf.if %11 {
      %cst_9 = arith.constant 0.000000e+00 : f32
      %12 = vector.broadcast %cst_9 : f32 to vector<1x128xf32>
      %c0_10 = arith.constant 0 : index
      %c0_11 = arith.constant 0 : index
      %13 = vector.load %arg7[%c0_10, %c0_11] : memref<128x128xf32, #tpu.memory_space<vmem>>, vector<128x128xf32>
      %cst_12 = arith.constant dense<0.000000e+00> : vector<128xf32>
      %14 = vector.multi_reduction <add>, %13, %cst_12 [0] : vector<128x128xf32> to vector<128xf32>
      %15 = vector.shape_cast %14 : vector<128xf32> to vector<1x128xf32>
      %16 = arith.addf %12, %15 : vector<1x128xf32>
      %cst_13 = arith.constant 7.812500e-03 : f32
      %17 = vector.broadcast %cst_13 : f32 to vector<1x128xf32>
      %18 = arith.mulf %16, %17 : vector<1x128xf32>
      %cst_14 = arith.constant 0.000000e+00 : f32
      %19 = vector.broadcast %cst_14 : f32 to vector<1x128xf32>
      %c0_15 = arith.constant 0 : index
      %c0_16 = arith.constant 0 : index
      %20 = vector.load %arg7[%c0_15, %c0_16] : memref<128x128xf32, #tpu.memory_space<vmem>>, vector<128x128xf32>
      %21 = vector.broadcast %18 : vector<1x128xf32> to vector<128x128xf32>
      %22 = arith.subf %20, %21 : vector<128x128xf32>
      %23 = arith.mulf %22, %22 : vector<128x128xf32>
      %cst_17 = arith.constant dense<0.000000e+00> : vector<128xf32>
      %24 = vector.multi_reduction <add>, %23, %cst_17 [0] : vector<128x128xf32> to vector<128xf32>
      %25 = vector.shape_cast %24 : vector<128xf32> to vector<1x128xf32>
      %26 = arith.addf %19, %25 : vector<1x128xf32>
      %cst_18 = arith.constant 7.812500e-03 : f32
      %27 = vector.broadcast %cst_18 : f32 to vector<1x128xf32>
      %28 = arith.mulf %26, %27 : vector<1x128xf32>
      %c0_19 = arith.constant 0 : index
      %c0_20 = arith.constant 0 : index
      %29 = vector.load %arg4[%c0_19, %c0_20] : memref<1x128xf32, #tpu.memory_space<vmem>>, vector<1x128xf32>
      %cst_21 = arith.constant 9.99999974E-6 : f32
      %30 = vector.broadcast %cst_21 : f32 to vector<1x128xf32>
      %31 = arith.addf %28, %30 : vector<1x128xf32>
      %32 = math.rsqrt %31 : vector<1x128xf32>
      %33 = arith.mulf %29, %32 : vector<1x128xf32>
      %c0_22 = arith.constant 0 : index
      %c0_23 = arith.constant 0 : index
      %34 = vector.load %arg5[%c0_22, %c0_23] : memref<1x128xf32, #tpu.memory_space<vmem>>, vector<1x128xf32>
      %35 = arith.mulf %18, %33 : vector<1x128xf32>
      %36 = arith.subf %34, %35 : vector<1x128xf32>
      %c0_24 = arith.constant 0 : index
      %c0_25 = arith.constant 0 : index
      %37 = vector.load %arg7[%c0_24, %c0_25] : memref<128x128xf32, #tpu.memory_space<vmem>>, vector<128x128xf32>
      %38 = vector.broadcast %33 : vector<1x128xf32> to vector<128x128xf32>
      %39 = arith.mulf %37, %38 : vector<128x128xf32>
      %40 = vector.broadcast %36 : vector<1x128xf32> to vector<128x128xf32>
      %41 = arith.addf %39, %40 : vector<128x128xf32>
      %cst_26 = arith.constant 0.000000e+00 : f32
      %42 = vector.broadcast %cst_26 : f32 to vector<128x128xf32>
      %43 = arith.cmpf ogt, %41, %42 : vector<128x128xf32>
      %cst_27 = arith.constant 2.000000e-01 : f32
      %44 = vector.broadcast %cst_27 : f32 to vector<128x128xf32>
      %45 = arith.mulf %44, %41 : vector<128x128xf32>
      %46 = arith.select %43, %41, %45 : vector<128x128xi1>, vector<128x128xf32>
      %47 = arith.truncf %46 : vector<128x128xf32> to vector<128x128xbf16>
      %c0_28 = arith.constant 0 : index
      %c0_29 = arith.constant 0 : index
      %48 = vector.load %arg6[%c0_28, %c0_29] : memref<128x128xbf16, #tpu.memory_space<vmem>>, vector<128x128xbf16>
      tpu.vector_store %arg6[%c0_28, %c0_29], %47 {strides = array<i32>} : memref<128x128xbf16, #tpu.memory_space<vmem>>, vector<128x128xbf16>,
    } else {
    }
    return
  }
  func.func @transform_0(%arg0: i32, %arg1: i32) -> (i32, i32) {
    %c0_i32 = arith.constant 0 : i32
    %c0_i32_0 = arith.constant 0 : i32
    return %c0_i32, %arg1 : i32, i32
  }
  func.func @transform_1(%arg0: i32, %arg1: i32) -> (i32, i32) {
    %c0_i32 = arith.constant 0 : i32
    return %arg1, %arg0 : i32, i32
  }
  func.func @transform_2(%arg0: i32, %arg1: i32) -> (i32, i32) {
    %c0_i32 = arith.constant 0 : i32
    %c0_i32_0 = arith.constant 0 : i32
    return %c0_i32, %arg0 : i32, i32
  }
  func.func @transform_3(%arg0: i32, %arg1: i32) -> (i32, i32) {
    %c0_i32 = arith.constant 0 : i32
    %c0_i32_0 = arith.constant 0 : i32
    return %c0_i32, %arg0 : i32, i32
  }
  func.func @transform_4(%arg0: i32, %arg1: i32) -> (i32, i32) {
    %c0_i32 = arith.constant 0 : i32
    %c0_i32_0 = arith.constant 0 : i32
    return %c0_i32, %arg0 : i32, i32
  }
}

module attributes {stable_mosaic.version = 11 : i64} {
  func.func @matmul_bn_lrelu_kernel(%arg0: i32, %arg1: i32, %arg2: memref<32x512xbf16, #tpu.memory_space<vmem>>, %arg3: memref<512x128xbf16, #tpu.memory_space<vmem>>, %arg4: memref<1x128xf32, #tpu.memory_space<vmem>>, %arg5: memref<1x128xf32, #tpu.memory_space<vmem>>, %arg6: memref<32x128xbf16, #tpu.memory_space<vmem>>, %arg7: memref<32x128xf32, #tpu.memory_space<vmem>>) attributes {dimension_semantics = [#tpu.dimension_semantics<parallel>, #tpu.dimension_semantics<arbitrary>], iteration_bounds = array<i64: 4, 8>, scalar_prefetch = 0 : i64, scratch_operands = 1 : i64, tpu.core_type = #tpu.core_type<tc>, window_params = [{transform_indices = @transform_0, window_bounds = array<i64: 32, 512>}, {transform_indices = @transform_1, window_bounds = array<i64: 512, 128>}, {transform_indices = @transform_2, window_bounds = array<i64: 1, 128>}, {transform_indices = @transform_3, window_bounds = array<i64: 1, 128>}, {transform_indices = @transform_4, window_bounds = array<i64: 32, 128>}]} {
    %c0_i32 = arith.constant 0 : i32
    %0 = arith.cmpi eq, %arg1, %c0_i32 : i32
    %1 = arith.extui %0 : i1 to i32
    %c0_i32_0 = arith.constant 0 : i32
    %2 = arith.cmpi ne, %1, %c0_i32_0 : i32
    scf.if %2 {
      %cst_9 = arith.constant 0.000000e+00 : f32
      %12 = vector.broadcast %cst_9 : f32 to vector<32x128xf32>
      %c0_10 = arith.constant 0 : index
      %c0_11 = arith.constant 0 : index
      %13 = vector.load %arg7[%c0_10, %c0_11] : memref<32x128xf32, #tpu.memory_space<vmem>>, vector<32x128xf32>
      tpu.vector_store %arg7[%c0_10, %c0_11], %12 {strides = array<i32>} : memref<32x128xf32, #tpu.memory_space<vmem>>, vector<32x128xf32>,
    } else {
    }
    %c0 = arith.constant 0 : index
    %c0_1 = arith.constant 0 : index
    %3 = vector.load %arg7[%c0, %c0_1] : memref<32x128xf32, #tpu.memory_space<vmem>>, vector<32x128xf32>
    %c0_2 = arith.constant 0 : index
    %c0_3 = arith.constant 0 : index
    %4 = vector.load %arg2[%c0_2, %c0_3] : memref<32x512xbf16, #tpu.memory_space<vmem>>, vector<32x512xbf16>
    %c0_4 = arith.constant 0 : index
    %c0_5 = arith.constant 0 : index
    %5 = vector.load %arg3[%c0_4, %c0_5] : memref<512x128xbf16, #tpu.memory_space<vmem>>, vector<512x128xbf16>
    %cst = arith.constant dense<0.000000e+00> : vector<32x128xf32>
    %6 = tpu.matmul %4, %5, %cst {dimension_numbers = #tpu.dot_dimension_numbers<[1], [0], [0], [1], [0, 0, 1, 1], [], []>} : vector<32x512xbf16>, vector<512x128xbf16>, vector<32x128xf32> -> vector<32x128xf32>
    %7 = arith.addf %3, %6 : vector<32x128xf32>
    %c0_6 = arith.constant 0 : index
    %c0_7 = arith.constant 0 : index
    %8 = vector.load %arg7[%c0_6, %c0_7] : memref<32x128xf32, #tpu.memory_space<vmem>>, vector<32x128xf32>
    tpu.vector_store %arg7[%c0_6, %c0_7], %7 {strides = array<i32>} : memref<32x128xf32, #tpu.memory_space<vmem>>, vector<32x128xf32>,
    %c7_i32 = arith.constant 7 : i32
    %9 = arith.cmpi eq, %arg1, %c7_i32 : i32
    %10 = arith.extui %9 : i1 to i32
    %c0_i32_8 = arith.constant 0 : i32
    %11 = arith.cmpi ne, %10, %c0_i32_8 : i32
    scf.if %11 {
      %cst_9 = arith.constant 0.000000e+00 : f32
      %12 = vector.broadcast %cst_9 : f32 to vector<1x128xf32>
      %c0_10 = arith.constant 0 : index
      %c0_11 = arith.constant 0 : index
      %13 = vector.load %arg7[%c0_10, %c0_11] : memref<32x128xf32, #tpu.memory_space<vmem>>, vector<32x128xf32>
      %cst_12 = arith.constant dense<0.000000e+00> : vector<128xf32>
      %14 = vector.multi_reduction <add>, %13, %cst_12 [0] : vector<32x128xf32> to vector<128xf32>
      %15 = vector.shape_cast %14 : vector<128xf32> to vector<1x128xf32>
      %16 = arith.addf %12, %15 : vector<1x128xf32>
      %cst_13 = arith.constant 3.125000e-02 : f32
      %17 = vector.broadcast %cst_13 : f32 to vector<1x128xf32>
      %18 = arith.mulf %16, %17 : vector<1x128xf32>
      %cst_14 = arith.constant 0.000000e+00 : f32
      %19 = vector.broadcast %cst_14 : f32 to vector<1x128xf32>
      %c0_15 = arith.constant 0 : index
      %c0_16 = arith.constant 0 : index
      %20 = vector.load %arg7[%c0_15, %c0_16] : memref<32x128xf32, #tpu.memory_space<vmem>>, vector<32x128xf32>
      %21 = vector.broadcast %18 : vector<1x128xf32> to vector<32x128xf32>
      %22 = arith.subf %20, %21 : vector<32x128xf32>
      %23 = arith.mulf %22, %22 : vector<32x128xf32>
      %cst_17 = arith.constant dense<0.000000e+00> : vector<128xf32>
      %24 = vector.multi_reduction <add>, %23, %cst_17 [0] : vector<32x128xf32> to vector<128xf32>
      %25 = vector.shape_cast %24 : vector<128xf32> to vector<1x128xf32>
      %26 = arith.addf %19, %25 : vector<1x128xf32>
      %cst_18 = arith.constant 3.125000e-02 : f32
      %27 = vector.broadcast %cst_18 : f32 to vector<1x128xf32>
      %28 = arith.mulf %26, %27 : vector<1x128xf32>
      %c0_19 = arith.constant 0 : index
      %c0_20 = arith.constant 0 : index
      %29 = vector.load %arg4[%c0_19, %c0_20] : memref<1x128xf32, #tpu.memory_space<vmem>>, vector<1x128xf32>
      %cst_21 = arith.constant 9.99999974E-6 : f32
      %30 = vector.broadcast %cst_21 : f32 to vector<1x128xf32>
      %31 = arith.addf %28, %30 : vector<1x128xf32>
      %32 = math.rsqrt %31 : vector<1x128xf32>
      %33 = arith.mulf %29, %32 : vector<1x128xf32>
      %c0_22 = arith.constant 0 : index
      %c0_23 = arith.constant 0 : index
      %34 = vector.load %arg5[%c0_22, %c0_23] : memref<1x128xf32, #tpu.memory_space<vmem>>, vector<1x128xf32>
      %35 = arith.mulf %18, %33 : vector<1x128xf32>
      %36 = arith.subf %34, %35 : vector<1x128xf32>
      %c0_24 = arith.constant 0 : index
      %c0_25 = arith.constant 0 : index
      %37 = vector.load %arg7[%c0_24, %c0_25] : memref<32x128xf32, #tpu.memory_space<vmem>>, vector<32x128xf32>
      %38 = vector.broadcast %33 : vector<1x128xf32> to vector<32x128xf32>
      %39 = arith.mulf %37, %38 : vector<32x128xf32>
      %40 = vector.broadcast %36 : vector<1x128xf32> to vector<32x128xf32>
      %41 = arith.addf %39, %40 : vector<32x128xf32>
      %cst_26 = arith.constant 0.000000e+00 : f32
      %42 = vector.broadcast %cst_26 : f32 to vector<32x128xf32>
      %43 = arith.cmpf ogt, %41, %42 : vector<32x128xf32>
      %cst_27 = arith.constant 2.000000e-01 : f32
      %44 = vector.broadcast %cst_27 : f32 to vector<32x128xf32>
      %45 = arith.mulf %44, %41 : vector<32x128xf32>
      %46 = arith.select %43, %41, %45 : vector<32x128xi1>, vector<32x128xf32>
      %47 = arith.truncf %46 : vector<32x128xf32> to vector<32x128xbf16>
      %c0_28 = arith.constant 0 : index
      %c0_29 = arith.constant 0 : index
      %48 = vector.load %arg6[%c0_28, %c0_29] : memref<32x128xbf16, #tpu.memory_space<vmem>>, vector<32x128xbf16>
      tpu.vector_store %arg6[%c0_28, %c0_29], %47 {strides = array<i32>} : memref<32x128xbf16, #tpu.memory_space<vmem>>, vector<32x128xbf16>,
    } else {
    }
    return
  }
  func.func @transform_0(%arg0: i32, %arg1: i32) -> (i32, i32) {
    %c0_i32 = arith.constant 0 : i32
    %c0_i32_0 = arith.constant 0 : i32
    return %c0_i32, %arg1 : i32, i32
  }
  func.func @transform_1(%arg0: i32, %arg1: i32) -> (i32, i32) {
    %c0_i32 = arith.constant 0 : i32
    return %arg1, %arg0 : i32, i32
  }
  func.func @transform_2(%arg0: i32, %arg1: i32) -> (i32, i32) {
    %c0_i32 = arith.constant 0 : i32
    %c0_i32_0 = arith.constant 0 : i32
    return %c0_i32, %arg0 : i32, i32
  }
  func.func @transform_3(%arg0: i32, %arg1: i32) -> (i32, i32) {
    %c0_i32 = arith.constant 0 : i32
    %c0_i32_0 = arith.constant 0 : i32
    return %c0_i32, %arg0 : i32, i32
  }
  func.func @transform_4(%arg0: i32, %arg1: i32) -> (i32, i32) {
    %c0_i32 = arith.constant 0 : i32
    %c0_i32_0 = arith.constant 0 : i32
    return %c0_i32, %arg0 : i32, i32
  }
}

module attributes {stable_mosaic.version = 11 : i64} {
  func.func @rowdot_sigmoid_kernel(%arg0: i32, %arg1: memref<2x8192xbf16, #tpu.memory_space<vmem>>, %arg2: memref<1x8192xbf16, #tpu.memory_space<vmem>>, %arg3: memref<2x1xf32, #tpu.memory_space<vmem>>) attributes {dimension_semantics = [#tpu.dimension_semantics<arbitrary>], iteration_bounds = array<i64: 1>, scalar_prefetch = 0 : i64, scratch_operands = 0 : i64, tpu.core_type = #tpu.core_type<tc>, window_params = [{pipeline_mode = #tpu.pipeline_mode<synchronous>, transform_indices = @transform_0, window_bounds = array<i64: 2, 8192>}, {pipeline_mode = #tpu.pipeline_mode<synchronous>, transform_indices = @transform_1, window_bounds = array<i64: 1, 8192>}, {pipeline_mode = #tpu.pipeline_mode<synchronous>, transform_indices = @transform_2, window_bounds = array<i64: 2, 1>}]} {
    %c0 = arith.constant 0 : index
    %c0_0 = arith.constant 0 : index
    %0 = vector.load %arg1[%c0, %c0_0] : memref<2x8192xbf16, #tpu.memory_space<vmem>>, vector<2x8192xbf16>
    %1 = arith.extf %0 : vector<2x8192xbf16> to vector<2x8192xf32>
    %c0_1 = arith.constant 0 : index
    %c0_2 = arith.constant 0 : index
    %2 = vector.load %arg2[%c0_1, %c0_2] : memref<1x8192xbf16, #tpu.memory_space<vmem>>, vector<1x8192xbf16>
    %3 = arith.extf %2 : vector<1x8192xbf16> to vector<1x8192xf32>
    %4 = vector.broadcast %3 : vector<1x8192xf32> to vector<2x8192xf32>
    %5 = arith.mulf %1, %4 : vector<2x8192xf32>
    %cst = arith.constant dense<0.000000e+00> : vector<2xf32>
    %6 = vector.multi_reduction <add>, %5, %cst [1] : vector<2x8192xf32> to vector<2xf32>
    %7 = vector.shape_cast %6 : vector<2xf32> to vector<2x1xf32>
    %cst_3 = arith.constant 0.000000e+00 : f32
    %8 = vector.broadcast %cst_3 : f32 to vector<2x1xf32>
    %9 = arith.subf %8, %7 : vector<2x1xf32>
    %10 = math.exp %9 : vector<2x1xf32>
    %cst_4 = arith.constant 1.000000e+00 : f32
    %11 = vector.broadcast %cst_4 : f32 to vector<2x1xf32>
    %12 = arith.addf %11, %10 : vector<2x1xf32>
    %cst_5 = arith.constant 1.000000e+00 : f32
    %13 = vector.broadcast %cst_5 : f32 to vector<2x1xf32>
    %14 = arith.divf %13, %12 : vector<2x1xf32>
    %c0_6 = arith.constant 0 : index
    %c0_7 = arith.constant 0 : index
    %15 = vector.load %arg3[%c0_6, %c0_7] : memref<2x1xf32, #tpu.memory_space<vmem>>, vector<2x1xf32>
    tpu.vector_store %arg3[%c0_6, %c0_7], %14 {strides = array<i32>} : memref<2x1xf32, #tpu.memory_space<vmem>>, vector<2x1xf32>,
    return
  }
  func.func @transform_0(%arg0: i32) -> (i32, i32) {
    %c0_i32 = arith.constant 0 : i32
    %c0_i32_0 = arith.constant 0 : i32
    %c0_i32_1 = arith.constant 0 : i32
    return %c0_i32, %c0_i32_0 : i32, i32
  }
  func.func @transform_1(%arg0: i32) -> (i32, i32) {
    %c0_i32 = arith.constant 0 : i32
    %c0_i32_0 = arith.constant 0 : i32
    %c0_i32_1 = arith.constant 0 : i32
    return %c0_i32, %c0_i32_0 : i32, i32
  }
  func.func @transform_2(%arg0: i32) -> (i32, i32) {
    %c0_i32 = arith.constant 0 : i32
    %c0_i32_0 = arith.constant 0 : i32
    %c0_i32_1 = arith.constant 0 : i32
    return %c0_i32, %c0_i32_0 : i32, i32
  }
}

</mosaic_0001>

<llo_original>
// kernel: discriminator_forward.5
$region0: #{discriminator_forward.5}
  #allocation0 [shape = 'u32[]', space=smem, size = 0x4, offset = 0x4, fixed_abs, tag = 'smem constant byte address 0x4 - core index']
  #allocation1 [shape = 'u32[72,128]{1,0:T(1,128)}', space=vmem, size = 0x9000, scoped, tag = 'internal scratch']
  %s0 = inlined_call_operand.vmem [shape: bf16[2048,48], index: 0, kind: input, shape index: {}]
  %s1 = inlined_call_operand.vmem [shape: bf16[48,128], index: 1, kind: input, shape index: {}]
  %s2 = inlined_call_operand.vmem [shape: bf16[2048,128], index: 2, kind: output, shape index: {}]
  %s3 = sld [smem:[#allocation0]]
  $region41: #{discriminator_forward.5} parent=0
    _
  %s5 = ssub.s32 1, %s3
  %s6 = scalar_select 0, %s5, %s3
  loop: start=0, step=1, limit=6
  $region2: #{discriminator_forward.5} parent=0 // loop_pre_header
    _
  $region3: #{discriminator_forward.5} parent=0 // loop_header
    %s8 = sphi 0, %s12
    %p9 = scmp.ge.s32.totalorder %s8, 6
    %s18 = sphi 0, %s20
    %s21 = sphi 0, %s18
    %s22 = sphi 0, %s21
    %s38 = sphi 0, %s22
    %s42 = sphi 0, %s42
    %s44 = sphi 0, %s42
    %s45 = sphi 0, %s44
    %s59 = sphi 0, %s45
    %s65 = sphi 0, %s67
    %s68 = sphi 0, %s65
    %s69 = sphi 0, %s68
    %s85 = sphi 0, %s69
  $region4: #{discriminator_forward.5} parent=0 // loop_header_branch
    %11 = sbr.rel (%p9) target = $region8
  $region5: #{discriminator_forward.5} parent=0 // loop_body
    %s13 = ssub.s32 %s8, 1
    %s14 = ssub.s32 %s8, 2
    %s15 = sadd.s32 %s8, 1
    %s16 = ssub.s32 %s8, %s15
    %p17 = scmp.eq.s32.totalorder %s16, 0
    %s19 = sadd.s32 %s18, 1
    %s20 = scalar_select %p17, %s18, %s19
    %p23 = pneg %p17
    %p24 = scmp.eq.s32.totalorder %s8, 3
    %p25 = por %p23, %p24
    %p26 = scmp.ne.s32.totalorder %s18, %s21
    %p27 = scmp.eq.s32.totalorder %s8, 0
    %p28 = por %p26, %p27
    %p29 = scmp.ne.s32.totalorder %s18, %s21
    %p30 = scmp.eq.s32.totalorder %s13, 3
    %p31 = por %p29, %p30
    %p32 = scmp.ne.s32.totalorder %s21, %s22
    %p33 = scmp.eq.s32.totalorder %s13, 0
    %p34 = por %p32, %p33
    %p35 = scmp.ne.s32.totalorder %s21, %s22
    %p36 = scmp.eq.s32.totalorder %s14, 3
    %p37 = por %p35, %p36
    %p39 = scmp.ne.s32.totalorder %s22, %s38
    %p40 = scmp.eq.s32.totalorder %s14, 0
    %p41 = por %p39, %p40
    %s43 = sadd.s32 %s42, 1
    %p46 = scmp.eq.s32.totalorder %s8, 3
    %p47 = scmp.ne.s32.totalorder %s42, %s44
    %p48 = scmp.eq.s32.totalorder %s8, 0
    %p49 = por %p47, %p48
    %p50 = scmp.ne.s32.totalorder %s42, %s44
    %p51 = scmp.eq.s32.totalorder %s13, 3
    %p52 = por %p50, %p51
    %p53 = scmp.ne.s32.totalorder %s44, %s45
    %p54 = scmp.eq.s32.totalorder %s13, 0
    %p55 = por %p53, %p54
    %p56 = scmp.ne.s32.totalorder %s44, %s45
    %p57 = scmp.eq.s32.totalorder %s14, 3
    %p58 = por %p56, %p57
    %p60 = scmp.ne.s32.totalorder %s45, %s59
    %p61 = scmp.eq.s32.totalorder %s14, 0
    %p62 = por %p60, %p61
    %s63 = ssub.s32 %s8, %s15
    %p64 = scmp.eq.s32.totalorder %s63, 0
    %s66 = sadd.s32 %s65, 1
    %s67 = scalar_select %p64, %s65, %s66
    %p70 = pneg %p64
    %p71 = scmp.eq.s32.totalorder %s8, 3
    %p72 = por %p70, %p71
    %p73 = scmp.ne.s32.totalorder %s65, %s68
    %p74 = scmp.eq.s32.totalorder %s8, 0
    %p75 = por %p73, %p74
    %p76 = scmp.ne.s32.totalorder %s65, %s68
    %p77 = scmp.eq.s32.totalorder %s13, 3
    %p78 = por %p76, %p77
    %p79 = scmp.ne.s32.totalorder %s68, %s69
    %p80 = scmp.eq.s32.totalorder %s13, 0
    %p81 = por %p79, %p80
    %p82 = scmp.ne.s32.totalorder %s68, %s69
    %p83 = scmp.eq.s32.totalorder %s14, 3
    %p84 = por %p82, %p83
    %p86 = scmp.ne.s32.totalorder %s69, %s85
    %p87 = scmp.eq.s32.totalorder %s14, 0
    %p88 = por %p86, %p87
    %p89 = scmp.le.s32.totalorder 1, %s8
    %p90 = scmp.lt.s32.totalorder %s8, 5
    %p91 = pnand %p89, %p90
    %p92 = pneg %p91
    // Predicated region
    $region9: #{discriminator_forward.5} parent=5 // pred_check
      _
    $region10: #{discriminator_forward.5} parent=5 // pred_check_branch
      %94 = sbr.rel (%p91) target = $region12
    $region11: #{discriminator_forward.5} parent=5 // pred_region
      %s95 = ssub.s32 %s8, 1
      // Predicated region
      $region13: #{discriminator_forward.5} parent=11 // pred_check
        %p96 = pneg %p55
      $region14: #{discriminator_forward.5} parent=11 // pred_check_branch
        %98 = sbr.rel (%p96) target = $region16
      $region15: #{discriminator_forward.5} parent=11 // pred_region
        _
      $region16: #{discriminator_forward.5} parent=11 // pred_fallthru
        _
    $region12: #{discriminator_forward.5} parent=5 // pred_fallthru
      _
    %p99 = scmp.lt.s32.totalorder %s8, 4
    // Predicated region
    $region17: #{discriminator_forward.5} parent=5 // pred_check
      %p100 = pneg %p99
    $region18: #{discriminator_forward.5} parent=5 // pred_check_branch
      %102 = sbr.rel (%p100) target = $region20
    $region19: #{discriminator_forward.5} parent=5 // pred_region
      // Predicated region
      $region21: #{discriminator_forward.5} parent=19 // pred_check
        %p103 = pneg %p28
      $region22: #{discriminator_forward.5} parent=19 // pred_check_branch
        %105 = sbr.rel (%p103) target = $region24
      $region23: #{discriminator_forward.5} parent=19 // pred_region
        %s106 = smul.u32 64, %s8
        %p107 = scmp.lt.s32.totalorder %s106, 255
        %s108 = scalar_select %p107, %s106, 255
        %s109 = smul.addr %s108, 4
        %s110 = scalar_lea.vmem %s0, %s109
        %s111 = smul.u32 64, %s8
      $region24: #{discriminator_forward.5} parent=19 // pred_fallthru
        _
    $region20: #{discriminator_forward.5} parent=5 // pred_fallthru
      _
    %p112 = scmp.le.s32.totalorder 1, %s8
    %p113 = scmp.lt.s32.totalorder %s8, 5
    %p114 = pnand %p112, %p113
    %p115 = pneg %p114
    // Predicated region
    $region25: #{discriminator_forward.5} parent=5 // pred_check
      _
    $region26: #{discriminator_forward.5} parent=5 // pred_check_branch
      %117 = sbr.rel (%p114) target = $region28
    $region27: #{discriminator_forward.5} parent=5 // pred_region
      %s118 = ssub.s32 %s8, 1
      %s119 = smul.u32 64, %s13
      %p120 = scmp.lt.s32.totalorder %s119, 255
      %s121 = scalar_select %p120, %s119, 255
      %s122 = smul.addr %s121, 4
      %s123 = scalar_lea.vmem %s0, %s122
      %p124 = pneg %p34
      %p125 = pneg %p31
      %p126 = pneg %p55
      %p127 = pneg %p52
      %p128 = pneg %p81
      %p129 = pneg %p78
      %s130 = smul.u32 64, %s13
      %p131 = scmp.lt.s32.totalorder %s130, 255
      %s132 = scalar_select %p131, %s130, 255
      %s133 = smul.addr %s132, 4
      %s134 = scalar_lea.vmem %s2, %s133
      %s135 = smul.u32 64, %s13
      %p136 = scmp.lt.s32.totalorder %s135, 255
      %s137 = scalar_select %p136, %s135, 255
      %s138 = smul.addr %s137, 4
      %s139 = scalar_lea.vmem %s0, %s138
      %s140 = smul.u32 64, %s13
      %s141 = smul.u32 64, %s13
      %p142 = scmp.lt.s32.totalorder %s141, 255
      %s143 = scalar_select %p142, %s141, 255
      %s144 = smul.addr %s143, 4
      %s145 = scalar_lea.vmem %s2, %s144
      %s146 = smul.u32 64, %s13
      %v148 = vld [vmem:[%s139] sm:$0xf]
      %v149 = vld [vmem:[%s139 + $0x4] sm:$0xf]
      %v150 = vld [vmem:[%s139 + $0x8] sm:$0xf]
      %v151 = vld [vmem:[%s139 + $0xc] sm:$0xf]
      %v152 = vld [vmem:[%s139 + $0x10] sm:$0xf]
      %v153 = vld [vmem:[%s139 + $0x14] sm:$0xf]
      %v154 = vld [vmem:[%s139 + $0x18] sm:$0xf]
      %v155 = vld [vmem:[%s139 + $0x1c] sm:$0xf]
      %v156 = vld [vmem:[%s139 + $0x20] sm:$0xf]
      %v157 = vld [vmem:[%s139 + $0x24] sm:$0xf]
      %v158 = vld [vmem:[%s139 + $0x28] sm:$0xf]
      %v159 = vld [vmem:[%s139 + $0x2c] sm:$0xf]
      %v160 = vld [vmem:[%s139 + $0x30] sm:$0xf]
      %v161 = vld [vmem:[%s139 + $0x34] sm:$0xf]
      %v162 = vld [vmem:[%s139 + $0x38] sm:$0xf]
      %v163 = vld [vmem:[%s139 + $0x3c] sm:$0xf]
      %v164 = vld [vmem:[%s139 + $0x40] sm:$0xf]
      %v165 = vld [vmem:[%s139 + $0x44] sm:$0xf]
      %v166 = vld [vmem:[%s139 + $0x48] sm:$0xf]
      %v167 = vld [vmem:[%s139 + $0x4c] sm:$0xf]
      %v168 = vld [vmem:[%s139 + $0x50] sm:$0xf]
      %v169 = vld [vmem:[%s139 + $0x54] sm:$0xf]
      %v170 = vld [vmem:[%s139 + $0x58] sm:$0xf]
      %v171 = vld [vmem:[%s139 + $0x5c] sm:$0xf]
      %v172 = vld [vmem:[%s139 + $0x60] sm:$0xf]
      %v173 = vld [vmem:[%s139 + $0x64] sm:$0xf]
      %v174 = vld [vmem:[%s139 + $0x68] sm:$0xf]
      %v175 = vld [vmem:[%s139 + $0x6c] sm:$0xf]
      %v176 = vld [vmem:[%s139 + $0x70] sm:$0xf]
      %v177 = vld [vmem:[%s139 + $0x74] sm:$0xf]
      %v178 = vld [vmem:[%s139 + $0x78] sm:$0xf]
      %v179 = vld [vmem:[%s139 + $0x7c] sm:$0xf]
      %v180 = vld [vmem:[%s139 + $0x80] sm:$0xf]
      %v181 = vld [vmem:[%s139 + $0x84] sm:$0xf]
      %v182 = vld [vmem:[%s139 + $0x88] sm:$0xf]
      %v183 = vld [vmem:[%s139 + $0x8c] sm:$0xf]
      %v184 = vld [vmem:[%s139 + $0x90] sm:$0xf]
      %v185 = vld [vmem:[%s139 + $0x94] sm:$0xf]
      %v186 = vld [vmem:[%s139 + $0x98] sm:$0xf]
      %v187 = vld [vmem:[%s139 + $0x9c] sm:$0xf]
      %v188 = vld [vmem:[%s139 + $0xa0] sm:$0xf]
      %v189 = vld [vmem:[%s139 + $0xa4] sm:$0xf]
      %v190 = vld [vmem:[%s139 + $0xa8] sm:$0xf]
      %v191 = vld [vmem:[%s139 + $0xac] sm:$0xf]
      %v192 = vld [vmem:[%s139 + $0xb0] sm:$0xf]
      %v193 = vld [vmem:[%s139 + $0xb4] sm:$0xf]
      %v194 = vld [vmem:[%s139 + $0xb8] sm:$0xf]
      %v195 = vld [vmem:[%s139 + $0xbc] sm:$0xf]
      %v196 = vld [vmem:[%s139 + $0xc0] sm:$0xf]
      %v197 = vld [vmem:[%s139 + $0xc4] sm:$0xf]
      %v198 = vld [vmem:[%s139 + $0xc8] sm:$0xf]
      %v199 = vld [vmem:[%s139 + $0xcc] sm:$0xf]
      %v200 = vld [vmem:[%s139 + $0xd0] sm:$0xf]
      %v201 = vld [vmem:[%s139 + $0xd4] sm:$0xf]
      %v202 = vld [vmem:[%s139 + $0xd8] sm:$0xf]
      %v203 = vld [vmem:[%s139 + $0xdc] sm:$0xf]
      %v204 = vld [vmem:[%s139 + $0xe0] sm:$0xf]
      %v205 = vld [vmem:[%s139 + $0xe4] sm:$0xf]
      %v206 = vld [vmem:[%s139 + $0xe8] sm:$0xf]
      %v207 = vld [vmem:[%s139 + $0xec] sm:$0xf]
      %v208 = vld [vmem:[%s139 + $0xf0] sm:$0xf]
      %v209 = vld [vmem:[%s139 + $0xf4] sm:$0xf]
      %v210 = vld [vmem:[%s139 + $0xf8] sm:$0xf]
      %v211 = vld [vmem:[%s139 + $0xfc] sm:$0xf]
      %v212 = vld [vmem:[%s1] sm:$0xf]
      %v213 = vld [vmem:[%s1 + $0x4] sm:$0xf]
      %v214 = vld [vmem:[%s1 + $0x8] sm:$0xf]
      %v215 = vld [vmem:[%s1 + $0xc] sm:$0xf]
      %v216 = vld [vmem:[%s1 + $0x10] sm:$0xf]
      %v217 = vld [vmem:[%s1 + $0x14] sm:$0xf]
      %v282 = vunpack.c.l.b16 %v148
      %v283 = vunpack.c.l.b16 %v149
      %v284 = vunpack.c.l.b16 %v150
      %v285 = vunpack.c.l.b16 %v151
      %v286 = vunpack.c.l.b16 %v152
      %v287 = vunpack.c.l.b16 %v153
      %v288 = vunpack.c.l.b16 %v154
      %v289 = vunpack.c.l.b16 %v155
      %v290 = vunpack.c.l.b16 %v156
      %v291 = vunpack.c.l.b16 %v157
      %v292 = vunpack.c.l.b16 %v158
      %v293 = vunpack.c.l.b16 %v159
      %v294 = vunpack.c.l.b16 %v160
      %v295 = vunpack.c.l.b16 %v161
      %v296 = vunpack.c.l.b16 %v162
      %v297 = vunpack.c.l.b16 %v163
      %v298 = vunpack.c.l.b16 %v164
      %v299 = vunpack.c.l.b16 %v165
      %v300 = vunpack.c.l.b16 %v166
      %v301 = vunpack.c.l.b16 %v167
      %v302 = vunpack.c.l.b16 %v168
      %v303 = vunpack.c.l.b16 %v169
      %v304 = vunpack.c.l.b16 %v170
      %v305 = vunpack.c.l.b16 %v171
      %v306 = vunpack.c.l.b16 %v172
      %v307 = vunpack.c.l.b16 %v173
      %v308 = vunpack.c.l.b16 %v174
      %v309 = vunpack.c.l.b16 %v175
      %v310 = vunpack.c.l.b16 %v176
      %v311 = vunpack.c.l.b16 %v177
      %v312 = vunpack.c.l.b16 %v178
      %v313 = vunpack.c.l.b16 %v179
      %v314 = vunpack.c.l.b16 %v180
      %v315 = vunpack.c.l.b16 %v181
      %v316 = vunpack.c.l.b16 %v182
      %v317 = vunpack.c.l.b16 %v183
      %v318 = vunpack.c.l.b16 %v184
      %v319 = vunpack.c.l.b16 %v185
      %v320 = vunpack.c.l.b16 %v186
      %v321 = vunpack.c.l.b16 %v187
      %v322 = vunpack.c.l.b16 %v188
      %v323 = vunpack.c.l.b16 %v189
      %v324 = vunpack.c.l.b16 %v190
      %v325 = vunpack.c.l.b16 %v191
      %v326 = vunpack.c.l.b16 %v192
      %v327 = vunpack.c.l.b16 %v193
      %v328 = vunpack.c.l.b16 %v194
      %v329 = vunpack.c.l.b16 %v195
      %v330 = vunpack.c.l.b16 %v196
      %v331 = vunpack.c.l.b16 %v197
      %v332 = vunpack.c.l.b16 %v198
      %v333 = vunpack.c.l.b16 %v199
      %v334 = vunpack.c.l.b16 %v200
      %v335 = vunpack.c.l.b16 %v201
      %v336 = vunpack.c.l.b16 %v202
      %v337 = vunpack.c.l.b16 %v203
      %v338 = vunpack.c.l.b16 %v204
      %v339 = vunpack.c.l.b16 %v205
      %v340 = vunpack.c.l.b16 %v206
      %v341 = vunpack.c.l.b16 %v207
      %v342 = vunpack.c.l.b16 %v208
      %v343 = vunpack.c.l.b16 %v209
      %v344 = vunpack.c.l.b16 %v210
      %v345 = vunpack.c.l.b16 %v211
      %v346 = vpack.c.b16 %v283, %v282
      %v347 = vpack.c.b16 %v285, %v284
      %v348 = vpack.c.b16 %v287, %v286
      %v349 = vpack.c.b16 %v289, %v288
      %v350 = vpack.c.b16 %v291, %v290
      %v351 = vpack.c.b16 %v293, %v292
      %v352 = vpack.c.b16 %v295, %v294
      %v353 = vpack.c.b16 %v297, %v296
      %v354 = vpack.c.b16 %v299, %v298
      %v355 = vpack.c.b16 %v301, %v300
      %v356 = vpack.c.b16 %v303, %v302
      %v357 = vpack.c.b16 %v305, %v304
      %v358 = vpack.c.b16 %v307, %v306
      %v359 = vpack.c.b16 %v309, %v308
      %v360 = vpack.c.b16 %v311, %v310
      %v361 = vpack.c.b16 %v313, %v312
      %v362 = vpack.c.b16 %v315, %v314
      %v363 = vpack.c.b16 %v317, %v316
      %v364 = vpack.c.b16 %v319, %v318
      %v365 = vpack.c.b16 %v321, %v320
      %v366 = vpack.c.b16 %v323, %v322
      %v367 = vpack.c.b16 %v325, %v324
      %v368 = vpack.c.b16 %v327, %v326
      %v369 = vpack.c.b16 %v329, %v328
      %v370 = vpack.c.b16 %v331, %v330
      %v371 = vpack.c.b16 %v333, %v332
      %v372 = vpack.c.b16 %v335, %v334
      %v373 = vpack.c.b16 %v337, %v336
      %v374 = vpack.c.b16 %v339, %v338
      %v375 = vpack.c.b16 %v341, %v340
      %v376 = vpack.c.b16 %v343, %v342
      %v377 = vpack.c.b16 %v345, %v344
      %v384 = vunpack.c.l.b16 %v212
      %v385 = vunpack.c.l.b16 %v213
      %v386 = vunpack.c.l.b16 %v214
      %v387 = vunpack.c.l.b16 %v215
      %v388 = vunpack.c.l.b16 %v216
      %v389 = vunpack.c.l.b16 %v217
      %v390 = vpack.c.b16 %v385, %v384
      %v391 = vpack.c.b16 %v387, %v386
      %v392 = vpack.c.b16 %v389, %v388
      %vm396 = vcmask 392192
      %v398 = vsel %vm396, %v346, 0
      %v401 = vsel %vm396, %v347, 0
      %v404 = vsel %vm396, %v348, 0
      %v407 = vsel %vm396, %v349, 0
      %v410 = vsel %vm396, %v350, 0
      %v413 = vsel %vm396, %v351, 0
      %v416 = vsel %vm396, %v352, 0
      %v419 = vsel %vm396, %v353, 0
      %v422 = vsel %vm396, %v354, 0
      %v425 = vsel %vm396, %v355, 0
      %v428 = vsel %vm396, %v356, 0
      %v431 = vsel %vm396, %v357, 0
      %v434 = vsel %vm396, %v358, 0
      %v437 = vsel %vm396, %v359, 0
      %v440 = vsel %vm396, %v360, 0
      %v443 = vsel %vm396, %v361, 0
      %v446 = vsel %vm396, %v362, 0
      %v449 = vsel %vm396, %v363, 0
      %v452 = vsel %vm396, %v364, 0
      %v455 = vsel %vm396, %v365, 0
      %v458 = vsel %vm396, %v366, 0
      %v461 = vsel %vm396, %v367, 0
      %v464 = vsel %vm396, %v368, 0
      %v467 = vsel %vm396, %v369, 0
      %v470 = vsel %vm396, %v370, 0
      %v473 = vsel %vm396, %v371, 0
      %v476 = vsel %vm396, %v372, 0
      %v479 = vsel %vm396, %v373, 0
      %v482 = vsel %vm396, %v374, 0
      %v485 = vsel %vm396, %v375, 0
      %v488 = vsel %vm396, %v376, 0
      %v491 = vsel %vm396, %v377, 0
      %493 = vmatpush.bf16.msra.mxu0 0
      %494 = vmatpush.bf16.msra.mxu0 0
      %495 = vmatpush.bf16.msra.mxu0 0
      %496 = vmatpush.bf16.msra.mxu0 0
      %497 = vmatpush.bf16.msra.mxu0 0
      %498 = vmatpush.bf16.msra.mxu0 %v392
      %499 = vmatpush.bf16.msra.mxu0 %v391
      %500 = vmatpush.bf16.msra.mxu0 %v390
      %501 = vmatmul.bf16.gmra.mxu0 %v398
      %v502 = vpop.f32.mrf.mxu0
      %v503 = vadd.f32 0.0, %v502
      %v504 = vpop.f32.mrf.mxu0
      %v505 = vadd.f32 0.0, %v504
      %506 = vmatmul.bf16.gmra.mxu0 %v401
      %v507 = vpop.f32.mrf.mxu0
      %v508 = vadd.f32 0.0, %v507
      %v509 = vpop.f32.mrf.mxu0
      %v510 = vadd.f32 0.0, %v509
      %511 = vmatmul.bf16.gmra.mxu0 %v404
      %v512 = vpop.f32.mrf.mxu0
      %v513 = vadd.f32 0.0, %v512
      %v514 = vpop.f32.mrf.mxu0
      %v515 = vadd.f32 0.0, %v514
      %516 = vmatmul.bf16.gmra.mxu0 %v407
      %v517 = vpop.f32.mrf.mxu0
      %v518 = vadd.f32 0.0, %v517
      %v519 = vpop.f32.mrf.mxu0
      %v520 = vadd.f32 0.0, %v519
      %521 = vmatmul.bf16.gmra.mxu0 %v410
      %v522 = vpop.f32.mrf.mxu0
      %v523 = vadd.f32 0.0, %v522
      %v524 = vpop.f32.mrf.mxu0
      %v525 = vadd.f32 0.0, %v524
      %526 = vmatmul.bf16.gmra.mxu0 %v413
      %v527 = vpop.f32.mrf.mxu0
      %v528 = vadd.f32 0.0, %v527
      %v529 = vpop.f32.mrf.mxu0
      %v530 = vadd.f32 0.0, %v529
      %531 = vmatmul.bf16.gmra.mxu0 %v416
      %v532 = vpop.f32.mrf.mxu0
      %v533 = vadd.f32 0.0, %v532
      %v534 = vpop.f32.mrf.mxu0
      %v535 = vadd.f32 0.0, %v534
      %536 = vmatmul.bf16.gmra.mxu0 %v419
      %v537 = vpop.f32.mrf.mxu0
      %v538 = vadd.f32 0.0, %v537
      %v539 = vpop.f32.mrf.mxu0
      %v540 = vadd.f32 0.0, %v539
      %541 = vmatmul.bf16.gmra.mxu0 %v422
      %v542 = vpop.f32.mrf.mxu0
      %v543 = vadd.f32 0.0, %v542
      %v544 = vpop.f32.mrf.mxu0
      %v545 = vadd.f32 0.0, %v544
      %546 = vmatmul.bf16.gmra.mxu0 %v425
      %v547 = vpop.f32.mrf.mxu0
      %v548 = vadd.f32 0.0, %v547
      %v549 = vpop.f32.mrf.mxu0
      %v550 = vadd.f32 0.0, %v549
      %551 = vmatmul.bf16.gmra.mxu0 %v428
      %v552 = vpop.f32.mrf.mxu0
      %v553 = vadd.f32 0.0, %v552
      %v554 = vpop.f32.mrf.mxu0
      %v555 = vadd.f32 0.0, %v554
      %556 = vmatmul.bf16.gmra.mxu0 %v431
      %v557 = vpop.f32.mrf.mxu0
      %v558 = vadd.f32 0.0, %v557
      %v559 = vpop.f32.mrf.mxu0
      %v560 = vadd.f32 0.0, %v559
      %561 = vmatmul.bf16.gmra.mxu0 %v434
      %v562 = vpop.f32.mrf.mxu0
      %v563 = vadd.f32 0.0, %v562
      %v564 = vpop.f32.mrf.mxu0
      %v565 = vadd.f32 0.0, %v564
      %566 = vmatmul.bf16.gmra.mxu0 %v437
      %v567 = vpop.f32.mrf.mxu0
      %v568 = vadd.f32 0.0, %v567
      %v569 = vpop.f32.mrf.mxu0
      %v570 = vadd.f32 0.0, %v569
      %571 = vmatmul.bf16.gmra.mxu0 %v440
      %v572 = vpop.f32.mrf.mxu0
      %v573 = vadd.f32 0.0, %v572
      %v574 = vpop.f32.mrf.mxu0
      %v575 = vadd.f32 0.0, %v574
      %576 = vmatmul.bf16.gmra.mxu0 %v443
      %v577 = vpop.f32.mrf.mxu0
      %v578 = vadd.f32 0.0, %v577
      %v579 = vpop.f32.mrf.mxu0
      %v580 = vadd.f32 0.0, %v579
      %581 = vmatmul.bf16.gmra.mxu0 %v446
      %v582 = vpop.f32.mrf.mxu0
      %v583 = vadd.f32 0.0, %v582
      %v584 = vpop.f32.mrf.mxu0
      %v585 = vadd.f32 0.0, %v584
      %586 = vmatmul.bf16.gmra.mxu0 %v449
      %v587 = vpop.f32.mrf.mxu0
      %v588 = vadd.f32 0.0, %v587
      %v589 = vpop.f32.mrf.mxu0
      %v590 = vadd.f32 0.0, %v589
      %591 = vmatmul.bf16.gmra.mxu0 %v452
      %v592 = vpop.f32.mrf.mxu0
      %v593 = vadd.f32 0.0, %v592
      %v594 = vpop.f32.mrf.mxu0
      %v595 = vadd.f32 0.0, %v594
      %596 = vmatmul.bf16.gmra.mxu0 %v455
      %v597 = vpop.f32.mrf.mxu0
      %v598 = vadd.f32 0.0, %v597
      %v599 = vpop.f32.mrf.mxu0
      %v600 = vadd.f32 0.0, %v599
      %601 = vmatmul.bf16.gmra.mxu0 %v458
      %v602 = vpop.f32.mrf.mxu0
      %v603 = vadd.f32 0.0, %v602
      %v604 = vpop.f32.mrf.mxu0
      %v605 = vadd.f32 0.0, %v604
      %606 = vmatmul.bf16.gmra.mxu0 %v461
      %v607 = vpop.f32.mrf.mxu0
      %v608 = vadd.f32 0.0, %v607
      %v609 = vpop.f32.mrf.mxu0
      %v610 = vadd.f32 0.0, %v609
      %611 = vmatmul.bf16.gmra.mxu0 %v464
      %v612 = vpop.f32.mrf.mxu0
      %v613 = vadd.f32 0.0, %v612
      %v614 = vpop.f32.mrf.mxu0
      %v615 = vadd.f32 0.0, %v614
      %616 = vmatmul.bf16.gmra.mxu0 %v467
      %v617 = vpop.f32.mrf.mxu0
      %v618 = vadd.f32 0.0, %v617
      %v619 = vpop.f32.mrf.mxu0
      %v620 = vadd.f32 0.0, %v619
      %621 = vmatmul.bf16.gmra.mxu0 %v470
      %v622 = vpop.f32.mrf.mxu0
      %v623 = vadd.f32 0.0, %v622
      %v624 = vpop.f32.mrf.mxu0
      %v625 = vadd.f32 0.0, %v624
      %626 = vmatmul.bf16.gmra.mxu0 %v473
      %v627 = vpop.f32.mrf.mxu0
      %v628 = vadd.f32 0.0, %v627
      %v629 = vpop.f32.mrf.mxu0
      %v630 = vadd.f32 0.0, %v629
      %631 = vmatmul.bf16.gmra.mxu0 %v476
      %v632 = vpop.f32.mrf.mxu0
      %v633 = vadd.f32 0.0, %v632
      %v634 = vpop.f32.mrf.mxu0
      %v635 = vadd.f32 0.0, %v634
      %636 = vmatmul.bf16.gmra.mxu0 %v479
      %v637 = vpop.f32.mrf.mxu0
      %v638 = vadd.f32 0.0, %v637
      %v639 = vpop.f32.mrf.mxu0
      %v640 = vadd.f32 0.0, %v639
      %641 = vmatmul.bf16.gmra.mxu0 %v482
      %v642 = vpop.f32.mrf.mxu0
      %v643 = vadd.f32 0.0, %v642
      %v644 = vpop.f32.mrf.mxu0
      %v645 = vadd.f32 0.0, %v644
      %646 = vmatmul.bf16.gmra.mxu0 %v485
      %v647 = vpop.f32.mrf.mxu0
      %v648 = vadd.f32 0.0, %v647
      %v649 = vpop.f32.mrf.mxu0
      %v650 = vadd.f32 0.0, %v649
      %651 = vmatmul.bf16.gmra.mxu0 %v488
      %v652 = vpop.f32.mrf.mxu0
      %v653 = vadd.f32 0.0, %v652
      %v654 = vpop.f32.mrf.mxu0
      %v655 = vadd.f32 0.0, %v654
      %656 = vmatmul.bf16.gmra.mxu0 %v491
      %v657 = vpop.f32.mrf.mxu0
      %v658 = vadd.f32 0.0, %v657
      %v659 = vpop.f32.mrf.mxu0
      %v660 = vadd.f32 0.0, %v659
      %661 = vdwg.mxu0
      %vm662 = vcmp.gt.f32.partialorder %v503, 0.0
      %vm663 = vcmp.gt.f32.partialorder %v505, 0.0
      %vm664 = vcmp.gt.f32.partialorder %v508, 0.0
      %vm665 = vcmp.gt.f32.partialorder %v510, 0.0
      %vm666 = vcmp.gt.f32.partialorder %v513, 0.0
      %vm667 = vcmp.gt.f32.partialorder %v515, 0.0
      %vm668 = vcmp.gt.f32.partialorder %v518, 0.0
      %vm669 = vcmp.gt.f32.partialorder %v520, 0.0
      %vm670 = vcmp.gt.f32.partialorder %v523, 0.0
      %vm671 = vcmp.gt.f32.partialorder %v525, 0.0
      %vm672 = vcmp.gt.f32.partialorder %v528, 0.0
      %vm673 = vcmp.gt.f32.partialorder %v530, 0.0
      %vm674 = vcmp.gt.f32.partialorder %v533, 0.0
      %vm675 = vcmp.gt.f32.partialorder %v535, 0.0
      %vm676 = vcmp.gt.f32.partialorder %v538, 0.0
      %vm677 = vcmp.gt.f32.partialorder %v540, 0.0
      %vm678 = vcmp.gt.f32.partialorder %v543, 0.0
      %vm679 = vcmp.gt.f32.partialorder %v545, 0.0
      %vm680 = vcmp.gt.f32.partialorder %v548, 0.0
      %vm681 = vcmp.gt.f32.partialorder %v550, 0.0
      %vm682 = vcmp.gt.f32.partialorder %v553, 0.0
      %vm683 = vcmp.gt.f32.partialorder %v555, 0.0
      %vm684 = vcmp.gt.f32.partialorder %v558, 0.0
      %vm685 = vcmp.gt.f32.partialorder %v560, 0.0
      %vm686 = vcmp.gt.f32.partialorder %v563, 0.0
      %vm687 = vcmp.gt.f32.partialorder %v565, 0.0
      %vm688 = vcmp.gt.f32.partialorder %v568, 0.0
      %vm689 = vcmp.gt.f32.partialorder %v570, 0.0
      %vm690 = vcmp.gt.f32.partialorder %v573, 0.0
      %vm691 = vcmp.gt.f32.partialorder %v575, 0.0
      %vm692 = vcmp.gt.f32.partialorder %v578, 0.0
      %vm693 = vcmp.gt.f32.partialorder %v580, 0.0
      %vm694 = vcmp.gt.f32.partialorder %v583, 0.0
      %vm695 = vcmp.gt.f32.partialorder %v585, 0.0
      %vm696 = vcmp.gt.f32.partialorder %v588, 0.0
      %vm697 = vcmp.gt.f32.partialorder %v590, 0.0
      %vm698 = vcmp.gt.f32.partialorder %v593, 0.0
      %vm699 = vcmp.gt.f32.partialorder %v595, 0.0
      %vm700 = vcmp.gt.f32.partialorder %v598, 0.0
      %vm701 = vcmp.gt.f32.partialorder %v600, 0.0
      %vm702 = vcmp.gt.f32.partialorder %v603, 0.0
      %vm703 = vcmp.gt.f32.partialorder %v605, 0.0
      %vm704 = vcmp.gt.f32.partialorder %v608, 0.0
      %vm705 = vcmp.gt.f32.partialorder %v610, 0.0
      %vm706 = vcmp.gt.f32.partialorder %v613, 0.0
      %vm707 = vcmp.gt.f32.partialorder %v615, 0.0
      %vm708 = vcmp.gt.f32.partialorder %v618, 0.0
      %vm709 = vcmp.gt.f32.partialorder %v620, 0.0
      %vm710 = vcmp.gt.f32.partialorder %v623, 0.0
      %vm711 = vcmp.gt.f32.partialorder %v625, 0.0
      %vm712 = vcmp.gt.f32.partialorder %v628, 0.0
      %vm713 = vcmp.gt.f32.partialorder %v630, 0.0
      %vm714 = vcmp.gt.f32.partialorder %v633, 0.0
      %vm715 = vcmp.gt.f32.partialorder %v635, 0.0
      %vm716 = vcmp.gt.f32.partialorder %v638, 0.0
      %vm717 = vcmp.gt.f32.partialorder %v640, 0.0
      %vm718 = vcmp.gt.f32.partialorder %v643, 0.0
      %vm719 = vcmp.gt.f32.partialorder %v645, 0.0
      %vm720 = vcmp.gt.f32.partialorder %v648, 0.0
      %vm721 = vcmp.gt.f32.partialorder %v650, 0.0
      %vm722 = vcmp.gt.f32.partialorder %v653, 0.0
      %vm723 = vcmp.gt.f32.partialorder %v655, 0.0
      %vm724 = vcmp.gt.f32.partialorder %v658, 0.0
      %vm725 = vcmp.gt.f32.partialorder %v660, 0.0
      %v726 = vmul.f32 %v503, 0.2
      %v727 = vmul.f32 %v505, 0.2
      %v728 = vmul.f32 %v508, 0.2
      %v729 = vmul.f32 %v510, 0.2
      %v730 = vmul.f32 %v513, 0.2
      %v731 = vmul.f32 %v515, 0.2
      %v732 = vmul.f32 %v518, 0.2
      %v733 = vmul.f32 %v520, 0.2
      %v734 = vmul.f32 %v523, 0.2
      %v735 = vmul.f32 %v525, 0.2
      %v736 = vmul.f32 %v528, 0.2
      %v737 = vmul.f32 %v530, 0.2
      %v738 = vmul.f32 %v533, 0.2
      %v739 = vmul.f32 %v535, 0.2
      %v740 = vmul.f32 %v538, 0.2
      %v741 = vmul.f32 %v540, 0.2
      %v742 = vmul.f32 %v543, 0.2
      %v743 = vmul.f32 %v545, 0.2
      %v744 = vmul.f32 %v548, 0.2
      %v745 = vmul.f32 %v550, 0.2
      %v746 = vmul.f32 %v553, 0.2
      %v747 = vmul.f32 %v555, 0.2
      %v748 = vmul.f32 %v558, 0.2
      %v749 = vmul.f32 %v560, 0.2
      %v750 = vmul.f32 %v563, 0.2
      %v751 = vmul.f32 %v565, 0.2
      %v752 = vmul.f32 %v568, 0.2
      %v753 = vmul.f32 %v570, 0.2
      %v754 = vmul.f32 %v573, 0.2
      %v755 = vmul.f32 %v575, 0.2
      %v756 = vmul.f32 %v578, 0.2
      %v757 = vmul.f32 %v580, 0.2
      %v758 = vmul.f32 %v583, 0.2
      %v759 = vmul.f32 %v585, 0.2
      %v760 = vmul.f32 %v588, 0.2
      %v761 = vmul.f32 %v590, 0.2
      %v762 = vmul.f32 %v593, 0.2
      %v763 = vmul.f32 %v595, 0.2
      %v764 = vmul.f32 %v598, 0.2
      %v765 = vmul.f32 %v600, 0.2
      %v766 = vmul.f32 %v603, 0.2
      %v767 = vmul.f32 %v605, 0.2
      %v768 = vmul.f32 %v608, 0.2
      %v769 = vmul.f32 %v610, 0.2
      %v770 = vmul.f32 %v613, 0.2
      %v771 = vmul.f32 %v615, 0.2
      %v772 = vmul.f32 %v618, 0.2
      %v773 = vmul.f32 %v620, 0.2
      %v774 = vmul.f32 %v623, 0.2
      %v775 = vmul.f32 %v625, 0.2
      %v776 = vmul.f32 %v628, 0.2
      %v777 = vmul.f32 %v630, 0.2
      %v778 = vmul.f32 %v633, 0.2
      %v779 = vmul.f32 %v635, 0.2
      %v780 = vmul.f32 %v638, 0.2
      %v781 = vmul.f32 %v640, 0.2
      %v782 = vmul.f32 %v643, 0.2
      %v783 = vmul.f32 %v645, 0.2
      %v784 = vmul.f32 %v648, 0.2
      %v785 = vmul.f32 %v650, 0.2
      %v786 = vmul.f32 %v653, 0.2
      %v787 = vmul.f32 %v655, 0.2
      %v788 = vmul.f32 %v658, 0.2
      %v789 = vmul.f32 %v660, 0.2
      %v790 = vsel %vm662, %v503, %v726
      %v791 = vsel %vm663, %v505, %v727
      %v792 = vsel %vm664, %v508, %v728
      %v793 = vsel %vm665, %v510, %v729
      %v794 = vsel %vm666, %v513, %v730
      %v795 = vsel %vm667, %v515, %v731
      %v796 = vsel %vm668, %v518, %v732
      %v797 = vsel %vm669, %v520, %v733
      %v798 = vsel %vm670, %v523, %v734
      %v799 = vsel %vm671, %v525, %v735
      %v800 = vsel %vm672, %v528, %v736
      %v801 = vsel %vm673, %v530, %v737
      %v802 = vsel %vm674, %v533, %v738
      %v803 = vsel %vm675, %v535, %v739
      %v804 = vsel %vm676, %v538, %v740
      %v805 = vsel %vm677, %v540, %v741
      %v806 = vsel %vm678, %v543, %v742
      %v807 = vsel %vm679, %v545, %v743
      %v808 = vsel %vm680, %v548, %v744
      %v809 = vsel %vm681, %v550, %v745
      %v810 = vsel %vm682, %v553, %v746
      %v811 = vsel %vm683, %v555, %v747
      %v812 = vsel %vm684, %v558, %v748
      %v813 = vsel %vm685, %v560, %v749
      %v814 = vsel %vm686, %v563, %v750
      %v815 = vsel %vm687, %v565, %v751
      %v816 = vsel %vm688, %v568, %v752
      %v817 = vsel %vm689, %v570, %v753
      %v818 = vsel %vm690, %v573, %v754
      %v819 = vsel %vm691, %v575, %v755
      %v820 = vsel %vm692, %v578, %v756
      %v821 = vsel %vm693, %v580, %v757
      %v822 = vsel %vm694, %v583, %v758
      %v823 = vsel %vm695, %v585, %v759
      %v824 = vsel %vm696, %v588, %v760
      %v825 = vsel %vm697, %v590, %v761
      %v826 = vsel %vm698, %v593, %v762
      %v827 = vsel %vm699, %v595, %v763
      %v828 = vsel %vm700, %v598, %v764
      %v829 = vsel %vm701, %v600, %v765
      %v830 = vsel %vm702, %v603, %v766
      %v831 = vsel %vm703, %v605, %v767
      %v832 = vsel %vm704, %v608, %v768
      %v833 = vsel %vm705, %v610, %v769
      %v834 = vsel %vm706, %v613, %v770
      %v835 = vsel %vm707, %v615, %v771
      %v836 = vsel %vm708, %v618, %v772
      %v837 = vsel %vm709, %v620, %v773
      %v838 = vsel %vm710, %v623, %v774
      %v839 = vsel %vm711, %v625, %v775
      %v840 = vsel %vm712, %v628, %v776
      %v841 = vsel %vm713, %v630, %v777
      %v842 = vsel %vm714, %v633, %v778
      %v843 = vsel %vm715, %v635, %v779
      %v844 = vsel %vm716, %v638, %v780
      %v845 = vsel %vm717, %v640, %v781
      %v846 = vsel %vm718, %v643, %v782
      %v847 = vsel %vm719, %v645, %v783
      %v848 = vsel %vm720, %v648, %v784
      %v849 = vsel %vm721, %v650, %v785
      %v850 = vsel %vm722, %v653, %v786
      %v851 = vsel %vm723, %v655, %v787
      %v852 = vsel %vm724, %v658, %v788
      %v853 = vsel %vm725, %v660, %v789
      %v854 = vpack.c.bf16 %v790, %v790
      %v855 = vpack.c.bf16 %v791, %v791
      %v856 = vpack.c.bf16 %v792, %v792
      %v857 = vpack.c.bf16 %v793, %v793
      %v858 = vpack.c.bf16 %v794, %v794
      %v859 = vpack.c.bf16 %v795, %v795
      %v860 = vpack.c.bf16 %v796, %v796
      %v861 = vpack.c.bf16 %v797, %v797
      %v862 = vpack.c.bf16 %v798, %v798
      %v863 = vpack.c.bf16 %v799, %v799
      %v864 = vpack.c.bf16 %v800, %v800
      %v865 = vpack.c.bf16 %v801, %v801
      %v866 = vpack.c.bf16 %v802, %v802
      %v867 = vpack.c.bf16 %v803, %v803
      %v868 = vpack.c.bf16 %v804, %v804
      %v869 = vpack.c.bf16 %v805, %v805
      %v870 = vpack.c.bf16 %v806, %v806
      %v871 = vpack.c.bf16 %v807, %v807
      %v872 = vpack.c.bf16 %v808, %v808
      %v873 = vpack.c.bf16 %v809, %v809
      %v874 = vpack.c.bf16 %v810, %v810
      %v875 = vpack.c.bf16 %v811, %v811
      %v876 = vpack.c.bf16 %v812, %v812
      %v877 = vpack.c.bf16 %v813, %v813
      %v878 = vpack.c.bf16 %v814, %v814
      %v879 = vpack.c.bf16 %v815, %v815
      %v880 = vpack.c.bf16 %v816, %v816
      %v881 = vpack.c.bf16 %v817, %v817
      %v882 = vpack.c.bf16 %v818, %v818
      %v883 = vpack.c.bf16 %v819, %v819
      %v884 = vpack.c.bf16 %v820, %v820
      %v885 = vpack.c.bf16 %v821, %v821
      %v886 = vpack.c.bf16 %v822, %v822
      %v887 = vpack.c.bf16 %v823, %v823
      %v888 = vpack.c.bf16 %v824, %v824
      %v889 = vpack.c.bf16 %v825, %v825
      %v890 = vpack.c.bf16 %v826, %v826
      %v891 = vpack.c.bf16 %v827, %v827
      %v892 = vpack.c.bf16 %v828, %v828
      %v893 = vpack.c.bf16 %v829, %v829
      %v894 = vpack.c.bf16 %v830, %v830
      %v895 = vpack.c.bf16 %v831, %v831
      %v896 = vpack.c.bf16 %v832, %v832
      %v897 = vpack.c.bf16 %v833, %v833
      %v898 = vpack.c.bf16 %v834, %v834
      %v899 = vpack.c.bf16 %v835, %v835
      %v900 = vpack.c.bf16 %v836, %v836
      %v901 = vpack.c.bf16 %v837, %v837
      %v902 = vpack.c.bf16 %v838, %v838
      %v903 = vpack.c.bf16 %v839, %v839
      %v904 = vpack.c.bf16 %v840, %v840
      %v905 = vpack.c.bf16 %v841, %v841
      %v906 = vpack.c.bf16 %v842, %v842
      %v907 = vpack.c.bf16 %v843, %v843
      %v908 = vpack.c.bf16 %v844, %v844
      %v909 = vpack.c.bf16 %v845, %v845
      %v910 = vpack.c.bf16 %v846, %v846
      %v911 = vpack.c.bf16 %v847, %v847
      %v912 = vpack.c.bf16 %v848, %v848
      %v913 = vpack.c.bf16 %v849, %v849
      %v914 = vpack.c.bf16 %v850, %v850
      %v915 = vpack.c.bf16 %v851, %v851
      %v916 = vpack.c.bf16 %v852, %v852
      %v917 = vpack.c.bf16 %v853, %v853
      %918 = vst [vmem:[%s145] sm:$0xf] %v854
      %919 = vst [vmem:[%s145 + $0x4] sm:$0xf] %v855
      %920 = vst [vmem:[%s145 + $0x8] sm:$0xf] %v856
      %921 = vst [vmem:[%s145 + $0xc] sm:$0xf] %v857
      %922 = vst [vmem:[%s145 + $0x10] sm:$0xf] %v858
      %923 = vst [vmem:[%s145 + $0x14] sm:$0xf] %v859
      %924 = vst [vmem:[%s145 + $0x18] sm:$0xf] %v860
      %925 = vst [vmem:[%s145 + $0x1c] sm:$0xf] %v861
      %926 = vst [vmem:[%s145 + $0x20] sm:$0xf] %v862
      %927 = vst [vmem:[%s145 + $0x24] sm:$0xf] %v863
      %928 = vst [vmem:[%s145 + $0x28] sm:$0xf] %v864
      %929 = vst [vmem:[%s145 + $0x2c] sm:$0xf] %v865
      %930 = vst [vmem:[%s145 + $0x30] sm:$0xf] %v866
      %931 = vst [vmem:[%s145 + $0x34] sm:$0xf] %v867
      %932 = vst [vmem:[%s145 + $0x38] sm:$0xf] %v868
      %933 = vst [vmem:[%s145 + $0x3c] sm:$0xf] %v869
      %934 = vst [vmem:[%s145 + $0x40] sm:$0xf] %v870
      %935 = vst [vmem:[%s145 + $0x44] sm:$0xf] %v871
      %936 = vst [vmem:[%s145 + $0x48] sm:$0xf] %v872
      %937 = vst [vmem:[%s145 + $0x4c] sm:$0xf] %v873
      %938 = vst [vmem:[%s145 + $0x50] sm:$0xf] %v874
      %939 = vst [vmem:[%s145 + $0x54] sm:$0xf] %v875
      %940 = vst [vmem:[%s145 + $0x58] sm:$0xf] %v876
      %941 = vst [vmem:[%s145 + $0x5c] sm:$0xf] %v877
      %942 = vst [vmem:[%s145 + $0x60] sm:$0xf] %v878
      %943 = vst [vmem:[%s145 + $0x64] sm:$0xf] %v879
      %944 = vst [vmem:[%s145 + $0x68] sm:$0xf] %v880
      %945 = vst [vmem:[%s145 + $0x6c] sm:$0xf] %v881
      %946 = vst [vmem:[%s145 + $0x70] sm:$0xf] %v882
      %947 = vst [vmem:[%s145 + $0x74] sm:$0xf] %v883
      %948 = vst [vmem:[%s145 + $0x78] sm:$0xf] %v884
      %949 = vst [vmem:[%s145 + $0x7c] sm:$0xf] %v885
      %950 = vst [vmem:[%s145 + $0x80] sm:$0xf] %v886
      %951 = vst [vmem:[%s145 + $0x84] sm:$0xf] %v887
      %952 = vst [vmem:[%s145 + $0x88] sm:$0xf] %v888
      %953 = vst [vmem:[%s145 + $0x8c] sm:$0xf] %v889
      %954 = vst [vmem:[%s145 + $0x90] sm:$0xf] %v890
      %955 = vst [vmem:[%s145 + $0x94] sm:$0xf] %v891
      %956 = vst [vmem:[%s145 + $0x98] sm:$0xf] %v892
      %957 = vst [vmem:[%s145 + $0x9c] sm:$0xf] %v893
      %958 = vst [vmem:[%s145 + $0xa0] sm:$0xf] %v894
      %959 = vst [vmem:[%s145 + $0xa4] sm:$0xf] %v895
      %960 = vst [vmem:[%s145 + $0xa8] sm:$0xf] %v896
      %961 = vst [vmem:[%s145 + $0xac] sm:$0xf] %v897
      %962 = vst [vmem:[%s145 + $0xb0] sm:$0xf] %v898
      %963 = vst [vmem:[%s145 + $0xb4] sm:$0xf] %v899
      %964 = vst [vmem:[%s145 + $0xb8] sm:$0xf] %v900
      %965 = vst [vmem:[%s145 + $0xbc] sm:$0xf] %v901
      %966 = vst [vmem:[%s145 + $0xc0] sm:$0xf] %v902
      %967 = vst [vmem:[%s145 + $0xc4] sm:$0xf] %v903
      %968 = vst [vmem:[%s145 + $0xc8] sm:$0xf] %v904
      %969 = vst [vmem:[%s145 + $0xcc] sm:$0xf] %v905
      %970 = vst [vmem:[%s145 + $0xd0] sm:$0xf] %v906
      %971 = vst [vmem:[%s145 + $0xd4] sm:$0xf] %v907
      %972 = vst [vmem:[%s145 + $0xd8] sm:$0xf] %v908
      %973 = vst [vmem:[%s145 + $0xdc] sm:$0xf] %v909
      %974 = vst [vmem:[%s145 + $0xe0] sm:$0xf] %v910
      %975 = vst [vmem:[%s145 + $0xe4] sm:$0xf] %v911
      %976 = vst [vmem:[%s145 + $0xe8] sm:$0xf] %v912
      %977 = vst [vmem:[%s145 + $0xec] sm:$0xf] %v913
      %978 = vst [vmem:[%s145 + $0xf0] sm:$0xf] %v914
      %979 = vst [vmem:[%s145 + $0xf4] sm:$0xf] %v915
      %980 = vst [vmem:[%s145 + $0xf8] sm:$0xf] %v916
      %981 = vst [vmem:[%s145 + $0xfc] sm:$0xf] %v917
      %s982 = smul.u32 64, %s13
      %p983 = scmp.lt.s32.totalorder %s982, 255
      %s984 = scalar_select %p983, %s982, 255
      %s985 = smul.addr %s984, 4
      %s986 = scalar_lea.vmem %s2, %s985
      // Predicated region
      $region29: #{discriminator_forward.5} parent=27 // pred_check
        %p987 = pneg %p78
      $region30: #{discriminator_forward.5} parent=27 // pred_check_branch
        %989 = sbr.rel (%p987) target = $region32
      $region31: #{discriminator_forward.5} parent=27 // pred_region
        %s990 = smul.u32 64, %s13
      $region32: #{discriminator_forward.5} parent=27 // pred_fallthru
        _
    $region28: #{discriminator_forward.5} parent=5 // pred_fallthru
      _
    %p991 = scmp.le.s32.totalorder 2, %s8
    // Predicated region
    $region33: #{discriminator_forward.5} parent=5 // pred_check
      %p992 = pneg %p991
    $region34: #{discriminator_forward.5} parent=5 // pred_check_branch
      %994 = sbr.rel (%p992) target = $region36
    $region35: #{discriminator_forward.5} parent=5 // pred_region
      %s995 = ssub.s32 %s8, 2
      // Predicated region
      $region37: #{discriminator_forward.5} parent=35 // pred_check
        %p996 = pneg %p84
      $region38: #{discriminator_forward.5} parent=35 // pred_check_branch
        %998 = sbr.rel (%p996) target = $region40
      $region39: #{discriminator_forward.5} parent=35 // pred_region
        %s999 = smul.u32 64, %s14
        %p1000 = scmp.lt.s32.totalorder %s999, 255
        %s1001 = scalar_select %p1000, %s999, 255
        %s1002 = smul.addr %s1001, 4
        %s1003 = scalar_lea.vmem %s2, %s1002
      $region40: #{discriminator_forward.5} parent=35 // pred_fallthru
        _
    $region36: #{discriminator_forward.5} parent=5 // pred_fallthru
      _
  $region6: #{discriminator_forward.5} parent=0 // loop_footer
    %s12 = sadd.s32 1, %s8
  $region7: #{discriminator_forward.5} parent=0 // loop_footer_branch
    %7 = sbr.rel target = $region3
  $region8: #{discriminator_forward.5} parent=0 // loop_exit
    _

// kernel: discriminator_forward.6
$region0: #{discriminator_forward.6}
  #allocation0 [shape = 'u32[]', space=smem, size = 0x4, offset = 0x4, fixed_abs, tag = 'smem constant byte address 0x4 - core index']
  #allocation1 [shape = 'u32[72,128]{1,0:T(1,128)}', space=vmem, size = 0x9000, scoped, tag = 'internal scratch']
  #allocation2 [shape = 'f32[512,128]{1,0:T(8,128)}', space=vmem, size = 0x40000, scoped, tag = 'scratch operand']
  %s0 = inlined_call_operand.vmem [shape: bf16[512,1024], index: 0, kind: input, shape index: {}]
  %s1 = inlined_call_operand.vmem [shape: bf16[1024,128], index: 1, kind: input, shape index: {}]
  %s2 = inlined_call_operand.vmem [shape: f32[1,128], index: 2, kind: input, shape index: {}]
  %s3 = inlined_call_operand.vmem [shape: f32[1,128], index: 3, kind: input, shape index: {}]
  %s4 = inlined_call_operand.vmem [shape: bf16[512,128], index: 4, kind: output, shape index: {}]
  %s5 = sld [smem:[#allocation0]]
  $region80: #{discriminator_forward.6} parent=0
    _
  %s7 = ssub.s32 1, %s5
  %s8 = scalar_select 0, %s7, %s5
  $region1: #{discriminator_forward.6} parent=0
    #allocation3 [shape = 'u8[1048576]{0}', space=vmem, size = 0x100000, scoped, tag = 'input window, operand 0']
    loop: start=0, step=1, limit=4
    $region2: #{discriminator_forward.6} parent=1 // loop_pre_header
      _
    $region3: #{discriminator_forward.6} parent=1 // loop_header
      %s10 = sphi 0, %s14
      %p11 = scmp.ge.s32.totalorder %s10, 4
      %s17 = sphi 0, %s29
      %s18 = sphi 0, %s25
      %s19 = sphi 0, %s17
      %s20 = sphi 0, %s18
      %s21 = sphi 0, %s19
      %s22 = sphi 0, %s20
      %s32 = sphi 0, %s34
      %s35 = sphi 0, %s32
      %s36 = sphi 0, %s35
      %s52 = sphi 0, %s36
      %s60 = sphi 0, %s62
      %s63 = sphi 0, %s60
      %s64 = sphi 0, %s63
      %s80 = sphi 0, %s64
      %s86 = sphi 0, %s88
      %s89 = sphi 0, %s86
      %s90 = sphi 0, %s89
      %s106 = sphi 0, %s90
      %s112 = sphi 0, %s114
      %s115 = sphi 0, %s112
      %s116 = sphi 0, %s115
      %s132 = sphi 0, %s116
      %s138 = sphi 0, %s140
      %s141 = sphi 0, %s138
      %s142 = sphi 0, %s141
      %s158 = sphi 0, %s142
    $region4: #{discriminator_forward.6} parent=1 // loop_header_branch
      %13 = sbr.rel (%p11) target = $region8
    $region5: #{discriminator_forward.6} parent=1 // loop_body
      %s15 = ssub.s32 %s10, 1
      %s16 = ssub.s32 %s10, 2
      %s23 = sadd.s32 1, %s18
      %p24 = scmp.ge.s32.totalorder %s23, 2
      %s25 = scalar_select %p24, 0, %s23
      %s26 = sadd.s32 1, %s17
      %s27 = scalar_select %p24, %s26, %s17
      %p28 = scmp.ge.s32.totalorder %s27, 1
      %s29 = scalar_select %p28, 0, %s27
      %s30 = ssub.s32 %s18, %s25
      %p31 = scmp.eq.s32.totalorder %s30, 0
      %s33 = sadd.s32 %s32, 1
      %s34 = scalar_select %p31, %s32, %s33
      %p37 = pneg %p31
      %p38 = scmp.eq.s32.totalorder %s10, 1
      %p39 = por %p37, %p38
      %p40 = scmp.ne.s32.totalorder %s32, %s35
      %p41 = scmp.eq.s32.totalorder %s10, 0
      %p42 = por %p40, %p41
      %p43 = scmp.ne.s32.totalorder %s32, %s35
      %p44 = scmp.eq.s32.totalorder %s15, 1
      %p45 = por %p43, %p44
      %p46 = scmp.ne.s32.totalorder %s35, %s36
      %p47 = scmp.eq.s32.totalorder %s15, 0
      %p48 = por %p46, %p47
      %p49 = scmp.ne.s32.totalorder %s35, %s36
      %p50 = scmp.eq.s32.totalorder %s16, 1
      %p51 = por %p49, %p50
      %p53 = scmp.ne.s32.totalorder %s36, %s52
      %p54 = scmp.eq.s32.totalorder %s16, 0
      %p55 = por %p53, %p54
      %s56 = ssub.s32 %s18, %s25
      %s57 = ssub.s32 %s17, %s29
      %s58 = sor.u32 %s56, %s57
      %p59 = scmp.eq.s32.totalorder %s58, 0
      %s61 = sadd.s32 %s60, 1
      %s62 = scalar_select %p59, %s60, %s61
      %p65 = pneg %p59
      %p66 = scmp.eq.s32.totalorder %s10, 1
      %p67 = por %p65, %p66
      %p68 = scmp.ne.s32.totalorder %s60, %s63
      %p69 = scmp.eq.s32.totalorder %s10, 0
      %p70 = por %p68, %p69
      %p71 = scmp.ne.s32.totalorder %s60, %s63
      %p72 = scmp.eq.s32.totalorder %s15, 1
      %p73 = por %p71, %p72
      %p74 = scmp.ne.s32.totalorder %s63, %s64
      %p75 = scmp.eq.s32.totalorder %s15, 0
      %p76 = por %p74, %p75
      %p77 = scmp.ne.s32.totalorder %s63, %s64
      %p78 = scmp.eq.s32.totalorder %s16, 1
      %p79 = por %p77, %p78
      %p81 = scmp.ne.s32.totalorder %s64, %s80
      %p82 = scmp.eq.s32.totalorder %s16, 0
      %p83 = por %p81, %p82
      %s84 = ssub.s32 %s17, %s29
      %p85 = scmp.eq.s32.totalorder %s84, 0
      %s87 = sadd.s32 %s86, 1
      %s88 = scalar_select %p85, %s86, %s87
      %p91 = pneg %p85
      %p92 = scmp.eq.s32.totalorder %s10, 1
      %p93 = por %p91, %p92
      %p94 = scmp.ne.s32.totalorder %s86, %s89
      %p95 = scmp.eq.s32.totalorder %s10, 0
      %p96 = por %p94, %p95
      %p97 = scmp.ne.s32.totalorder %s86, %s89
      %p98 = scmp.eq.s32.totalorder %s15, 1
      %p99 = por %p97, %p98
      %p100 = scmp.ne.s32.totalorder %s89, %s90
      %p101 = scmp.eq.s32.totalorder %s15, 0
      %p102 = por %p100, %p101
      %p103 = scmp.ne.s32.totalorder %s89, %s90
      %p104 = scmp.eq.s32.totalorder %s16, 1
      %p105 = por %p103, %p104
      %p107 = scmp.ne.s32.totalorder %s90, %s106
      %p108 = scmp.eq.s32.totalorder %s16, 0
      %p109 = por %p107, %p108
      %s110 = ssub.s32 %s17, %s29
      %p111 = scmp.eq.s32.totalorder %s110, 0
      %s113 = sadd.s32 %s112, 1
      %s114 = scalar_select %p111, %s112, %s113
      %p117 = pneg %p111
      %p118 = scmp.eq.s32.totalorder %s10, 1
      %p119 = por %p117, %p118
      %p120 = scmp.ne.s32.totalorder %s112, %s115
      %p121 = scmp.eq.s32.totalorder %s10, 0
      %p122 = por %p120, %p121
      %p123 = scmp.ne.s32.totalorder %s112, %s115
      %p124 = scmp.eq.s32.totalorder %s15, 1
      %p125 = por %p123, %p124
      %p126 = scmp.ne.s32.totalorder %s115, %s116
      %p127 = scmp.eq.s32.totalorder %s15, 0
      %p128 = por %p126, %p127
      %p129 = scmp.ne.s32.totalorder %s115, %s116
      %p130 = scmp.eq.s32.totalorder %s16, 1
      %p131 = por %p129, %p130
      %p133 = scmp.ne.s32.totalorder %s116, %s132
      %p134 = scmp.eq.s32.totalorder %s16, 0
      %p135 = por %p133, %p134
      %s136 = ssub.s32 %s17, %s29
      %p137 = scmp.eq.s32.totalorder %s136, 0
      %s139 = sadd.s32 %s138, 1
      %s140 = scalar_select %p137, %s138, %s139
      %p143 = pneg %p137
      %p144 = scmp.eq.s32.totalorder %s10, 1
      %p145 = por %p143, %p144
      %p146 = scmp.ne.s32.totalorder %s138, %s141
      %p147 = scmp.eq.s32.totalorder %s10, 0
      %p148 = por %p146, %p147
      %p149 = scmp.ne.s32.totalorder %s138, %s141
      %p150 = scmp.eq.s32.totalorder %s15, 1
      %p151 = por %p149, %p150
      %p152 = scmp.ne.s32.totalorder %s141, %s142
      %p153 = scmp.eq.s32.totalorder %s15, 0
      %p154 = por %p152, %p153
      %p155 = scmp.ne.s32.totalorder %s141, %s142
      %p156 = scmp.eq.s32.totalorder %s16, 1
      %p157 = por %p155, %p156
      %p159 = scmp.ne.s32.totalorder %s142, %s158
      %p160 = scmp.eq.s32.totalorder %s16, 0
      %p161 = por %p159, %p160
      %p162 = scmp.le.s32.totalorder 1, %s10
      %p163 = scmp.lt.s32.totalorder %s10, 3
      %p164 = pnand %p162, %p163
      %p165 = pneg %p164
      // Predicated region
      $region9: #{discriminator_forward.6} parent=5 // pred_check
        _
      $region10: #{discriminator_forward.6} parent=5 // pred_check_branch
        %167 = sbr.rel (%p164) target = $region12
      $region11: #{discriminator_forward.6} parent=5 // pred_region
        %s168 = ssub.s32 %s10, 1
        // Predicated region
        $region13: #{discriminator_forward.6} parent=11 // pred_check
          %p169 = pneg %p102
        $region14: #{discriminator_forward.6} parent=11 // pred_check_branch
          %171 = sbr.rel (%p169) target = $region16
        $region15: #{discriminator_forward.6} parent=11 // pred_region
          %p172 = scmp.lt.s32.totalorder %s19, 0
          %s173 = scalar_select %p172, %s19, 0
          %s174 = scalar_lea.vmem %s2, %s173
        $region16: #{discriminator_forward.6} parent=11 // pred_fallthru
          _
        // Predicated region
        $region17: #{discriminator_forward.6} parent=11 // pred_check
          %p175 = pneg %p128
        $region18: #{discriminator_forward.6} parent=11 // pred_check_branch
          %177 = sbr.rel (%p175) target = $region20
        $region19: #{discriminator_forward.6} parent=11 // pred_region
          %p178 = scmp.lt.s32.totalorder %s19, 0
          %s179 = scalar_select %p178, %s19, 0
          %s180 = scalar_lea.vmem %s3, %s179
        $region20: #{discriminator_forward.6} parent=11 // pred_fallthru
          _
      $region12: #{discriminator_forward.6} parent=5 // pred_fallthru
        _
      %p181 = scmp.lt.s32.totalorder %s10, 2
      // Predicated region
      $region21: #{discriminator_forward.6} parent=5 // pred_check
        %p182 = pneg %p181
      $region22: #{discriminator_forward.6} parent=5 // pred_check_branch
        %184 = sbr.rel (%p182) target = $region24
      $region23: #{discriminator_forward.6} parent=5 // pred_region
        // Predicated region
        $region25: #{discriminator_forward.6} parent=23 // pred_check
          %p185 = pneg %p42
        $region26: #{discriminator_forward.6} parent=23 // pred_check_branch
          %187 = sbr.rel (%p185) target = $region28
        $region27: #{discriminator_forward.6} parent=23 // pred_region
          %s188 = sand.u32 %s32, 1
          %s189 = sand.u32 %s32, 1
          %s190 = smul.addr %s189, 1024
          %s191 = scalar_lea.vmem [#allocation3], %s190
          %s192 = smul.u32 4, %s18
          %s193 = smul.addr %s192, 4
          %s194 = scalar_lea.vmem %s0, %s193
          // Predicated region
          $region29: #{discriminator_forward.6} parent=27 // pred_check
            _
          $region30: #{discriminator_forward.6} parent=27 // pred_check_branch
            %196 = sbr.rel (0) target = $region32
          $region31: #{discriminator_forward.6} parent=27 // pred_region
            // Predicated region
            $region33: #{discriminator_forward.6} parent=31 // pred_check
              _
            $region34: #{discriminator_forward.6} parent=31 // pred_check_branch
              %198 = sbr.rel (0) target = $region36
            $region35: #{discriminator_forward.6} parent=31 // pred_region
              loop: start=0, step=1, limit=1
              $region37: #{discriminator_forward.6} parent=35 // loop_pre_header
                _
              $region38: #{discriminator_forward.6} parent=35 // loop_header
                %s200 = sphi 0, %s204
                %p201 = scmp.ge.s32.totalorder %s200, 1
                %s205 = sphi %s194, %s194
                %s206 = sphi %s191, %s191
              $region39: #{discriminator_forward.6} parent=35 // loop_header_branch
                %203 = sbr.rel (%p201) target = $region43
              $region40: #{discriminator_forward.6} parent=35 // loop_body
                %v207 = vld [vmem:[%s205] sm:$0xff]
                %208 = vst [vmem:[%s206] sm:$0xff] %v207
                %v209 = vld [vmem:[%s205 + $0x8] sm:$0xff]
                %210 = vst [vmem:[%s206 + $0x8] sm:$0xff] %v209
                %v211 = vld [vmem:[%s205 + $0x20] sm:$0xff]
                %212 = vst [vmem:[%s206 + $0x10] sm:$0xff] %v211
                %v213 = vld [vmem:[%s205 + $0x28] sm:$0xff]
                %214 = vst [vmem:[%s206 + $0x18] sm:$0xff] %v213
                %v215 = vld [vmem:[%s205 + $0x40] sm:$0xff]
                %216 = vst [vmem:[%s206 + $0x20] sm:$0xff] %v215
                %v217 = vld [vmem:[%s205 + $0x48] sm:$0xff]
                %218 = vst [vmem:[%s206 + $0x28] sm:$0xff] %v217
                %v219 = vld [vmem:[%s205 + $0x60] sm:$0xff]
                %220 = vst [vmem:[%s206 + $0x30] sm:$0xff] %v219
                %v221 = vld [vmem:[%s205 + $0x68] sm:$0xff]
                %222 = vst [vmem:[%s206 + $0x38] sm:$0xff] %v221
                %v223 = vld [vmem:[%s205 + $0x80] sm:$0xff]
                %224 = vst [vmem:[%s206 + $0x40] sm:$0xff] %v223
                %v225 = vld [vmem:[%s205 + $0x88] sm:$0xff]
                %226 = vst [vmem:[%s206 + $0x48] sm:$0xff] %v225
                %v227 = vld [vmem:[%s205 + $0xa0] sm:$0xff]
                %228 = vst [vmem:[%s206 + $0x50] sm:$0xff] %v227
                %v229 = vld [vmem:[%s205 + $0xa8] sm:$0xff]
                %230 = vst [vmem:[%s206 + $0x58] sm:$0xff] %v229
                %v231 = vld [vmem:[%s205 + $0xc0] sm:$0xff]
                %232 = vst [vmem:[%s206 + $0x60] sm:$0xff] %v231
                %v233 = vld [vmem:[%s205 + $0xc8] sm:$0xff]
                %234 = vst [vmem:[%s206 + $0x68] sm:$0xff] %v233
                %v235 = vld [vmem:[%s205 + $0xe0] sm:$0xff]
                %236 = vst [vmem:[%s206 + $0x70] sm:$0xff] %v235
                %v237 = vld [vmem:[%s205 + $0xe8] sm:$0xff]
                %238 = vst [vmem:[%s206 + $0x78] sm:$0xff] %v237
                %v239 = vld [vmem:[%s205 + $0x100] sm:$0xff]
                %240 = vst [vmem:[%s206 + $0x80] sm:$0xff] %v239
                %v241 = vld [vmem:[%s205 + $0x108] sm:$0xff]
                %242 = vst [vmem:[%s206 + $0x88] sm:$0xff] %v241
                %v243 = vld [vmem:[%s205 + $0x120] sm:$0xff]
                %244 = vst [vmem:[%s206 + $0x90] sm:$0xff] %v243
                %v245 = vld [vmem:[%s205 + $0x128] sm:$0xff]
                %246 = vst [vmem:[%s206 + $0x98] sm:$0xff] %v245
                %v247 = vld [vmem:[%s205 + $0x140] sm:$0xff]
                %248 = vst [vmem:[%s206 + $0xa0] sm:$0xff] %v247
                %v249 = vld [vmem:[%s205 + $0x148] sm:$0xff]
                %250 = vst [vmem:[%s206 + $0xa8] sm:$0xff] %v249
                %v251 = vld [vmem:[%s205 + $0x160] sm:$0xff]
                %252 = vst [vmem:[%s206 + $0xb0] sm:$0xff] %v251
                %v253 = vld [vmem:[%s205 + $0x168] sm:$0xff]
                %254 = vst [vmem:[%s206 + $0xb8] sm:$0xff] %v253
                %v255 = vld [vmem:[%s205 + $0x180] sm:$0xff]
                %256 = vst [vmem:[%s206 + $0xc0] sm:$0xff] %v255
                %v257 = vld [vmem:[%s205 + $0x188] sm:$0xff]
                %258 = vst [vmem:[%s206 + $0xc8] sm:$0xff] %v257
                %v259 = vld [vmem:[%s205 + $0x1a0] sm:$0xff]
                %260 = vst [vmem:[%s206 + $0xd0] sm:$0xff] %v259
                %v261 = vld [vmem:[%s205 + $0x1a8] sm:$0xff]
                %262 = vst [vmem:[%s206 + $0xd8] sm:$0xff] %v261
                %v263 = vld [vmem:[%s205 + $0x1c0] sm:$0xff]
                %264 = vst [vmem:[%s206 + $0xe0] sm:$0xff] %v263
                %v265 = vld [vmem:[%s205 + $0x1c8] sm:$0xff]
                %266 = vst [vmem:[%s206 + $0xe8] sm:$0xff] %v265
                %v267 = vld [vmem:[%s205 + $0x1e0] sm:$0xff]
                %268 = vst [vmem:[%s206 + $0xf0] sm:$0xff] %v267
                %v269 = vld [vmem:[%s205 + $0x1e8] sm:$0xff]
                %270 = vst [vmem:[%s206 + $0xf8] sm:$0xff] %v269
                %v271 = vld [vmem:[%s205 + $0x200] sm:$0xff]
                %272 = vst [vmem:[%s206 + $0x100] sm:$0xff] %v271
                %v273 = vld [vmem:[%s205 + $0x208] sm:$0xff]
                %274 = vst [vmem:[%s206 + $0x108] sm:$0xff] %v273
                %v275 = vld [vmem:[%s205 + $0x220] sm:$0xff]
                %276 = vst [vmem:[%s206 + $0x110] sm:$0xff] %v275
                %v277 = vld [vmem:[%s205 + $0x228] sm:$0xff]
                %278 = vst [vmem:[%s206 + $0x118] sm:$0xff] %v277
                %v279 = vld [vmem:[%s205 + $0x240] sm:$0xff]
                %280 = vst [vmem:[%s206 + $0x120] sm:$0xff] %v279
                %v281 = vld [vmem:[%s205 + $0x248] sm:$0xff]
                %282 = vst [vmem:[%s206 + $0x128] sm:$0xff] %v281
                %v283 = vld [vmem:[%s205 + $0x260] sm:$0xff]
                %284 = vst [vmem:[%s206 + $0x130] sm:$0xff] %v283
                %v285 = vld [vmem:[%s205 + $0x268] sm:$0xff]
                %286 = vst [vmem:[%s206 + $0x138] sm:$0xff] %v285
                %v287 = vld [vmem:[%s205 + $0x280] sm:$0xff]
                %288 = vst [vmem:[%s206 + $0x140] sm:$0xff] %v287
                %v289 = vld [vmem:[%s205 + $0x288] sm:$0xff]
                %290 = vst [vmem:[%s206 + $0x148] sm:$0xff] %v289
                %v291 = vld [vmem:[%s205 + $0x2a0] sm:$0xff]
                %292 = vst [vmem:[%s206 + $0x150] sm:$0xff] %v291
                %v293 = vld [vmem:[%s205 + $0x2a8] sm:$0xff]
                %294 = vst [vmem:[%s206 + $0x158] sm:$0xff] %v293
                %v295 = vld [vmem:[%s205 + $0x2c0] sm:$0xff]
                %296 = vst [vmem:[%s206 + $0x160] sm:$0xff] %v295
                %v297 = vld [vmem:[%s205 + $0x2c8] sm:$0xff]
                %298 = vst [vmem:[%s206 + $0x168] sm:$0xff] %v297
                %v299 = vld [vmem:[%s205 + $0x2e0] sm:$0xff]
                %300 = vst [vmem:[%s206 + $0x170] sm:$0xff] %v299
                %v301 = vld [vmem:[%s205 + $0x2e8] sm:$0xff]
                %302 = vst [vmem:[%s206 + $0x178] sm:$0xff] %v301
                %v303 = vld [vmem:[%s205 + $0x300] sm:$0xff]
                %304 = vst [vmem:[%s206 + $0x180] sm:$0xff] %v303
                %v305 = vld [vmem:[%s205 + $0x308] sm:$0xff]
                %306 = vst [vmem:[%s206 + $0x188] sm:$0xff] %v305
                %v307 = vld [vmem:[%s205 + $0x320] sm:$0xff]
                %308 = vst [vmem:[%s206 + $0x190] sm:$0xff] %v307
                %v309 = vld [vmem:[%s205 + $0x328] sm:$0xff]
                %310 = vst [vmem:[%s206 + $0x198] sm:$0xff] %v309
                %v311 = vld [vmem:[%s205 + $0x340] sm:$0xff]
                %312 = vst [vmem:[%s206 + $0x1a0] sm:$0xff] %v311
                %v313 = vld [vmem:[%s205 + $0x348] sm:$0xff]
                %314 = vst [vmem:[%s206 + $0x1a8] sm:$0xff] %v313
                %v315 = vld [vmem:[%s205 + $0x360] sm:$0xff]
                %316 = vst [vmem:[%s206 + $0x1b0] sm:$0xff] %v315
                %v317 = vld [vmem:[%s205 + $0x368] sm:$0xff]
                %318 = vst [vmem:[%s206 + $0x1b8] sm:$0xff] %v317
                %v319 = vld [vmem:[%s205 + $0x380] sm:$0xff]
                %320 = vst [vmem:[%s206 + $0x1c0] sm:$0xff] %v319
                %v321 = vld [vmem:[%s205 + $0x388] sm:$0xff]
                %322 = vst [vmem:[%s206 + $0x1c8] sm:$0xff] %v321
                %v323 = vld [vmem:[%s205 + $0x3a0] sm:$0xff]
                %324 = vst [vmem:[%s206 + $0x1d0] sm:$0xff] %v323
                %v325 = vld [vmem:[%s205 + $0x3a8] sm:$0xff]
                %326 = vst [vmem:[%s206 + $0x1d8] sm:$0xff] %v325
                %v327 = vld [vmem:[%s205 + $0x3c0] sm:$0xff]
                %328 = vst [vmem:[%s206 + $0x1e0] sm:$0xff] %v327
                %v329 = vld [vmem:[%s205 + $0x3c8] sm:$0xff]
                %330 = vst [vmem:[%s206 + $0x1e8] sm:$0xff] %v329
                %v331 = vld [vmem:[%s205 + $0x3e0] sm:$0xff]
                %332 = vst [vmem:[%s206 + $0x1f0] sm:$0xff] %v331
                %v333 = vld [vmem:[%s205 + $0x3e8] sm:$0xff]
                %334 = vst [vmem:[%s206 + $0x1f8] sm:$0xff] %v333
                %v335 = vld [vmem:[%s205 + $0x400] sm:$0xff]
                %336 = vst [vmem:[%s206 + $0x200] sm:$0xff] %v335
                %v337 = vld [vmem:[%s205 + $0x408] sm:$0xff]
                %338 = vst [vmem:[%s206 + $0x208] sm:$0xff] %v337
                %v339 = vld [vmem:[%s205 + $0x420] sm:$0xff]
                %340 = vst [vmem:[%s206 + $0x210] sm:$0xff] %v339
                %v341 = vld [vmem:[%s205 + $0x428] sm:$0xff]
                %342 = vst [vmem:[%s206 + $0x218] sm:$0xff] %v341
                %v343 = vld [vmem:[%s205 + $0x440] sm:$0xff]
                %344 = vst [vmem:[%s206 + $0x220] sm:$0xff] %v343
                %v345 = vld [vmem:[%s205 + $0x448] sm:$0xff]
                %346 = vst [vmem:[%s206 + $0x228] sm:$0xff] %v345
                %v347 = vld [vmem:[%s205 + $0x460] sm:$0xff]
                %348 = vst [vmem:[%s206 + $0x230] sm:$0xff] %v347
                %v349 = vld [vmem:[%s205 + $0x468] sm:$0xff]
                %350 = vst [vmem:[%s206 + $0x238] sm:$0xff] %v349
                %v351 = vld [vmem:[%s205 + $0x480] sm:$0xff]
                %352 = vst [vmem:[%s206 + $0x240] sm:$0xff] %v351
                %v353 = vld [vmem:[%s205 + $0x488] sm:$0xff]
                %354 = vst [vmem:[%s206 + $0x248] sm:$0xff] %v353
                %v355 = vld [vmem:[%s205 + $0x4a0] sm:$0xff]
                %356 = vst [vmem:[%s206 + $0x250] sm:$0xff] %v355
                %v357 = vld [vmem:[%s205 + $0x4a8] sm:$0xff]
                %358 = vst [vmem:[%s206 + $0x258] sm:$0xff] %v357
                %v359 = vld [vmem:[%s205 + $0x4c0] sm:$0xff]
                %360 = vst [vmem:[%s206 + $0x260] sm:$0xff] %v359
                %v361 = vld [vmem:[%s205 + $0x4c8] sm:$0xff]
                %362 = vst [vmem:[%s206 + $0x268] sm:$0xff] %v361
                %v363 = vld [vmem:[%s205 + $0x4e0] sm:$0xff]
                %364 = vst [vmem:[%s206 + $0x270] sm:$0xff] %v363
                %v365 = vld [vmem:[%s205 + $0x4e8] sm:$0xff]
                %366 = vst [vmem:[%s206 + $0x278] sm:$0xff] %v365
                %v367 = vld [vmem:[%s205 + $0x500] sm:$0xff]
                %368 = vst [vmem:[%s206 + $0x280] sm:$0xff] %v367
                %v369 = vld [vmem:[%s205 + $0x508] sm:$0xff]
                %370 = vst [vmem:[%s206 + $0x288] sm:$0xff] %v369
                %v371 = vld [vmem:[%s205 + $0x520] sm:$0xff]
                %372 = vst [vmem:[%s206 + $0x290] sm:$0xff] %v371
                %v373 = vld [vmem:[%s205 + $0x528] sm:$0xff]
                %374 = vst [vmem:[%s206 + $0x298] sm:$0xff] %v373
                %v375 = vld [vmem:[%s205 + $0x540] sm:$0xff]
                %376 = vst [vmem:[%s206 + $0x2a0] sm:$0xff] %v375
                %v377 = vld [vmem:[%s205 + $0x548] sm:$0xff]
                %378 = vst [vmem:[%s206 + $0x2a8] sm:$0xff] %v377
                %v379 = vld [vmem:[%s205 + $0x560] sm:$0xff]
                %380 = vst [vmem:[%s206 + $0x2b0] sm:$0xff] %v379
                %v381 = vld [vmem:[%s205 + $0x568] sm:$0xff]
                %382 = vst [vmem:[%s206 + $0x2b8] sm:$0xff] %v381
                %v383 = vld [vmem:[%s205 + $0x580] sm:$0xff]
                %384 = vst [vmem:[%s206 + $0x2c0] sm:$0xff] %v383
                %v385 = vld [vmem:[%s205 + $0x588] sm:$0xff]
                %386 = vst [vmem:[%s206 + $0x2c8] sm:$0xff] %v385
                %v387 = vld [vmem:[%s205 + $0x5a0] sm:$0xff]
                %388 = vst [vmem:[%s206 + $0x2d0] sm:$0xff] %v387
                %v389 = vld [vmem:[%s205 + $0x5a8] sm:$0xff]
                %390 = vst [vmem:[%s206 + $0x2d8] sm:$0xff] %v389
                %v391 = vld [vmem:[%s205 + $0x5c0] sm:$0xff]
                %392 = vst [vmem:[%s206 + $0x2e0] sm:$0xff] %v391
                %v393 = vld [vmem:[%s205 + $0x5c8] sm:$0xff]
                %394 = vst [vmem:[%s206 + $0x2e8] sm:$0xff] %v393
                %v395 = vld [vmem:[%s205 + $0x5e0] sm:$0xff]
                %396 = vst [vmem:[%s206 + $0x2f0] sm:$0xff] %v395
                %v397 = vld [vmem:[%s205 + $0x5e8] sm:$0xff]
                %398 = vst [vmem:[%s206 + $0x2f8] sm:$0xff] %v397
                %v399 = vld [vmem:[%s205 + $0x600] sm:$0xff]
                %400 = vst [vmem:[%s206 + $0x300] sm:$0xff] %v399
                %v401 = vld [vmem:[%s205 + $0x608] sm:$0xff]
                %402 = vst [vmem:[%s206 + $0x308] sm:$0xff] %v401
                %v403 = vld [vmem:[%s205 + $0x620] sm:$0xff]
                %404 = vst [vmem:[%s206 + $0x310] sm:$0xff] %v403
                %v405 = vld [vmem:[%s205 + $0x628] sm:$0xff]
                %406 = vst [vmem:[%s206 + $0x318] sm:$0xff] %v405
                %v407 = vld [vmem:[%s205 + $0x640] sm:$0xff]
                %408 = vst [vmem:[%s206 + $0x320] sm:$0xff] %v407
                %v409 = vld [vmem:[%s205 + $0x648] sm:$0xff]
                %410 = vst [vmem:[%s206 + $0x328] sm:$0xff] %v409
                %v411 = vld [vmem:[%s205 + $0x660] sm:$0xff]
                %412 = vst [vmem:[%s206 + $0x330] sm:$0xff] %v411
                %v413 = vld [vmem:[%s205 + $0x668] sm:$0xff]
                %414 = vst [vmem:[%s206 + $0x338] sm:$0xff] %v413
                %v415 = vld [vmem:[%s205 + $0x680] sm:$0xff]
                %416 = vst [vmem:[%s206 + $0x340] sm:$0xff] %v415
                %v417 = vld [vmem:[%s205 + $0x688] sm:$0xff]
                %418 = vst [vmem:[%s206 + $0x348] sm:$0xff] %v417
                %v419 = vld [vmem:[%s205 + $0x6a0] sm:$0xff]
                %420 = vst [vmem:[%s206 + $0x350] sm:$0xff] %v419
                %v421 = vld [vmem:[%s205 + $0x6a8] sm:$0xff]
                %422 = vst [vmem:[%s206 + $0x358] sm:$0xff] %v421
                %v423 = vld [vmem:[%s205 + $0x6c0] sm:$0xff]
                %424 = vst [vmem:[%s206 + $0x360] sm:$0xff] %v423
                %v425 = vld [vmem:[%s205 + $0x6c8] sm:$0xff]
                %426 = vst [vmem:[%s206 + $0x368] sm:$0xff] %v425
                %v427 = vld [vmem:[%s205 + $0x6e0] sm:$0xff]
                %428 = vst [vmem:[%s206 + $0x370] sm:$0xff] %v427
                %v429 = vld [vmem:[%s205 + $0x6e8] sm:$0xff]
                %430 = vst [vmem:[%s206 + $0x378] sm:$0xff] %v429
                %v431 = vld [vmem:[%s205 + $0x700] sm:$0xff]
                %432 = vst [vmem:[%s206 + $0x380] sm:$0xff] %v431
                %v433 = vld [vmem:[%s205 + $0x708] sm:$0xff]
                %434 = vst [vmem:[%s206 + $0x388] sm:$0xff] %v433
                %v435 = vld [vmem:[%s205 + $0x720] sm:$0xff]
                %436 = vst [vmem:[%s206 + $0x390] sm:$0xff] %v435
                %v437 = vld [vmem:[%s205 + $0x728] sm:$0xff]
                %438 = vst [vmem:[%s206 + $0x398] sm:$0xff] %v437
                %v439 = vld [vmem:[%s205 + $0x740] sm:$0xff]
                %440 = vst [vmem:[%s206 + $0x3a0] sm:$0xff] %v439
                %v441 = vld [vmem:[%s205 + $0x748] sm:$0xff]
                %442 = vst [vmem:[%s206 + $0x3a8] sm:$0xff] %v441
                %v443 = vld [vmem:[%s205 + $0x760] sm:$0xff]
                %444 = vst [vmem:[%s206 + $0x3b0] sm:$0xff] %v443
                %v445 = vld [vmem:[%s205 + $0x768] sm:$0xff]
                %446 = vst [vmem:[%s206 + $0x3b8] sm:$0xff] %v445
                %v447 = vld [vmem:[%s205 + $0x780] sm:$0xff]
                %448 = vst [vmem:[%s206 + $0x3c0] sm:$0xff] %v447
                %v449 = vld [vmem:[%s205 + $0x788] sm:$0xff]
                %450 = vst [vmem:[%s206 + $0x3c8] sm:$0xff] %v449
                %v451 = vld [vmem:[%s205 + $0x7a0] sm:$0xff]
                %452 = vst [vmem:[%s206 + $0x3d0] sm:$0xff] %v451
                %v453 = vld [vmem:[%s205 + $0x7a8] sm:$0xff]
                %454 = vst [vmem:[%s206 + $0x3d8] sm:$0xff] %v453
                %v455 = vld [vmem:[%s205 + $0x7c0] sm:$0xff]
                %456 = vst [vmem:[%s206 + $0x3e0] sm:$0xff] %v455
                %v457 = vld [vmem:[%s205 + $0x7c8] sm:$0xff]
                %458 = vst [vmem:[%s206 + $0x3e8] sm:$0xff] %v457
                %v459 = vld [vmem:[%s205 + $0x7e0] sm:$0xff]
                %460 = vst [vmem:[%s206 + $0x3f0] sm:$0xff] %v459
                %v461 = vld [vmem:[%s205 + $0x7e8] sm:$0xff]
                %462 = vst [vmem:[%s206 + $0x3f8] sm:$0xff] %v461
              $region41: #{discriminator_forward.6} parent=35 // loop_footer
                %s204 = sadd.s32 1, %s200
              $region42: #{discriminator_forward.6} parent=35 // loop_footer_branch
                %199 = sbr.rel target = $region38
              $region43: #{discriminator_forward.6} parent=35 // loop_exit
                _
            $region36: #{discriminator_forward.6} parent=31 // pred_fallthru
              _
            // Predicated region
            $region44: #{discriminator_forward.6} parent=31 // pred_check
              _
            $region45: #{discriminator_forward.6} parent=31 // pred_check_branch
              %464 = sbr.rel target = $region47
            $region46: #{discriminator_forward.6} parent=31 // pred_region
              _
            $region47: #{discriminator_forward.6} parent=31 // pred_fallthru
              _
          $region32: #{discriminator_forward.6} parent=27 // pred_fallthru
            _
          %465 = vnop
        $region28: #{discriminator_forward.6} parent=23 // pred_fallthru
          _
        // Predicated region
        $region48: #{discriminator_forward.6} parent=23 // pred_check
          %p466 = pneg %p70
        $region49: #{discriminator_forward.6} parent=23 // pred_check_branch
          %468 = sbr.rel (%p466) target = $region51
        $region50: #{discriminator_forward.6} parent=23 // pred_region
          %s469 = smul.u32 64, %s18
          %p470 = scmp.lt.s32.totalorder %s469, 127
          %s471 = scalar_select %p470, %s469, 127
          %p472 = scmp.lt.s32.totalorder %s17, 0
          %s473 = scalar_select %p472, %s17, 0
          %s474 = sadd.s32 %s473, %s471
          %s475 = smul.addr %s474, 4
          %s476 = scalar_lea.vmem %s1, %s475
          %s477 = smul.u32 64, %s18
        $region51: #{discriminator_forward.6} parent=23 // pred_fallthru
          _
      $region24: #{discriminator_forward.6} parent=5 // pred_fallthru
        _
      %p478 = scmp.le.s32.totalorder 1, %s10
      %p479 = scmp.lt.s32.totalorder %s10, 3
      %p480 = pnand %p478, %p479
      %p481 = pneg %p480
      // Predicated region
      $region52: #{discriminator_forward.6} parent=5 // pred_check
        _
      $region53: #{discriminator_forward.6} parent=5 // pred_check_branch
        %483 = sbr.rel (%p480) target = $region55
      $region54: #{discriminator_forward.6} parent=5 // pred_region
        %s484 = ssub.s32 %s10, 1
        %s485 = sand.u32 %s35, 1
        %s486 = sand.u32 %s35, 1
        %s487 = smul.addr %s486, 1024
        %s488 = scalar_lea.vmem [#allocation3], %s487
        // Predicated region
        $region56: #{discriminator_forward.6} parent=54 // pred_check
          %p489 = pneg %p48
        $region57: #{discriminator_forward.6} parent=54 // pred_check_branch
          %491 = sbr.rel (%p489) target = $region59
        $region58: #{discriminator_forward.6} parent=54 // pred_region
          _
        $region59: #{discriminator_forward.6} parent=54 // pred_fallthru
          _
        %s492 = sand.u32 %s35, 1
        %s493 = sand.u32 %s35, 1
        %s494 = smul.addr %s493, 1024
        %s495 = scalar_lea.vmem [#allocation3], %s494
        %p496 = pneg %p48
        %p497 = pneg %p45
        %s498 = smul.u32 64, %s20
        %p499 = scmp.lt.s32.totalorder %s498, 127
        %s500 = scalar_select %p499, %s498, 127
        %p501 = scmp.lt.s32.totalorder %s19, 0
        %s502 = scalar_select %p501, %s19, 0
        %s503 = sadd.s32 %s502, %s500
        %s504 = smul.addr %s503, 4
        %s505 = scalar_lea.vmem %s1, %s504
        %p506 = pneg %p76
        %p507 = pneg %p73
        %p508 = scmp.lt.s32.totalorder %s19, 0
        %s509 = scalar_select %p508, %s19, 0
        %s510 = scalar_lea.vmem %s2, %s509
        %p511 = pneg %p102
        %p512 = pneg %p99
        %p513 = scmp.lt.s32.totalorder %s19, 0
        %s514 = scalar_select %p513, %s19, 0
        %s515 = scalar_lea.vmem %s3, %s514
        %p516 = pneg %p128
        %p517 = pneg %p125
        %p518 = pneg %p154
        %p519 = pneg %p151
        %p520 = scmp.lt.s32.totalorder %s19, 0
        %s521 = scalar_select %p520, %s19, 0
        %s522 = smul.addr %s521, 4
        %s523 = scalar_lea.vmem %s4, %s522
        %s524 = smul.u32 4, %s20
        %s525 = smul.u32 64, %s20
        %p526 = scmp.lt.s32.totalorder %s525, 127
        %s527 = scalar_select %p526, %s525, 127
        %p528 = scmp.lt.s32.totalorder %s19, 0
        %s529 = scalar_select %p528, %s19, 0
        %s530 = sadd.s32 %s529, %s527
        %s531 = smul.addr %s530, 4
        %s532 = scalar_lea.vmem %s1, %s531
        %s533 = smul.u32 64, %s20
        %p534 = scmp.lt.s32.totalorder %s19, 0
        %s535 = scalar_select %p534, %s19, 0
        %s536 = scalar_lea.vmem %s2, %s535
        %p537 = scmp.lt.s32.totalorder %s19, 0
        %s538 = scalar_select %p537, %s19, 0
        %s539 = scalar_lea.vmem %s3, %s538
        %p540 = scmp.lt.s32.totalorder %s19, 0
        %s541 = scalar_select %p540, %s19, 0
        %s542 = smul.addr %s541, 4
        %s543 = scalar_lea.vmem %s4, %s542
        %p544 = scmp.eq.s32.totalorder %s20, 0
        // Predicated region
        $region60: #{discriminator_forward.6} parent=54 // pred_check
          %p545 = pneg %p544
        $region61: #{discriminator_forward.6} parent=54 // pred_check_branch
          %547 = sbr.rel (%p545) target = $region63
        $region62: #{discriminator_forward.6} parent=54 // pred_region
          %548 = vst [vmem:[#allocation2] sm:$0xff] 0.0
          %549 = vst [vmem:[#allocation2 + $0x8] sm:$0xff] 0.0
          %550 = vst [vmem:[#allocation2 + $0x10] sm:$0xff] 0.0
          %551 = vst [vmem:[#allocation2 + $0x18] sm:$0xff] 0.0
          %552 = vst [vmem:[#allocation2 + $0x20] sm:$0xff] 0.0
          %553 = vst [vmem:[#allocation2 + $0x28] sm:$0xff] 0.0
          %554 = vst [vmem:[#allocation2 + $0x30] sm:$0xff] 0.0
          %555 = vst [vmem:[#allocation2 + $0x38] sm:$0xff] 0.0
          %556 = vst [vmem:[#allocation2 + $0x40] sm:$0xff] 0.0
          %557 = vst [vmem:[#allocation2 + $0x48] sm:$0xff] 0.0
          %558 = vst [vmem:[#allocation2 + $0x50] sm:$0xff] 0.0
          %559 = vst [vmem:[#allocation2 + $0x58] sm:$0xff] 0.0
          %560 = vst [vmem:[#allocation2 + $0x60] sm:$0xff] 0.0
          %561 = vst [vmem:[#allocation2 + $0x68] sm:$0xff] 0.0
          %562 = vst [vmem:[#allocation2 + $0x70] sm:$0xff] 0.0
          %563 = vst [vmem:[#allocation2 + $0x78] sm:$0xff] 0.0
          %564 = vst [vmem:[#allocation2 + $0x80] sm:$0xff] 0.0
          %565 = vst [vmem:[#allocation2 + $0x88] sm:$0xff] 0.0
          %566 = vst [vmem:[#allocation2 + $0x90] sm:$0xff] 0.0
          %567 = vst [vmem:[#allocation2 + $0x98] sm:$0xff] 0.0
          %568 = vst [vmem:[#allocation2 + $0xa0] sm:$0xff] 0.0
          %569 = vst [vmem:[#allocation2 + $0xa8] sm:$0xff] 0.0
          %570 = vst [vmem:[#allocation2 + $0xb0] sm:$0xff] 0.0
          %571 = vst [vmem:[#allocation2 + $0xb8] sm:$0xff] 0.0
          %572 = vst [vmem:[#allocation2 + $0xc0] sm:$0xff] 0.0
          %573 = vst [vmem:[#allocation2 + $0xc8] sm:$0xff] 0.0
          %574 = vst [vmem:[#allocation2 + $0xd0] sm:$0xff] 0.0
          %575 = vst [vmem:[#allocation2 + $0xd8] sm:$0xff] 0.0
          %576 = vst [vmem:[#allocation2 + $0xe0] sm:$0xff] 0.0
          %577 = vst [vmem:[#allocation2 + $0xe8] sm:$0xff] 0.0
          %578 = vst [vmem:[#allocation2 + $0xf0] sm:$0xff] 0.0
          %579 = vst [vmem:[#allocation2 + $0xf8] sm:$0xff] 0.0
          %580 = vst [vmem:[#allocation2 + $0x100] sm:$0xff] 0.0
          %581 = vst [vmem:[#allocation2 + $0x108] sm:$0xff] 0.0
          %582 = vst [vmem:[#allocation2 + $0x110] sm:$0xff] 0.0
          %583 = vst [vmem:[#allocation2 + $0x118] sm:$0xff] 0.0
          %584 = vst [vmem:[#allocation2 + $0x120] sm:$0xff] 0.0
          %585 = vst [vmem:[#allocation2 + $0x128] sm:$0xff] 0.0
          %586 = vst [vmem:[#allocation2 + $0x130] sm:$0xff] 0.0
          %587 = vst [vmem:[#allocation2 + $0x138] sm:$0xff] 0.0
          %588 = vst [vmem:[#allocation2 + $0x140] sm:$0xff] 0.0
          %589 = vst [vmem:[#allocation2 + $0x148] sm:$0xff] 0.0
          %590 = vst [vmem:[#allocation2 + $0x150] sm:$0xff] 0.0
          %591 = vst [vmem:[#allocation2 + $0x158] sm:$0xff] 0.0
          %592 = vst [vmem:[#allocation2 + $0x160] sm:$0xff] 0.0
          %593 = vst [vmem:[#allocation2 + $0x168] sm:$0xff] 0.0
          %594 = vst [vmem:[#allocation2 + $0x170] sm:$0xff] 0.0
          %595 = vst [vmem:[#allocation2 + $0x178] sm:$0xff] 0.0
          %596 = vst [vmem:[#allocation2 + $0x180] sm:$0xff] 0.0
          %597 = vst [vmem:[#allocation2 + $0x188] sm:$0xff] 0.0
          %598 = vst [vmem:[#allocation2 + $0x190] sm:$0xff] 0.0
          %599 = vst [vmem:[#allocation2 + $0x198] sm:$0xff] 0.0
          %600 = vst [vmem:[#allocation2 + $0x1a0] sm:$0xff] 0.0
          %601 = vst [vmem:[#allocation2 + $0x1a8] sm:$0xff] 0.0
          %602 = vst [vmem:[#allocation2 + $0x1b0] sm:$0xff] 0.0
          %603 = vst [vmem:[#allocation2 + $0x1b8] sm:$0xff] 0.0
          %604 = vst [vmem:[#allocation2 + $0x1c0] sm:$0xff] 0.0
          %605 = vst [vmem:[#allocation2 + $0x1c8] sm:$0xff] 0.0
          %606 = vst [vmem:[#allocation2 + $0x1d0] sm:$0xff] 0.0
          %607 = vst [vmem:[#allocation2 + $0x1d8] sm:$0xff] 0.0
          %608 = vst [vmem:[#allocation2 + $0x1e0] sm:$0xff] 0.0
          %609 = vst [vmem:[#allocation2 + $0x1e8] sm:$0xff] 0.0
          %610 = vst [vmem:[#allocation2 + $0x1f0] sm:$0xff] 0.0
          %611 = vst [vmem:[#allocation2 + $0x1f8] sm:$0xff] 0.0
        $region63: #{discriminator_forward.6} parent=54 // pred_fallthru
          _
        %v612 = vld [vmem:[#allocation2] sm:$0xff]
        %v613 = vld [vmem:[#allocation2 + $0x8] sm:$0xff]
        %v614 = vld [vmem:[#allocation2 + $0x10] sm:$0xff]
        %v615 = vld [vmem:[#allocation2 + $0x18] sm:$0xff]
        %v616 = vld [vmem:[#allocation2 + $0x20] sm:$0xff]
        %v617 = vld [vmem:[#allocation2 + $0x28] sm:$0xff]
        %v618 = vld [vmem:[#allocation2 + $0x30] sm:$0xff]
        %v619 = vld [vmem:[#allocation2 + $0x38] sm:$0xff]
        %v620 = vld [vmem:[#allocation2 + $0x40] sm:$0xff]
        %v621 = vld [vmem:[#allocation2 + $0x48] sm:$0xff]
        %v622 = vld [vmem:[#allocation2 + $0x50] sm:$0xff]
        %v623 = vld [vmem:[#allocation2 + $0x58] sm:$0xff]
        %v624 = vld [vmem:[#allocation2 + $0x60] sm:$0xff]
        %v625 = vld [vmem:[#allocation2 + $0x68] sm:$0xff]
        %v626 = vld [vmem:[#allocation2 + $0x70] sm:$0xff]
        %v627 = vld [vmem:[#allocation2 + $0x78] sm:$0xff]
        %v628 = vld [vmem:[%s488] sm:$0xff]
        %v629 = vld [vmem:[%s488 + $0x8] sm:$0xff]
        %v630 = vld [vmem:[%s488 + $0x10] sm:$0xff]
        %v631 = vld [vmem:[%s488 + $0x18] sm:$0xff]
        %v632 = vld [vmem:[%s488 + $0x20] sm:$0xff]
        %v633 = vld [vmem:[%s488 + $0x28] sm:$0xff]
        %v634 = vld [vmem:[%s488 + $0x30] sm:$0xff]
        %v635 = vld [vmem:[%s488 + $0x38] sm:$0xff]
        %v636 = vld [vmem:[%s488 + $0x40] sm:$0xff]
        %v637 = vld [vmem:[%s488 + $0x48] sm:$0xff]
        %v638 = vld [vmem:[%s488 + $0x50] sm:$0xff]
        %v639 = vld [vmem:[%s488 + $0x58] sm:$0xff]
        %v640 = vld [vmem:[%s488 + $0x60] sm:$0xff]
        %v641 = vld [vmem:[%s488 + $0x68] sm:$0xff]
        %v642 = vld [vmem:[%s488 + $0x70] sm:$0xff]
        %v643 = vld [vmem:[%s488 + $0x78] sm:$0xff]
        %v644 = vld [vmem:[%s488 + $0x80] sm:$0xff]
        %v645 = vld [vmem:[%s488 + $0x88] sm:$0xff]
        %v646 = vld [vmem:[%s488 + $0x90] sm:$0xff]
        %v647 = vld [vmem:[%s488 + $0x98] sm:$0xff]
        %v648 = vld [vmem:[%s488 + $0xa0] sm:$0xff]
        %v649 = vld [vmem:[%s488 + $0xa8] sm:$0xff]
        %v650 = vld [vmem:[%s488 + $0xb0] sm:$0xff]
        %v651 = vld [vmem:[%s488 + $0xb8] sm:$0xff]
        %v652 = vld [vmem:[%s488 + $0xc0] sm:$0xff]
        %v653 = vld [vmem:[%s488 + $0xc8] sm:$0xff]
        %v654 = vld [vmem:[%s488 + $0xd0] sm:$0xff]
        %v655 = vld [vmem:[%s488 + $0xd8] sm:$0xff]
        %v656 = vld [vmem:[%s488 + $0xe0] sm:$0xff]
        %v657 = vld [vmem:[%s488 + $0xe8] sm:$0xff]
        %v658 = vld [vmem:[%s488 + $0xf0] sm:$0xff]
        %v659 = vld [vmem:[%s488 + $0xf8] sm:$0xff]
        %v660 = vld [vmem:[%s532] sm:$0xf]
        %v661 = vld [vmem:[%s532 + $0x4] sm:$0xf]
        %v662 = vld [vmem:[%s532 + $0x8] sm:$0xf]
        %v663 = vld [vmem:[%s532 + $0xc] sm:$0xf]
        %v664 = vld [vmem:[%s532 + $0x10] sm:$0xf]
        %v665 = vld [vmem:[%s532 + $0x14] sm:$0xf]
        %v666 = vld [vmem:[%s532 + $0x18] sm:$0xf]
        %v667 = vld [vmem:[%s532 + $0x1c] sm:$0xf]
        %v668 = vld [vmem:[%s532 + $0x20] sm:$0xf]
        %v669 = vld [vmem:[%s532 + $0x24] sm:$0xf]
        %v670 = vld [vmem:[%s532 + $0x28] sm:$0xf]
        %v671 = vld [vmem:[%s532 + $0x2c] sm:$0xf]
        %v672 = vld [vmem:[%s532 + $0x30] sm:$0xf]
        %v673 = vld [vmem:[%s532 + $0x34] sm:$0xf]
        %v674 = vld [vmem:[%s532 + $0x38] sm:$0xf]
        %v675 = vld [vmem:[%s532 + $0x3c] sm:$0xf]
        %v676 = vld [vmem:[%s532 + $0x40] sm:$0xf]
        %v677 = vld [vmem:[%s532 + $0x44] sm:$0xf]
        %v678 = vld [vmem:[%s532 + $0x48] sm:$0xf]
        %v679 = vld [vmem:[%s532 + $0x4c] sm:$0xf]
        %v680 = vld [vmem:[%s532 + $0x50] sm:$0xf]
        %v681 = vld [vmem:[%s532 + $0x54] sm:$0xf]
        %v682 = vld [vmem:[%s532 + $0x58] sm:$0xf]
        %v683 = vld [vmem:[%s532 + $0x5c] sm:$0xf]
        %v684 = vld [vmem:[%s532 + $0x60] sm:$0xf]
        %v685 = vld [vmem:[%s532 + $0x64] sm:$0xf]
        %v686 = vld [vmem:[%s532 + $0x68] sm:$0xf]
        %v687 = vld [vmem:[%s532 + $0x6c] sm:$0xf]
        %v688 = vld [vmem:[%s532 + $0x70] sm:$0xf]
        %v689 = vld [vmem:[%s532 + $0x74] sm:$0xf]
        %v690 = vld [vmem:[%s532 + $0x78] sm:$0xf]
        %v691 = vld [vmem:[%s532 + $0x7c] sm:$0xf]
        %v692 = vld [vmem:[%s532 + $0x80] sm:$0xf]
        %v693 = vld [vmem:[%s532 + $0x84] sm:$0xf]
        %v694 = vld [vmem:[%s532 + $0x88] sm:$0xf]
        %v695 = vld [vmem:[%s532 + $0x8c] sm:$0xf]
        %v696 = vld [vmem:[%s532 + $0x90] sm:$0xf]
        %v697 = vld [vmem:[%s532 + $0x94] sm:$0xf]
        %v698 = vld [vmem:[%s532 + $0x98] sm:$0xf]
        %v699 = vld [vmem:[%s532 + $0x9c] sm:$0xf]
        %v700 = vld [vmem:[%s532 + $0xa0] sm:$0xf]
        %v701 = vld [vmem:[%s532 + $0xa4] sm:$0xf]
        %v702 = vld [vmem:[%s532 + $0xa8] sm:$0xf]
        %v703 = vld [vmem:[%s532 + $0xac] sm:$0xf]
        %v704 = vld [vmem:[%s532 + $0xb0] sm:$0xf]
        %v705 = vld [vmem:[%s532 + $0xb4] sm:$0xf]
        %v706 = vld [vmem:[%s532 + $0xb8] sm:$0xf]
        %v707 = vld [vmem:[%s532 + $0xbc] sm:$0xf]
        %v708 = vld [vmem:[%s532 + $0xc0] sm:$0xf]
        %v709 = vld [vmem:[%s532 + $0xc4] sm:$0xf]
        %v710 = vld [vmem:[%s532 + $0xc8] sm:$0xf]
        %v711 = vld [vmem:[%s532 + $0xcc] sm:$0xf]
        %v712 = vld [vmem:[%s532 + $0xd0] sm:$0xf]
        %v713 = vld [vmem:[%s532 + $0xd4] sm:$0xf]
        %v714 = vld [vmem:[%s532 + $0xd8] sm:$0xf]
        %v715 = vld [vmem:[%s532 + $0xdc] sm:$0xf]
        %v716 = vld [vmem:[%s532 + $0xe0] sm:$0xf]
        %v717 = vld [vmem:[%s532 + $0xe4] sm:$0xf]
        %v718 = vld [vmem:[%s532 + $0xe8] sm:$0xf]
        %v719 = vld [vmem:[%s532 + $0xec] sm:$0xf]
        %v720 = vld [vmem:[%s532 + $0xf0] sm:$0xf]
        %v721 = vld [vmem:[%s532 + $0xf4] sm:$0xf]
        %v722 = vld [vmem:[%s532 + $0xf8] sm:$0xf]
        %v723 = vld [vmem:[%s532 + $0xfc] sm:$0xf]
        %v756 = vunpack.c.l.b16 %v628
        %v757 = vunpack.c.h.b16 %v628
        %v758 = vunpack.c.l.b16 %v629
        %v759 = vunpack.c.h.b16 %v629
        %v760 = vunpack.c.l.b16 %v630
        %v761 = vunpack.c.h.b16 %v630
        %v762 = vunpack.c.l.b16 %v631
        %v763 = vunpack.c.h.b16 %v631
        %v764 = vunpack.c.l.b16 %v632
        %v765 = vunpack.c.h.b16 %v632
        %v766 = vunpack.c.l.b16 %v633
        %v767 = vunpack.c.h.b16 %v633
        %v768 = vunpack.c.l.b16 %v634
        %v769 = vunpack.c.h.b16 %v634
        %v770 = vunpack.c.l.b16 %v635
        %v771 = vunpack.c.h.b16 %v635
        %v772 = vunpack.c.l.b16 %v636
        %v773 = vunpack.c.h.b16 %v636
        %v774 = vunpack.c.l.b16 %v637
        %v775 = vunpack.c.h.b16 %v637
        %v776 = vunpack.c.l.b16 %v638
        %v777 = vunpack.c.h.b16 %v638
        %v778 = vunpack.c.l.b16 %v639
        %v779 = vunpack.c.h.b16 %v639
        %v780 = vunpack.c.l.b16 %v640
        %v781 = vunpack.c.h.b16 %v640
        %v782 = vunpack.c.l.b16 %v641
        %v783 = vunpack.c.h.b16 %v641
        %v784 = vunpack.c.l.b16 %v642
        %v785 = vunpack.c.h.b16 %v642
        %v786 = vunpack.c.l.b16 %v643
        %v787 = vunpack.c.h.b16 %v643
        %v788 = vunpack.c.l.b16 %v644
        %v789 = vunpack.c.h.b16 %v644
        %v790 = vunpack.c.l.b16 %v645
        %v791 = vunpack.c.h.b16 %v645
        %v792 = vunpack.c.l.b16 %v646
        %v793 = vunpack.c.h.b16 %v646
        %v794 = vunpack.c.l.b16 %v647
        %v795 = vunpack.c.h.b16 %v647
        %v796 = vunpack.c.l.b16 %v648
        %v797 = vunpack.c.h.b16 %v648
        %v798 = vunpack.c.l.b16 %v649
        %v799 = vunpack.c.h.b16 %v649
        %v800 = vunpack.c.l.b16 %v650
        %v801 = vunpack.c.h.b16 %v650
        %v802 = vunpack.c.l.b16 %v651
        %v803 = vunpack.c.h.b16 %v651
        %v804 = vunpack.c.l.b16 %v652
        %v805 = vunpack.c.h.b16 %v652
        %v806 = vunpack.c.l.b16 %v653
        %v807 = vunpack.c.h.b16 %v653
        %v808 = vunpack.c.l.b16 %v654
        %v809 = vunpack.c.h.b16 %v654
        %v810 = vunpack.c.l.b16 %v655
        %v811 = vunpack.c.h.b16 %v655
        %v812 = vunpack.c.l.b16 %v656
        %v813 = vunpack.c.h.b16 %v656
        %v814 = vunpack.c.l.b16 %v657
        %v815 = vunpack.c.h.b16 %v657
        %v816 = vunpack.c.l.b16 %v658
        %v817 = vunpack.c.h.b16 %v658
        %v818 = vunpack.c.l.b16 %v659
        %v819 = vunpack.c.h.b16 %v659
        %v820 = vpack.c.b16 %v760, %v756
        %v821 = vpack.c.b16 %v761, %v757
        %v822 = vpack.c.b16 %v762, %v758
        %v823 = vpack.c.b16 %v763, %v759
        %v824 = vpack.c.b16 %v768, %v764
        %v825 = vpack.c.b16 %v769, %v765
        %v826 = vpack.c.b16 %v770, %v766
        %v827 = vpack.c.b16 %v771, %v767
        %v828 = vpack.c.b16 %v776, %v772
        %v829 = vpack.c.b16 %v777, %v773
        %v830 = vpack.c.b16 %v778, %v774
        %v831 = vpack.c.b16 %v779, %v775
        %v832 = vpack.c.b16 %v784, %v780
        %v833 = vpack.c.b16 %v785, %v781
        %v834 = vpack.c.b16 %v786, %v782
        %v835 = vpack.c.b16 %v787, %v783
        %v836 = vpack.c.b16 %v792, %v788
        %v837 = vpack.c.b16 %v793, %v789
        %v838 = vpack.c.b16 %v794, %v790
        %v839 = vpack.c.b16 %v795, %v791
        %v840 = vpack.c.b16 %v800, %v796
        %v841 = vpack.c.b16 %v801, %v797
        %v842 = vpack.c.b16 %v802, %v798
        %v843 = vpack.c.b16 %v803, %v799
        %v844 = vpack.c.b16 %v808, %v804
        %v845 = vpack.c.b16 %v809, %v805
        %v846 = vpack.c.b16 %v810, %v806
        %v847 = vpack.c.b16 %v811, %v807
        %v848 = vpack.c.b16 %v816, %v812
        %v849 = vpack.c.b16 %v817, %v813
        %v850 = vpack.c.b16 %v818, %v814
        %v851 = vpack.c.b16 %v819, %v815
        %v948 = vunpack.c.l.b16 %v660
        %v949 = vunpack.c.l.b16 %v661
        %v950 = vunpack.c.l.b16 %v662
        %v951 = vunpack.c.l.b16 %v663
        %v952 = vunpack.c.l.b16 %v664
        %v953 = vunpack.c.l.b16 %v665
        %v954 = vunpack.c.l.b16 %v666
        %v955 = vunpack.c.l.b16 %v667
        %v956 = vunpack.c.l.b16 %v668
        %v957 = vunpack.c.l.b16 %v669
        %v958 = vunpack.c.l.b16 %v670
        %v959 = vunpack.c.l.b16 %v671
        %v960 = vunpack.c.l.b16 %v672
        %v961 = vunpack.c.l.b16 %v673
        %v962 = vunpack.c.l.b16 %v674
        %v963 = vunpack.c.l.b16 %v675
        %v964 = vunpack.c.l.b16 %v676
        %v965 = vunpack.c.l.b16 %v677
        %v966 = vunpack.c.l.b16 %v678
        %v967 = vunpack.c.l.b16 %v679
        %v968 = vunpack.c.l.b16 %v680
        %v969 = vunpack.c.l.b16 %v681
        %v970 = vunpack.c.l.b16 %v682
        %v971 = vunpack.c.l.b16 %v683
        %v972 = vunpack.c.l.b16 %v684
        %v973 = vunpack.c.l.b16 %v685
        %v974 = vunpack.c.l.b16 %v686
        %v975 = vunpack.c.l.b16 %v687
        %v976 = vunpack.c.l.b16 %v688
        %v977 = vunpack.c.l.b16 %v689
        %v978 = vunpack.c.l.b16 %v690
        %v979 = vunpack.c.l.b16 %v691
        %v980 = vunpack.c.l.b16 %v692
        %v981 = vunpack.c.l.b16 %v693
        %v982 = vunpack.c.l.b16 %v694
        %v983 = vunpack.c.l.b16 %v695
        %v984 = vunpack.c.l.b16 %v696
        %v985 = vunpack.c.l.b16 %v697
        %v986 = vunpack.c.l.b16 %v698
        %v987 = vunpack.c.l.b16 %v699
        %v988 = vunpack.c.l.b16 %v700
        %v989 = vunpack.c.l.b16 %v701
        %v990 = vunpack.c.l.b16 %v702
        %v991 = vunpack.c.l.b16 %v703
        %v992 = vunpack.c.l.b16 %v704
        %v993 = vunpack.c.l.b16 %v705
        %v994 = vunpack.c.l.b16 %v706
        %v995 = vunpack.c.l.b16 %v707
        %v996 = vunpack.c.l.b16 %v708
        %v997 = vunpack.c.l.b16 %v709
        %v998 = vunpack.c.l.b16 %v710
        %v999 = vunpack.c.l.b16 %v711
        %v1000 = vunpack.c.l.b16 %v712
        %v1001 = vunpack.c.l.b16 %v713
        %v1002 = vunpack.c.l.b16 %v714
        %v1003 = vunpack.c.l.b16 %v715
        %v1004 = vunpack.c.l.b16 %v716
        %v1005 = vunpack.c.l.b16 %v717
        %v1006 = vunpack.c.l.b16 %v718
        %v1007 = vunpack.c.l.b16 %v719
        %v1008 = vunpack.c.l.b16 %v720
        %v1009 = vunpack.c.l.b16 %v721
        %v1010 = vunpack.c.l.b16 %v722
        %v1011 = vunpack.c.l.b16 %v723
        %v1012 = vpack.c.b16 %v949, %v948
        %v1013 = vpack.c.b16 %v951, %v950
        %v1014 = vpack.c.b16 %v953, %v952
        %v1015 = vpack.c.b16 %v955, %v954
        %v1016 = vpack.c.b16 %v957, %v956
        %v1017 = vpack.c.b16 %v959, %v958
        %v1018 = vpack.c.b16 %v961, %v960
        %v1019 = vpack.c.b16 %v963, %v962
        %v1020 = vpack.c.b16 %v965, %v964
        %v1021 = vpack.c.b16 %v967, %v966
        %v1022 = vpack.c.b16 %v969, %v968
        %v1023 = vpack.c.b16 %v971, %v970
        %v1024 = vpack.c.b16 %v973, %v972
        %v1025 = vpack.c.b16 %v975, %v974
        %v1026 = vpack.c.b16 %v977, %v976
        %v1027 = vpack.c.b16 %v979, %v978
        %v1028 = vpack.c.b16 %v981, %v980
        %v1029 = vpack.c.b16 %v983, %v982
        %v1030 = vpack.c.b16 %v985, %v984
        %v1031 = vpack.c.b16 %v987, %v986
        %v1032 = vpack.c.b16 %v989, %v988
        %v1033 = vpack.c.b16 %v991, %v990
        %v1034 = vpack.c.b16 %v993, %v992
        %v1035 = vpack.c.b16 %v995, %v994
        %v1036 = vpack.c.b16 %v997, %v996
        %v1037 = vpack.c.b16 %v999, %v998
        %v1038 = vpack.c.b16 %v1001, %v1000
        %v1039 = vpack.c.b16 %v1003, %v1002
        %v1040 = vpack.c.b16 %v1005, %v1004
        %v1041 = vpack.c.b16 %v1007, %v1006
        %v1042 = vpack.c.b16 %v1009, %v1008
        %v1043 = vpack.c.b16 %v1011, %v1010
        %1076 = vmatpush.bf16.msra.mxu0 %v1019
        %1077 = vmatpush.bf16.msra.mxu0 %v1018
        %1078 = vmatpush.bf16.msra.mxu0 %v1017
        %1079 = vmatpush.bf16.msra.mxu0 %v1016
        %1080 = vmatpush.bf16.msra.mxu0 %v1015
        %1081 = vmatpush.bf16.msra.mxu0 %v1014
        %1082 = vmatpush.bf16.msra.mxu0 %v1013
        %1083 = vmatpush.bf16.msra.mxu0 %v1012
        %1084 = vmatmul.bf16.gmra.mxu0 %v820
        %v1085 = vpop.f32.mrf.mxu0
        %v1086 = vadd.f32 0.0, %v1085
        %v1087 = vpop.f32.mrf.mxu0
        %v1088 = vadd.f32 0.0, %v1087
        %1089 = vmatmul.bf16.gmra.mxu0 %v824
        %v1090 = vpop.f32.mrf.mxu0
        %v1091 = vadd.f32 0.0, %v1090
        %v1092 = vpop.f32.mrf.mxu0
        %v1093 = vadd.f32 0.0, %v1092
        %1094 = vmatmul.bf16.gmra.mxu0 %v828
        %v1095 = vpop.f32.mrf.mxu0
        %v1096 = vadd.f32 0.0, %v1095
        %v1097 = vpop.f32.mrf.mxu0
        %v1098 = vadd.f32 0.0, %v1097
        %1099 = vmatmul.bf16.gmra.mxu0 %v832
        %v1100 = vpop.f32.mrf.mxu0
        %v1101 = vadd.f32 0.0, %v1100
        %v1102 = vpop.f32.mrf.mxu0
        %v1103 = vadd.f32 0.0, %v1102
        %1104 = vmatmul.bf16.gmra.mxu0 %v836
        %v1105 = vpop.f32.mrf.mxu0
        %v1106 = vadd.f32 0.0, %v1105
        %v1107 = vpop.f32.mrf.mxu0
        %v1108 = vadd.f32 0.0, %v1107
        %1109 = vmatmul.bf16.gmra.mxu0 %v840
        %v1110 = vpop.f32.mrf.mxu0
        %v1111 = vadd.f32 0.0, %v1110
        %v1112 = vpop.f32.mrf.mxu0
        %v1113 = vadd.f32 0.0, %v1112
        %1114 = vmatmul.bf16.gmra.mxu0 %v844
        %v1115 = vpop.f32.mrf.mxu0
        %v1116 = vadd.f32 0.0, %v1115
        %v1117 = vpop.f32.mrf.mxu0
        %v1118 = vadd.f32 0.0, %v1117
        %1119 = vmatmul.bf16.gmra.mxu0 %v848
        %v1120 = vpop.f32.mrf.mxu0
        %v1121 = vadd.f32 0.0, %v1120
        %v1122 = vpop.f32.mrf.mxu0
        %v1123 = vadd.f32 0.0, %v1122
        %1124 = vdwg.mxu0
        %1125 = vmatpush.bf16.msra.mxu0 %v1027
        %1126 = vmatpush.bf16.msra.mxu0 %v1026
        %1127 = vmatpush.bf16.msra.mxu0 %v1025
        %1128 = vmatpush.bf16.msra.mxu0 %v1024
        %1129 = vmatpush.bf16.msra.mxu0 %v1023
        %1130 = vmatpush.bf16.msra.mxu0 %v1022
        %1131 = vmatpush.bf16.msra.mxu0 %v1021
        %1132 = vmatpush.bf16.msra.mxu0 %v1020
        %1133 = vmatmul.bf16.gmra.mxu0 %v821
        %v1134 = vpop.f32.mrf.mxu0
        %v1135 = vadd.f32 %v1086, %v1134
        %v1136 = vpop.f32.mrf.mxu0
        %v1137 = vadd.f32 %v1088, %v1136
        %1138 = vmatmul.bf16.gmra.mxu0 %v825
        %v1139 = vpop.f32.mrf.mxu0
        %v1140 = vadd.f32 %v1091, %v1139
        %v1141 = vpop.f32.mrf.mxu0
        %v1142 = vadd.f32 %v1093, %v1141
        %1143 = vmatmul.bf16.gmra.mxu0 %v829
        %v1144 = vpop.f32.mrf.mxu0
        %v1145 = vadd.f32 %v1096, %v1144
        %v1146 = vpop.f32.mrf.mxu0
        %v1147 = vadd.f32 %v1098, %v1146
        %1148 = vmatmul.bf16.gmra.mxu0 %v833
        %v1149 = vpop.f32.mrf.mxu0
        %v1150 = vadd.f32 %v1101, %v1149
        %v1151 = vpop.f32.mrf.mxu0
        %v1152 = vadd.f32 %v1103, %v1151
        %1153 = vmatmul.bf16.gmra.mxu0 %v837
        %v1154 = vpop.f32.mrf.mxu0
        %v1155 = vadd.f32 %v1106, %v1154
        %v1156 = vpop.f32.mrf.mxu0
        %v1157 = vadd.f32 %v1108, %v1156
        %1158 = vmatmul.bf16.gmra.mxu0 %v841
        %v1159 = vpop.f32.mrf.mxu0
        %v1160 = vadd.f32 %v1111, %v1159
        %v1161 = vpop.f32.mrf.mxu0
        %v1162 = vadd.f32 %v1113, %v1161
        %1163 = vmatmul.bf16.gmra.mxu0 %v845
        %v1164 = vpop.f32.mrf.mxu0
        %v1165 = vadd.f32 %v1116, %v1164
        %v1166 = vpop.f32.mrf.mxu0
        %v1167 = vadd.f32 %v1118, %v1166
        %1168 = vmatmul.bf16.gmra.mxu0 %v849
        %v1169 = vpop.f32.mrf.mxu0
        %v1170 = vadd.f32 %v1121, %v1169
        %v1171 = vpop.f32.mrf.mxu0
        %v1172 = vadd.f32 %v1123, %v1171
        %1173 = vdwg.mxu0
        %1174 = vmatpush.bf16.msra.mxu0 %v1035
        %1175 = vmatpush.bf16.msra.mxu0 %v1034
        %1176 = vmatpush.bf16.msra.mxu0 %v1033
        %1177 = vmatpush.bf16.msra.mxu0 %v1032
        %1178 = vmatpush.bf16.msra.mxu0 %v1031
        %1179 = vmatpush.bf16.msra.mxu0 %v1030
        %1180 = vmatpush.bf16.msra.mxu0 %v1029
        %1181 = vmatpush.bf16.msra.mxu0 %v1028
        %1182 = vmatmul.bf16.gmra.mxu0 %v822
        %v1183 = vpop.f32.mrf.mxu0
        %v1184 = vadd.f32 %v1135, %v1183
        %v1185 = vpop.f32.mrf.mxu0
        %v1186 = vadd.f32 %v1137, %v1185
        %1187 = vmatmul.bf16.gmra.mxu0 %v826
        %v1188 = vpop.f32.mrf.mxu0
        %v1189 = vadd.f32 %v1140, %v1188
        %v1190 = vpop.f32.mrf.mxu0
        %v1191 = vadd.f32 %v1142, %v1190
        %1192 = vmatmul.bf16.gmra.mxu0 %v830
        %v1193 = vpop.f32.mrf.mxu0
        %v1194 = vadd.f32 %v1145, %v1193
        %v1195 = vpop.f32.mrf.mxu0
        %v1196 = vadd.f32 %v1147, %v1195
        %1197 = vmatmul.bf16.gmra.mxu0 %v834
        %v1198 = vpop.f32.mrf.mxu0
        %v1199 = vadd.f32 %v1150, %v1198
        %v1200 = vpop.f32.mrf.mxu0
        %v1201 = vadd.f32 %v1152, %v1200
        %1202 = vmatmul.bf16.gmra.mxu0 %v838
        %v1203 = vpop.f32.mrf.mxu0
        %v1204 = vadd.f32 %v1155, %v1203
        %v1205 = vpop.f32.mrf.mxu0
        %v1206 = vadd.f32 %v1157, %v1205
        %1207 = vmatmul.bf16.gmra.mxu0 %v842
        %v1208 = vpop.f32.mrf.mxu0
        %v1209 = vadd.f32 %v1160, %v1208
        %v1210 = vpop.f32.mrf.mxu0
        %v1211 = vadd.f32 %v1162, %v1210
        %1212 = vmatmul.bf16.gmra.mxu0 %v846
        %v1213 = vpop.f32.mrf.mxu0
        %v1214 = vadd.f32 %v1165, %v1213
        %v1215 = vpop.f32.mrf.mxu0
        %v1216 = vadd.f32 %v1167, %v1215
        %1217 = vmatmul.bf16.gmra.mxu0 %v850
        %v1218 = vpop.f32.mrf.mxu0
        %v1219 = vadd.f32 %v1170, %v1218
        %v1220 = vpop.f32.mrf.mxu0
        %v1221 = vadd.f32 %v1172, %v1220
        %1222 = vdwg.mxu0
        %1223 = vmatpush.bf16.msra.mxu0 %v1043
        %1224 = vmatpush.bf16.msra.mxu0 %v1042
        %1225 = vmatpush.bf16.msra.mxu0 %v1041
        %1226 = vmatpush.bf16.msra.mxu0 %v1040
        %1227 = vmatpush.bf16.msra.mxu0 %v1039
        %1228 = vmatpush.bf16.msra.mxu0 %v1038
        %1229 = vmatpush.bf16.msra.mxu0 %v1037
        %1230 = vmatpush.bf16.msra.mxu0 %v1036
        %1231 = vmatmul.bf16.gmra.mxu0 %v823
        %v1232 = vpop.f32.mrf.mxu0
        %v1233 = vadd.f32 %v1184, %v1232
        %v1234 = vpop.f32.mrf.mxu0
        %v1235 = vadd.f32 %v1186, %v1234
        %1236 = vmatmul.bf16.gmra.mxu0 %v827
        %v1237 = vpop.f32.mrf.mxu0
        %v1238 = vadd.f32 %v1189, %v1237
        %v1239 = vpop.f32.mrf.mxu0
        %v1240 = vadd.f32 %v1191, %v1239
        %1241 = vmatmul.bf16.gmra.mxu0 %v831
        %v1242 = vpop.f32.mrf.mxu0
        %v1243 = vadd.f32 %v1194, %v1242
        %v1244 = vpop.f32.mrf.mxu0
        %v1245 = vadd.f32 %v1196, %v1244
        %1246 = vmatmul.bf16.gmra.mxu0 %v835
        %v1247 = vpop.f32.mrf.mxu0
        %v1248 = vadd.f32 %v1199, %v1247
        %v1249 = vpop.f32.mrf.mxu0
        %v1250 = vadd.f32 %v1201, %v1249
        %1251 = vmatmul.bf16.gmra.mxu0 %v839
        %v1252 = vpop.f32.mrf.mxu0
        %v1253 = vadd.f32 %v1204, %v1252
        %v1254 = vpop.f32.mrf.mxu0
        %v1255 = vadd.f32 %v1206, %v1254
        %1256 = vmatmul.bf16.gmra.mxu0 %v843
        %v1257 = vpop.f32.mrf.mxu0
        %v1258 = vadd.f32 %v1209, %v1257
        %v1259 = vpop.f32.mrf.mxu0
        %v1260 = vadd.f32 %v1211, %v1259
        %1261 = vmatmul.bf16.gmra.mxu0 %v847
        %v1262 = vpop.f32.mrf.mxu0
        %v1263 = vadd.f32 %v1214, %v1262
        %v1264 = vpop.f32.mrf.mxu0
        %v1265 = vadd.f32 %v1216, %v1264
        %1266 = vmatmul.bf16.gmra.mxu0 %v851
        %v1267 = vpop.f32.mrf.mxu0
        %v1268 = vadd.f32 %v1219, %v1267
        %v1269 = vpop.f32.mrf.mxu0
        %v1270 = vadd.f32 %v1221, %v1269
        %1271 = vdwg.mxu0
        %v1272 = vadd.f32 %v612, %v1233
        %v1273 = vadd.f32 %v613, %v1235
        %v1274 = vadd.f32 %v614, %v1238
        %v1275 = vadd.f32 %v615, %v1240
        %v1276 = vadd.f32 %v616, %v1243
        %v1277 = vadd.f32 %v617, %v1245
        %v1278 = vadd.f32 %v618, %v1248
        %v1279 = vadd.f32 %v619, %v1250
        %v1280 = vadd.f32 %v620, %v1253
        %v1281 = vadd.f32 %v621, %v1255
        %v1282 = vadd.f32 %v622, %v1258
        %v1283 = vadd.f32 %v623, %v1260
        %v1284 = vadd.f32 %v624, %v1263
        %v1285 = vadd.f32 %v625, %v1265
        %v1286 = vadd.f32 %v626, %v1268
        %v1287 = vadd.f32 %v627, %v1270
        %1288 = vst [vmem:[#allocation2] sm:$0xff] %v1272
        %1289 = vst [vmem:[#allocation2 + $0x8] sm:$0xff] %v1273
        %1290 = vst [vmem:[#allocation2 + $0x10] sm:$0xff] %v1274
        %1291 = vst [vmem:[#allocation2 + $0x18] sm:$0xff] %v1275
        %1292 = vst [vmem:[#allocation2 + $0x20] sm:$0xff] %v1276
        %1293 = vst [vmem:[#allocation2 + $0x28] sm:$0xff] %v1277
        %1294 = vst [vmem:[#allocation2 + $0x30] sm:$0xff] %v1278
        %1295 = vst [vmem:[#allocation2 + $0x38] sm:$0xff] %v1279
        %1296 = vst [vmem:[#allocation2 + $0x40] sm:$0xff] %v1280
        %1297 = vst [vmem:[#allocation2 + $0x48] sm:$0xff] %v1281
        %1298 = vst [vmem:[#allocation2 + $0x50] sm:$0xff] %v1282
        %1299 = vst [vmem:[#allocation2 + $0x58] sm:$0xff] %v1283
        %1300 = vst [vmem:[#allocation2 + $0x60] sm:$0xff] %v1284
        %1301 = vst [vmem:[#allocation2 + $0x68] sm:$0xff] %v1285
        %1302 = vst [vmem:[#allocation2 + $0x70] sm:$0xff] %v1286
        %1303 = vst [vmem:[#allocation2 + $0x78] sm:$0xff] %v1287
        %v1304 = vld [vmem:[#allocation2 + $0x80] sm:$0xff]
        %v1305 = vld [vmem:[#allocation2 + $0x88] sm:$0xff]
        %v1306 = vld [vmem:[#allocation2 + $0x90] sm:$0xff]
        %v1307 = vld [vmem:[#allocation2 + $0x98] sm:$0xff]
        %v1308 = vld [vmem:[#allocation2 + $0xa0] sm:$0xff]
        %v1309 = vld [vmem:[#allocation2 + $0xa8] sm:$0xff]
        %v1310 = vld [vmem:[#allocation2 + $0xb0] sm:$0xff]
        %v1311 = vld [vmem:[#allocation2 + $0xb8] sm:$0xff]
        %v1312 = vld [vmem:[#allocation2 + $0xc0] sm:$0xff]
        %v1313 = vld [vmem:[#allocation2 + $0xc8] sm:$0xff]
        %v1314 = vld [vmem:[#allocation2 + $0xd0] sm:$0xff]
        %v1315 = vld [vmem:[#allocation2 + $0xd8] sm:$0xff]
        %v1316 = vld [vmem:[#allocation2 + $0xe0] sm:$0xff]
        %v1317 = vld [vmem:[#allocation2 + $0xe8] sm:$0xff]
        %v1318 = vld [vmem:[#allocation2 + $0xf0] sm:$0xff]
        %v1319 = vld [vmem:[#allocation2 + $0xf8] sm:$0xff]
        %v1320 = vld [vmem:[%s488 + $0x100] sm:$0xff]
        %v1321 = vld [vmem:[%s488 + $0x108] sm:$0xff]
        %v1322 = vld [vmem:[%s488 + $0x110] sm:$0xff]
        %v1323 = vld [vmem:[%s488 + $0x118] sm:$0xff]
        %v1324 = vld [vmem:[%s488 + $0x120] sm:$0xff]
        %v1325 = vld [vmem:[%s488 + $0x128] sm:$0xff]
        %v1326 = vld [vmem:[%s488 + $0x130] sm:$0xff]
        %v1327 = vld [vmem:[%s488 + $0x138] sm:$0xff]
        %v1328 = vld [vmem:[%s488 + $0x140] sm:$0xff]
        %v1329 = vld [vmem:[%s488 + $0x148] sm:$0xff]
        %v1330 = vld [vmem:[%s488 + $0x150] sm:$0xff]
        %v1331 = vld [vmem:[%s488 + $0x158] sm:$0xff]
        %v1332 = vld [vmem:[%s488 + $0x160] sm:$0xff]
        %v1333 = vld [vmem:[%s488 + $0x168] sm:$0xff]
        %v1334 = vld [vmem:[%s488 + $0x170] sm:$0xff]
        %v1335 = vld [vmem:[%s488 + $0x178] sm:$0xff]
        %v1336 = vld [vmem:[%s488 + $0x180] sm:$0xff]
        %v1337 = vld [vmem:[%s488 + $0x188] sm:$0xff]
        %v1338 = vld [vmem:[%s488 + $0x190] sm:$0xff]
        %v1339 = vld [vmem:[%s488 + $0x198] sm:$0xff]
        %v1340 = vld [vmem:[%s488 + $0x1a0] sm:$0xff]
        %v1341 = vld [vmem:[%s488 + $0x1a8] sm:$0xff]
        %v1342 = vld [vmem:[%s488 + $0x1b0] sm:$0xff]
        %v1343 = vld [vmem:[%s488 + $0x1b8] sm:$0xff]
        %v1344 = vld [vmem:[%s488 + $0x1c0] sm:$0xff]
        %v1345 = vld [vmem:[%s488 + $0x1c8] sm:$0xff]
        %v1346 = vld [vmem:[%s488 + $0x1d0] sm:$0xff]
        %v1347 = vld [vmem:[%s488 + $0x1d8] sm:$0xff]
        %v1348 = vld [vmem:[%s488 + $0x1e0] sm:$0xff]
        %v1349 = vld [vmem:[%s488 + $0x1e8] sm:$0xff]
        %v1350 = vld [vmem:[%s488 + $0x1f0] sm:$0xff]
        %v1351 = vld [vmem:[%s488 + $0x1f8] sm:$0xff]
        %v1352 = vld [vmem:[%s532] sm:$0xf]
        %v1353 = vld [vmem:[%s532 + $0x4] sm:$0xf]
        %v1354 = vld [vmem:[%s532 + $0x8] sm:$0xf]
        %v1355 = vld [vmem:[%s532 + $0xc] sm:$0xf]
        %v1356 = vld [vmem:[%s532 + $0x10] sm:$0xf]
        %v1357 = vld [vmem:[%s532 + $0x14] sm:$0xf]
        %v1358 = vld [vmem:[%s532 + $0x18] sm:$0xf]
        %v1359 = vld [vmem:[%s532 + $0x1c] sm:$0xf]
        %v1360 = vld [vmem:[%s532 + $0x20] sm:$0xf]
        %v1361 = vld [vmem:[%s532 + $0x24] sm:$0xf]
        %v1362 = vld [vmem:[%s532 + $0x28] sm:$0xf]
        %v1363 = vld [vmem:[%s532 + $0x2c] sm:$0xf]
        %v1364 = vld [vmem:[%s532 + $0x30] sm:$0xf]
        %v1365 = vld [vmem:[%s532 + $0x34] sm:$0xf]
        %v1366 = vld [vmem:[%s532 + $0x38] sm:$0xf]
        %v1367 = vld [vmem:[%s532 + $0x3c] sm:$0xf]
        %v1368 = vld [vmem:[%s532 + $0x40] sm:$0xf]
        %v1369 = vld [vmem:[%s532 + $0x44] sm:$0xf]
        %v1370 = vld [vmem:[%s532 + $0x48] sm:$0xf]
        %v1371 = vld [vmem:[%s532 + $0x4c] sm:$0xf]
        %v1372 = vld [vmem:[%s532 + $0x50] sm:$0xf]
        %v1373 = vld [vmem:[%s532 + $0x54] sm:$0xf]
        %v1374 = vld [vmem:[%s532 + $0x58] sm:$0xf]
        %v1375 = vld [vmem:[%s532 + $0x5c] sm:$0xf]
        %v1376 = vld [vmem:[%s532 + $0x60] sm:$0xf]
        %v1377 = vld [vmem:[%s532 + $0x64] sm:$0xf]
        %v1378 = vld [vmem:[%s532 + $0x68] sm:$0xf]
        %v1379 = vld [vmem:[%s532 + $0x6c] sm:$0xf]
        %v1380 = vld [vmem:[%s532 + $0x70] sm:$0xf]
        %v1381 = vld [vmem:[%s532 + $0x74] sm:$0xf]
        %v1382 = vld [vmem:[%s532 + $0x78] sm:$0xf]
        %v1383 = vld [vmem:[%s532 + $0x7c] sm:$0xf]
        %v1384 = vld [vmem:[%s532 + $0x80] sm:$0xf]
        %v1385 = vld [vmem:[%s532 + $0x84] sm:$0xf]
        %v1386 = vld [vmem:[%s532 + $0x88] sm:$0xf]
        %v1387 = vld [vmem:[%s532 + $0x8c] sm:$0xf]
        %v1388 = vld [vmem:[%s532 + $0x90] sm:$0xf]
        %v1389 = vld [vmem:[%s532 + $0x94] sm:$0xf]
        %v1390 = vld [vmem:[%s532 + $0x98] sm:$0xf]
        %v1391 = vld [vmem:[%s532 + $0x9c] sm:$0xf]
        %v1392 = vld [vmem:[%s532 + $0xa0] sm:$0xf]
        %v1393 = vld [vmem:[%s532 + $0xa4] sm:$0xf]
        %v1394 = vld [vmem:[%s532 + $0xa8] sm:$0xf]
        %v1395 = vld [vmem:[%s532 + $0xac] sm:$0xf]
        %v1396 = vld [vmem:[%s532 + $0xb0] sm:$0xf]
        %v1397 = vld [vmem:[%s532 + $0xb4] sm:$0xf]
        %v1398 = vld [vmem:[%s532 + $0xb8] sm:$0xf]
        %v1399 = vld [vmem:[%s532 + $0xbc] sm:$0xf]
        %v1400 = vld [vmem:[%s532 + $0xc0] sm:$0xf]
        %v1401 = vld [vmem:[%s532 + $0xc4] sm:$0xf]
        %v1402 = vld [vmem:[%s532 + $0xc8] sm:$0xf]
        %v1403 = vld [vmem:[%s532 + $0xcc] sm:$0xf]
        %v1404 = vld [vmem:[%s532 + $0xd0] sm:$0xf]
        %v1405 = vld [vmem:[%s532 + $0xd4] sm:$0xf]
        %v1406 = vld [vmem:[%s532 + $0xd8] sm:$0xf]
        %v1407 = vld [vmem:[%s532 + $0xdc] sm:$0xf]
        %v1408 = vld [vmem:[%s532 + $0xe0] sm:$0xf]
        %v1409 = vld [vmem:[%s532 + $0xe4] sm:$0xf]
        %v1410 = vld [vmem:[%s532 + $0xe8] sm:$0xf]
        %v1411 = vld [vmem:[%s532 + $0xec] sm:$0xf]
        %v1412 = vld [vmem:[%s532 + $0xf0] sm:$0xf]
        %v1413 = vld [vmem:[%s532 + $0xf4] sm:$0xf]
        %v1414 = vld [vmem:[%s532 + $0xf8] sm:$0xf]
        %v1415 = vld [vmem:[%s532 + $0xfc] sm:$0xf]
        %v1448 = vunpack.c.l.b16 %v1320
        %v1449 = vunpack.c.h.b16 %v1320
        %v1450 = vunpack.c.l.b16 %v1321
        %v1451 = vunpack.c.h.b16 %v1321
        %v1452 = vunpack.c.l.b16 %v1322
        %v1453 = vunpack.c.h.b16 %v1322
        %v1454 = vunpack.c.l.b16 %v1323
        %v1455 = vunpack.c.h.b16 %v1323
        %v1456 = vunpack.c.l.b16 %v1324
        %v1457 = vunpack.c.h.b16 %v1324
        %v1458 = vunpack.c.l.b16 %v1325
        %v1459 = vunpack.c.h.b16 %v1325
        %v1460 = vunpack.c.l.b16 %v1326
        %v1461 = vunpack.c.h.b16 %v1326
        %v1462 = vunpack.c.l.b16 %v1327
        %v1463 = vunpack.c.h.b16 %v1327
        %v1464 = vunpack.c.l.b16 %v1328
        %v1465 = vunpack.c.h.b16 %v1328
        %v1466 = vunpack.c.l.b16 %v1329
        %v1467 = vunpack.c.h.b16 %v1329
        %v1468 = vunpack.c.l.b16 %v1330
        %v1469 = vunpack.c.h.b16 %v1330
        %v1470 = vunpack.c.l.b16 %v1331
        %v1471 = vunpack.c.h.b16 %v1331
        %v1472 = vunpack.c.l.b16 %v1332
        %v1473 = vunpack.c.h.b16 %v1332
        %v1474 = vunpack.c.l.b16 %v1333
        %v1475 = vunpack.c.h.b16 %v1333
        %v1476 = vunpack.c.l.b16 %v1334
        %v1477 = vunpack.c.h.b16 %v1334
        %v1478 = vunpack.c.l.b16 %v1335
        %v1479 = vunpack.c.h.b16 %v1335
        %v1480 = vunpack.c.l.b16 %v1336
        %v1481 = vunpack.c.h.b16 %v1336
        %v1482 = vunpack.c.l.b16 %v1337
        %v1483 = vunpack.c.h.b16 %v1337
        %v1484 = vunpack.c.l.b16 %v1338
        %v1485 = vunpack.c.h.b16 %v1338
        %v1486 = vunpack.c.l.b16 %v1339
        %v1487 = vunpack.c.h.b16 %v1339
        %v1488 = vunpack.c.l.b16 %v1340
        %v1489 = vunpack.c.h.b16 %v1340
        %v1490 = vunpack.c.l.b16 %v1341
        %v1491 = vunpack.c.h.b16 %v1341
        %v1492 = vunpack.c.l.b16 %v1342
        %v1493 = vunpack.c.h.b16 %v1342
        %v1494 = vunpack.c.l.b16 %v1343
        %v1495 = vunpack.c.h.b16 %v1343
        %v1496 = vunpack.c.l.b16 %v1344
        %v1497 = vunpack.c.h.b16 %v1344
        %v1498 = vunpack.c.l.b16 %v1345
        %v1499 = vunpack.c.h.b16 %v1345
        %v1500 = vunpack.c.l.b16 %v1346
        %v1501 = vunpack.c.h.b16 %v1346
        %v1502 = vunpack.c.l.b16 %v1347
        %v1503 = vunpack.c.h.b16 %v1347
        %v1504 = vunpack.c.l.b16 %v1348
        %v1505 = vunpack.c.h.b16 %v1348
        %v1506 = vunpack.c.l.b16 %v1349
        %v1507 = vunpack.c.h.b16 %v1349
        %v1508 = vunpack.c.l.b16 %v1350
        %v1509 = vunpack.c.h.b16 %v1350
        %v1510 = vunpack.c.l.b16 %v1351
        %v1511 = vunpack.c.h.b16 %v1351
        %v1512 = vpack.c.b16 %v1452, %v1448
        %v1513 = vpack.c.b16 %v1453, %v1449
        %v1514 = vpack.c.b16 %v1454, %v1450
        %v1515 = vpack.c.b16 %v1455, %v1451
        %v1516 = vpack.c.b16 %v1460, %v1456
        %v1517 = vpack.c.b16 %v1461, %v1457
        %v1518 = vpack.c.b16 %v1462, %v1458
        %v1519 = vpack.c.b16 %v1463, %v1459
        %v1520 = vpack.c.b16 %v1468, %v1464
        %v1521 = vpack.c.b16 %v1469, %v1465
        %v1522 = vpack.c.b16 %v1470, %v1466
        %v1523 = vpack.c.b16 %v1471, %v1467
        %v1524 = vpack.c.b16 %v1476, %v1472
        %v1525 = vpack.c.b16 %v1477, %v1473
        %v1526 = vpack.c.b16 %v1478, %v1474
        %v1527 = vpack.c.b16 %v1479, %v1475
        %v1528 = vpack.c.b16 %v1484, %v1480
        %v1529 = vpack.c.b16 %v1485, %v1481
        %v1530 = vpack.c.b16 %v1486, %v1482
        %v1531 = vpack.c.b16 %v1487, %v1483
        %v1532 = vpack.c.b16 %v1492, %v1488
        %v1533 = vpack.c.b16 %v1493, %v1489
        %v1534 = vpack.c.b16 %v1494, %v1490
        %v1535 = vpack.c.b16 %v1495, %v1491
        %v1536 = vpack.c.b16 %v1500, %v1496
        %v1537 = vpack.c.b16 %v1501, %v1497
        %v1538 = vpack.c.b16 %v1502, %v1498
        %v1539 = vpack.c.b16 %v1503, %v1499
        %v1540 = vpack.c.b16 %v1508, %v1504
        %v1541 = vpack.c.b16 %v1509, %v1505
        %v1542 = vpack.c.b16 %v1510, %v1506
        %v1543 = vpack.c.b16 %v1511, %v1507
        %v1640 = vunpack.c.l.b16 %v1352
        %v1641 = vunpack.c.l.b16 %v1353
        %v1642 = vunpack.c.l.b16 %v1354
        %v1643 = vunpack.c.l.b16 %v1355
        %v1644 = vunpack.c.l.b16 %v1356
        %v1645 = vunpack.c.l.b16 %v1357
        %v1646 = vunpack.c.l.b16 %v1358
        %v1647 = vunpack.c.l.b16 %v1359
        %v1648 = vunpack.c.l.b16 %v1360
        %v1649 = vunpack.c.l.b16 %v1361
        %v1650 = vunpack.c.l.b16 %v1362
        %v1651 = vunpack.c.l.b16 %v1363
        %v1652 = vunpack.c.l.b16 %v1364
        %v1653 = vunpack.c.l.b16 %v1365
        %v1654 = vunpack.c.l.b16 %v1366
        %v1655 = vunpack.c.l.b16 %v1367
        %v1656 = vunpack.c.l.b16 %v1368
        %v1657 = vunpack.c.l.b16 %v1369
        %v1658 = vunpack.c.l.b16 %v1370
        %v1659 = vunpack.c.l.b16 %v1371
        %v1660 = vunpack.c.l.b16 %v1372
        %v1661 = vunpack.c.l.b16 %v1373
        %v1662 = vunpack.c.l.b16 %v1374
        %v1663 = vunpack.c.l.b16 %v1375
        %v1664 = vunpack.c.l.b16 %v1376
        %v1665 = vunpack.c.l.b16 %v1377
        %v1666 = vunpack.c.l.b16 %v1378
        %v1667 = vunpack.c.l.b16 %v1379
        %v1668 = vunpack.c.l.b16 %v1380
        %v1669 = vunpack.c.l.b16 %v1381
        %v1670 = vunpack.c.l.b16 %v1382
        %v1671 = vunpack.c.l.b16 %v1383
        %v1672 = vunpack.c.l.b16 %v1384
        %v1673 = vunpack.c.l.b16 %v1385
        %v1674 = vunpack.c.l.b16 %v1386
        %v1675 = vunpack.c.l.b16 %v1387
        %v1676 = vunpack.c.l.b16 %v1388
        %v1677 = vunpack.c.l.b16 %v1389
        %v1678 = vunpack.c.l.b16 %v1390
        %v1679 = vunpack.c.l.b16 %v1391
        %v1680 = vunpack.c.l.b16 %v1392
        %v1681 = vunpack.c.l.b16 %v1393
        %v1682 = vunpack.c.l.b16 %v1394
        %v1683 = vunpack.c.l.b16 %v1395
        %v1684 = vunpack.c.l.b16 %v1396
        %v1685 = vunpack.c.l.b16 %v1397
        %v1686 = vunpack.c.l.b16 %v1398
        %v1687 = vunpack.c.l.b16 %v1399
        %v1688 = vunpack.c.l.b16 %v1400
        %v1689 = vunpack.c.l.b16 %v1401
        %v1690 = vunpack.c.l.b16 %v1402
        %v1691 = vunpack.c.l.b16 %v1403
        %v1692 = vunpack.c.l.b16 %v1404
        %v1693 = vunpack.c.l.b16 %v1405
        %v1694 = vunpack.c.l.b16 %v1406
        %v1695 = vunpack.c.l.b16 %v1407
        %v1696 = vunpack.c.l.b16 %v1408
        %v1697 = vunpack.c.l.b16 %v1409
        %v1698 = vunpack.c.l.b16 %v1410
        %v1699 = vunpack.c.l.b16 %v1411
        %v1700 = vunpack.c.l.b16 %v1412
        %v1701 = vunpack.c.l.b16 %v1413
        %v1702 = vunpack.c.l.b16 %v1414
        %v1703 = vunpack.c.l.b16 %v1415
        %v1704 = vpack.c.b16 %v1641, %v1640
        %v1705 = vpack.c.b16 %v1643, %v1642
        %v1706 = vpack.c.b16 %v1645, %v1644
        %v1707 = vpack.c.b16 %v1647, %v1646
        %v1708 = vpack.c.b16 %v1649, %v1648
        %v1709 = vpack.c.b16 %v1651, %v1650
        %v1710 = vpack.c.b16 %v1653, %v1652
        %v1711 = vpack.c.b16 %v1655, %v1654
        %v1712 = vpack.c.b16 %v1657, %v1656
        %v1713 = vpack.c.b16 %v1659, %v1658
        %v1714 = vpack.c.b16 %v1661, %v1660
        %v1715 = vpack.c.b16 %v1663, %v1662
        %v1716 = vpack.c.b16 %v1665, %v1664
        %v1717 = vpack.c.b16 %v1667, %v1666
        %v1718 = vpack.c.b16 %v1669, %v1668
        %v1719 = vpack.c.b16 %v1671, %v1670
        %v1720 = vpack.c.b16 %v1673, %v1672
        %v1721 = vpack.c.b16 %v1675, %v1674
        %v1722 = vpack.c.b16 %v1677, %v1676
        %v1723 = vpack.c.b16 %v1679, %v1678
        %v1724 = vpack.c.b16 %v1681, %v1680
        %v1725 = vpack.c.b16 %v1683, %v1682
        %v1726 = vpack.c.b16 %v1685, %v1684
        %v1727 = vpack.c.b16 %v1687, %v1686
        %v1728 = vpack.c.b16 %v1689, %v1688
        %v1729 = vpack.c.b16 %v1691, %v1690
        %v1730 = vpack.c.b16 %v1693, %v1692
        %v1731 = vpack.c.b16 %v1695, %v1694
        %v1732 = vpack.c.b16 %v1697, %v1696
        %v1733 = vpack.c.b16 %v1699, %v1698
        %v1734 = vpack.c.b16 %v1701, %v1700
        %v1735 = vpack.c.b16 %v1703, %v1702
        %1768 = vmatpush.bf16.msra.mxu0 %v1711
        %1769 = vmatpush.bf16.msra.mxu0 %v1710
        %1770 = vmatpush.bf16.msra.mxu0 %v1709
        %1771 = vmatpush.bf16.msra.mxu0 %v1708
        %1772 = vmatpush.bf16.msra.mxu0 %v1707
        %1773 = vmatpush.bf16.msra.mxu0 %v1706
        %1774 = vmatpush.bf16.msra.mxu0 %v1705
        %1775 = vmatpush.bf16.msra.mxu0 %v1704
        %1776 = vmatmul.bf16.gmra.mxu0 %v1512
        %v1777 = vpop.f32.mrf.mxu0
        %v1778 = vadd.f32 0.0, %v1777
        %v1779 = vpop.f32.mrf.mxu0
        %v1780 = vadd.f32 0.0, %v1779
        %1781 = vmatmul.bf16.gmra.mxu0 %v1516
        %v1782 = vpop.f32.mrf.mxu0
        %v1783 = vadd.f32 0.0, %v1782
        %v1784 = vpop.f32.mrf.mxu0
        %v1785 = vadd.f32 0.0, %v1784
        %1786 = vmatmul.bf16.gmra.mxu0 %v1520
        %v1787 = vpop.f32.mrf.mxu0
        %v1788 = vadd.f32 0.0, %v1787
        %v1789 = vpop.f32.mrf.mxu0
        %v1790 = vadd.f32 0.0, %v1789
        %1791 = vmatmul.bf16.gmra.mxu0 %v1524
        %v1792 = vpop.f32.mrf.mxu0
        %v1793 = vadd.f32 0.0, %v1792
        %v1794 = vpop.f32.mrf.mxu0
        %v1795 = vadd.f32 0.0, %v1794
        %1796 = vmatmul.bf16.gmra.mxu0 %v1528
        %v1797 = vpop.f32.mrf.mxu0
        %v1798 = vadd.f32 0.0, %v1797
        %v1799 = vpop.f32.mrf.mxu0
        %v1800 = vadd.f32 0.0, %v1799
        %1801 = vmatmul.bf16.gmra.mxu0 %v1532
        %v1802 = vpop.f32.mrf.mxu0
        %v1803 = vadd.f32 0.0, %v1802
        %v1804 = vpop.f32.mrf.mxu0
        %v1805 = vadd.f32 0.0, %v1804
        %1806 = vmatmul.bf16.gmra.mxu0 %v1536
        %v1807 = vpop.f32.mrf.mxu0
        %v1808 = vadd.f32 0.0, %v1807
        %v1809 = vpop.f32.mrf.mxu0
        %v1810 = vadd.f32 0.0, %v1809
        %1811 = vmatmul.bf16.gmra.mxu0 %v1540
        %v1812 = vpop.f32.mrf.mxu0
        %v1813 = vadd.f32 0.0, %v1812
        %v1814 = vpop.f32.mrf.mxu0
        %v1815 = vadd.f32 0.0, %v1814
        %1816 = vdwg.mxu0
        %1817 = vmatpush.bf16.msra.mxu0 %v1719
        %1818 = vmatpush.bf16.msra.mxu0 %v1718
        %1819 = vmatpush.bf16.msra.mxu0 %v1717
        %1820 = vmatpush.bf16.msra.mxu0 %v1716
        %1821 = vmatpush.bf16.msra.mxu0 %v1715
        %1822 = vmatpush.bf16.msra.mxu0 %v1714
        %1823 = vmatpush.bf16.msra.mxu0 %v1713
        %1824 = vmatpush.bf16.msra.mxu0 %v1712
        %1825 = vmatmul.bf16.gmra.mxu0 %v1513
        %v1826 = vpop.f32.mrf.mxu0
        %v1827 = vadd.f32 %v1778, %v1826
        %v1828 = vpop.f32.mrf.mxu0
        %v1829 = vadd.f32 %v1780, %v1828
        %1830 = vmatmul.bf16.gmra.mxu0 %v1517
        %v1831 = vpop.f32.mrf.mxu0
        %v1832 = vadd.f32 %v1783, %v1831
        %v1833 = vpop.f32.mrf.mxu0
        %v1834 = vadd.f32 %v1785, %v1833
        %1835 = vmatmul.bf16.gmra.mxu0 %v1521
        %v1836 = vpop.f32.mrf.mxu0
        %v1837 = vadd.f32 %v1788, %v1836
        %v1838 = vpop.f32.mrf.mxu0
        %v1839 = vadd.f32 %v1790, %v1838
        %1840 = vmatmul.bf16.gmra.mxu0 %v1525
        %v1841 = vpop.f32.mrf.mxu0
        %v1842 = vadd.f32 %v1793, %v1841
        %v1843 = vpop.f32.mrf.mxu0
        %v1844 = vadd.f32 %v1795, %v1843
        %1845 = vmatmul.bf16.gmra.mxu0 %v1529
        %v1846 = vpop.f32.mrf.mxu0
        %v1847 = vadd.f32 %v1798, %v1846
        %v1848 = vpop.f32.mrf.mxu0
        %v1849 = vadd.f32 %v1800, %v1848
        %1850 = vmatmul.bf16.gmra.mxu0 %v1533
        %v1851 = vpop.f32.mrf.mxu0
        %v1852 = vadd.f32 %v1803, %v1851
        %v1853 = vpop.f32.mrf.mxu0
        %v1854 = vadd.f32 %v1805, %v1853
        %1855 = vmatmul.bf16.gmra.mxu0 %v1537
        %v1856 = vpop.f32.mrf.mxu0
        %v1857 = vadd.f32 %v1808, %v1856
        %v1858 = vpop.f32.mrf.mxu0
        %v1859 = vadd.f32 %v1810, %v1858
        %1860 = vmatmul.bf16.gmra.mxu0 %v1541
        %v1861 = vpop.f32.mrf.mxu0
        %v1862 = vadd.f32 %v1813, %v1861
        %v1863 = vpop.f32.mrf.mxu0
        %v1864 = vadd.f32 %v1815, %v1863
        %1865 = vdwg.mxu0
        %1866 = vmatpush.bf16.msra.mxu0 %v1727
        %1867 = vmatpush.bf16.msra.mxu0 %v1726
        %1868 = vmatpush.bf16.msra.mxu0 %v1725
        %1869 = vmatpush.bf16.msra.mxu0 %v1724
        %1870 = vmatpush.bf16.msra.mxu0 %v1723
        %1871 = vmatpush.bf16.msra.mxu0 %v1722
        %1872 = vmatpush.bf16.msra.mxu0 %v1721
        %1873 = vmatpush.bf16.msra.mxu0 %v1720
        %1874 = vmatmul.bf16.gmra.mxu0 %v1514
        %v1875 = vpop.f32.mrf.mxu0
        %v1876 = vadd.f32 %v1827, %v1875
        %v1877 = vpop.f32.mrf.mxu0
        %v1878 = vadd.f32 %v1829, %v1877
        %1879 = vmatmul.bf16.gmra.mxu0 %v1518
        %v1880 = vpop.f32.mrf.mxu0
        %v1881 = vadd.f32 %v1832, %v1880
        %v1882 = vpop.f32.mrf.mxu0
        %v1883 = vadd.f32 %v1834, %v1882
        %1884 = vmatmul.bf16.gmra.mxu0 %v1522
        %v1885 = vpop.f32.mrf.mxu0
        %v1886 = vadd.f32 %v1837, %v1885
        %v1887 = vpop.f32.mrf.mxu0
        %v1888 = vadd.f32 %v1839, %v1887
        %1889 = vmatmul.bf16.gmra.mxu0 %v1526
        %v1890 = vpop.f32.mrf.mxu0
        %v1891 = vadd.f32 %v1842, %v1890
        %v1892 = vpop.f32.mrf.mxu0
        %v1893 = vadd.f32 %v1844, %v1892
        %1894 = vmatmul.bf16.gmra.mxu0 %v1530
        %v1895 = vpop.f32.mrf.mxu0
        %v1896 = vadd.f32 %v1847, %v1895
        %v1897 = vpop.f32.mrf.mxu0
        %v1898 = vadd.f32 %v1849, %v1897
        %1899 = vmatmul.bf16.gmra.mxu0 %v1534
        %v1900 = vpop.f32.mrf.mxu0
        %v1901 = vadd.f32 %v1852, %v1900
        %v1902 = vpop.f32.mrf.mxu0
        %v1903 = vadd.f32 %v1854, %v1902
        %1904 = vmatmul.bf16.gmra.mxu0 %v1538
        %v1905 = vpop.f32.mrf.mxu0
        %v1906 = vadd.f32 %v1857, %v1905
        %v1907 = vpop.f32.mrf.mxu0
        %v1908 = vadd.f32 %v1859, %v1907
        %1909 = vmatmul.bf16.gmra.mxu0 %v1542
        %v1910 = vpop.f32.mrf.mxu0
        %v1911 = vadd.f32 %v1862, %v1910
        %v1912 = vpop.f32.mrf.mxu0
        %v1913 = vadd.f32 %v1864, %v1912
        %1914 = vdwg.mxu0
        %1915 = vmatpush.bf16.msra.mxu0 %v1735
        %1916 = vmatpush.bf16.msra.mxu0 %v1734
        %1917 = vmatpush.bf16.msra.mxu0 %v1733
        %1918 = vmatpush.bf16.msra.mxu0 %v1732
        %1919 = vmatpush.bf16.msra.mxu0 %v1731
        %1920 = vmatpush.bf16.msra.mxu0 %v1730
        %1921 = vmatpush.bf16.msra.mxu0 %v1729
        %1922 = vmatpush.bf16.msra.mxu0 %v1728
        %1923 = vmatmul.bf16.gmra.mxu0 %v1515
        %v1924 = vpop.f32.mrf.mxu0
        %v1925 = vadd.f32 %v1876, %v1924
        %v1926 = vpop.f32.mrf.mxu0
        %v1927 = vadd.f32 %v1878, %v1926
        %1928 = vmatmul.bf16.gmra.mxu0 %v1519
        %v1929 = vpop.f32.mrf.mxu0
        %v1930 = vadd.f32 %v1881, %v1929
        %v1931 = vpop.f32.mrf.mxu0
        %v1932 = vadd.f32 %v1883, %v1931
        %1933 = vmatmul.bf16.gmra.mxu0 %v1523
        %v1934 = vpop.f32.mrf.mxu0
        %v1935 = vadd.f32 %v1886, %v1934
        %v1936 = vpop.f32.mrf.mxu0
        %v1937 = vadd.f32 %v1888, %v1936
        %1938 = vmatmul.bf16.gmra.mxu0 %v1527
        %v1939 = vpop.f32.mrf.mxu0
        %v1940 = vadd.f32 %v1891, %v1939
        %v1941 = vpop.f32.mrf.mxu0
        %v1942 = vadd.f32 %v1893, %v1941
        %1943 = vmatmul.bf16.gmra.mxu0 %v1531
        %v1944 = vpop.f32.mrf.mxu0
        %v1945 = vadd.f32 %v1896, %v1944
        %v1946 = vpop.f32.mrf.mxu0
        %v1947 = vadd.f32 %v1898, %v1946
        %1948 = vmatmul.bf16.gmra.mxu0 %v1535
        %v1949 = vpop.f32.mrf.mxu0
        %v1950 = vadd.f32 %v1901, %v1949
        %v1951 = vpop.f32.mrf.mxu0
        %v1952 = vadd.f32 %v1903, %v1951
        %1953 = vmatmul.bf16.gmra.mxu0 %v1539
        %v1954 = vpop.f32.mrf.mxu0
        %v1955 = vadd.f32 %v1906, %v1954
        %v1956 = vpop.f32.mrf.mxu0
        %v1957 = vadd.f32 %v1908, %v1956
        %1958 = vmatmul.bf16.gmra.mxu0 %v1543
        %v1959 = vpop.f32.mrf.mxu0
        %v1960 = vadd.f32 %v1911, %v1959
        %v1961 = vpop.f32.mrf.mxu0
        %v1962 = vadd.f32 %v1913, %v1961
        %1963 = vdwg.mxu0
        %v1964 = vadd.f32 %v1304, %v1925
        %v1965 = vadd.f32 %v1305, %v1927
        %v1966 = vadd.f32 %v1306, %v1930
        %v1967 = vadd.f32 %v1307, %v1932
        %v1968 = vadd.f32 %v1308, %v1935
        %v1969 = vadd.f32 %v1309, %v1937
        %v1970 = vadd.f32 %v1310, %v1940
        %v1971 = vadd.f32 %v1311, %v1942
        %v1972 = vadd.f32 %v1312, %v1945
        %v1973 = vadd.f32 %v1313, %v1947
        %v1974 = vadd.f32 %v1314, %v1950
        %v1975 = vadd.f32 %v1315, %v1952
        %v1976 = vadd.f32 %v1316, %v1955
        %v1977 = vadd.f32 %v1317, %v1957
        %v1978 = vadd.f32 %v1318, %v1960
        %v1979 = vadd.f32 %v1319, %v1962
        %1980 = vst [vmem:[#allocation2 + $0x80] sm:$0xff] %v1964
        %1981 = vst [vmem:[#allocation2 + $0x88] sm:$0xff] %v1965
        %1982 = vst [vmem:[#allocation2 + $0x90] sm:$0xff] %v1966
        %1983 = vst [vmem:[#allocation2 + $0x98] sm:$0xff] %v1967
        %1984 = vst [vmem:[#allocation2 + $0xa0] sm:$0xff] %v1968
        %1985 = vst [vmem:[#allocation2 + $0xa8] sm:$0xff] %v1969
        %1986 = vst [vmem:[#allocation2 + $0xb0] sm:$0xff] %v1970
        %1987 = vst [vmem:[#allocation2 + $0xb8] sm:$0xff] %v1971
        %1988 = vst [vmem:[#allocation2 + $0xc0] sm:$0xff] %v1972
        %1989 = vst [vmem:[#allocation2 + $0xc8] sm:$0xff] %v1973
        %1990 = vst [vmem:[#allocation2 + $0xd0] sm:$0xff] %v1974
        %1991 = vst [vmem:[#allocation2 + $0xd8] sm:$0xff] %v1975
        %1992 = vst [vmem:[#allocation2 + $0xe0] sm:$0xff] %v1976
        %1993 = vst [vmem:[#allocation2 + $0xe8] sm:$0xff] %v1977
        %1994 = vst [vmem:[#allocation2 + $0xf0] sm:$0xff] %v1978
        %1995 = vst [vmem:[#allocation2 + $0xf8] sm:$0xff] %v1979
        %v1996 = vld [vmem:[#allocation2 + $0x100] sm:$0xff]
        %v1997 = vld [vmem:[#allocation2 + $0x108] sm:$0xff]
        %v1998 = vld [vmem:[#allocation2 + $0x110] sm:$0xff]
        %v1999 = vld [vmem:[#allocation2 + $0x118] sm:$0xff]
        %v2000 = vld [vmem:[#allocation2 + $0x120] sm:$0xff]
        %v2001 = vld [vmem:[#allocation2 + $0x128] sm:$0xff]
        %v2002 = vld [vmem:[#allocation2 + $0x130] sm:$0xff]
        %v2003 = vld [vmem:[#allocation2 + $0x138] sm:$0xff]
        %v2004 = vld [vmem:[#allocation2 + $0x140] sm:$0xff]
        %v2005 = vld [vmem:[#allocation2 + $0x148] sm:$0xff]
        %v2006 = vld [vmem:[#allocation2 + $0x150] sm:$0xff]
        %v2007 = vld [vmem:[#allocation2 + $0x158] sm:$0xff]
        %v2008 = vld [vmem:[#allocation2 + $0x160] sm:$0xff]
        %v2009 = vld [vmem:[#allocation2 + $0x168] sm:$0xff]
        %v2010 = vld [vmem:[#allocation2 + $0x170] sm:$0xff]
        %v2011 = vld [vmem:[#allocation2 + $0x178] sm:$0xff]
        %v2012 = vld [vmem:[%s488 + $0x200] sm:$0xff]
        %v2013 = vld [vmem:[%s488 + $0x208] sm:$0xff]
        %v2014 = vld [vmem:[%s488 + $0x210] sm:$0xff]
        %v2015 = vld [vmem:[%s488 + $0x218] sm:$0xff]
        %v2016 = vld [vmem:[%s488 + $0x220] sm:$0xff]
        %v2017 = vld [vmem:[%s488 + $0x228] sm:$0xff]
        %v2018 = vld [vmem:[%s488 + $0x230] sm:$0xff]
        %v2019 = vld [vmem:[%s488 + $0x238] sm:$0xff]
        %v2020 = vld [vmem:[%s488 + $0x240] sm:$0xff]
        %v2021 = vld [vmem:[%s488 + $0x248] sm:$0xff]
        %v2022 = vld [vmem:[%s488 + $0x250] sm:$0xff]
        %v2023 = vld [vmem:[%s488 + $0x258] sm:$0xff]
        %v2024 = vld [vmem:[%s488 + $0x260] sm:$0xff]
        %v2025 = vld [vmem:[%s488 + $0x268] sm:$0xff]
        %v2026 = vld [vmem:[%s488 + $0x270] sm:$0xff]
        %v2027 = vld [vmem:[%s488 + $0x278] sm:$0xff]
        %v2028 = vld [vmem:[%s488 + $0x280] sm:$0xff]
        %v2029 = vld [vmem:[%s488 + $0x288] sm:$0xff]
        %v2030 = vld [vmem:[%s488 + $0x290] sm:$0xff]
        %v2031 = vld [vmem:[%s488 + $0x298] sm:$0xff]
        %v2032 = vld [vmem:[%s488 + $0x2a0] sm:$0xff]
        %v2033 = vld [vmem:[%s488 + $0x2a8] sm:$0xff]
        %v2034 = vld [vmem:[%s488 + $0x2b0] sm:$0xff]
        %v2035 = vld [vmem:[%s488 + $0x2b8] sm:$0xff]
        %v2036 = vld [vmem:[%s488 + $0x2c0] sm:$0xff]
        %v2037 = vld [vmem:[%s488 + $0x2c8] sm:$0xff]
        %v2038 = vld [vmem:[%s488 + $0x2d0] sm:$0xff]
        %v2039 = vld [vmem:[%s488 + $0x2d8] sm:$0xff]
        %v2040 = vld [vmem:[%s488 + $0x2e0] sm:$0xff]
        %v2041 = vld [vmem:[%s488 + $0x2e8] sm:$0xff]
        %v2042 = vld [vmem:[%s488 + $0x2f0] sm:$0xff]
        %v2043 = vld [vmem:[%s488 + $0x2f8] sm:$0xff]
        %v2044 = vld [vmem:[%s532] sm:$0xf]
        %v2045 = vld [vmem:[%s532 + $0x4] sm:$0xf]
        %v2046 = vld [vmem:[%s532 + $0x8] sm:$0xf]
        %v2047 = vld [vmem:[%s532 + $0xc] sm:$0xf]
        %v2048 = vld [vmem:[%s532 + $0x10] sm:$0xf]
        %v2049 = vld [vmem:[%s532 + $0x14] sm:$0xf]
        %v2050 = vld [vmem:[%s532 + $0x18] sm:$0xf]
        %v2051 = vld [vmem:[%s532 + $0x1c] sm:$0xf]
        %v2052 = vld [vmem:[%s532 + $0x20] sm:$0xf]
        %v2053 = vld [vmem:[%s532 + $0x24] sm:$0xf]
        %v2054 = vld [vmem:[%s532 + $0x28] sm:$0xf]
        %v2055 = vld [vmem:[%s532 + $0x2c] sm:$0xf]
        %v2056 = vld [vmem:[%s532 + $0x30] sm:$0xf]
        %v2057 = vld [vmem:[%s532 + $0x34] sm:$0xf]
        %v2058 = vld [vmem:[%s532 + $0x38] sm:$0xf]
        %v2059 = vld [vmem:[%s532 + $0x3c] sm:$0xf]
        %v2060 = vld [vmem:[%s532 + $0x40] sm:$0xf]
        %v2061 = vld [vmem:[%s532 + $0x44] sm:$0xf]
        %v2062 = vld [vmem:[%s532 + $0x48] sm:$0xf]
        %v2063 = vld [vmem:[%s532 + $0x4c] sm:$0xf]
        %v2064 = vld [vmem:[%s532 + $0x50] sm:$0xf]
        %v2065 = vld [vmem:[%s532 + $0x54] sm:$0xf]
        %v2066 = vld [vmem:[%s532 + $0x58] sm:$0xf]
        %v2067 = vld [vmem:[%s532 + $0x5c] sm:$0xf]
        %v2068 = vld [vmem:[%s532 + $0x60] sm:$0xf]
        %v2069 = vld [vmem:[%s532 + $0x64] sm:$0xf]
        %v2070 = vld [vmem:[%s532 + $0x68] sm:$0xf]
        %v2071 = vld [vmem:[%s532 + $0x6c] sm:$0xf]
        %v2072 = vld [vmem:[%s532 + $0x70] sm:$0xf]
        %v2073 = vld [vmem:[%s532 + $0x74] sm:$0xf]
        %v2074 = vld [vmem:[%s532 + $0x78] sm:$0xf]
        %v2075 = vld [vmem:[%s532 + $0x7c] sm:$0xf]
        %v2076 = vld [vmem:[%s532 + $0x80] sm:$0xf]
        %v2077 = vld [vmem:[%s532 + $0x84] sm:$0xf]
        %v2078 = vld [vmem:[%s532 + $0x88] sm:$0xf]
        %v2079 = vld [vmem:[%s532 + $0x8c] sm:$0xf]
        %v2080 = vld [vmem:[%s532 + $0x90] sm:$0xf]
        %v2081 = vld [vmem:[%s532 + $0x94] sm:$0xf]
        %v2082 = vld [vmem:[%s532 + $0x98] sm:$0xf]
        %v2083 = vld [vmem:[%s532 + $0x9c] sm:$0xf]
        %v2084 = vld [vmem:[%s532 + $0xa0] sm:$0xf]
        %v2085 = vld [vmem:[%s532 + $0xa4] sm:$0xf]
        %v2086 = vld [vmem:[%s532 + $0xa8] sm:$0xf]
        %v2087 = vld [vmem:[%s532 + $0xac] sm:$0xf]
        %v2088 = vld [vmem:[%s532 + $0xb0] sm:$0xf]
        %v2089 = vld [vmem:[%s532 + $0xb4] sm:$0xf]
        %v2090 = vld [vmem:[%s532 + $0xb8] sm:$0xf]
        %v2091 = vld [vmem:[%s532 + $0xbc] sm:$0xf]
        %v2092 = vld [vmem:[%s532 + $0xc0] sm:$0xf]
        %v2093 = vld [vmem:[%s532 + $0xc4] sm:$0xf]
        %v2094 = vld [vmem:[%s532 + $0xc8] sm:$0xf]
        %v2095 = vld [vmem:[%s532 + $0xcc] sm:$0xf]
        %v2096 = vld [vmem:[%s532 + $0xd0] sm:$0xf]
        %v2097 = vld [vmem:[%s532 + $0xd4] sm:$0xf]
        %v2098 = vld [vmem:[%s532 + $0xd8] sm:$0xf]
        %v2099 = vld [vmem:[%s532 + $0xdc] sm:$0xf]
        %v2100 = vld [vmem:[%s532 + $0xe0] sm:$0xf]
        %v2101 = vld [vmem:[%s532 + $0xe4] sm:$0xf]
        %v2102 = vld [vmem:[%s532 + $0xe8] sm:$0xf]
        %v2103 = vld [vmem:[%s532 + $0xec] sm:$0xf]
        %v2104 = vld [vmem:[%s532 + $0xf0] sm:$0xf]
        %v2105 = vld [vmem:[%s532 + $0xf4] sm:$0xf]
        %v2106 = vld [vmem:[%s532 + $0xf8] sm:$0xf]
        %v2107 = vld [vmem:[%s532 + $0xfc] sm:$0xf]
        %v2140 = vunpack.c.l.b16 %v2012
        %v2141 = vunpack.c.h.b16 %v2012
        %v2142 = vunpack.c.l.b16 %v2013
        %v2143 = vunpack.c.h.b16 %v2013
        %v2144 = vunpack.c.l.b16 %v2014
        %v2145 = vunpack.c.h.b16 %v2014
        %v2146 = vunpack.c.l.b16 %v2015
        %v2147 = vunpack.c.h.b16 %v2015
        %v2148 = vunpack.c.l.b16 %v2016
        %v2149 = vunpack.c.h.b16 %v2016
        %v2150 = vunpack.c.l.b16 %v2017
        %v2151 = vunpack.c.h.b16 %v2017
        %v2152 = vunpack.c.l.b16 %v2018
        %v2153 = vunpack.c.h.b16 %v2018
        %v2154 = vunpack.c.l.b16 %v2019
        %v2155 = vunpack.c.h.b16 %v2019
        %v2156 = vunpack.c.l.b16 %v2020
        %v2157 = vunpack.c.h.b16 %v2020
        %v2158 = vunpack.c.l.b16 %v2021
        %v2159 = vunpack.c.h.b16 %v2021
        %v2160 = vunpack.c.l.b16 %v2022
        %v2161 = vunpack.c.h.b16 %v2022
        %v2162 = vunpack.c.l.b16 %v2023
        %v2163 = vunpack.c.h.b16 %v2023
        %v2164 = vunpack.c.l.b16 %v2024
        %v2165 = vunpack.c.h.b16 %v2024
        %v2166 = vunpack.c.l.b16 %v2025
        %v2167 = vunpack.c.h.b16 %v2025
        %v2168 = vunpack.c.l.b16 %v2026
        %v2169 = vunpack.c.h.b16 %v2026
        %v2170 = vunpack.c.l.b16 %v2027
        %v2171 = vunpack.c.h.b16 %v2027
        %v2172 = vunpack.c.l.b16 %v2028
        %v2173 = vunpack.c.h.b16 %v2028
        %v2174 = vunpack.c.l.b16 %v2029
        %v2175 = vunpack.c.h.b16 %v2029
        %v2176 = vunpack.c.l.b16 %v2030
        %v2177 = vunpack.c.h.b16 %v2030
        %v2178 = vunpack.c.l.b16 %v2031
        %v2179 = vunpack.c.h.b16 %v2031
        %v2180 = vunpack.c.l.b16 %v2032
        %v2181 = vunpack.c.h.b16 %v2032
        %v2182 = vunpack.c.l.b16 %v2033
        %v2183 = vunpack.c.h.b16 %v2033
        %v2184 = vunpack.c.l.b16 %v2034
        %v2185 = vunpack.c.h.b16 %v2034
        %v2186 = vunpack.c.l.b16 %v2035
        %v2187 = vunpack.c.h.b16 %v2035
        %v2188 = vunpack.c.l.b16 %v2036
        %v2189 = vunpack.c.h.b16 %v2036
        %v2190 = vunpack.c.l.b16 %v2037
        %v2191 = vunpack.c.h.b16 %v2037
        %v2192 = vunpack.c.l.b16 %v2038
        %v2193 = vunpack.c.h.b16 %v2038
        %v2194 = vunpack.c.l.b16 %v2039
        %v2195 = vunpack.c.h.b16 %v2039
        %v2196 = vunpack.c.l.b16 %v2040
        %v2197 = vunpack.c.h.b16 %v2040
        %v2198 = vunpack.c.l.b16 %v2041
        %v2199 = vunpack.c.h.b16 %v2041
        %v2200 = vunpack.c.l.b16 %v2042
        %v2201 = vunpack.c.h.b16 %v2042
        %v2202 = vunpack.c.l.b16 %v2043
        %v2203 = vunpack.c.h.b16 %v2043
        %v2204 = vpack.c.b16 %v2144, %v2140
        %v2205 = vpack.c.b16 %v2145, %v2141
        %v2206 = vpack.c.b16 %v2146, %v2142
        %v2207 = vpack.c.b16 %v2147, %v2143
        %v2208 = vpack.c.b16 %v2152, %v2148
        %v2209 = vpack.c.b16 %v2153, %v2149
        %v2210 = vpack.c.b16 %v2154, %v2150
        %v2211 = vpack.c.b16 %v2155, %v2151
        %v2212 = vpack.c.b16 %v2160, %v2156
        %v2213 = vpack.c.b16 %v2161, %v2157
        %v2214 = vpack.c.b16 %v2162, %v2158
        %v2215 = vpack.c.b16 %v2163, %v2159
        %v2216 = vpack.c.b16 %v2168, %v2164
        %v2217 = vpack.c.b16 %v2169, %v2165
        %v2218 = vpack.c.b16 %v2170, %v2166
        %v2219 = vpack.c.b16 %v2171, %v2167
        %v2220 = vpack.c.b16 %v2176, %v2172
        %v2221 = vpack.c.b16 %v2177, %v2173
        %v2222 = vpack.c.b16 %v2178, %v2174
        %v2223 = vpack.c.b16 %v2179, %v2175
        %v2224 = vpack.c.b16 %v2184, %v2180
        %v2225 = vpack.c.b16 %v2185, %v2181
        %v2226 = vpack.c.b16 %v2186, %v2182
        %v2227 = vpack.c.b16 %v2187, %v2183
        %v2228 = vpack.c.b16 %v2192, %v2188
        %v2229 = vpack.c.b16 %v2193, %v2189
        %v2230 = vpack.c.b16 %v2194, %v2190
        %v2231 = vpack.c.b16 %v2195, %v2191
        %v2232 = vpack.c.b16 %v2200, %v2196
        %v2233 = vpack.c.b16 %v2201, %v2197
        %v2234 = vpack.c.b16 %v2202, %v2198
        %v2235 = vpack.c.b16 %v2203, %v2199
        %v2332 = vunpack.c.l.b16 %v2044
        %v2333 = vunpack.c.l.b16 %v2045
        %v2334 = vunpack.c.l.b16 %v2046
        %v2335 = vunpack.c.l.b16 %v2047
        %v2336 = vunpack.c.l.b16 %v2048
        %v2337 = vunpack.c.l.b16 %v2049
        %v2338 = vunpack.c.l.b16 %v2050
        %v2339 = vunpack.c.l.b16 %v2051
        %v2340 = vunpack.c.l.b16 %v2052
        %v2341 = vunpack.c.l.b16 %v2053
        %v2342 = vunpack.c.l.b16 %v2054
        %v2343 = vunpack.c.l.b16 %v2055
        %v2344 = vunpack.c.l.b16 %v2056
        %v2345 = vunpack.c.l.b16 %v2057
        %v2346 = vunpack.c.l.b16 %v2058
        %v2347 = vunpack.c.l.b16 %v2059
        %v2348 = vunpack.c.l.b16 %v2060
        %v2349 = vunpack.c.l.b16 %v2061
        %v2350 = vunpack.c.l.b16 %v2062
        %v2351 = vunpack.c.l.b16 %v2063
        %v2352 = vunpack.c.l.b16 %v2064
        %v2353 = vunpack.c.l.b16 %v2065
        %v2354 = vunpack.c.l.b16 %v2066
        %v2355 = vunpack.c.l.b16 %v2067
        %v2356 = vunpack.c.l.b16 %v2068
        %v2357 = vunpack.c.l.b16 %v2069
        %v2358 = vunpack.c.l.b16 %v2070
        %v2359 = vunpack.c.l.b16 %v2071
        %v2360 = vunpack.c.l.b16 %v2072
        %v2361 = vunpack.c.l.b16 %v2073
        %v2362 = vunpack.c.l.b16 %v2074
        %v2363 = vunpack.c.l.b16 %v2075
        %v2364 = vunpack.c.l.b16 %v2076
        %v2365 = vunpack.c.l.b16 %v2077
        %v2366 = vunpack.c.l.b16 %v2078
        %v2367 = vunpack.c.l.b16 %v2079
        %v2368 = vunpack.c.l.b16 %v2080
        %v2369 = vunpack.c.l.b16 %v2081
        %v2370 = vunpack.c.l.b16 %v2082
        %v2371 = vunpack.c.l.b16 %v2083
        %v2372 = vunpack.c.l.b16 %v2084
        %v2373 = vunpack.c.l.b16 %v2085
        %v2374 = vunpack.c.l.b16 %v2086
        %v2375 = vunpack.c.l.b16 %v2087
        %v2376 = vunpack.c.l.b16 %v2088
        %v2377 = vunpack.c.l.b16 %v2089
        %v2378 = vunpack.c.l.b16 %v2090
        %v2379 = vunpack.c.l.b16 %v2091
        %v2380 = vunpack.c.l.b16 %v2092
        %v2381 = vunpack.c.l.b16 %v2093
        %v2382 = vunpack.c.l.b16 %v2094
        %v2383 = vunpack.c.l.b16 %v2095
        %v2384 = vunpack.c.l.b16 %v2096
        %v2385 = vunpack.c.l.b16 %v2097
        %v2386 = vunpack.c.l.b16 %v2098
        %v2387 = vunpack.c.l.b16 %v2099
        %v2388 = vunpack.c.l.b16 %v2100
        %v2389 = vunpack.c.l.b16 %v2101
        %v2390 = vunpack.c.l.b16 %v2102
        %v2391 = vunpack.c.l.b16 %v2103
        %v2392 = vunpack.c.l.b16 %v2104
        %v2393 = vunpack.c.l.b16 %v2105
        %v2394 = vunpack.c.l.b16 %v2106
        %v2395 = vunpack.c.l.b16 %v2107
        %v2396 = vpack.c.b16 %v2333, %v2332
        %v2397 = vpack.c.b16 %v2335, %v2334
        %v2398 = vpack.c.b16 %v2337, %v2336
        %v2399 = vpack.c.b16 %v2339, %v2338
        %v2400 = vpack.c.b16 %v2341, %v2340
        %v2401 = vpack.c.b16 %v2343, %v2342
        %v2402 = vpack.c.b16 %v2345, %v2344
        %v2403 = vpack.c.b16 %v2347, %v2346
        %v2404 = vpack.c.b16 %v2349, %v2348
        %v2405 = vpack.c.b16 %v2351, %v2350
        %v2406 = vpack.c.b16 %v2353, %v2352
        %v2407 = vpack.c.b16 %v2355, %v2354
        %v2408 = vpack.c.b16 %v2357, %v2356
        %v2409 = vpack.c.b16 %v2359, %v2358
        %v2410 = vpack.c.b16 %v2361, %v2360
        %v2411 = vpack.c.b16 %v2363, %v2362
        %v2412 = vpack.c.b16 %v2365, %v2364
        %v2413 = vpack.c.b16 %v2367, %v2366
        %v2414 = vpack.c.b16 %v2369, %v2368
        %v2415 = vpack.c.b16 %v2371, %v2370
        %v2416 = vpack.c.b16 %v2373, %v2372
        %v2417 = vpack.c.b16 %v2375, %v2374
        %v2418 = vpack.c.b16 %v2377, %v2376
        %v2419 = vpack.c.b16 %v2379, %v2378
        %v2420 = vpack.c.b16 %v2381, %v2380
        %v2421 = vpack.c.b16 %v2383, %v2382
        %v2422 = vpack.c.b16 %v2385, %v2384
        %v2423 = vpack.c.b16 %v2387, %v2386
        %v2424 = vpack.c.b16 %v2389, %v2388
        %v2425 = vpack.c.b16 %v2391, %v2390
        %v2426 = vpack.c.b16 %v2393, %v2392
        %v2427 = vpack.c.b16 %v2395, %v2394
        %2460 = vmatpush.bf16.msra.mxu0 %v2403
        %2461 = vmatpush.bf16.msra.mxu0 %v2402
        %2462 = vmatpush.bf16.msra.mxu0 %v2401
        %2463 = vmatpush.bf16.msra.mxu0 %v2400
        %2464 = vmatpush.bf16.msra.mxu0 %v2399
        %2465 = vmatpush.bf16.msra.mxu0 %v2398
        %2466 = vmatpush.bf16.msra.mxu0 %v2397
        %2467 = vmatpush.bf16.msra.mxu0 %v2396
        %2468 = vmatmul.bf16.gmra.mxu0 %v2204
        %v2469 = vpop.f32.mrf.mxu0
        %v2470 = vadd.f32 0.0, %v2469
        %v2471 = vpop.f32.mrf.mxu0
        %v2472 = vadd.f32 0.0, %v2471
        %2473 = vmatmul.bf16.gmra.mxu0 %v2208
        %v2474 = vpop.f32.mrf.mxu0
        %v2475 = vadd.f32 0.0, %v2474
        %v2476 = vpop.f32.mrf.mxu0
        %v2477 = vadd.f32 0.0, %v2476
        %2478 = vmatmul.bf16.gmra.mxu0 %v2212
        %v2479 = vpop.f32.mrf.mxu0
        %v2480 = vadd.f32 0.0, %v2479
        %v2481 = vpop.f32.mrf.mxu0
        %v2482 = vadd.f32 0.0, %v2481
        %2483 = vmatmul.bf16.gmra.mxu0 %v2216
        %v2484 = vpop.f32.mrf.mxu0
        %v2485 = vadd.f32 0.0, %v2484
        %v2486 = vpop.f32.mrf.mxu0
        %v2487 = vadd.f32 0.0, %v2486
        %2488 = vmatmul.bf16.gmra.mxu0 %v2220
        %v2489 = vpop.f32.mrf.mxu0
        %v2490 = vadd.f32 0.0, %v2489
        %v2491 = vpop.f32.mrf.mxu0
        %v2492 = vadd.f32 0.0, %v2491
        %2493 = vmatmul.bf16.gmra.mxu0 %v2224
        %v2494 = vpop.f32.mrf.mxu0
        %v2495 = vadd.f32 0.0, %v2494
        %v2496 = vpop.f32.mrf.mxu0
        %v2497 = vadd.f32 0.0, %v2496
        %2498 = vmatmul.bf16.gmra.mxu0 %v2228
        %v2499 = vpop.f32.mrf.mxu0
        %v2500 = vadd.f32 0.0, %v2499
        %v2501 = vpop.f32.mrf.mxu0
        %v2502 = vadd.f32 0.0, %v2501
        %2503 = vmatmul.bf16.gmra.mxu0 %v2232
        %v2504 = vpop.f32.mrf.mxu0
        %v2505 = vadd.f32 0.0, %v2504
        %v2506 = vpop.f32.mrf.mxu0
        %v2507 = vadd.f32 0.0, %v2506
        %2508 = vdwg.mxu0
        %2509 = vmatpush.bf16.msra.mxu0 %v2411
        %2510 = vmatpush.bf16.msra.mxu0 %v2410
        %2511 = vmatpush.bf16.msra.mxu0 %v2409
        %2512 = vmatpush.bf16.msra.mxu0 %v2408
        %2513 = vmatpush.bf16.msra.mxu0 %v2407
        %2514 = vmatpush.bf16.msra.mxu0 %v2406
        %2515 = vmatpush.bf16.msra.mxu0 %v2405
        %2516 = vmatpush.bf16.msra.mxu0 %v2404
        %2517 = vmatmul.bf16.gmra.mxu0 %v2205
        %v2518 = vpop.f32.mrf.mxu0
        %v2519 = vadd.f32 %v2470, %v2518
        %v2520 = vpop.f32.mrf.mxu0
        %v2521 = vadd.f32 %v2472, %v2520
        %2522 = vmatmul.bf16.gmra.mxu0 %v2209
        %v2523 = vpop.f32.mrf.mxu0
        %v2524 = vadd.f32 %v2475, %v2523
        %v2525 = vpop.f32.mrf.mxu0
        %v2526 = vadd.f32 %v2477, %v2525
        %2527 = vmatmul.bf16.gmra.mxu0 %v2213
        %v2528 = vpop.f32.mrf.mxu0
        %v2529 = vadd.f32 %v2480, %v2528
        %v2530 = vpop.f32.mrf.mxu0
        %v2531 = vadd.f32 %v2482, %v2530
        %2532 = vmatmul.bf16.gmra.mxu0 %v2217
        %v2533 = vpop.f32.mrf.mxu0
        %v2534 = vadd.f32 %v2485, %v2533
        %v2535 = vpop.f32.mrf.mxu0
        %v2536 = vadd.f32 %v2487, %v2535
        %2537 = vmatmul.bf16.gmra.mxu0 %v2221
        %v2538 = vpop.f32.mrf.mxu0
        %v2539 = vadd.f32 %v2490, %v2538
        %v2540 = vpop.f32.mrf.mxu0
        %v2541 = vadd.f32 %v2492, %v2540
        %2542 = vmatmul.bf16.gmra.mxu0 %v2225
        %v2543 = vpop.f32.mrf.mxu0
        %v2544 = vadd.f32 %v2495, %v2543
        %v2545 = vpop.f32.mrf.mxu0
        %v2546 = vadd.f32 %v2497, %v2545
        %2547 = vmatmul.bf16.gmra.mxu0 %v2229
        %v2548 = vpop.f32.mrf.mxu0
        %v2549 = vadd.f32 %v2500, %v2548
        %v2550 = vpop.f32.mrf.mxu0
        %v2551 = vadd.f32 %v2502, %v2550
        %2552 = vmatmul.bf16.gmra.mxu0 %v2233
        %v2553 = vpop.f32.mrf.mxu0
        %v2554 = vadd.f32 %v2505, %v2553
        %v2555 = vpop.f32.mrf.mxu0
        %v2556 = vadd.f32 %v2507, %v2555
        %2557 = vdwg.mxu0
        %2558 = vmatpush.bf16.msra.mxu0 %v2419
        %2559 = vmatpush.bf16.msra.mxu0 %v2418
        %2560 = vmatpush.bf16.msra.mxu0 %v2417
        %2561 = vmatpush.bf16.msra.mxu0 %v2416
        %2562 = vmatpush.bf16.msra.mxu0 %v2415
        %2563 = vmatpush.bf16.msra.mxu0 %v2414
        %2564 = vmatpush.bf16.msra.mxu0 %v2413
        %2565 = vmatpush.bf16.msra.mxu0 %v2412
        %2566 = vmatmul.bf16.gmra.mxu0 %v2206
        %v2567 = vpop.f32.mrf.mxu0
        %v2568 = vadd.f32 %v2519, %v2567
        %v2569 = vpop.f32.mrf.mxu0
        %v2570 = vadd.f32 %v2521, %v2569
        %2571 = vmatmul.bf16.gmra.mxu0 %v2210
        %v2572 = vpop.f32.mrf.mxu0
        %v2573 = vadd.f32 %v2524, %v2572
        %v2574 = vpop.f32.mrf.mxu0
        %v2575 = vadd.f32 %v2526, %v2574
        %2576 = vmatmul.bf16.gmra.mxu0 %v2214
        %v2577 = vpop.f32.mrf.mxu0
        %v2578 = vadd.f32 %v2529, %v2577
        %v2579 = vpop.f32.mrf.mxu0
        %v2580 = vadd.f32 %v2531, %v2579
        %2581 = vmatmul.bf16.gmra.mxu0 %v2218
        %v2582 = vpop.f32.mrf.mxu0
        %v2583 = vadd.f32 %v2534, %v2582
        %v2584 = vpop.f32.mrf.mxu0
        %v2585 = vadd.f32 %v2536, %v2584
        %2586 = vmatmul.bf16.gmra.mxu0 %v2222
        %v2587 = vpop.f32.mrf.mxu0
        %v2588 = vadd.f32 %v2539, %v2587
        %v2589 = vpop.f32.mrf.mxu0
        %v2590 = vadd.f32 %v2541, %v2589
        %2591 = vmatmul.bf16.gmra.mxu0 %v2226
        %v2592 = vpop.f32.mrf.mxu0
        %v2593 = vadd.f32 %v2544, %v2592
        %v2594 = vpop.f32.mrf.mxu0
        %v2595 = vadd.f32 %v2546, %v2594
        %2596 = vmatmul.bf16.gmra.mxu0 %v2230
        %v2597 = vpop.f32.mrf.mxu0
        %v2598 = vadd.f32 %v2549, %v2597
        %v2599 = vpop.f32.mrf.mxu0
        %v2600 = vadd.f32 %v2551, %v2599
        %2601 = vmatmul.bf16.gmra.mxu0 %v2234
        %v2602 = vpop.f32.mrf.mxu0
        %v2603 = vadd.f32 %v2554, %v2602
        %v2604 = vpop.f32.mrf.mxu0
        %v2605 = vadd.f32 %v2556, %v2604
        %2606 = vdwg.mxu0
        %2607 = vmatpush.bf16.msra.mxu0 %v2427
        %2608 = vmatpush.bf16.msra.mxu0 %v2426
        %2609 = vmatpush.bf16.msra.mxu0 %v2425
        %2610 = vmatpush.bf16.msra.mxu0 %v2424
        %2611 = vmatpush.bf16.msra.mxu0 %v2423
        %2612 = vmatpush.bf16.msra.mxu0 %v2422
        %2613 = vmatpush.bf16.msra.mxu0 %v2421
        %2614 = vmatpush.bf16.msra.mxu0 %v2420
        %2615 = vmatmul.bf16.gmra.mxu0 %v2207
        %v2616 = vpop.f32.mrf.mxu0
        %v2617 = vadd.f32 %v2568, %v2616
        %v2618 = vpop.f32.mrf.mxu0
        %v2619 = vadd.f32 %v2570, %v2618
        %2620 = vmatmul.bf16.gmra.mxu0 %v2211
        %v2621 = vpop.f32.mrf.mxu0
        %v2622 = vadd.f32 %v2573, %v2621
        %v2623 = vpop.f32.mrf.mxu0
        %v2624 = vadd.f32 %v2575, %v2623
        %2625 = vmatmul.bf16.gmra.mxu0 %v2215
        %v2626 = vpop.f32.mrf.mxu0
        %v2627 = vadd.f32 %v2578, %v2626
        %v2628 = vpop.f32.mrf.mxu0
        %v2629 = vadd.f32 %v2580, %v2628
        %2630 = vmatmul.bf16.gmra.mxu0 %v2219
        %v2631 = vpop.f32.mrf.mxu0
        %v2632 = vadd.f32 %v2583, %v2631
        %v2633 = vpop.f32.mrf.mxu0
        %v2634 = vadd.f32 %v2585, %v2633
        %2635 = vmatmul.bf16.gmra.mxu0 %v2223
        %v2636 = vpop.f32.mrf.mxu0
        %v2637 = vadd.f32 %v2588, %v2636
        %v2638 = vpop.f32.mrf.mxu0
        %v2639 = vadd.f32 %v2590, %v2638
        %2640 = vmatmul.bf16.gmra.mxu0 %v2227
        %v2641 = vpop.f32.mrf.mxu0
        %v2642 = vadd.f32 %v2593, %v2641
        %v2643 = vpop.f32.mrf.mxu0
        %v2644 = vadd.f32 %v2595, %v2643
        %2645 = vmatmul.bf16.gmra.mxu0 %v2231
        %v2646 = vpop.f32.mrf.mxu0
        %v2647 = vadd.f32 %v2598, %v2646
        %v2648 = vpop.f32.mrf.mxu0
        %v2649 = vadd.f32 %v2600, %v2648
        %2650 = vmatmul.bf16.gmra.mxu0 %v2235
        %v2651 = vpop.f32.mrf.mxu0
        %v2652 = vadd.f32 %v2603, %v2651
        %v2653 = vpop.f32.mrf.mxu0
        %v2654 = vadd.f32 %v2605, %v2653
        %2655 = vdwg.mxu0
        %v2656 = vadd.f32 %v1996, %v2617
        %v2657 = vadd.f32 %v1997, %v2619
        %v2658 = vadd.f32 %v1998, %v2622
        %v2659 = vadd.f32 %v1999, %v2624
        %v2660 = vadd.f32 %v2000, %v2627
        %v2661 = vadd.f32 %v2001, %v2629
        %v2662 = vadd.f32 %v2002, %v2632
        %v2663 = vadd.f32 %v2003, %v2634
        %v2664 = vadd.f32 %v2004, %v2637
        %v2665 = vadd.f32 %v2005, %v2639
        %v2666 = vadd.f32 %v2006, %v2642
        %v2667 = vadd.f32 %v2007, %v2644
        %v2668 = vadd.f32 %v2008, %v2647
        %v2669 = vadd.f32 %v2009, %v2649
        %v2670 = vadd.f32 %v2010, %v2652
        %v2671 = vadd.f32 %v2011, %v2654
        %2672 = vst [vmem:[#allocation2 + $0x100] sm:$0xff] %v2656
        %2673 = vst [vmem:[#allocation2 + $0x108] sm:$0xff] %v2657
        %2674 = vst [vmem:[#allocation2 + $0x110] sm:$0xff] %v2658
        %2675 = vst [vmem:[#allocation2 + $0x118] sm:$0xff] %v2659
        %2676 = vst [vmem:[#allocation2 + $0x120] sm:$0xff] %v2660
        %2677 = vst [vmem:[#allocation2 + $0x128] sm:$0xff] %v2661
        %2678 = vst [vmem:[#allocation2 + $0x130] sm:$0xff] %v2662
        %2679 = vst [vmem:[#allocation2 + $0x138] sm:$0xff] %v2663
        %2680 = vst [vmem:[#allocation2 + $0x140] sm:$0xff] %v2664
        %2681 = vst [vmem:[#allocation2 + $0x148] sm:$0xff] %v2665
        %2682 = vst [vmem:[#allocation2 + $0x150] sm:$0xff] %v2666
        %2683 = vst [vmem:[#allocation2 + $0x158] sm:$0xff] %v2667
        %2684 = vst [vmem:[#allocation2 + $0x160] sm:$0xff] %v2668
        %2685 = vst [vmem:[#allocation2 + $0x168] sm:$0xff] %v2669
        %2686 = vst [vmem:[#allocation2 + $0x170] sm:$0xff] %v2670
        %2687 = vst [vmem:[#allocation2 + $0x178] sm:$0xff] %v2671
        %v2688 = vld [vmem:[#allocation2 + $0x180] sm:$0xff]
        %v2689 = vld [vmem:[#allocation2 + $0x188] sm:$0xff]
        %v2690 = vld [vmem:[#allocation2 + $0x190] sm:$0xff]
        %v2691 = vld [vmem:[#allocation2 + $0x198] sm:$0xff]
        %v2692 = vld [vmem:[#allocation2 + $0x1a0] sm:$0xff]
        %v2693 = vld [vmem:[#allocation2 + $0x1a8] sm:$0xff]
        %v2694 = vld [vmem:[#allocation2 + $0x1b0] sm:$0xff]
        %v2695 = vld [vmem:[#allocation2 + $0x1b8] sm:$0xff]
        %v2696 = vld [vmem:[#allocation2 + $0x1c0] sm:$0xff]
        %v2697 = vld [vmem:[#allocation2 + $0x1c8] sm:$0xff]
        %v2698 = vld [vmem:[#allocation2 + $0x1d0] sm:$0xff]
        %v2699 = vld [vmem:[#allocation2 + $0x1d8] sm:$0xff]
        %v2700 = vld [vmem:[#allocation2 + $0x1e0] sm:$0xff]
        %v2701 = vld [vmem:[#allocation2 + $0x1e8] sm:$0xff]
        %v2702 = vld [vmem:[#allocation2 + $0x1f0] sm:$0xff]
        %v2703 = vld [vmem:[#allocation2 + $0x1f8] sm:$0xff]
        %v2704 = vld [vmem:[%s488 + $0x300] sm:$0xff]
        %v2705 = vld [vmem:[%s488 + $0x308] sm:$0xff]
        %v2706 = vld [vmem:[%s488 + $0x310] sm:$0xff]
        %v2707 = vld [vmem:[%s488 + $0x318] sm:$0xff]
        %v2708 = vld [vmem:[%s488 + $0x320] sm:$0xff]
        %v2709 = vld [vmem:[%s488 + $0x328] sm:$0xff]
        %v2710 = vld [vmem:[%s488 + $0x330] sm:$0xff]
        %v2711 = vld [vmem:[%s488 + $0x338] sm:$0xff]
        %v2712 = vld [vmem:[%s488 + $0x340] sm:$0xff]
        %v2713 = vld [vmem:[%s488 + $0x348] sm:$0xff]
        %v2714 = vld [vmem:[%s488 + $0x350] sm:$0xff]
        %v2715 = vld [vmem:[%s488 + $0x358] sm:$0xff]
        %v2716 = vld [vmem:[%s488 + $0x360] sm:$0xff]
        %v2717 = vld [vmem:[%s488 + $0x368] sm:$0xff]
        %v2718 = vld [vmem:[%s488 + $0x370] sm:$0xff]
        %v2719 = vld [vmem:[%s488 + $0x378] sm:$0xff]
        %v2720 = vld [vmem:[%s488 + $0x380] sm:$0xff]
        %v2721 = vld [vmem:[%s488 + $0x388] sm:$0xff]
        %v2722 = vld [vmem:[%s488 + $0x390] sm:$0xff]
        %v2723 = vld [vmem:[%s488 + $0x398] sm:$0xff]
        %v2724 = vld [vmem:[%s488 + $0x3a0] sm:$0xff]
        %v2725 = vld [vmem:[%s488 + $0x3a8] sm:$0xff]
        %v2726 = vld [vmem:[%s488 + $0x3b0] sm:$0xff]
        %v2727 = vld [vmem:[%s488 + $0x3b8] sm:$0xff]
        %v2728 = vld [vmem:[%s488 + $0x3c0] sm:$0xff]
        %v2729 = vld [vmem:[%s488 + $0x3c8] sm:$0xff]
        %v2730 = vld [vmem:[%s488 + $0x3d0] sm:$0xff]
        %v2731 = vld [vmem:[%s488 + $0x3d8] sm:$0xff]
        %v2732 = vld [vmem:[%s488 + $0x3e0] sm:$0xff]
        %v2733 = vld [vmem:[%s488 + $0x3e8] sm:$0xff]
        %v2734 = vld [vmem:[%s488 + $0x3f0] sm:$0xff]
        %v2735 = vld [vmem:[%s488 + $0x3f8] sm:$0xff]
        %v2736 = vld [vmem:[%s532] sm:$0xf]
        %v2737 = vld [vmem:[%s532 + $0x4] sm:$0xf]
        %v2738 = vld [vmem:[%s532 + $0x8] sm:$0xf]
        %v2739 = vld [vmem:[%s532 + $0xc] sm:$0xf]
        %v2740 = vld [vmem:[%s532 + $0x10] sm:$0xf]
        %v2741 = vld [vmem:[%s532 + $0x14] sm:$0xf]
        %v2742 = vld [vmem:[%s532 + $0x18] sm:$0xf]
        %v2743 = vld [vmem:[%s532 + $0x1c] sm:$0xf]
        %v2744 = vld [vmem:[%s532 + $0x20] sm:$0xf]
        %v2745 = vld [vmem:[%s532 + $0x24] sm:$0xf]
        %v2746 = vld [vmem:[%s532 + $0x28] sm:$0xf]
        %v2747 = vld [vmem:[%s532 + $0x2c] sm:$0xf]
        %v2748 = vld [vmem:[%s532 + $0x30] sm:$0xf]
        %v2749 = vld [vmem:[%s532 + $0x34] sm:$0xf]
        %v2750 = vld [vmem:[%s532 + $0x38] sm:$0xf]
        %v2751 = vld [vmem:[%s532 + $0x3c] sm:$0xf]
        %v2752 = vld [vmem:[%s532 + $0x40] sm:$0xf]
        %v2753 = vld [vmem:[%s532 + $0x44] sm:$0xf]
        %v2754 = vld [vmem:[%s532 + $0x48] sm:$0xf]
        %v2755 = vld [vmem:[%s532 + $0x4c] sm:$0xf]
        %v2756 = vld [vmem:[%s532 + $0x50] sm:$0xf]
        %v2757 = vld [vmem:[%s532 + $0x54] sm:$0xf]
        %v2758 = vld [vmem:[%s532 + $0x58] sm:$0xf]
        %v2759 = vld [vmem:[%s532 + $0x5c] sm:$0xf]
        %v2760 = vld [vmem:[%s532 + $0x60] sm:$0xf]
        %v2761 = vld [vmem:[%s532 + $0x64] sm:$0xf]
        %v2762 = vld [vmem:[%s532 + $0x68] sm:$0xf]
        %v2763 = vld [vmem:[%s532 + $0x6c] sm:$0xf]
        %v2764 = vld [vmem:[%s532 + $0x70] sm:$0xf]
        %v2765 = vld [vmem:[%s532 + $0x74] sm:$0xf]
        %v2766 = vld [vmem:[%s532 + $0x78] sm:$0xf]
        %v2767 = vld [vmem:[%s532 + $0x7c] sm:$0xf]
        %v2768 = vld [vmem:[%s532 + $0x80] sm:$0xf]
        %v2769 = vld [vmem:[%s532 + $0x84] sm:$0xf]
        %v2770 = vld [vmem:[%s532 + $0x88] sm:$0xf]
        %v2771 = vld [vmem:[%s532 + $0x8c] sm:$0xf]
        %v2772 = vld [vmem:[%s532 + $0x90] sm:$0xf]
        %v2773 = vld [vmem:[%s532 + $0x94] sm:$0xf]
        %v2774 = vld [vmem:[%s532 + $0x98] sm:$0xf]
        %v2775 = vld [vmem:[%s532 + $0x9c] sm:$0xf]
        %v2776 = vld [vmem:[%s532 + $0xa0] sm:$0xf]
        %v2777 = vld [vmem:[%s532 + $0xa4] sm:$0xf]
        %v2778 = vld [vmem:[%s532 + $0xa8] sm:$0xf]
        %v2779 = vld [vmem:[%s532 + $0xac] sm:$0xf]
        %v2780 = vld [vmem:[%s532 + $0xb0] sm:$0xf]
        %v2781 = vld [vmem:[%s532 + $0xb4] sm:$0xf]
        %v2782 = vld [vmem:[%s532 + $0xb8] sm:$0xf]
        %v2783 = vld [vmem:[%s532 + $0xbc] sm:$0xf]
        %v2784 = vld [vmem:[%s532 + $0xc0] sm:$0xf]
        %v2785 = vld [vmem:[%s532 + $0xc4] sm:$0xf]
        %v2786 = vld [vmem:[%s532 + $0xc8] sm:$0xf]
        %v2787 = vld [vmem:[%s532 + $0xcc] sm:$0xf]
        %v2788 = vld [vmem:[%s532 + $0xd0] sm:$0xf]
        %v2789 = vld [vmem:[%s532 + $0xd4] sm:$0xf]
        %v2790 = vld [vmem:[%s532 + $0xd8] sm:$0xf]
        %v2791 = vld [vmem:[%s532 + $0xdc] sm:$0xf]
        %v2792 = vld [vmem:[%s532 + $0xe0] sm:$0xf]
        %v2793 = vld [vmem:[%s532 + $0xe4] sm:$0xf]
        %v2794 = vld [vmem:[%s532 + $0xe8] sm:$0xf]
        %v2795 = vld [vmem:[%s532 + $0xec] sm:$0xf]
        %v2796 = vld [vmem:[%s532 + $0xf0] sm:$0xf]
        %v2797 = vld [vmem:[%s532 + $0xf4] sm:$0xf]
        %v2798 = vld [vmem:[%s532 + $0xf8] sm:$0xf]
        %v2799 = vld [vmem:[%s532 + $0xfc] sm:$0xf]
        %v2832 = vunpack.c.l.b16 %v2704
        %v2833 = vunpack.c.h.b16 %v2704
        %v2834 = vunpack.c.l.b16 %v2705
        %v2835 = vunpack.c.h.b16 %v2705
        %v2836 = vunpack.c.l.b16 %v2706
        %v2837 = vunpack.c.h.b16 %v2706
        %v2838 = vunpack.c.l.b16 %v2707
        %v2839 = vunpack.c.h.b16 %v2707
        %v2840 = vunpack.c.l.b16 %v2708
        %v2841 = vunpack.c.h.b16 %v2708
        %v2842 = vunpack.c.l.b16 %v2709
        %v2843 = vunpack.c.h.b16 %v2709
        %v2844 = vunpack.c.l.b16 %v2710
        %v2845 = vunpack.c.h.b16 %v2710
        %v2846 = vunpack.c.l.b16 %v2711
        %v2847 = vunpack.c.h.b16 %v2711
        %v2848 = vunpack.c.l.b16 %v2712
        %v2849 = vunpack.c.h.b16 %v2712
        %v2850 = vunpack.c.l.b16 %v2713
        %v2851 = vunpack.c.h.b16 %v2713
        %v2852 = vunpack.c.l.b16 %v2714
        %v2853 = vunpack.c.h.b16 %v2714
        %v2854 = vunpack.c.l.b16 %v2715
        %v2855 = vunpack.c.h.b16 %v2715
        %v2856 = vunpack.c.l.b16 %v2716
        %v2857 = vunpack.c.h.b16 %v2716
        %v2858 = vunpack.c.l.b16 %v2717
        %v2859 = vunpack.c.h.b16 %v2717
        %v2860 = vunpack.c.l.b16 %v2718
        %v2861 = vunpack.c.h.b16 %v2718
        %v2862 = vunpack.c.l.b16 %v2719
        %v2863 = vunpack.c.h.b16 %v2719
        %v2864 = vunpack.c.l.b16 %v2720
        %v2865 = vunpack.c.h.b16 %v2720
        %v2866 = vunpack.c.l.b16 %v2721
        %v2867 = vunpack.c.h.b16 %v2721
        %v2868 = vunpack.c.l.b16 %v2722
        %v2869 = vunpack.c.h.b16 %v2722
        %v2870 = vunpack.c.l.b16 %v2723
        %v2871 = vunpack.c.h.b16 %v2723
        %v2872 = vunpack.c.l.b16 %v2724
        %v2873 = vunpack.c.h.b16 %v2724
        %v2874 = vunpack.c.l.b16 %v2725
        %v2875 = vunpack.c.h.b16 %v2725
        %v2876 = vunpack.c.l.b16 %v2726
        %v2877 = vunpack.c.h.b16 %v2726
        %v2878 = vunpack.c.l.b16 %v2727
        %v2879 = vunpack.c.h.b16 %v2727
        %v2880 = vunpack.c.l.b16 %v2728
        %v2881 = vunpack.c.h.b16 %v2728
        %v2882 = vunpack.c.l.b16 %v2729
        %v2883 = vunpack.c.h.b16 %v2729
        %v2884 = vunpack.c.l.b16 %v2730
        %v2885 = vunpack.c.h.b16 %v2730
        %v2886 = vunpack.c.l.b16 %v2731
        %v2887 = vunpack.c.h.b16 %v2731
        %v2888 = vunpack.c.l.b16 %v2732
        %v2889 = vunpack.c.h.b16 %v2732
        %v2890 = vunpack.c.l.b16 %v2733
        %v2891 = vunpack.c.h.b16 %v2733
        %v2892 = vunpack.c.l.b16 %v2734
        %v2893 = vunpack.c.h.b16 %v2734
        %v2894 = vunpack.c.l.b16 %v2735
        %v2895 = vunpack.c.h.b16 %v2735
        %v2896 = vpack.c.b16 %v2836, %v2832
        %v2897 = vpack.c.b16 %v2837, %v2833
        %v2898 = vpack.c.b16 %v2838, %v2834
        %v2899 = vpack.c.b16 %v2839, %v2835
        %v2900 = vpack.c.b16 %v2844, %v2840
        %v2901 = vpack.c.b16 %v2845, %v2841
        %v2902 = vpack.c.b16 %v2846, %v2842
        %v2903 = vpack.c.b16 %v2847, %v2843
        %v2904 = vpack.c.b16 %v2852, %v2848
        %v2905 = vpack.c.b16 %v2853, %v2849
        %v2906 = vpack.c.b16 %v2854, %v2850
        %v2907 = vpack.c.b16 %v2855, %v2851
        %v2908 = vpack.c.b16 %v2860, %v2856
        %v2909 = vpack.c.b16 %v2861, %v2857
        %v2910 = vpack.c.b16 %v2862, %v2858
        %v2911 = vpack.c.b16 %v2863, %v2859
        %v2912 = vpack.c.b16 %v2868, %v2864
        %v2913 = vpack.c.b16 %v2869, %v2865
        %v2914 = vpack.c.b16 %v2870, %v2866
        %v2915 = vpack.c.b16 %v2871, %v2867
        %v2916 = vpack.c.b16 %v2876, %v2872
        %v2917 = vpack.c.b16 %v2877, %v2873
        %v2918 = vpack.c.b16 %v2878, %v2874
        %v2919 = vpack.c.b16 %v2879, %v2875
        %v2920 = vpack.c.b16 %v2884, %v2880
        %v2921 = vpack.c.b16 %v2885, %v2881
        %v2922 = vpack.c.b16 %v2886, %v2882
        %v2923 = vpack.c.b16 %v2887, %v2883
        %v2924 = vpack.c.b16 %v2892, %v2888
        %v2925 = vpack.c.b16 %v2893, %v2889
        %v2926 = vpack.c.b16 %v2894, %v2890
        %v2927 = vpack.c.b16 %v2895, %v2891
        %v3024 = vunpack.c.l.b16 %v2736
        %v3025 = vunpack.c.l.b16 %v2737
        %v3026 = vunpack.c.l.b16 %v2738
        %v3027 = vunpack.c.l.b16 %v2739
        %v3028 = vunpack.c.l.b16 %v2740
        %v3029 = vunpack.c.l.b16 %v2741
        %v3030 = vunpack.c.l.b16 %v2742
        %v3031 = vunpack.c.l.b16 %v2743
        %v3032 = vunpack.c.l.b16 %v2744
        %v3033 = vunpack.c.l.b16 %v2745
        %v3034 = vunpack.c.l.b16 %v2746
        %v3035 = vunpack.c.l.b16 %v2747
        %v3036 = vunpack.c.l.b16 %v2748
        %v3037 = vunpack.c.l.b16 %v2749
        %v3038 = vunpack.c.l.b16 %v2750
        %v3039 = vunpack.c.l.b16 %v2751
        %v3040 = vunpack.c.l.b16 %v2752
        %v3041 = vunpack.c.l.b16 %v2753
        %v3042 = vunpack.c.l.b16 %v2754
        %v3043 = vunpack.c.l.b16 %v2755
        %v3044 = vunpack.c.l.b16 %v2756
        %v3045 = vunpack.c.l.b16 %v2757
        %v3046 = vunpack.c.l.b16 %v2758
        %v3047 = vunpack.c.l.b16 %v2759
        %v3048 = vunpack.c.l.b16 %v2760
        %v3049 = vunpack.c.l.b16 %v2761
        %v3050 = vunpack.c.l.b16 %v2762
        %v3051 = vunpack.c.l.b16 %v2763
        %v3052 = vunpack.c.l.b16 %v2764
        %v3053 = vunpack.c.l.b16 %v2765
        %v3054 = vunpack.c.l.b16 %v2766
        %v3055 = vunpack.c.l.b16 %v2767
        %v3056 = vunpack.c.l.b16 %v2768
        %v3057 = vunpack.c.l.b16 %v2769
        %v3058 = vunpack.c.l.b16 %v2770
        %v3059 = vunpack.c.l.b16 %v2771
        %v3060 = vunpack.c.l.b16 %v2772
        %v3061 = vunpack.c.l.b16 %v2773
        %v3062 = vunpack.c.l.b16 %v2774
        %v3063 = vunpack.c.l.b16 %v2775
        %v3064 = vunpack.c.l.b16 %v2776
        %v3065 = vunpack.c.l.b16 %v2777
        %v3066 = vunpack.c.l.b16 %v2778
        %v3067 = vunpack.c.l.b16 %v2779
        %v3068 = vunpack.c.l.b16 %v2780
        %v3069 = vunpack.c.l.b16 %v2781
        %v3070 = vunpack.c.l.b16 %v2782
        %v3071 = vunpack.c.l.b16 %v2783
        %v3072 = vunpack.c.l.b16 %v2784
        %v3073 = vunpack.c.l.b16 %v2785
        %v3074 = vunpack.c.l.b16 %v2786
        %v3075 = vunpack.c.l.b16 %v2787
        %v3076 = vunpack.c.l.b16 %v2788
        %v3077 = vunpack.c.l.b16 %v2789
        %v3078 = vunpack.c.l.b16 %v2790
        %v3079 = vunpack.c.l.b16 %v2791
        %v3080 = vunpack.c.l.b16 %v2792
        %v3081 = vunpack.c.l.b16 %v2793
        %v3082 = vunpack.c.l.b16 %v2794
        %v3083 = vunpack.c.l.b16 %v2795
        %v3084 = vunpack.c.l.b16 %v2796
        %v3085 = vunpack.c.l.b16 %v2797
        %v3086 = vunpack.c.l.b16 %v2798
        %v3087 = vunpack.c.l.b16 %v2799
        %v3088 = vpack.c.b16 %v3025, %v3024
        %v3089 = vpack.c.b16 %v3027, %v3026
        %v3090 = vpack.c.b16 %v3029, %v3028
        %v3091 = vpack.c.b16 %v3031, %v3030
        %v3092 = vpack.c.b16 %v3033, %v3032
        %v3093 = vpack.c.b16 %v3035, %v3034
        %v3094 = vpack.c.b16 %v3037, %v3036
        %v3095 = vpack.c.b16 %v3039, %v3038
        %v3096 = vpack.c.b16 %v3041, %v3040
        %v3097 = vpack.c.b16 %v3043, %v3042
        %v3098 = vpack.c.b16 %v3045, %v3044
        %v3099 = vpack.c.b16 %v3047, %v3046
        %v3100 = vpack.c.b16 %v3049, %v3048
        %v3101 = vpack.c.b16 %v3051, %v3050
        %v3102 = vpack.c.b16 %v3053, %v3052
        %v3103 = vpack.c.b16 %v3055, %v3054
        %v3104 = vpack.c.b16 %v3057, %v3056
        %v3105 = vpack.c.b16 %v3059, %v3058
        %v3106 = vpack.c.b16 %v3061, %v3060
        %v3107 = vpack.c.b16 %v3063, %v3062
        %v3108 = vpack.c.b16 %v3065, %v3064
        %v3109 = vpack.c.b16 %v3067, %v3066
        %v3110 = vpack.c.b16 %v3069, %v3068
        %v3111 = vpack.c.b16 %v3071, %v3070
        %v3112 = vpack.c.b16 %v3073, %v3072
        %v3113 = vpack.c.b16 %v3075, %v3074
        %v3114 = vpack.c.b16 %v3077, %v3076
        %v3115 = vpack.c.b16 %v3079, %v3078
        %v3116 = vpack.c.b16 %v3081, %v3080
        %v3117 = vpack.c.b16 %v3083, %v3082
        %v3118 = vpack.c.b16 %v3085, %v3084
        %v3119 = vpack.c.b16 %v3087, %v3086
        %3152 = vmatpush.bf16.msra.mxu0 %v3095
        %3153 = vmatpush.bf16.msra.mxu0 %v3094
        %3154 = vmatpush.bf16.msra.mxu0 %v3093
        %3155 = vmatpush.bf16.msra.mxu0 %v3092
        %3156 = vmatpush.bf16.msra.mxu0 %v3091
        %3157 = vmatpush.bf16.msra.mxu0 %v3090
        %3158 = vmatpush.bf16.msra.mxu0 %v3089
        %3159 = vmatpush.bf16.msra.mxu0 %v3088
        %3160 = vmatmul.bf16.gmra.mxu0 %v2896
        %v3161 = vpop.f32.mrf.mxu0
        %v3162 = vadd.f32 0.0, %v3161
        %v3163 = vpop.f32.mrf.mxu0
        %v3164 = vadd.f32 0.0, %v3163
        %3165 = vmatmul.bf16.gmra.mxu0 %v2900
        %v3166 = vpop.f32.mrf.mxu0
        %v3167 = vadd.f32 0.0, %v3166
        %v3168 = vpop.f32.mrf.mxu0
        %v3169 = vadd.f32 0.0, %v3168
        %3170 = vmatmul.bf16.gmra.mxu0 %v2904
        %v3171 = vpop.f32.mrf.mxu0
        %v3172 = vadd.f32 0.0, %v3171
        %v3173 = vpop.f32.mrf.mxu0
        %v3174 = vadd.f32 0.0, %v3173
        %3175 = vmatmul.bf16.gmra.mxu0 %v2908
        %v3176 = vpop.f32.mrf.mxu0
        %v3177 = vadd.f32 0.0, %v3176
        %v3178 = vpop.f32.mrf.mxu0
        %v3179 = vadd.f32 0.0, %v3178
        %3180 = vmatmul.bf16.gmra.mxu0 %v2912
        %v3181 = vpop.f32.mrf.mxu0
        %v3182 = vadd.f32 0.0, %v3181
        %v3183 = vpop.f32.mrf.mxu0
        %v3184 = vadd.f32 0.0, %v3183
        %3185 = vmatmul.bf16.gmra.mxu0 %v2916
        %v3186 = vpop.f32.mrf.mxu0
        %v3187 = vadd.f32 0.0, %v3186
        %v3188 = vpop.f32.mrf.mxu0
        %v3189 = vadd.f32 0.0, %v3188
        %3190 = vmatmul.bf16.gmra.mxu0 %v2920
        %v3191 = vpop.f32.mrf.mxu0
        %v3192 = vadd.f32 0.0, %v3191
        %v3193 = vpop.f32.mrf.mxu0
        %v3194 = vadd.f32 0.0, %v3193
        %3195 = vmatmul.bf16.gmra.mxu0 %v2924
        %v3196 = vpop.f32.mrf.mxu0
        %v3197 = vadd.f32 0.0, %v3196
        %v3198 = vpop.f32.mrf.mxu0
        %v3199 = vadd.f32 0.0, %v3198
        %3200 = vdwg.mxu0
        %3201 = vmatpush.bf16.msra.mxu0 %v3103
        %3202 = vmatpush.bf16.msra.mxu0 %v3102
        %3203 = vmatpush.bf16.msra.mxu0 %v3101
        %3204 = vmatpush.bf16.msra.mxu0 %v3100
        %3205 = vmatpush.bf16.msra.mxu0 %v3099
        %3206 = vmatpush.bf16.msra.mxu0 %v3098
        %3207 = vmatpush.bf16.msra.mxu0 %v3097
        %3208 = vmatpush.bf16.msra.mxu0 %v3096
        %3209 = vmatmul.bf16.gmra.mxu0 %v2897
        %v3210 = vpop.f32.mrf.mxu0
        %v3211 = vadd.f32 %v3162, %v3210
        %v3212 = vpop.f32.mrf.mxu0
        %v3213 = vadd.f32 %v3164, %v3212
        %3214 = vmatmul.bf16.gmra.mxu0 %v2901
        %v3215 = vpop.f32.mrf.mxu0
        %v3216 = vadd.f32 %v3167, %v3215
        %v3217 = vpop.f32.mrf.mxu0
        %v3218 = vadd.f32 %v3169, %v3217
        %3219 = vmatmul.bf16.gmra.mxu0 %v2905
        %v3220 = vpop.f32.mrf.mxu0
        %v3221 = vadd.f32 %v3172, %v3220
        %v3222 = vpop.f32.mrf.mxu0
        %v3223 = vadd.f32 %v3174, %v3222
        %3224 = vmatmul.bf16.gmra.mxu0 %v2909
        %v3225 = vpop.f32.mrf.mxu0
        %v3226 = vadd.f32 %v3177, %v3225
        %v3227 = vpop.f32.mrf.mxu0
        %v3228 = vadd.f32 %v3179, %v3227
        %3229 = vmatmul.bf16.gmra.mxu0 %v2913
        %v3230 = vpop.f32.mrf.mxu0
        %v3231 = vadd.f32 %v3182, %v3230
        %v3232 = vpop.f32.mrf.mxu0
        %v3233 = vadd.f32 %v3184, %v3232
        %3234 = vmatmul.bf16.gmra.mxu0 %v2917
        %v3235 = vpop.f32.mrf.mxu0
        %v3236 = vadd.f32 %v3187, %v3235
        %v3237 = vpop.f32.mrf.mxu0
        %v3238 = vadd.f32 %v3189, %v3237
        %3239 = vmatmul.bf16.gmra.mxu0 %v2921
        %v3240 = vpop.f32.mrf.mxu0
        %v3241 = vadd.f32 %v3192, %v3240
        %v3242 = vpop.f32.mrf.mxu0
        %v3243 = vadd.f32 %v3194, %v3242
        %3244 = vmatmul.bf16.gmra.mxu0 %v2925
        %v3245 = vpop.f32.mrf.mxu0
        %v3246 = vadd.f32 %v3197, %v3245
        %v3247 = vpop.f32.mrf.mxu0
        %v3248 = vadd.f32 %v3199, %v3247
        %3249 = vdwg.mxu0
        %3250 = vmatpush.bf16.msra.mxu0 %v3111
        %3251 = vmatpush.bf16.msra.mxu0 %v3110
        %3252 = vmatpush.bf16.msra.mxu0 %v3109
        %3253 = vmatpush.bf16.msra.mxu0 %v3108
        %3254 = vmatpush.bf16.msra.mxu0 %v3107
        %3255 = vmatpush.bf16.msra.mxu0 %v3106
        %3256 = vmatpush.bf16.msra.mxu0 %v3105
        %3257 = vmatpush.bf16.msra.mxu0 %v3104
        %3258 = vmatmul.bf16.gmra.mxu0 %v2898
        %v3259 = vpop.f32.mrf.mxu0
        %v3260 = vadd.f32 %v3211, %v3259
        %v3261 = vpop.f32.mrf.mxu0
        %v3262 = vadd.f32 %v3213, %v3261
        %3263 = vmatmul.bf16.gmra.mxu0 %v2902
        %v3264 = vpop.f32.mrf.mxu0
        %v3265 = vadd.f32 %v3216, %v3264
        %v3266 = vpop.f32.mrf.mxu0
        %v3267 = vadd.f32 %v3218, %v3266
        %3268 = vmatmul.bf16.gmra.mxu0 %v2906
        %v3269 = vpop.f32.mrf.mxu0
        %v3270 = vadd.f32 %v3221, %v3269
        %v3271 = vpop.f32.mrf.mxu0
        %v3272 = vadd.f32 %v3223, %v3271
        %3273 = vmatmul.bf16.gmra.mxu0 %v2910
        %v3274 = vpop.f32.mrf.mxu0
        %v3275 = vadd.f32 %v3226, %v3274
        %v3276 = vpop.f32.mrf.mxu0
        %v3277 = vadd.f32 %v3228, %v3276
        %3278 = vmatmul.bf16.gmra.mxu0 %v2914
        %v3279 = vpop.f32.mrf.mxu0
        %v3280 = vadd.f32 %v3231, %v3279
        %v3281 = vpop.f32.mrf.mxu0
        %v3282 = vadd.f32 %v3233, %v3281
        %3283 = vmatmul.bf16.gmra.mxu0 %v2918
        %v3284 = vpop.f32.mrf.mxu0
        %v3285 = vadd.f32 %v3236, %v3284
        %v3286 = vpop.f32.mrf.mxu0
        %v3287 = vadd.f32 %v3238, %v3286
        %3288 = vmatmul.bf16.gmra.mxu0 %v2922
        %v3289 = vpop.f32.mrf.mxu0
        %v3290 = vadd.f32 %v3241, %v3289
        %v3291 = vpop.f32.mrf.mxu0
        %v3292 = vadd.f32 %v3243, %v3291
        %3293 = vmatmul.bf16.gmra.mxu0 %v2926
        %v3294 = vpop.f32.mrf.mxu0
        %v3295 = vadd.f32 %v3246, %v3294
        %v3296 = vpop.f32.mrf.mxu0
        %v3297 = vadd.f32 %v3248, %v3296
        %3298 = vdwg.mxu0
        %3299 = vmatpush.bf16.msra.mxu0 %v3119
        %3300 = vmatpush.bf16.msra.mxu0 %v3118
        %3301 = vmatpush.bf16.msra.mxu0 %v3117
        %3302 = vmatpush.bf16.msra.mxu0 %v3116
        %3303 = vmatpush.bf16.msra.mxu0 %v3115
        %3304 = vmatpush.bf16.msra.mxu0 %v3114
        %3305 = vmatpush.bf16.msra.mxu0 %v3113
        %3306 = vmatpush.bf16.msra.mxu0 %v3112
        %3307 = vmatmul.bf16.gmra.mxu0 %v2899
        %v3308 = vpop.f32.mrf.mxu0
        %v3309 = vadd.f32 %v3260, %v3308
        %v3310 = vpop.f32.mrf.mxu0
        %v3311 = vadd.f32 %v3262, %v3310
        %3312 = vmatmul.bf16.gmra.mxu0 %v2903
        %v3313 = vpop.f32.mrf.mxu0
        %v3314 = vadd.f32 %v3265, %v3313
        %v3315 = vpop.f32.mrf.mxu0
        %v3316 = vadd.f32 %v3267, %v3315
        %3317 = vmatmul.bf16.gmra.mxu0 %v2907
        %v3318 = vpop.f32.mrf.mxu0
        %v3319 = vadd.f32 %v3270, %v3318
        %v3320 = vpop.f32.mrf.mxu0
        %v3321 = vadd.f32 %v3272, %v3320
        %3322 = vmatmul.bf16.gmra.mxu0 %v2911
        %v3323 = vpop.f32.mrf.mxu0
        %v3324 = vadd.f32 %v3275, %v3323
        %v3325 = vpop.f32.mrf.mxu0
        %v3326 = vadd.f32 %v3277, %v3325
        %3327 = vmatmul.bf16.gmra.mxu0 %v2915
        %v3328 = vpop.f32.mrf.mxu0
        %v3329 = vadd.f32 %v3280, %v3328
        %v3330 = vpop.f32.mrf.mxu0
        %v3331 = vadd.f32 %v3282, %v3330
        %3332 = vmatmul.bf16.gmra.mxu0 %v2919
        %v3333 = vpop.f32.mrf.mxu0
        %v3334 = vadd.f32 %v3285, %v3333
        %v3335 = vpop.f32.mrf.mxu0
        %v3336 = vadd.f32 %v3287, %v3335
        %3337 = vmatmul.bf16.gmra.mxu0 %v2923
        %v3338 = vpop.f32.mrf.mxu0
        %v3339 = vadd.f32 %v3290, %v3338
        %v3340 = vpop.f32.mrf.mxu0
        %v3341 = vadd.f32 %v3292, %v3340
        %3342 = vmatmul.bf16.gmra.mxu0 %v2927
        %v3343 = vpop.f32.mrf.mxu0
        %v3344 = vadd.f32 %v3295, %v3343
        %v3345 = vpop.f32.mrf.mxu0
        %v3346 = vadd.f32 %v3297, %v3345
        %3347 = vdwg.mxu0
        %v3348 = vadd.f32 %v2688, %v3309
        %v3349 = vadd.f32 %v2689, %v3311
        %v3350 = vadd.f32 %v2690, %v3314
        %v3351 = vadd.f32 %v2691, %v3316
        %v3352 = vadd.f32 %v2692, %v3319
        %v3353 = vadd.f32 %v2693, %v3321
        %v3354 = vadd.f32 %v2694, %v3324
        %v3355 = vadd.f32 %v2695, %v3326
        %v3356 = vadd.f32 %v2696, %v3329
        %v3357 = vadd.f32 %v2697, %v3331
        %v3358 = vadd.f32 %v2698, %v3334
        %v3359 = vadd.f32 %v2699, %v3336
        %v3360 = vadd.f32 %v2700, %v3339
        %v3361 = vadd.f32 %v2701, %v3341
        %v3362 = vadd.f32 %v2702, %v3344
        %v3363 = vadd.f32 %v2703, %v3346
        %3364 = vst [vmem:[#allocation2 + $0x180] sm:$0xff] %v3348
        %3365 = vst [vmem:[#allocation2 + $0x188] sm:$0xff] %v3349
        %3366 = vst [vmem:[#allocation2 + $0x190] sm:$0xff] %v3350
        %3367 = vst [vmem:[#allocation2 + $0x198] sm:$0xff] %v3351
        %3368 = vst [vmem:[#allocation2 + $0x1a0] sm:$0xff] %v3352
        %3369 = vst [vmem:[#allocation2 + $0x1a8] sm:$0xff] %v3353
        %3370 = vst [vmem:[#allocation2 + $0x1b0] sm:$0xff] %v3354
        %3371 = vst [vmem:[#allocation2 + $0x1b8] sm:$0xff] %v3355
        %3372 = vst [vmem:[#allocation2 + $0x1c0] sm:$0xff] %v3356
        %3373 = vst [vmem:[#allocation2 + $0x1c8] sm:$0xff] %v3357
        %3374 = vst [vmem:[#allocation2 + $0x1d0] sm:$0xff] %v3358
        %3375 = vst [vmem:[#allocation2 + $0x1d8] sm:$0xff] %v3359
        %3376 = vst [vmem:[#allocation2 + $0x1e0] sm:$0xff] %v3360
        %3377 = vst [vmem:[#allocation2 + $0x1e8] sm:$0xff] %v3361
        %3378 = vst [vmem:[#allocation2 + $0x1f0] sm:$0xff] %v3362
        %3379 = vst [vmem:[#allocation2 + $0x1f8] sm:$0xff] %v3363
        %p3380 = scmp.eq.s32.totalorder %s20, 1
        // Predicated region
        $region64: #{discriminator_forward.6} parent=54 // pred_check
          %p3381 = pneg %p3380
        $region65: #{discriminator_forward.6} parent=54 // pred_check_branch
          %3383 = sbr.rel (%p3381) target = $region67
        $region66: #{discriminator_forward.6} parent=54 // pred_region
          %v3384 = vld [vmem:[#allocation2] sm:$0xff]
          %v3385 = vld [vmem:[#allocation2 + $0x8] sm:$0xff]
          %v3386 = vld [vmem:[#allocation2 + $0x10] sm:$0xff]
          %v3387 = vld [vmem:[#allocation2 + $0x18] sm:$0xff]
          %v3388 = vld [vmem:[#allocation2 + $0x20] sm:$0xff]
          %v3389 = vld [vmem:[#allocation2 + $0x28] sm:$0xff]
          %v3390 = vld [vmem:[#allocation2 + $0x30] sm:$0xff]
          %v3391 = vld [vmem:[#allocation2 + $0x38] sm:$0xff]
          %v3392 = vld [vmem:[#allocation2 + $0x40] sm:$0xff]
          %v3393 = vld [vmem:[#allocation2 + $0x48] sm:$0xff]
          %v3394 = vld [vmem:[#allocation2 + $0x50] sm:$0xff]
          %v3395 = vld [vmem:[#allocation2 + $0x58] sm:$0xff]
          %v3396 = vld [vmem:[#allocation2 + $0x60] sm:$0xff]
          %v3397 = vld [vmem:[#allocation2 + $0x68] sm:$0xff]
          %v3398 = vld [vmem:[#allocation2 + $0x70] sm:$0xff]
          %v3399 = vld [vmem:[#allocation2 + $0x78] sm:$0xff]
          %v3400 = vadd.f32 %v3384, %v3385
          %v3401 = vadd.f32 %v3400, %v3386
          %v3402 = vadd.f32 %v3401, %v3387
          %v3403 = vadd.f32 %v3402, %v3388
          %v3404 = vadd.f32 %v3403, %v3389
          %v3405 = vadd.f32 %v3404, %v3390
          %v3406 = vadd.f32 %v3405, %v3391
          %v3407 = vadd.f32 %v3406, %v3392
          %v3408 = vadd.f32 %v3407, %v3393
          %v3409 = vadd.f32 %v3408, %v3394
          %v3410 = vadd.f32 %v3409, %v3395
          %v3411 = vadd.f32 %v3410, %v3396
          %v3412 = vadd.f32 %v3411, %v3397
          %v3413 = vadd.f32 %v3412, %v3398
          %v3414 = vadd.f32 %v3413, %v3399
          %v3415 = vrot.slane %v3414, 4
          %v3416 = vadd.f32 %v3414, %v3415
          %v3417 = vrot.slane %v3416, 2
          %v3418 = vadd.f32 %v3416, %v3417
          %v3419 = vrot.slane %v3418, 1
          %v3420 = vadd.f32 %v3418, %v3419
          %v3421 = vadd.f32 %v3420, 0.0
          %v3422 = vld [vmem:[#allocation2 + $0x80] sm:$0xff]
          %v3423 = vld [vmem:[#allocation2 + $0x88] sm:$0xff]
          %v3424 = vld [vmem:[#allocation2 + $0x90] sm:$0xff]
          %v3425 = vld [vmem:[#allocation2 + $0x98] sm:$0xff]
          %v3426 = vld [vmem:[#allocation2 + $0xa0] sm:$0xff]
          %v3427 = vld [vmem:[#allocation2 + $0xa8] sm:$0xff]
          %v3428 = vld [vmem:[#allocation2 + $0xb0] sm:$0xff]
          %v3429 = vld [vmem:[#allocation2 + $0xb8] sm:$0xff]
          %v3430 = vld [vmem:[#allocation2 + $0xc0] sm:$0xff]
          %v3431 = vld [vmem:[#allocation2 + $0xc8] sm:$0xff]
          %v3432 = vld [vmem:[#allocation2 + $0xd0] sm:$0xff]
          %v3433 = vld [vmem:[#allocation2 + $0xd8] sm:$0xff]
          %v3434 = vld [vmem:[#allocation2 + $0xe0] sm:$0xff]
          %v3435 = vld [vmem:[#allocation2 + $0xe8] sm:$0xff]
          %v3436 = vld [vmem:[#allocation2 + $0xf0] sm:$0xff]
          %v3437 = vld [vmem:[#allocation2 + $0xf8] sm:$0xff]
          %v3438 = vadd.f32 %v3422, %v3423
          %v3439 = vadd.f32 %v3438, %v3424
          %v3440 = vadd.f32 %v3439, %v3425
          %v3441 = vadd.f32 %v3440, %v3426
          %v3442 = vadd.f32 %v3441, %v3427
          %v3443 = vadd.f32 %v3442, %v3428
          %v3444 = vadd.f32 %v3443, %v3429
          %v3445 = vadd.f32 %v3444, %v3430
          %v3446 = vadd.f32 %v3445, %v3431
          %v3447 = vadd.f32 %v3446, %v3432
          %v3448 = vadd.f32 %v3447, %v3433
          %v3449 = vadd.f32 %v3448, %v3434
          %v3450 = vadd.f32 %v3449, %v3435
          %v3451 = vadd.f32 %v3450, %v3436
          %v3452 = vadd.f32 %v3451, %v3437
          %v3453 = vrot.slane %v3452, 4
          %v3454 = vadd.f32 %v3452, %v3453
          %v3455 = vrot.slane %v3454, 2
          %v3456 = vadd.f32 %v3454, %v3455
          %v3457 = vrot.slane %v3456, 1
          %v3458 = vadd.f32 %v3456, %v3457
          %v3459 = vadd.f32 %v3421, %v3458
          %v3460 = vld [vmem:[#allocation2 + $0x100] sm:$0xff]
          %v3461 = vld [vmem:[#allocation2 + $0x108] sm:$0xff]
          %v3462 = vld [vmem:[#allocation2 + $0x110] sm:$0xff]
          %v3463 = vld [vmem:[#allocation2 + $0x118] sm:$0xff]
          %v3464 = vld [vmem:[#allocation2 + $0x120] sm:$0xff]
          %v3465 = vld [vmem:[#allocation2 + $0x128] sm:$0xff]
          %v3466 = vld [vmem:[#allocation2 + $0x130] sm:$0xff]
          %v3467 = vld [vmem:[#allocation2 + $0x138] sm:$0xff]
          %v3468 = vld [vmem:[#allocation2 + $0x140] sm:$0xff]
          %v3469 = vld [vmem:[#allocation2 + $0x148] sm:$0xff]
          %v3470 = vld [vmem:[#allocation2 + $0x150] sm:$0xff]
          %v3471 = vld [vmem:[#allocation2 + $0x158] sm:$0xff]
          %v3472 = vld [vmem:[#allocation2 + $0x160] sm:$0xff]
          %v3473 = vld [vmem:[#allocation2 + $0x168] sm:$0xff]
          %v3474 = vld [vmem:[#allocation2 + $0x170] sm:$0xff]
          %v3475 = vld [vmem:[#allocation2 + $0x178] sm:$0xff]
          %v3476 = vadd.f32 %v3460, %v3461
          %v3477 = vadd.f32 %v3476, %v3462
          %v3478 = vadd.f32 %v3477, %v3463
          %v3479 = vadd.f32 %v3478, %v3464
          %v3480 = vadd.f32 %v3479, %v3465
          %v3481 = vadd.f32 %v3480, %v3466
          %v3482 = vadd.f32 %v3481, %v3467
          %v3483 = vadd.f32 %v3482, %v3468
          %v3484 = vadd.f32 %v3483, %v3469
          %v3485 = vadd.f32 %v3484, %v3470
          %v3486 = vadd.f32 %v3485, %v3471
          %v3487 = vadd.f32 %v3486, %v3472
          %v3488 = vadd.f32 %v3487, %v3473
          %v3489 = vadd.f32 %v3488, %v3474
          %v3490 = vadd.f32 %v3489, %v3475
          %v3491 = vrot.slane %v3490, 4
          %v3492 = vadd.f32 %v3490, %v3491
          %v3493 = vrot.slane %v3492, 2
          %v3494 = vadd.f32 %v3492, %v3493
          %v3495 = vrot.slane %v3494, 1
          %v3496 = vadd.f32 %v3494, %v3495
          %v3497 = vadd.f32 %v3459, %v3496
          %v3498 = vld [vmem:[#allocation2 + $0x180] sm:$0xff]
          %v3499 = vld [vmem:[#allocation2 + $0x188] sm:$0xff]
          %v3500 = vld [vmem:[#allocation2 + $0x190] sm:$0xff]
          %v3501 = vld [vmem:[#allocation2 + $0x198] sm:$0xff]
          %v3502 = vld [vmem:[#allocation2 + $0x1a0] sm:$0xff]
          %v3503 = vld [vmem:[#allocation2 + $0x1a8] sm:$0xff]
          %v3504 = vld [vmem:[#allocation2 + $0x1b0] sm:$0xff]
          %v3505 = vld [vmem:[#allocation2 + $0x1b8] sm:$0xff]
          %v3506 = vld [vmem:[#allocation2 + $0x1c0] sm:$0xff]
          %v3507 = vld [vmem:[#allocation2 + $0x1c8] sm:$0xff]
          %v3508 = vld [vmem:[#allocation2 + $0x1d0] sm:$0xff]
          %v3509 = vld [vmem:[#allocation2 + $0x1d8] sm:$0xff]
          %v3510 = vld [vmem:[#allocation2 + $0x1e0] sm:$0xff]
          %v3511 = vld [vmem:[#allocation2 + $0x1e8] sm:$0xff]
          %v3512 = vld [vmem:[#allocation2 + $0x1f0] sm:$0xff]
          %v3513 = vld [vmem:[#allocation2 + $0x1f8] sm:$0xff]
          %v3514 = vadd.f32 %v3498, %v3499
          %v3515 = vadd.f32 %v3514, %v3500
          %v3516 = vadd.f32 %v3515, %v3501
          %v3517 = vadd.f32 %v3516, %v3502
          %v3518 = vadd.f32 %v3517, %v3503
          %v3519 = vadd.f32 %v3518, %v3504
          %v3520 = vadd.f32 %v3519, %v3505
          %v3521 = vadd.f32 %v3520, %v3506
          %v3522 = vadd.f32 %v3521, %v3507
          %v3523 = vadd.f32 %v3522, %v3508
          %v3524 = vadd.f32 %v3523, %v3509
          %v3525 = vadd.f32 %v3524, %v3510
          %v3526 = vadd.f32 %v3525, %v3511
          %v3527 = vadd.f32 %v3526, %v3512
          %v3528 = vadd.f32 %v3527, %v3513
          %v3529 = vrot.slane %v3528, 4
          %v3530 = vadd.f32 %v3528, %v3529
          %v3531 = vrot.slane %v3530, 2
          %v3532 = vadd.f32 %v3530, %v3531
          %v3533 = vrot.slane %v3532, 1
          %v3534 = vadd.f32 %v3532, %v3533
          %v3535 = vadd.f32 %v3497, %v3534
          %v3536 = vmul.f32 %v3535, 0.001953125
          %v3537 = vsub.f32 %v3384, %v3536
          %v3538 = vsub.f32 %v3385, %v3536
          %v3539 = vsub.f32 %v3386, %v3536
          %v3540 = vsub.f32 %v3387, %v3536
          %v3541 = vsub.f32 %v3388, %v3536
          %v3542 = vsub.f32 %v3389, %v3536
          %v3543 = vsub.f32 %v3390, %v3536
          %v3544 = vsub.f32 %v3391, %v3536
          %v3545 = vsub.f32 %v3392, %v3536
          %v3546 = vsub.f32 %v3393, %v3536
          %v3547 = vsub.f32 %v3394, %v3536
          %v3548 = vsub.f32 %v3395, %v3536
          %v3549 = vsub.f32 %v3396, %v3536
          %v3550 = vsub.f32 %v3397, %v3536
          %v3551 = vsub.f32 %v3398, %v3536
          %v3552 = vsub.f32 %v3399, %v3536
          %v3553 = vmul.f32 %v3537, %v3537
          %v3554 = vmul.f32 %v3538, %v3538
          %v3555 = vmul.f32 %v3539, %v3539
          %v3556 = vmul.f32 %v3540, %v3540
          %v3557 = vmul.f32 %v3541, %v3541
          %v3558 = vmul.f32 %v3542, %v3542
          %v3559 = vmul.f32 %v3543, %v3543
          %v3560 = vmul.f32 %v3544, %v3544
          %v3561 = vmul.f32 %v3545, %v3545
          %v3562 = vmul.f32 %v3546, %v3546
          %v3563 = vmul.f32 %v3547, %v3547
          %v3564 = vmul.f32 %v3548, %v3548
          %v3565 = vmul.f32 %v3549, %v3549
          %v3566 = vmul.f32 %v3550, %v3550
          %v3567 = vmul.f32 %v3551, %v3551
          %v3568 = vmul.f32 %v3552, %v3552
          %v3569 = vadd.f32 %v3553, %v3554
          %v3570 = vadd.f32 %v3569, %v3555
          %v3571 = vadd.f32 %v3570, %v3556
          %v3572 = vadd.f32 %v3571, %v3557
          %v3573 = vadd.f32 %v3572, %v3558
          %v3574 = vadd.f32 %v3573, %v3559
          %v3575 = vadd.f32 %v3574, %v3560
          %v3576 = vadd.f32 %v3575, %v3561
          %v3577 = vadd.f32 %v3576, %v3562
          %v3578 = vadd.f32 %v3577, %v3563
          %v3579 = vadd.f32 %v3578, %v3564
          %v3580 = vadd.f32 %v3579, %v3565
          %v3581 = vadd.f32 %v3580, %v3566
          %v3582 = vadd.f32 %v3581, %v3567
          %v3583 = vadd.f32 %v3582, %v3568
          %v3584 = vrot.slane %v3583, 4
          %v3585 = vadd.f32 %v3583, %v3584
          %v3586 = vrot.slane %v3585, 2
          %v3587 = vadd.f32 %v3585, %v3586
          %v3588 = vrot.slane %v3587, 1
          %v3589 = vadd.f32 %v3587, %v3588
          %v3590 = vadd.f32 %v3589, 0.0
          %v3591 = vsub.f32 %v3422, %v3536
          %v3592 = vsub.f32 %v3423, %v3536
          %v3593 = vsub.f32 %v3424, %v3536
          %v3594 = vsub.f32 %v3425, %v3536
          %v3595 = vsub.f32 %v3426, %v3536
          %v3596 = vsub.f32 %v3427, %v3536
          %v3597 = vsub.f32 %v3428, %v3536
          %v3598 = vsub.f32 %v3429, %v3536
          %v3599 = vsub.f32 %v3430, %v3536
          %v3600 = vsub.f32 %v3431, %v3536
          %v3601 = vsub.f32 %v3432, %v3536
          %v3602 = vsub.f32 %v3433, %v3536
          %v3603 = vsub.f32 %v3434, %v3536
          %v3604 = vsub.f32 %v3435, %v3536
          %v3605 = vsub.f32 %v3436, %v3536
          %v3606 = vsub.f32 %v3437, %v3536
          %v3607 = vmul.f32 %v3591, %v3591
          %v3608 = vmul.f32 %v3592, %v3592
          %v3609 = vmul.f32 %v3593, %v3593
          %v3610 = vmul.f32 %v3594, %v3594
          %v3611 = vmul.f32 %v3595, %v3595
          %v3612 = vmul.f32 %v3596, %v3596
          %v3613 = vmul.f32 %v3597, %v3597
          %v3614 = vmul.f32 %v3598, %v3598
          %v3615 = vmul.f32 %v3599, %v3599
          %v3616 = vmul.f32 %v3600, %v3600
          %v3617 = vmul.f32 %v3601, %v3601
          %v3618 = vmul.f32 %v3602, %v3602
          %v3619 = vmul.f32 %v3603, %v3603
          %v3620 = vmul.f32 %v3604, %v3604
          %v3621 = vmul.f32 %v3605, %v3605
          %v3622 = vmul.f32 %v3606, %v3606
          %v3623 = vadd.f32 %v3607, %v3608
          %v3624 = vadd.f32 %v3623, %v3609
          %v3625 = vadd.f32 %v3624, %v3610
          %v3626 = vadd.f32 %v3625, %v3611
          %v3627 = vadd.f32 %v3626, %v3612
          %v3628 = vadd.f32 %v3627, %v3613
          %v3629 = vadd.f32 %v3628, %v3614
          %v3630 = vadd.f32 %v3629, %v3615
          %v3631 = vadd.f32 %v3630, %v3616
          %v3632 = vadd.f32 %v3631, %v3617
          %v3633 = vadd.f32 %v3632, %v3618
          %v3634 = vadd.f32 %v3633, %v3619
          %v3635 = vadd.f32 %v3634, %v3620
          %v3636 = vadd.f32 %v3635, %v3621
          %v3637 = vadd.f32 %v3636, %v3622
          %v3638 = vrot.slane %v3637, 4
          %v3639 = vadd.f32 %v3637, %v3638
          %v3640 = vrot.slane %v3639, 2
          %v3641 = vadd.f32 %v3639, %v3640
          %v3642 = vrot.slane %v3641, 1
          %v3643 = vadd.f32 %v3641, %v3642
          %v3644 = vadd.f32 %v3590, %v3643
          %v3645 = vsub.f32 %v3460, %v3536
          %v3646 = vsub.f32 %v3461, %v3536
          %v3647 = vsub.f32 %v3462, %v3536
          %v3648 = vsub.f32 %v3463, %v3536
          %v3649 = vsub.f32 %v3464, %v3536
          %v3650 = vsub.f32 %v3465, %v3536
          %v3651 = vsub.f32 %v3466, %v3536
          %v3652 = vsub.f32 %v3467, %v3536
          %v3653 = vsub.f32 %v3468, %v3536
          %v3654 = vsub.f32 %v3469, %v3536
          %v3655 = vsub.f32 %v3470, %v3536
          %v3656 = vsub.f32 %v3471, %v3536
          %v3657 = vsub.f32 %v3472, %v3536
          %v3658 = vsub.f32 %v3473, %v3536
          %v3659 = vsub.f32 %v3474, %v3536
          %v3660 = vsub.f32 %v3475, %v3536
          %v3661 = vmul.f32 %v3645, %v3645
          %v3662 = vmul.f32 %v3646, %v3646
          %v3663 = vmul.f32 %v3647, %v3647
          %v3664 = vmul.f32 %v3648, %v3648
          %v3665 = vmul.f32 %v3649, %v3649
          %v3666 = vmul.f32 %v3650, %v3650
          %v3667 = vmul.f32 %v3651, %v3651
          %v3668 = vmul.f32 %v3652, %v3652
          %v3669 = vmul.f32 %v3653, %v3653
          %v3670 = vmul.f32 %v3654, %v3654
          %v3671 = vmul.f32 %v3655, %v3655
          %v3672 = vmul.f32 %v3656, %v3656
          %v3673 = vmul.f32 %v3657, %v3657
          %v3674 = vmul.f32 %v3658, %v3658
          %v3675 = vmul.f32 %v3659, %v3659
          %v3676 = vmul.f32 %v3660, %v3660
          %v3677 = vadd.f32 %v3661, %v3662
          %v3678 = vadd.f32 %v3677, %v3663
          %v3679 = vadd.f32 %v3678, %v3664
          %v3680 = vadd.f32 %v3679, %v3665
          %v3681 = vadd.f32 %v3680, %v3666
          %v3682 = vadd.f32 %v3681, %v3667
          %v3683 = vadd.f32 %v3682, %v3668
          %v3684 = vadd.f32 %v3683, %v3669
          %v3685 = vadd.f32 %v3684, %v3670
          %v3686 = vadd.f32 %v3685, %v3671
          %v3687 = vadd.f32 %v3686, %v3672
          %v3688 = vadd.f32 %v3687, %v3673
          %v3689 = vadd.f32 %v3688, %v3674
          %v3690 = vadd.f32 %v3689, %v3675
          %v3691 = vadd.f32 %v3690, %v3676
          %v3692 = vrot.slane %v3691, 4
          %v3693 = vadd.f32 %v3691, %v3692
          %v3694 = vrot.slane %v3693, 2
          %v3695 = vadd.f32 %v3693, %v3694
          %v3696 = vrot.slane %v3695, 1
          %v3697 = vadd.f32 %v3695, %v3696
          %v3698 = vadd.f32 %v3644, %v3697
          %v3699 = vsub.f32 %v3498, %v3536
          %v3700 = vsub.f32 %v3499, %v3536
          %v3701 = vsub.f32 %v3500, %v3536
          %v3702 = vsub.f32 %v3501, %v3536
          %v3703 = vsub.f32 %v3502, %v3536
          %v3704 = vsub.f32 %v3503, %v3536
          %v3705 = vsub.f32 %v3504, %v3536
          %v3706 = vsub.f32 %v3505, %v3536
          %v3707 = vsub.f32 %v3506, %v3536
          %v3708 = vsub.f32 %v3507, %v3536
          %v3709 = vsub.f32 %v3508, %v3536
          %v3710 = vsub.f32 %v3509, %v3536
          %v3711 = vsub.f32 %v3510, %v3536
          %v3712 = vsub.f32 %v3511, %v3536
          %v3713 = vsub.f32 %v3512, %v3536
          %v3714 = vsub.f32 %v3513, %v3536
          %v3715 = vmul.f32 %v3699, %v3699
          %v3716 = vmul.f32 %v3700, %v3700
          %v3717 = vmul.f32 %v3701, %v3701
          %v3718 = vmul.f32 %v3702, %v3702
          %v3719 = vmul.f32 %v3703, %v3703
          %v3720 = vmul.f32 %v3704, %v3704
          %v3721 = vmul.f32 %v3705, %v3705
          %v3722 = vmul.f32 %v3706, %v3706
          %v3723 = vmul.f32 %v3707, %v3707
          %v3724 = vmul.f32 %v3708, %v3708
          %v3725 = vmul.f32 %v3709, %v3709
          %v3726 = vmul.f32 %v3710, %v3710
          %v3727 = vmul.f32 %v3711, %v3711
          %v3728 = vmul.f32 %v3712, %v3712
          %v3729 = vmul.f32 %v3713, %v3713
          %v3730 = vmul.f32 %v3714, %v3714
          %v3731 = vadd.f32 %v3715, %v3716
          %v3732 = vadd.f32 %v3731, %v3717
          %v3733 = vadd.f32 %v3732, %v3718
          %v3734 = vadd.f32 %v3733, %v3719
          %v3735 = vadd.f32 %v3734, %v3720
          %v3736 = vadd.f32 %v3735, %v3721
          %v3737 = vadd.f32 %v3736, %v3722
          %v3738 = vadd.f32 %v3737, %v3723
          %v3739 = vadd.f32 %v3738, %v3724
          %v3740 = vadd.f32 %v3739, %v3725
          %v3741 = vadd.f32 %v3740, %v3726
          %v3742 = vadd.f32 %v3741, %v3727
          %v3743 = vadd.f32 %v3742, %v3728
          %v3744 = vadd.f32 %v3743, %v3729
          %v3745 = vadd.f32 %v3744, %v3730
          %v3746 = vrot.slane %v3745, 4
          %v3747 = vadd.f32 %v3745, %v3746
          %v3748 = vrot.slane %v3747, 2
          %v3749 = vadd.f32 %v3747, %v3748
          %v3750 = vrot.slane %v3749, 1
          %v3751 = vadd.f32 %v3749, %v3750
          %v3752 = vadd.f32 %v3698, %v3751
          %v3753 = vmul.f32 %v3752, 0.001953125
          %v3754 = vld [vmem:[%s536] sm:$0x1]
          %v3755 = vadd.f32 %v3753, 1e-05
          %v3756 = vrsqrt.pop %v3755
          %v3757 = vmul.f32 %v3756, %v3755
          %v3758 = vmul.f32 %v3757, %v3756
          %v3759 = vmul.f32 0.5, %v3758
          %v3760 = vsub.f32 1.5, %v3759
          %v3761 = vmul.f32 %v3756, %v3760
          %vm3762 = vweird.f32 %v3755
          %vm3763 = vweird.f32 %v3756
          %vm3764 = vmor %vm3762, %vm3763
          %v3765 = vsel %vm3764, %v3756, %v3761
          %v3766 = vmul.f32 %v3754, %v3765
          %v3767 = vld [vmem:[%s539] sm:$0x1]
          %v3768 = vmul.f32 %v3536, %v3766
          %v3769 = vsub.f32 %v3767, %v3768
          %v3771 = vperm.slane %v3766, 0
          %v3773 = vmul.f32 %v3384, %v3771
          %v3774 = vmul.f32 %v3385, %v3771
          %v3775 = vmul.f32 %v3386, %v3771
          %v3776 = vmul.f32 %v3387, %v3771
          %v3777 = vmul.f32 %v3388, %v3771
          %v3778 = vmul.f32 %v3389, %v3771
          %v3779 = vmul.f32 %v3390, %v3771
          %v3780 = vmul.f32 %v3391, %v3771
          %v3781 = vmul.f32 %v3392, %v3771
          %v3782 = vmul.f32 %v3393, %v3771
          %v3783 = vmul.f32 %v3394, %v3771
          %v3784 = vmul.f32 %v3395, %v3771
          %v3785 = vmul.f32 %v3396, %v3771
          %v3786 = vmul.f32 %v3397, %v3771
          %v3787 = vmul.f32 %v3398, %v3771
          %v3788 = vmul.f32 %v3399, %v3771
          %v3790 = vperm.slane %v3769, 0
          %v3792 = vadd.f32 %v3773, %v3790
          %v3793 = vadd.f32 %v3774, %v3790
          %v3794 = vadd.f32 %v3775, %v3790
          %v3795 = vadd.f32 %v3776, %v3790
          %v3796 = vadd.f32 %v3777, %v3790
          %v3797 = vadd.f32 %v3778, %v3790
          %v3798 = vadd.f32 %v3779, %v3790
          %v3799 = vadd.f32 %v3780, %v3790
          %v3800 = vadd.f32 %v3781, %v3790
          %v3801 = vadd.f32 %v3782, %v3790
          %v3802 = vadd.f32 %v3783, %v3790
          %v3803 = vadd.f32 %v3784, %v3790
          %v3804 = vadd.f32 %v3785, %v3790
          %v3805 = vadd.f32 %v3786, %v3790
          %v3806 = vadd.f32 %v3787, %v3790
          %v3807 = vadd.f32 %v3788, %v3790
          %vm3808 = vcmp.gt.f32.partialorder %v3792, 0.0
          %vm3809 = vcmp.gt.f32.partialorder %v3793, 0.0
          %vm3810 = vcmp.gt.f32.partialorder %v3794, 0.0
          %vm3811 = vcmp.gt.f32.partialorder %v3795, 0.0
          %vm3812 = vcmp.gt.f32.partialorder %v3796, 0.0
          %vm3813 = vcmp.gt.f32.partialorder %v3797, 0.0
          %vm3814 = vcmp.gt.f32.partialorder %v3798, 0.0
          %vm3815 = vcmp.gt.f32.partialorder %v3799, 0.0
          %vm3816 = vcmp.gt.f32.partialorder %v3800, 0.0
          %vm3817 = vcmp.gt.f32.partialorder %v3801, 0.0
          %vm3818 = vcmp.gt.f32.partialorder %v3802, 0.0
          %vm3819 = vcmp.gt.f32.partialorder %v3803, 0.0
          %vm3820 = vcmp.gt.f32.partialorder %v3804, 0.0
          %vm3821 = vcmp.gt.f32.partialorder %v3805, 0.0
          %vm3822 = vcmp.gt.f32.partialorder %v3806, 0.0
          %vm3823 = vcmp.gt.f32.partialorder %v3807, 0.0
          %v3824 = vmul.f32 %v3792, 0.2
          %v3825 = vmul.f32 %v3793, 0.2
          %v3826 = vmul.f32 %v3794, 0.2
          %v3827 = vmul.f32 %v3795, 0.2
          %v3828 = vmul.f32 %v3796, 0.2
          %v3829 = vmul.f32 %v3797, 0.2
          %v3830 = vmul.f32 %v3798, 0.2
          %v3831 = vmul.f32 %v3799, 0.2
          %v3832 = vmul.f32 %v3800, 0.2
          %v3833 = vmul.f32 %v3801, 0.2
          %v3834 = vmul.f32 %v3802, 0.2
          %v3835 = vmul.f32 %v3803, 0.2
          %v3836 = vmul.f32 %v3804, 0.2
          %v3837 = vmul.f32 %v3805, 0.2
          %v3838 = vmul.f32 %v3806, 0.2
          %v3839 = vmul.f32 %v3807, 0.2
          %v3840 = vsel %vm3808, %v3792, %v3824
          %v3841 = vsel %vm3809, %v3793, %v3825
          %v3842 = vsel %vm3810, %v3794, %v3826
          %v3843 = vsel %vm3811, %v3795, %v3827
          %v3844 = vsel %vm3812, %v3796, %v3828
          %v3845 = vsel %vm3813, %v3797, %v3829
          %v3846 = vsel %vm3814, %v3798, %v3830
          %v3847 = vsel %vm3815, %v3799, %v3831
          %v3848 = vsel %vm3816, %v3800, %v3832
          %v3849 = vsel %vm3817, %v3801, %v3833
          %v3850 = vsel %vm3818, %v3802, %v3834
          %v3851 = vsel %vm3819, %v3803, %v3835
          %v3852 = vsel %vm3820, %v3804, %v3836
          %v3853 = vsel %vm3821, %v3805, %v3837
          %v3854 = vsel %vm3822, %v3806, %v3838
          %v3855 = vsel %vm3823, %v3807, %v3839
          %v3856 = vpack.c.bf16 %v3840, %v3840
          %v3857 = vpack.c.bf16 %v3841, %v3841
          %v3858 = vpack.c.bf16 %v3842, %v3842
          %v3859 = vpack.c.bf16 %v3843, %v3843
          %v3860 = vpack.c.bf16 %v3844, %v3844
          %v3861 = vpack.c.bf16 %v3845, %v3845
          %v3862 = vpack.c.bf16 %v3846, %v3846
          %v3863 = vpack.c.bf16 %v3847, %v3847
          %v3864 = vpack.c.bf16 %v3848, %v3848
          %v3865 = vpack.c.bf16 %v3849, %v3849
          %v3866 = vpack.c.bf16 %v3850, %v3850
          %v3867 = vpack.c.bf16 %v3851, %v3851
          %v3868 = vpack.c.bf16 %v3852, %v3852
          %v3869 = vpack.c.bf16 %v3853, %v3853
          %v3870 = vpack.c.bf16 %v3854, %v3854
          %v3871 = vpack.c.bf16 %v3855, %v3855
          %3872 = vst [vmem:[%s543] sm:$0xf] %v3856
          %3873 = vst [vmem:[%s543 + $0x4] sm:$0xf] %v3857
          %3874 = vst [vmem:[%s543 + $0x8] sm:$0xf] %v3858
          %3875 = vst [vmem:[%s543 + $0xc] sm:$0xf] %v3859
          %3876 = vst [vmem:[%s543 + $0x10] sm:$0xf] %v3860
          %3877 = vst [vmem:[%s543 + $0x14] sm:$0xf] %v3861
          %3878 = vst [vmem:[%s543 + $0x18] sm:$0xf] %v3862
          %3879 = vst [vmem:[%s543 + $0x1c] sm:$0xf] %v3863
          %3880 = vst [vmem:[%s543 + $0x20] sm:$0xf] %v3864
          %3881 = vst [vmem:[%s543 + $0x24] sm:$0xf] %v3865
          %3882 = vst [vmem:[%s543 + $0x28] sm:$0xf] %v3866
          %3883 = vst [vmem:[%s543 + $0x2c] sm:$0xf] %v3867
          %3884 = vst [vmem:[%s543 + $0x30] sm:$0xf] %v3868
          %3885 = vst [vmem:[%s543 + $0x34] sm:$0xf] %v3869
          %3886 = vst [vmem:[%s543 + $0x38] sm:$0xf] %v3870
          %3887 = vst [vmem:[%s543 + $0x3c] sm:$0xf] %v3871
          %v3888 = vld [vmem:[#allocation2 + $0x80] sm:$0xff]
          %v3889 = vld [vmem:[#allocation2 + $0x88] sm:$0xff]
          %v3890 = vld [vmem:[#allocation2 + $0x90] sm:$0xff]
          %v3891 = vld [vmem:[#allocation2 + $0x98] sm:$0xff]
          %v3892 = vld [vmem:[#allocation2 + $0xa0] sm:$0xff]
          %v3893 = vld [vmem:[#allocation2 + $0xa8] sm:$0xff]
          %v3894 = vld [vmem:[#allocation2 + $0xb0] sm:$0xff]
          %v3895 = vld [vmem:[#allocation2 + $0xb8] sm:$0xff]
          %v3896 = vld [vmem:[#allocation2 + $0xc0] sm:$0xff]
          %v3897 = vld [vmem:[#allocation2 + $0xc8] sm:$0xff]
          %v3898 = vld [vmem:[#allocation2 + $0xd0] sm:$0xff]
          %v3899 = vld [vmem:[#allocation2 + $0xd8] sm:$0xff]
          %v3900 = vld [vmem:[#allocation2 + $0xe0] sm:$0xff]
          %v3901 = vld [vmem:[#allocation2 + $0xe8] sm:$0xff]
          %v3902 = vld [vmem:[#allocation2 + $0xf0] sm:$0xff]
          %v3903 = vld [vmem:[#allocation2 + $0xf8] sm:$0xff]
          %v3904 = vmul.f32 %v3888, %v3771
          %v3905 = vmul.f32 %v3889, %v3771
          %v3906 = vmul.f32 %v3890, %v3771
          %v3907 = vmul.f32 %v3891, %v3771
          %v3908 = vmul.f32 %v3892, %v3771
          %v3909 = vmul.f32 %v3893, %v3771
          %v3910 = vmul.f32 %v3894, %v3771
          %v3911 = vmul.f32 %v3895, %v3771
          %v3912 = vmul.f32 %v3896, %v3771
          %v3913 = vmul.f32 %v3897, %v3771
          %v3914 = vmul.f32 %v3898, %v3771
          %v3915 = vmul.f32 %v3899, %v3771
          %v3916 = vmul.f32 %v3900, %v3771
          %v3917 = vmul.f32 %v3901, %v3771
          %v3918 = vmul.f32 %v3902, %v3771
          %v3919 = vmul.f32 %v3903, %v3771
          %v3920 = vadd.f32 %v3904, %v3790
          %v3921 = vadd.f32 %v3905, %v3790
          %v3922 = vadd.f32 %v3906, %v3790
          %v3923 = vadd.f32 %v3907, %v3790
          %v3924 = vadd.f32 %v3908, %v3790
          %v3925 = vadd.f32 %v3909, %v3790
          %v3926 = vadd.f32 %v3910, %v3790
          %v3927 = vadd.f32 %v3911, %v3790
          %v3928 = vadd.f32 %v3912, %v3790
          %v3929 = vadd.f32 %v3913, %v3790
          %v3930 = vadd.f32 %v3914, %v3790
          %v3931 = vadd.f32 %v3915, %v3790
          %v3932 = vadd.f32 %v3916, %v3790
          %v3933 = vadd.f32 %v3917, %v3790
          %v3934 = vadd.f32 %v3918, %v3790
          %v3935 = vadd.f32 %v3919, %v3790
          %vm3936 = vcmp.gt.f32.partialorder %v3920, 0.0
          %vm3937 = vcmp.gt.f32.partialorder %v3921, 0.0
          %vm3938 = vcmp.gt.f32.partialorder %v3922, 0.0
          %vm3939 = vcmp.gt.f32.partialorder %v3923, 0.0
          %vm3940 = vcmp.gt.f32.partialorder %v3924, 0.0
          %vm3941 = vcmp.gt.f32.partialorder %v3925, 0.0
          %vm3942 = vcmp.gt.f32.partialorder %v3926, 0.0
          %vm3943 = vcmp.gt.f32.partialorder %v3927, 0.0
          %vm3944 = vcmp.gt.f32.partialorder %v3928, 0.0
          %vm3945 = vcmp.gt.f32.partialorder %v3929, 0.0
          %vm3946 = vcmp.gt.f32.partialorder %v3930, 0.0
          %vm3947 = vcmp.gt.f32.partialorder %v3931, 0.0
          %vm3948 = vcmp.gt.f32.partialorder %v3932, 0.0
          %vm3949 = vcmp.gt.f32.partialorder %v3933, 0.0
          %vm3950 = vcmp.gt.f32.partialorder %v3934, 0.0
          %vm3951 = vcmp.gt.f32.partialorder %v3935, 0.0
          %v3952 = vmul.f32 %v3920, 0.2
          %v3953 = vmul.f32 %v3921, 0.2
          %v3954 = vmul.f32 %v3922, 0.2
          %v3955 = vmul.f32 %v3923, 0.2
          %v3956 = vmul.f32 %v3924, 0.2
          %v3957 = vmul.f32 %v3925, 0.2
          %v3958 = vmul.f32 %v3926, 0.2
          %v3959 = vmul.f32 %v3927, 0.2
          %v3960 = vmul.f32 %v3928, 0.2
          %v3961 = vmul.f32 %v3929, 0.2
          %v3962 = vmul.f32 %v3930, 0.2
          %v3963 = vmul.f32 %v3931, 0.2
          %v3964 = vmul.f32 %v3932, 0.2
          %v3965 = vmul.f32 %v3933, 0.2
          %v3966 = vmul.f32 %v3934, 0.2
          %v3967 = vmul.f32 %v3935, 0.2
          %v3968 = vsel %vm3936, %v3920, %v3952
          %v3969 = vsel %vm3937, %v3921, %v3953
          %v3970 = vsel %vm3938, %v3922, %v3954
          %v3971 = vsel %vm3939, %v3923, %v3955
          %v3972 = vsel %vm3940, %v3924, %v3956
          %v3973 = vsel %vm3941, %v3925, %v3957
          %v3974 = vsel %vm3942, %v3926, %v3958
          %v3975 = vsel %vm3943, %v3927, %v3959
          %v3976 = vsel %vm3944, %v3928, %v3960
          %v3977 = vsel %vm3945, %v3929, %v3961
          %v3978 = vsel %vm3946, %v3930, %v3962
          %v3979 = vsel %vm3947, %v3931, %v3963
          %v3980 = vsel %vm3948, %v3932, %v3964
          %v3981 = vsel %vm3949, %v3933, %v3965
          %v3982 = vsel %vm3950, %v3934, %v3966
          %v3983 = vsel %vm3951, %v3935, %v3967
          %v3984 = vpack.c.bf16 %v3968, %v3968
          %v3985 = vpack.c.bf16 %v3969, %v3969
          %v3986 = vpack.c.bf16 %v3970, %v3970
          %v3987 = vpack.c.bf16 %v3971, %v3971
          %v3988 = vpack.c.bf16 %v3972, %v3972
          %v3989 = vpack.c.bf16 %v3973, %v3973
          %v3990 = vpack.c.bf16 %v3974, %v3974
          %v3991 = vpack.c.bf16 %v3975, %v3975
          %v3992 = vpack.c.bf16 %v3976, %v3976
          %v3993 = vpack.c.bf16 %v3977, %v3977
          %v3994 = vpack.c.bf16 %v3978, %v3978
          %v3995 = vpack.c.bf16 %v3979, %v3979
          %v3996 = vpack.c.bf16 %v3980, %v3980
          %v3997 = vpack.c.bf16 %v3981, %v3981
          %v3998 = vpack.c.bf16 %v3982, %v3982
          %v3999 = vpack.c.bf16 %v3983, %v3983
          %4000 = vst [vmem:[%s543 + $0x40] sm:$0xf] %v3984
          %4001 = vst [vmem:[%s543 + $0x44] sm:$0xf] %v3985
          %4002 = vst [vmem:[%s543 + $0x48] sm:$0xf] %v3986
          %4003 = vst [vmem:[%s543 + $0x4c] sm:$0xf] %v3987
          %4004 = vst [vmem:[%s543 + $0x50] sm:$0xf] %v3988
          %4005 = vst [vmem:[%s543 + $0x54] sm:$0xf] %v3989
          %4006 = vst [vmem:[%s543 + $0x58] sm:$0xf] %v3990
          %4007 = vst [vmem:[%s543 + $0x5c] sm:$0xf] %v3991
          %4008 = vst [vmem:[%s543 + $0x60] sm:$0xf] %v3992
          %4009 = vst [vmem:[%s543 + $0x64] sm:$0xf] %v3993
          %4010 = vst [vmem:[%s543 + $0x68] sm:$0xf] %v3994
          %4011 = vst [vmem:[%s543 + $0x6c] sm:$0xf] %v3995
          %4012 = vst [vmem:[%s543 + $0x70] sm:$0xf] %v3996
          %4013 = vst [vmem:[%s543 + $0x74] sm:$0xf] %v3997
          %4014 = vst [vmem:[%s543 + $0x78] sm:$0xf] %v3998
          %4015 = vst [vmem:[%s543 + $0x7c] sm:$0xf] %v3999
          %v4016 = vld [vmem:[#allocation2 + $0x100] sm:$0xff]
          %v4017 = vld [vmem:[#allocation2 + $0x108] sm:$0xff]
          %v4018 = vld [vmem:[#allocation2 + $0x110] sm:$0xff]
          %v4019 = vld [vmem:[#allocation2 + $0x118] sm:$0xff]
          %v4020 = vld [vmem:[#allocation2 + $0x120] sm:$0xff]
          %v4021 = vld [vmem:[#allocation2 + $0x128] sm:$0xff]
          %v4022 = vld [vmem:[#allocation2 + $0x130] sm:$0xff]
          %v4023 = vld [vmem:[#allocation2 + $0x138] sm:$0xff]
          %v4024 = vld [vmem:[#allocation2 + $0x140] sm:$0xff]
          %v4025 = vld [vmem:[#allocation2 + $0x148] sm:$0xff]
          %v4026 = vld [vmem:[#allocation2 + $0x150] sm:$0xff]
          %v4027 = vld [vmem:[#allocation2 + $0x158] sm:$0xff]
          %v4028 = vld [vmem:[#allocation2 + $0x160] sm:$0xff]
          %v4029 = vld [vmem:[#allocation2 + $0x168] sm:$0xff]
          %v4030 = vld [vmem:[#allocation2 + $0x170] sm:$0xff]
          %v4031 = vld [vmem:[#allocation2 + $0x178] sm:$0xff]
          %v4032 = vmul.f32 %v4016, %v3771
          %v4033 = vmul.f32 %v4017, %v3771
          %v4034 = vmul.f32 %v4018, %v3771
          %v4035 = vmul.f32 %v4019, %v3771
          %v4036 = vmul.f32 %v4020, %v3771
          %v4037 = vmul.f32 %v4021, %v3771
          %v4038 = vmul.f32 %v4022, %v3771
          %v4039 = vmul.f32 %v4023, %v3771
          %v4040 = vmul.f32 %v4024, %v3771
          %v4041 = vmul.f32 %v4025, %v3771
          %v4042 = vmul.f32 %v4026, %v3771
          %v4043 = vmul.f32 %v4027, %v3771
          %v4044 = vmul.f32 %v4028, %v3771
          %v4045 = vmul.f32 %v4029, %v3771
          %v4046 = vmul.f32 %v4030, %v3771
          %v4047 = vmul.f32 %v4031, %v3771
          %v4048 = vadd.f32 %v4032, %v3790
          %v4049 = vadd.f32 %v4033, %v3790
          %v4050 = vadd.f32 %v4034, %v3790
          %v4051 = vadd.f32 %v4035, %v3790
          %v4052 = vadd.f32 %v4036, %v3790
          %v4053 = vadd.f32 %v4037, %v3790
          %v4054 = vadd.f32 %v4038, %v3790
          %v4055 = vadd.f32 %v4039, %v3790
          %v4056 = vadd.f32 %v4040, %v3790
          %v4057 = vadd.f32 %v4041, %v3790
          %v4058 = vadd.f32 %v4042, %v3790
          %v4059 = vadd.f32 %v4043, %v3790
          %v4060 = vadd.f32 %v4044, %v3790
          %v4061 = vadd.f32 %v4045, %v3790
          %v4062 = vadd.f32 %v4046, %v3790
          %v4063 = vadd.f32 %v4047, %v3790
          %vm4064 = vcmp.gt.f32.partialorder %v4048, 0.0
          %vm4065 = vcmp.gt.f32.partialorder %v4049, 0.0
          %vm4066 = vcmp.gt.f32.partialorder %v4050, 0.0
          %vm4067 = vcmp.gt.f32.partialorder %v4051, 0.0
          %vm4068 = vcmp.gt.f32.partialorder %v4052, 0.0
          %vm4069 = vcmp.gt.f32.partialorder %v4053, 0.0
          %vm4070 = vcmp.gt.f32.partialorder %v4054, 0.0
          %vm4071 = vcmp.gt.f32.partialorder %v4055, 0.0
          %vm4072 = vcmp.gt.f32.partialorder %v4056, 0.0
          %vm4073 = vcmp.gt.f32.partialorder %v4057, 0.0
          %vm4074 = vcmp.gt.f32.partialorder %v4058, 0.0
          %vm4075 = vcmp.gt.f32.partialorder %v4059, 0.0
          %vm4076 = vcmp.gt.f32.partialorder %v4060, 0.0
          %vm4077 = vcmp.gt.f32.partialorder %v4061, 0.0
          %vm4078 = vcmp.gt.f32.partialorder %v4062, 0.0
          %vm4079 = vcmp.gt.f32.partialorder %v4063, 0.0
          %v4080 = vmul.f32 %v4048, 0.2
          %v4081 = vmul.f32 %v4049, 0.2
          %v4082 = vmul.f32 %v4050, 0.2
          %v4083 = vmul.f32 %v4051, 0.2
          %v4084 = vmul.f32 %v4052, 0.2
          %v4085 = vmul.f32 %v4053, 0.2
          %v4086 = vmul.f32 %v4054, 0.2
          %v4087 = vmul.f32 %v4055, 0.2
          %v4088 = vmul.f32 %v4056, 0.2
          %v4089 = vmul.f32 %v4057, 0.2
          %v4090 = vmul.f32 %v4058, 0.2
          %v4091 = vmul.f32 %v4059, 0.2
          %v4092 = vmul.f32 %v4060, 0.2
          %v4093 = vmul.f32 %v4061, 0.2
          %v4094 = vmul.f32 %v4062, 0.2
          %v4095 = vmul.f32 %v4063, 0.2
          %v4096 = vsel %vm4064, %v4048, %v4080
          %v4097 = vsel %vm4065, %v4049, %v4081
          %v4098 = vsel %vm4066, %v4050, %v4082
          %v4099 = vsel %vm4067, %v4051, %v4083
          %v4100 = vsel %vm4068, %v4052, %v4084
          %v4101 = vsel %vm4069, %v4053, %v4085
          %v4102 = vsel %vm4070, %v4054, %v4086
          %v4103 = vsel %vm4071, %v4055, %v4087
          %v4104 = vsel %vm4072, %v4056, %v4088
          %v4105 = vsel %vm4073, %v4057, %v4089
          %v4106 = vsel %vm4074, %v4058, %v4090
          %v4107 = vsel %vm4075, %v4059, %v4091
          %v4108 = vsel %vm4076, %v4060, %v4092
          %v4109 = vsel %vm4077, %v4061, %v4093
          %v4110 = vsel %vm4078, %v4062, %v4094
          %v4111 = vsel %vm4079, %v4063, %v4095
          %v4112 = vpack.c.bf16 %v4096, %v4096
          %v4113 = vpack.c.bf16 %v4097, %v4097
          %v4114 = vpack.c.bf16 %v4098, %v4098
          %v4115 = vpack.c.bf16 %v4099, %v4099
          %v4116 = vpack.c.bf16 %v4100, %v4100
          %v4117 = vpack.c.bf16 %v4101, %v4101
          %v4118 = vpack.c.bf16 %v4102, %v4102
          %v4119 = vpack.c.bf16 %v4103, %v4103
          %v4120 = vpack.c.bf16 %v4104, %v4104
          %v4121 = vpack.c.bf16 %v4105, %v4105
          %v4122 = vpack.c.bf16 %v4106, %v4106
          %v4123 = vpack.c.bf16 %v4107, %v4107
          %v4124 = vpack.c.bf16 %v4108, %v4108
          %v4125 = vpack.c.bf16 %v4109, %v4109
          %v4126 = vpack.c.bf16 %v4110, %v4110
          %v4127 = vpack.c.bf16 %v4111, %v4111
          %4128 = vst [vmem:[%s543 + $0x80] sm:$0xf] %v4112
          %4129 = vst [vmem:[%s543 + $0x84] sm:$0xf] %v4113
          %4130 = vst [vmem:[%s543 + $0x88] sm:$0xf] %v4114
          %4131 = vst [vmem:[%s543 + $0x8c] sm:$0xf] %v4115
          %4132 = vst [vmem:[%s543 + $0x90] sm:$0xf] %v4116
          %4133 = vst [vmem:[%s543 + $0x94] sm:$0xf] %v4117
          %4134 = vst [vmem:[%s543 + $0x98] sm:$0xf] %v4118
          %4135 = vst [vmem:[%s543 + $0x9c] sm:$0xf] %v4119
          %4136 = vst [vmem:[%s543 + $0xa0] sm:$0xf] %v4120
          %4137 = vst [vmem:[%s543 + $0xa4] sm:$0xf] %v4121
          %4138 = vst [vmem:[%s543 + $0xa8] sm:$0xf] %v4122
          %4139 = vst [vmem:[%s543 + $0xac] sm:$0xf] %v4123
          %4140 = vst [vmem:[%s543 + $0xb0] sm:$0xf] %v4124
          %4141 = vst [vmem:[%s543 + $0xb4] sm:$0xf] %v4125
          %4142 = vst [vmem:[%s543 + $0xb8] sm:$0xf] %v4126
          %4143 = vst [vmem:[%s543 + $0xbc] sm:$0xf] %v4127
          %v4144 = vld [vmem:[#allocation2 + $0x180] sm:$0xff]
          %v4145 = vld [vmem:[#allocation2 + $0x188] sm:$0xff]
          %v4146 = vld [vmem:[#allocation2 + $0x190] sm:$0xff]
          %v4147 = vld [vmem:[#allocation2 + $0x198] sm:$0xff]
          %v4148 = vld [vmem:[#allocation2 + $0x1a0] sm:$0xff]
          %v4149 = vld [vmem:[#allocation2 + $0x1a8] sm:$0xff]
          %v4150 = vld [vmem:[#allocation2 + $0x1b0] sm:$0xff]
          %v4151 = vld [vmem:[#allocation2 + $0x1b8] sm:$0xff]
          %v4152 = vld [vmem:[#allocation2 + $0x1c0] sm:$0xff]
          %v4153 = vld [vmem:[#allocation2 + $0x1c8] sm:$0xff]
          %v4154 = vld [vmem:[#allocation2 + $0x1d0] sm:$0xff]
          %v4155 = vld [vmem:[#allocation2 + $0x1d8] sm:$0xff]
          %v4156 = vld [vmem:[#allocation2 + $0x1e0] sm:$0xff]
          %v4157 = vld [vmem:[#allocation2 + $0x1e8] sm:$0xff]
          %v4158 = vld [vmem:[#allocation2 + $0x1f0] sm:$0xff]
          %v4159 = vld [vmem:[#allocation2 + $0x1f8] sm:$0xff]
          %v4160 = vmul.f32 %v4144, %v3771
          %v4161 = vmul.f32 %v4145, %v3771
          %v4162 = vmul.f32 %v4146, %v3771
          %v4163 = vmul.f32 %v4147, %v3771
          %v4164 = vmul.f32 %v4148, %v3771
          %v4165 = vmul.f32 %v4149, %v3771
          %v4166 = vmul.f32 %v4150, %v3771
          %v4167 = vmul.f32 %v4151, %v3771
          %v4168 = vmul.f32 %v4152, %v3771
          %v4169 = vmul.f32 %v4153, %v3771
          %v4170 = vmul.f32 %v4154, %v3771
          %v4171 = vmul.f32 %v4155, %v3771
          %v4172 = vmul.f32 %v4156, %v3771
          %v4173 = vmul.f32 %v4157, %v3771
          %v4174 = vmul.f32 %v4158, %v3771
          %v4175 = vmul.f32 %v4159, %v3771
          %v4176 = vadd.f32 %v4160, %v3790
          %v4177 = vadd.f32 %v4161, %v3790
          %v4178 = vadd.f32 %v4162, %v3790
          %v4179 = vadd.f32 %v4163, %v3790
          %v4180 = vadd.f32 %v4164, %v3790
          %v4181 = vadd.f32 %v4165, %v3790
          %v4182 = vadd.f32 %v4166, %v3790
          %v4183 = vadd.f32 %v4167, %v3790
          %v4184 = vadd.f32 %v4168, %v3790
          %v4185 = vadd.f32 %v4169, %v3790
          %v4186 = vadd.f32 %v4170, %v3790
          %v4187 = vadd.f32 %v4171, %v3790
          %v4188 = vadd.f32 %v4172, %v3790
          %v4189 = vadd.f32 %v4173, %v3790
          %v4190 = vadd.f32 %v4174, %v3790
          %v4191 = vadd.f32 %v4175, %v3790
          %vm4192 = vcmp.gt.f32.partialorder %v4176, 0.0
          %vm4193 = vcmp.gt.f32.partialorder %v4177, 0.0
          %vm4194 = vcmp.gt.f32.partialorder %v4178, 0.0
          %vm4195 = vcmp.gt.f32.partialorder %v4179, 0.0
          %vm4196 = vcmp.gt.f32.partialorder %v4180, 0.0
          %vm4197 = vcmp.gt.f32.partialorder %v4181, 0.0
          %vm4198 = vcmp.gt.f32.partialorder %v4182, 0.0
          %vm4199 = vcmp.gt.f32.partialorder %v4183, 0.0
          %vm4200 = vcmp.gt.f32.partialorder %v4184, 0.0
          %vm4201 = vcmp.gt.f32.partialorder %v4185, 0.0
          %vm4202 = vcmp.gt.f32.partialorder %v4186, 0.0
          %vm4203 = vcmp.gt.f32.partialorder %v4187, 0.0
          %vm4204 = vcmp.gt.f32.partialorder %v4188, 0.0
          %vm4205 = vcmp.gt.f32.partialorder %v4189, 0.0
          %vm4206 = vcmp.gt.f32.partialorder %v4190, 0.0
          %vm4207 = vcmp.gt.f32.partialorder %v4191, 0.0
          %v4208 = vmul.f32 %v4176, 0.2
          %v4209 = vmul.f32 %v4177, 0.2
          %v4210 = vmul.f32 %v4178, 0.2
          %v4211 = vmul.f32 %v4179, 0.2
          %v4212 = vmul.f32 %v4180, 0.2
          %v4213 = vmul.f32 %v4181, 0.2
          %v4214 = vmul.f32 %v4182, 0.2
          %v4215 = vmul.f32 %v4183, 0.2
          %v4216 = vmul.f32 %v4184, 0.2
          %v4217 = vmul.f32 %v4185, 0.2
          %v4218 = vmul.f32 %v4186, 0.2
          %v4219 = vmul.f32 %v4187, 0.2
          %v4220 = vmul.f32 %v4188, 0.2
          %v4221 = vmul.f32 %v4189, 0.2
          %v4222 = vmul.f32 %v4190, 0.2
          %v4223 = vmul.f32 %v4191, 0.2
          %v4224 = vsel %vm4192, %v4176, %v4208
          %v4225 = vsel %vm4193, %v4177, %v4209
          %v4226 = vsel %vm4194, %v4178, %v4210
          %v4227 = vsel %vm4195, %v4179, %v4211
          %v4228 = vsel %vm4196, %v4180, %v4212
          %v4229 = vsel %vm4197, %v4181, %v4213
          %v4230 = vsel %vm4198, %v4182, %v4214
          %v4231 = vsel %vm4199, %v4183, %v4215
          %v4232 = vsel %vm4200, %v4184, %v4216
          %v4233 = vsel %vm4201, %v4185, %v4217
          %v4234 = vsel %vm4202, %v4186, %v4218
          %v4235 = vsel %vm4203, %v4187, %v4219
          %v4236 = vsel %vm4204, %v4188, %v4220
          %v4237 = vsel %vm4205, %v4189, %v4221
          %v4238 = vsel %vm4206, %v4190, %v4222
          %v4239 = vsel %vm4207, %v4191, %v4223
          %v4240 = vpack.c.bf16 %v4224, %v4224
          %v4241 = vpack.c.bf16 %v4225, %v4225
          %v4242 = vpack.c.bf16 %v4226, %v4226
          %v4243 = vpack.c.bf16 %v4227, %v4227
          %v4244 = vpack.c.bf16 %v4228, %v4228
          %v4245 = vpack.c.bf16 %v4229, %v4229
          %v4246 = vpack.c.bf16 %v4230, %v4230
          %v4247 = vpack.c.bf16 %v4231, %v4231
          %v4248 = vpack.c.bf16 %v4232, %v4232
          %v4249 = vpack.c.bf16 %v4233, %v4233
          %v4250 = vpack.c.bf16 %v4234, %v4234
          %v4251 = vpack.c.bf16 %v4235, %v4235
          %v4252 = vpack.c.bf16 %v4236, %v4236
          %v4253 = vpack.c.bf16 %v4237, %v4237
          %v4254 = vpack.c.bf16 %v4238, %v4238
          %v4255 = vpack.c.bf16 %v4239, %v4239
          %4256 = vst [vmem:[%s543 + $0xc0] sm:$0xf] %v4240
          %4257 = vst [vmem:[%s543 + $0xc4] sm:$0xf] %v4241
          %4258 = vst [vmem:[%s543 + $0xc8] sm:$0xf] %v4242
          %4259 = vst [vmem:[%s543 + $0xcc] sm:$0xf] %v4243
          %4260 = vst [vmem:[%s543 + $0xd0] sm:$0xf] %v4244
          %4261 = vst [vmem:[%s543 + $0xd4] sm:$0xf] %v4245
          %4262 = vst [vmem:[%s543 + $0xd8] sm:$0xf] %v4246
          %4263 = vst [vmem:[%s543 + $0xdc] sm:$0xf] %v4247
          %4264 = vst [vmem:[%s543 + $0xe0] sm:$0xf] %v4248
          %4265 = vst [vmem:[%s543 + $0xe4] sm:$0xf] %v4249
          %4266 = vst [vmem:[%s543 + $0xe8] sm:$0xf] %v4250
          %4267 = vst [vmem:[%s543 + $0xec] sm:$0xf] %v4251
          %4268 = vst [vmem:[%s543 + $0xf0] sm:$0xf] %v4252
          %4269 = vst [vmem:[%s543 + $0xf4] sm:$0xf] %v4253
          %4270 = vst [vmem:[%s543 + $0xf8] sm:$0xf] %v4254
          %4271 = vst [vmem:[%s543 + $0xfc] sm:$0xf] %v4255
        $region67: #{discriminator_forward.6} parent=54 // pred_fallthru
          _
        %p4272 = scmp.lt.s32.totalorder %s19, 0
        %s4273 = scalar_select %p4272, %s19, 0
        %s4274 = smul.addr %s4273, 4
        %s4275 = scalar_lea.vmem %s4, %s4274
        // Predicated region
        $region68: #{discriminator_forward.6} parent=54 // pred_check
          %p4276 = pneg %p151
        $region69: #{discriminator_forward.6} parent=54 // pred_check_branch
          %4278 = sbr.rel (%p4276) target = $region71
        $region70: #{discriminator_forward.6} parent=54 // pred_region
          _
        $region71: #{discriminator_forward.6} parent=54 // pred_fallthru
          _
        // Predicated region
        $region72: #{discriminator_forward.6} parent=54 // pred_check
          %p4279 = pneg %p151
        $region73: #{discriminator_forward.6} parent=54 // pred_check_branch
          %4281 = sbr.rel (%p4279) target = $region75
        $region74: #{discriminator_forward.6} parent=54 // pred_region
          %p4282 = scmp.lt.s32.totalorder %s19, 0
          %s4283 = scalar_select %p4282, %s19, 0
          %s4284 = smul.addr %s4283, 4
          %s4285 = scalar_lea.vmem %s4, %s4284
        $region75: #{discriminator_forward.6} parent=54 // pred_fallthru
          _
      $region55: #{discriminator_forward.6} parent=5 // pred_fallthru
        _
      %p4286 = scmp.le.s32.totalorder 2, %s10
      // Predicated region
      $region76: #{discriminator_forward.6} parent=5 // pred_check
        %p4287 = pneg %p4286
      $region77: #{discriminator_forward.6} parent=5 // pred_check_branch
        %4289 = sbr.rel (%p4287) target = $region79
      $region78: #{discriminator_forward.6} parent=5 // pred_region
        %s4290 = ssub.s32 %s10, 2
      $region79: #{discriminator_forward.6} parent=5 // pred_fallthru
        _
    $region6: #{discriminator_forward.6} parent=1 // loop_footer
      %s14 = sadd.s32 1, %s10
    $region7: #{discriminator_forward.6} parent=1 // loop_footer_branch
      %9 = sbr.rel target = $region3
    $region8: #{discriminator_forward.6} parent=1 // loop_exit
      _

// kernel: discriminator_forward.7
$region0: #{discriminator_forward.7}
  #allocation0 [shape = 'u32[]', space=smem, size = 0x4, offset = 0x4, fixed_abs, tag = 'smem constant byte address 0x4 - core index']
  #allocation1 [shape = 'u32[72,128]{1,0:T(1,128)}', space=vmem, size = 0x9000, scoped, tag = 'internal scratch']
  #allocation2 [shape = 'f32[128,128]{1,0:T(8,128)}', space=vmem, size = 0x10000, scoped, tag = 'scratch operand']
  %s0 = inlined_call_operand.vmem [shape: bf16[128,2048], index: 0, kind: input, shape index: {}]
  %s1 = inlined_call_operand.vmem [shape: bf16[2048,256], index: 1, kind: input, shape index: {}]
  %s2 = inlined_call_operand.vmem [shape: f32[1,256], index: 2, kind: input, shape index: {}]
  %s3 = inlined_call_operand.vmem [shape: f32[1,256], index: 3, kind: input, shape index: {}]
  %s4 = inlined_call_operand.vmem [shape: bf16[128,256], index: 4, kind: output, shape index: {}]
  %s5 = sld [smem:[#allocation0]]
  $region158: #{discriminator_forward.7} parent=0
    _
  %s7 = ssub.s32 1, %s5
  %s8 = scalar_select 0, %s7, %s5
  $region1: #{discriminator_forward.7} parent=0
    #allocation3 [shape = 'u8[262144]{0}', space=vmem, size = 0x40000, scoped, tag = 'input window, operand 0']
    #allocation4 [shape = 'u8[262144]{0}', space=vmem, size = 0x40000, scoped, tag = 'input window, operand 1']
    #allocation5 [shape = 'u8[65536]{0}', space=vmem, size = 0x10000, scoped, tag = 'output window, operand 0']
    loop: start=0, step=1, limit=10
    $region2: #{discriminator_forward.7} parent=1 // loop_pre_header
      _
    $region3: #{discriminator_forward.7} parent=1 // loop_header
      %s10 = sphi 0, %s14
      %p11 = scmp.ge.s32.totalorder %s10, 10
      %s17 = sphi 0, %s29
      %s18 = sphi 0, %s25
      %s19 = sphi 0, %s17
      %s20 = sphi 0, %s18
      %s21 = sphi 0, %s19
      %s22 = sphi 0, %s20
      %s32 = sphi 0, %s34
      %s35 = sphi 0, %s32
      %s36 = sphi 0, %s35
      %s52 = sphi 0, %s36
      %s60 = sphi 0, %s62
      %s63 = sphi 0, %s60
      %s64 = sphi 0, %s63
      %s80 = sphi 0, %s64
      %s86 = sphi 0, %s88
      %s89 = sphi 0, %s86
      %s90 = sphi 0, %s89
      %s106 = sphi 0, %s90
      %s112 = sphi 0, %s114
      %s115 = sphi 0, %s112
      %s116 = sphi 0, %s115
      %s132 = sphi 0, %s116
      %s138 = sphi 0, %s140
      %s141 = sphi 0, %s138
      %s142 = sphi 0, %s141
      %s158 = sphi 0, %s142
    $region4: #{discriminator_forward.7} parent=1 // loop_header_branch
      %13 = sbr.rel (%p11) target = $region8
    $region5: #{discriminator_forward.7} parent=1 // loop_body
      %s15 = ssub.s32 %s10, 1
      %s16 = ssub.s32 %s10, 2
      %s23 = sadd.s32 1, %s18
      %p24 = scmp.ge.s32.totalorder %s23, 4
      %s25 = scalar_select %p24, 0, %s23
      %s26 = sadd.s32 1, %s17
      %s27 = scalar_select %p24, %s26, %s17
      %p28 = scmp.ge.s32.totalorder %s27, 2
      %s29 = scalar_select %p28, 0, %s27
      %s30 = ssub.s32 %s18, %s25
      %p31 = scmp.eq.s32.totalorder %s30, 0
      %s33 = sadd.s32 %s32, 1
      %s34 = scalar_select %p31, %s32, %s33
      %p37 = pneg %p31
      %p38 = scmp.eq.s32.totalorder %s10, 7
      %p39 = por %p37, %p38
      %p40 = scmp.ne.s32.totalorder %s32, %s35
      %p41 = scmp.eq.s32.totalorder %s10, 0
      %p42 = por %p40, %p41
      %p43 = scmp.ne.s32.totalorder %s32, %s35
      %p44 = scmp.eq.s32.totalorder %s15, 7
      %p45 = por %p43, %p44
      %p46 = scmp.ne.s32.totalorder %s35, %s36
      %p47 = scmp.eq.s32.totalorder %s15, 0
      %p48 = por %p46, %p47
      %p49 = scmp.ne.s32.totalorder %s35, %s36
      %p50 = scmp.eq.s32.totalorder %s16, 7
      %p51 = por %p49, %p50
      %p53 = scmp.ne.s32.totalorder %s36, %s52
      %p54 = scmp.eq.s32.totalorder %s16, 0
      %p55 = por %p53, %p54
      %s56 = ssub.s32 %s18, %s25
      %s57 = ssub.s32 %s17, %s29
      %s58 = sor.u32 %s56, %s57
      %p59 = scmp.eq.s32.totalorder %s58, 0
      %s61 = sadd.s32 %s60, 1
      %s62 = scalar_select %p59, %s60, %s61
      %p65 = pneg %p59
      %p66 = scmp.eq.s32.totalorder %s10, 7
      %p67 = por %p65, %p66
      %p68 = scmp.ne.s32.totalorder %s60, %s63
      %p69 = scmp.eq.s32.totalorder %s10, 0
      %p70 = por %p68, %p69
      %p71 = scmp.ne.s32.totalorder %s60, %s63
      %p72 = scmp.eq.s32.totalorder %s15, 7
      %p73 = por %p71, %p72
      %p74 = scmp.ne.s32.totalorder %s63, %s64
      %p75 = scmp.eq.s32.totalorder %s15, 0
      %p76 = por %p74, %p75
      %p77 = scmp.ne.s32.totalorder %s63, %s64
      %p78 = scmp.eq.s32.totalorder %s16, 7
      %p79 = por %p77, %p78
      %p81 = scmp.ne.s32.totalorder %s64, %s80
      %p82 = scmp.eq.s32.totalorder %s16, 0
      %p83 = por %p81, %p82
      %s84 = ssub.s32 %s17, %s29
      %p85 = scmp.eq.s32.totalorder %s84, 0
      %s87 = sadd.s32 %s86, 1
      %s88 = scalar_select %p85, %s86, %s87
      %p91 = pneg %p85
      %p92 = scmp.eq.s32.totalorder %s10, 7
      %p93 = por %p91, %p92
      %p94 = scmp.ne.s32.totalorder %s86, %s89
      %p95 = scmp.eq.s32.totalorder %s10, 0
      %p96 = por %p94, %p95
      %p97 = scmp.ne.s32.totalorder %s86, %s89
      %p98 = scmp.eq.s32.totalorder %s15, 7
      %p99 = por %p97, %p98
      %p100 = scmp.ne.s32.totalorder %s89, %s90
      %p101 = scmp.eq.s32.totalorder %s15, 0
      %p102 = por %p100, %p101
      %p103 = scmp.ne.s32.totalorder %s89, %s90
      %p104 = scmp.eq.s32.totalorder %s16, 7
      %p105 = por %p103, %p104
      %p107 = scmp.ne.s32.totalorder %s90, %s106
      %p108 = scmp.eq.s32.totalorder %s16, 0
      %p109 = por %p107, %p108
      %s110 = ssub.s32 %s17, %s29
      %p111 = scmp.eq.s32.totalorder %s110, 0
      %s113 = sadd.s32 %s112, 1
      %s114 = scalar_select %p111, %s112, %s113
      %p117 = pneg %p111
      %p118 = scmp.eq.s32.totalorder %s10, 7
      %p119 = por %p117, %p118
      %p120 = scmp.ne.s32.totalorder %s112, %s115
      %p121 = scmp.eq.s32.totalorder %s10, 0
      %p122 = por %p120, %p121
      %p123 = scmp.ne.s32.totalorder %s112, %s115
      %p124 = scmp.eq.s32.totalorder %s15, 7
      %p125 = por %p123, %p124
      %p126 = scmp.ne.s32.totalorder %s115, %s116
      %p127 = scmp.eq.s32.totalorder %s15, 0
      %p128 = por %p126, %p127
      %p129 = scmp.ne.s32.totalorder %s115, %s116
      %p130 = scmp.eq.s32.totalorder %s16, 7
      %p131 = por %p129, %p130
      %p133 = scmp.ne.s32.totalorder %s116, %s132
      %p134 = scmp.eq.s32.totalorder %s16, 0
      %p135 = por %p133, %p134
      %s136 = ssub.s32 %s17, %s29
      %p137 = scmp.eq.s32.totalorder %s136, 0
      %s139 = sadd.s32 %s138, 1
      %s140 = scalar_select %p137, %s138, %s139
      %p143 = pneg %p137
      %p144 = scmp.eq.s32.totalorder %s10, 7
      %p145 = por %p143, %p144
      %p146 = scmp.ne.s32.totalorder %s138, %s141
      %p147 = scmp.eq.s32.totalorder %s10, 0
      %p148 = por %p146, %p147
      %p149 = scmp.ne.s32.totalorder %s138, %s141
      %p150 = scmp.eq.s32.totalorder %s15, 7
      %p151 = por %p149, %p150
      %p152 = scmp.ne.s32.totalorder %s141, %s142
      %p153 = scmp.eq.s32.totalorder %s15, 0
      %p154 = por %p152, %p153
      %p155 = scmp.ne.s32.totalorder %s141, %s142
      %p156 = scmp.eq.s32.totalorder %s16, 7
      %p157 = por %p155, %p156
      %p159 = scmp.ne.s32.totalorder %s142, %s158
      %p160 = scmp.eq.s32.totalorder %s16, 0
      %p161 = por %p159, %p160
      %p162 = scmp.le.s32.totalorder 1, %s10
      %p163 = scmp.lt.s32.totalorder %s10, 9
      %p164 = pnand %p162, %p163
      %p165 = pneg %p164
      // Predicated region
      $region9: #{discriminator_forward.7} parent=5 // pred_check
        _
      $region10: #{discriminator_forward.7} parent=5 // pred_check_branch
        %167 = sbr.rel (%p164) target = $region12
      $region11: #{discriminator_forward.7} parent=5 // pred_region
        %s168 = ssub.s32 %s10, 1
      $region12: #{discriminator_forward.7} parent=5 // pred_fallthru
        _
      %p169 = scmp.lt.s32.totalorder %s10, 8
      // Predicated region
      $region13: #{discriminator_forward.7} parent=5 // pred_check
        %p170 = pneg %p169
      $region14: #{discriminator_forward.7} parent=5 // pred_check_branch
        %172 = sbr.rel (%p170) target = $region16
      $region15: #{discriminator_forward.7} parent=5 // pred_region
        // Predicated region
        $region17: #{discriminator_forward.7} parent=15 // pred_check
          %p173 = pneg %p42
        $region18: #{discriminator_forward.7} parent=15 // pred_check_branch
          %175 = sbr.rel (%p173) target = $region20
        $region19: #{discriminator_forward.7} parent=15 // pred_region
          %s176 = sand.u32 %s32, 1
          %s177 = sand.u32 %s32, 1
          %s178 = smul.addr %s177, 256
          %s179 = scalar_lea.vmem [#allocation3], %s178
          %s180 = smul.u32 4, %s18
          %s181 = smul.addr %s180, 4
          %s182 = scalar_lea.vmem %s0, %s181
          // Predicated region
          $region21: #{discriminator_forward.7} parent=19 // pred_check
            _
          $region22: #{discriminator_forward.7} parent=19 // pred_check_branch
            %184 = sbr.rel (0) target = $region24
          $region23: #{discriminator_forward.7} parent=19 // pred_region
            // Predicated region
            $region25: #{discriminator_forward.7} parent=23 // pred_check
              _
            $region26: #{discriminator_forward.7} parent=23 // pred_check_branch
              %186 = sbr.rel (0) target = $region28
            $region27: #{discriminator_forward.7} parent=23 // pred_region
              loop: start=0, step=1, limit=1
              $region29: #{discriminator_forward.7} parent=27 // loop_pre_header
                _
              $region30: #{discriminator_forward.7} parent=27 // loop_header
                %s188 = sphi 0, %s192
                %p189 = scmp.ge.s32.totalorder %s188, 1
                %s193 = sphi %s182, %s182
                %s194 = sphi %s179, %s179
              $region31: #{discriminator_forward.7} parent=27 // loop_header_branch
                %191 = sbr.rel (%p189) target = $region35
              $region32: #{discriminator_forward.7} parent=27 // loop_body
                %v195 = vld [vmem:[%s193] sm:$0xff]
                %196 = vst [vmem:[%s194] sm:$0xff] %v195
                %v197 = vld [vmem:[%s193 + $0x8] sm:$0xff]
                %198 = vst [vmem:[%s194 + $0x8] sm:$0xff] %v197
                %v199 = vld [vmem:[%s193 + $0x40] sm:$0xff]
                %200 = vst [vmem:[%s194 + $0x10] sm:$0xff] %v199
                %v201 = vld [vmem:[%s193 + $0x48] sm:$0xff]
                %202 = vst [vmem:[%s194 + $0x18] sm:$0xff] %v201
                %v203 = vld [vmem:[%s193 + $0x80] sm:$0xff]
                %204 = vst [vmem:[%s194 + $0x20] sm:$0xff] %v203
                %v205 = vld [vmem:[%s193 + $0x88] sm:$0xff]
                %206 = vst [vmem:[%s194 + $0x28] sm:$0xff] %v205
                %v207 = vld [vmem:[%s193 + $0xc0] sm:$0xff]
                %208 = vst [vmem:[%s194 + $0x30] sm:$0xff] %v207
                %v209 = vld [vmem:[%s193 + $0xc8] sm:$0xff]
                %210 = vst [vmem:[%s194 + $0x38] sm:$0xff] %v209
                %v211 = vld [vmem:[%s193 + $0x100] sm:$0xff]
                %212 = vst [vmem:[%s194 + $0x40] sm:$0xff] %v211
                %v213 = vld [vmem:[%s193 + $0x108] sm:$0xff]
                %214 = vst [vmem:[%s194 + $0x48] sm:$0xff] %v213
                %v215 = vld [vmem:[%s193 + $0x140] sm:$0xff]
                %216 = vst [vmem:[%s194 + $0x50] sm:$0xff] %v215
                %v217 = vld [vmem:[%s193 + $0x148] sm:$0xff]
                %218 = vst [vmem:[%s194 + $0x58] sm:$0xff] %v217
                %v219 = vld [vmem:[%s193 + $0x180] sm:$0xff]
                %220 = vst [vmem:[%s194 + $0x60] sm:$0xff] %v219
                %v221 = vld [vmem:[%s193 + $0x188] sm:$0xff]
                %222 = vst [vmem:[%s194 + $0x68] sm:$0xff] %v221
                %v223 = vld [vmem:[%s193 + $0x1c0] sm:$0xff]
                %224 = vst [vmem:[%s194 + $0x70] sm:$0xff] %v223
                %v225 = vld [vmem:[%s193 + $0x1c8] sm:$0xff]
                %226 = vst [vmem:[%s194 + $0x78] sm:$0xff] %v225
                %v227 = vld [vmem:[%s193 + $0x200] sm:$0xff]
                %228 = vst [vmem:[%s194 + $0x80] sm:$0xff] %v227
                %v229 = vld [vmem:[%s193 + $0x208] sm:$0xff]
                %230 = vst [vmem:[%s194 + $0x88] sm:$0xff] %v229
                %v231 = vld [vmem:[%s193 + $0x240] sm:$0xff]
                %232 = vst [vmem:[%s194 + $0x90] sm:$0xff] %v231
                %v233 = vld [vmem:[%s193 + $0x248] sm:$0xff]
                %234 = vst [vmem:[%s194 + $0x98] sm:$0xff] %v233
                %v235 = vld [vmem:[%s193 + $0x280] sm:$0xff]
                %236 = vst [vmem:[%s194 + $0xa0] sm:$0xff] %v235
                %v237 = vld [vmem:[%s193 + $0x288] sm:$0xff]
                %238 = vst [vmem:[%s194 + $0xa8] sm:$0xff] %v237
                %v239 = vld [vmem:[%s193 + $0x2c0] sm:$0xff]
                %240 = vst [vmem:[%s194 + $0xb0] sm:$0xff] %v239
                %v241 = vld [vmem:[%s193 + $0x2c8] sm:$0xff]
                %242 = vst [vmem:[%s194 + $0xb8] sm:$0xff] %v241
                %v243 = vld [vmem:[%s193 + $0x300] sm:$0xff]
                %244 = vst [vmem:[%s194 + $0xc0] sm:$0xff] %v243
                %v245 = vld [vmem:[%s193 + $0x308] sm:$0xff]
                %246 = vst [vmem:[%s194 + $0xc8] sm:$0xff] %v245
                %v247 = vld [vmem:[%s193 + $0x340] sm:$0xff]
                %248 = vst [vmem:[%s194 + $0xd0] sm:$0xff] %v247
                %v249 = vld [vmem:[%s193 + $0x348] sm:$0xff]
                %250 = vst [vmem:[%s194 + $0xd8] sm:$0xff] %v249
                %v251 = vld [vmem:[%s193 + $0x380] sm:$0xff]
                %252 = vst [vmem:[%s194 + $0xe0] sm:$0xff] %v251
                %v253 = vld [vmem:[%s193 + $0x388] sm:$0xff]
                %254 = vst [vmem:[%s194 + $0xe8] sm:$0xff] %v253
                %v255 = vld [vmem:[%s193 + $0x3c0] sm:$0xff]
                %256 = vst [vmem:[%s194 + $0xf0] sm:$0xff] %v255
                %v257 = vld [vmem:[%s193 + $0x3c8] sm:$0xff]
                %258 = vst [vmem:[%s194 + $0xf8] sm:$0xff] %v257
              $region33: #{discriminator_forward.7} parent=27 // loop_footer
                %s192 = sadd.s32 1, %s188
              $region34: #{discriminator_forward.7} parent=27 // loop_footer_branch
                %187 = sbr.rel target = $region30
              $region35: #{discriminator_forward.7} parent=27 // loop_exit
                _
            $region28: #{discriminator_forward.7} parent=23 // pred_fallthru
              _
            // Predicated region
            $region36: #{discriminator_forward.7} parent=23 // pred_check
              _
            $region37: #{discriminator_forward.7} parent=23 // pred_check_branch
              %260 = sbr.rel target = $region39
            $region38: #{discriminator_forward.7} parent=23 // pred_region
              _
            $region39: #{discriminator_forward.7} parent=23 // pred_fallthru
              _
          $region24: #{discriminator_forward.7} parent=19 // pred_fallthru
            _
          %261 = vnop
        $region20: #{discriminator_forward.7} parent=15 // pred_fallthru
          _
        // Predicated region
        $region40: #{discriminator_forward.7} parent=15 // pred_check
          %p262 = pneg %p70
        $region41: #{discriminator_forward.7} parent=15 // pred_check_branch
          %264 = sbr.rel (%p262) target = $region43
        $region42: #{discriminator_forward.7} parent=15 // pred_region
          %s265 = sand.u32 %s60, 1
          %s266 = sand.u32 %s60, 1
          %s267 = smul.addr %s266, 256
          %s268 = scalar_lea.vmem [#allocation4], %s267
          %s269 = smul.u32 64, %s18
          %s270 = smul.addr %s269, 2
          %s271 = sadd.s32 %s17, %s270
          %s272 = smul.addr %s271, 4
          %s273 = scalar_lea.vmem %s1, %s272
          // Predicated region
          $region44: #{discriminator_forward.7} parent=42 // pred_check
            _
          $region45: #{discriminator_forward.7} parent=42 // pred_check_branch
            %275 = sbr.rel (0) target = $region47
          $region46: #{discriminator_forward.7} parent=42 // pred_region
            // Predicated region
            $region48: #{discriminator_forward.7} parent=46 // pred_check
              _
            $region49: #{discriminator_forward.7} parent=46 // pred_check_branch
              %277 = sbr.rel target = $region51
            $region50: #{discriminator_forward.7} parent=46 // pred_region
              // Predicated region
              $region63: #{discriminator_forward.7} parent=50 // pred_check
                _
              $region64: #{discriminator_forward.7} parent=50 // pred_check_branch
                %419 = sbr.rel (0) target = $region66
              $region65: #{discriminator_forward.7} parent=50 // pred_region
                loop: start=0, step=1, limit=1
                $region67: #{discriminator_forward.7} parent=65 // loop_pre_header
                  _
                $region68: #{discriminator_forward.7} parent=65 // loop_header
                  %s421 = sphi 0, %s425
                  %p422 = scmp.ge.s32.totalorder %s421, 1
                  %s426 = sphi %s273, %s273
                  %s427 = sphi %s268, %s268
                $region69: #{discriminator_forward.7} parent=65 // loop_header_branch
                  %424 = sbr.rel (%p422) target = $region73
                $region70: #{discriminator_forward.7} parent=65 // loop_body
                  _
                $region71: #{discriminator_forward.7} parent=65 // loop_footer
                  %s425 = sadd.s32 1, %s421
                $region72: #{discriminator_forward.7} parent=65 // loop_footer_branch
                  %420 = sbr.rel target = $region68
                $region73: #{discriminator_forward.7} parent=65 // loop_exit
                  _
                %s429 = ssub.s32 16, 1
                loop: start=0, step=1, limit=1
                $region74: #{discriminator_forward.7} parent=65 // loop_pre_header
                  _
                $region75: #{discriminator_forward.7} parent=65 // loop_header
                  %s431 = sphi 0, %s435
                  %p432 = scmp.ge.s32.totalorder %s431, 1
                  %s436 = sphi %s273, %s273
                  %s437 = sphi %s268, %s268
                $region76: #{discriminator_forward.7} parent=65 // loop_header_branch
                  %434 = sbr.rel (%p432) target = $region80
                $region77: #{discriminator_forward.7} parent=65 // loop_body
                  %v438 = vld [vmem:[%s436] sm:%s429]
                  %439 = vst [vmem:[%s437] sm:%s429] %v438
                  %v440 = vld [vmem:[%s436 + $0x8] sm:%s429]
                  %441 = vst [vmem:[%s437 + $0x4] sm:%s429] %v440
                  %v442 = vld [vmem:[%s436 + $0x10] sm:%s429]
                  %443 = vst [vmem:[%s437 + $0x8] sm:%s429] %v442
                  %v444 = vld [vmem:[%s436 + $0x18] sm:%s429]
                  %445 = vst [vmem:[%s437 + $0xc] sm:%s429] %v444
                  %v446 = vld [vmem:[%s436 + $0x20] sm:%s429]
                  %447 = vst [vmem:[%s437 + $0x10] sm:%s429] %v446
                  %v448 = vld [vmem:[%s436 + $0x28] sm:%s429]
                  %449 = vst [vmem:[%s437 + $0x14] sm:%s429] %v448
                  %v450 = vld [vmem:[%s436 + $0x30] sm:%s429]
                  %451 = vst [vmem:[%s437 + $0x18] sm:%s429] %v450
                  %v452 = vld [vmem:[%s436 + $0x38] sm:%s429]
                  %453 = vst [vmem:[%s437 + $0x1c] sm:%s429] %v452
                  %v454 = vld [vmem:[%s436 + $0x40] sm:%s429]
                  %455 = vst [vmem:[%s437 + $0x20] sm:%s429] %v454
                  %v456 = vld [vmem:[%s436 + $0x48] sm:%s429]
                  %457 = vst [vmem:[%s437 + $0x24] sm:%s429] %v456
                  %v458 = vld [vmem:[%s436 + $0x50] sm:%s429]
                  %459 = vst [vmem:[%s437 + $0x28] sm:%s429] %v458
                  %v460 = vld [vmem:[%s436 + $0x58] sm:%s429]
                  %461 = vst [vmem:[%s437 + $0x2c] sm:%s429] %v460
                  %v462 = vld [vmem:[%s436 + $0x60] sm:%s429]
                  %463 = vst [vmem:[%s437 + $0x30] sm:%s429] %v462
                  %v464 = vld [vmem:[%s436 + $0x68] sm:%s429]
                  %465 = vst [vmem:[%s437 + $0x34] sm:%s429] %v464
                  %v466 = vld [vmem:[%s436 + $0x70] sm:%s429]
                  %467 = vst [vmem:[%s437 + $0x38] sm:%s429] %v466
                  %v468 = vld [vmem:[%s436 + $0x78] sm:%s429]
                  %469 = vst [vmem:[%s437 + $0x3c] sm:%s429] %v468
                  %v470 = vld [vmem:[%s436 + $0x80] sm:%s429]
                  %471 = vst [vmem:[%s437 + $0x40] sm:%s429] %v470
                  %v472 = vld [vmem:[%s436 + $0x88] sm:%s429]
                  %473 = vst [vmem:[%s437 + $0x44] sm:%s429] %v472
                  %v474 = vld [vmem:[%s436 + $0x90] sm:%s429]
                  %475 = vst [vmem:[%s437 + $0x48] sm:%s429] %v474
                  %v476 = vld [vmem:[%s436 + $0x98] sm:%s429]
                  %477 = vst [vmem:[%s437 + $0x4c] sm:%s429] %v476
                  %v478 = vld [vmem:[%s436 + $0xa0] sm:%s429]
                  %479 = vst [vmem:[%s437 + $0x50] sm:%s429] %v478
                  %v480 = vld [vmem:[%s436 + $0xa8] sm:%s429]
                  %481 = vst [vmem:[%s437 + $0x54] sm:%s429] %v480
                  %v482 = vld [vmem:[%s436 + $0xb0] sm:%s429]
                  %483 = vst [vmem:[%s437 + $0x58] sm:%s429] %v482
                  %v484 = vld [vmem:[%s436 + $0xb8] sm:%s429]
                  %485 = vst [vmem:[%s437 + $0x5c] sm:%s429] %v484
                  %v486 = vld [vmem:[%s436 + $0xc0] sm:%s429]
                  %487 = vst [vmem:[%s437 + $0x60] sm:%s429] %v486
                  %v488 = vld [vmem:[%s436 + $0xc8] sm:%s429]
                  %489 = vst [vmem:[%s437 + $0x64] sm:%s429] %v488
                  %v490 = vld [vmem:[%s436 + $0xd0] sm:%s429]
                  %491 = vst [vmem:[%s437 + $0x68] sm:%s429] %v490
                  %v492 = vld [vmem:[%s436 + $0xd8] sm:%s429]
                  %493 = vst [vmem:[%s437 + $0x6c] sm:%s429] %v492
                  %v494 = vld [vmem:[%s436 + $0xe0] sm:%s429]
                  %495 = vst [vmem:[%s437 + $0x70] sm:%s429] %v494
                  %v496 = vld [vmem:[%s436 + $0xe8] sm:%s429]
                  %497 = vst [vmem:[%s437 + $0x74] sm:%s429] %v496
                  %v498 = vld [vmem:[%s436 + $0xf0] sm:%s429]
                  %499 = vst [vmem:[%s437 + $0x78] sm:%s429] %v498
                  %v500 = vld [vmem:[%s436 + $0xf8] sm:%s429]
                  %501 = vst [vmem:[%s437 + $0x7c] sm:%s429] %v500
                  %v502 = vld [vmem:[%s436 + $0x100] sm:%s429]
                  %503 = vst [vmem:[%s437 + $0x80] sm:%s429] %v502
                  %v504 = vld [vmem:[%s436 + $0x108] sm:%s429]
                  %505 = vst [vmem:[%s437 + $0x84] sm:%s429] %v504
                  %v506 = vld [vmem:[%s436 + $0x110] sm:%s429]
                  %507 = vst [vmem:[%s437 + $0x88] sm:%s429] %v506
                  %v508 = vld [vmem:[%s436 + $0x118] sm:%s429]
                  %509 = vst [vmem:[%s437 + $0x8c] sm:%s429] %v508
                  %v510 = vld [vmem:[%s436 + $0x120] sm:%s429]
                  %511 = vst [vmem:[%s437 + $0x90] sm:%s429] %v510
                  %v512 = vld [vmem:[%s436 + $0x128] sm:%s429]
                  %513 = vst [vmem:[%s437 + $0x94] sm:%s429] %v512
                  %v514 = vld [vmem:[%s436 + $0x130] sm:%s429]
                  %515 = vst [vmem:[%s437 + $0x98] sm:%s429] %v514
                  %v516 = vld [vmem:[%s436 + $0x138] sm:%s429]
                  %517 = vst [vmem:[%s437 + $0x9c] sm:%s429] %v516
                  %v518 = vld [vmem:[%s436 + $0x140] sm:%s429]
                  %519 = vst [vmem:[%s437 + $0xa0] sm:%s429] %v518
                  %v520 = vld [vmem:[%s436 + $0x148] sm:%s429]
                  %521 = vst [vmem:[%s437 + $0xa4] sm:%s429] %v520
                  %v522 = vld [vmem:[%s436 + $0x150] sm:%s429]
                  %523 = vst [vmem:[%s437 + $0xa8] sm:%s429] %v522
                  %v524 = vld [vmem:[%s436 + $0x158] sm:%s429]
                  %525 = vst [vmem:[%s437 + $0xac] sm:%s429] %v524
                  %v526 = vld [vmem:[%s436 + $0x160] sm:%s429]
                  %527 = vst [vmem:[%s437 + $0xb0] sm:%s429] %v526
                  %v528 = vld [vmem:[%s436 + $0x168] sm:%s429]
                  %529 = vst [vmem:[%s437 + $0xb4] sm:%s429] %v528
                  %v530 = vld [vmem:[%s436 + $0x170] sm:%s429]
                  %531 = vst [vmem:[%s437 + $0xb8] sm:%s429] %v530
                  %v532 = vld [vmem:[%s436 + $0x178] sm:%s429]
                  %533 = vst [vmem:[%s437 + $0xbc] sm:%s429] %v532
                  %v534 = vld [vmem:[%s436 + $0x180] sm:%s429]
                  %535 = vst [vmem:[%s437 + $0xc0] sm:%s429] %v534
                  %v536 = vld [vmem:[%s436 + $0x188] sm:%s429]
                  %537 = vst [vmem:[%s437 + $0xc4] sm:%s429] %v536
                  %v538 = vld [vmem:[%s436 + $0x190] sm:%s429]
                  %539 = vst [vmem:[%s437 + $0xc8] sm:%s429] %v538
                  %v540 = vld [vmem:[%s436 + $0x198] sm:%s429]
                  %541 = vst [vmem:[%s437 + $0xcc] sm:%s429] %v540
                  %v542 = vld [vmem:[%s436 + $0x1a0] sm:%s429]
                  %543 = vst [vmem:[%s437 + $0xd0] sm:%s429] %v542
                  %v544 = vld [vmem:[%s436 + $0x1a8] sm:%s429]
                  %545 = vst [vmem:[%s437 + $0xd4] sm:%s429] %v544
                  %v546 = vld [vmem:[%s436 + $0x1b0] sm:%s429]
                  %547 = vst [vmem:[%s437 + $0xd8] sm:%s429] %v546
                  %v548 = vld [vmem:[%s436 + $0x1b8] sm:%s429]
                  %549 = vst [vmem:[%s437 + $0xdc] sm:%s429] %v548
                  %v550 = vld [vmem:[%s436 + $0x1c0] sm:%s429]
                  %551 = vst [vmem:[%s437 + $0xe0] sm:%s429] %v550
                  %v552 = vld [vmem:[%s436 + $0x1c8] sm:%s429]
                  %553 = vst [vmem:[%s437 + $0xe4] sm:%s429] %v552
                  %v554 = vld [vmem:[%s436 + $0x1d0] sm:%s429]
                  %555 = vst [vmem:[%s437 + $0xe8] sm:%s429] %v554
                  %v556 = vld [vmem:[%s436 + $0x1d8] sm:%s429]
                  %557 = vst [vmem:[%s437 + $0xec] sm:%s429] %v556
                  %v558 = vld [vmem:[%s436 + $0x1e0] sm:%s429]
                  %559 = vst [vmem:[%s437 + $0xf0] sm:%s429] %v558
                  %v560 = vld [vmem:[%s436 + $0x1e8] sm:%s429]
                  %561 = vst [vmem:[%s437 + $0xf4] sm:%s429] %v560
                  %v562 = vld [vmem:[%s436 + $0x1f0] sm:%s429]
                  %563 = vst [vmem:[%s437 + $0xf8] sm:%s429] %v562
                  %v564 = vld [vmem:[%s436 + $0x1f8] sm:%s429]
                  %565 = vst [vmem:[%s437 + $0xfc] sm:%s429] %v564
                $region78: #{discriminator_forward.7} parent=65 // loop_footer
                  %s435 = sadd.s32 1, %s431
                $region79: #{discriminator_forward.7} parent=65 // loop_footer_branch
                  %430 = sbr.rel target = $region75
                $region80: #{discriminator_forward.7} parent=65 // loop_exit
                  _
              $region66: #{discriminator_forward.7} parent=50 // pred_fallthru
                _
            $region51: #{discriminator_forward.7} parent=46 // pred_fallthru
              _
            // Predicated region
            $region52: #{discriminator_forward.7} parent=46 // pred_check
              _
            $region53: #{discriminator_forward.7} parent=46 // pred_check_branch
              %279 = sbr.rel (0) target = $region55
            $region54: #{discriminator_forward.7} parent=46 // pred_region
              %s281 = ssub.s32 16, 1
              loop: start=0, step=1, limit=1
              $region56: #{discriminator_forward.7} parent=54 // loop_pre_header
                _
              $region57: #{discriminator_forward.7} parent=54 // loop_header
                %s283 = sphi 0, %s287
                %p284 = scmp.ge.s32.totalorder %s283, 1
                %s288 = sphi %s273, %s273
                %s289 = sphi %s268, %s268
              $region58: #{discriminator_forward.7} parent=54 // loop_header_branch
                %286 = sbr.rel (%p284) target = $region62
              $region59: #{discriminator_forward.7} parent=54 // loop_body
                %v290 = vld [vmem:[%s288] sm:%s281]
                %291 = vst [vmem:[%s289] sm:%s281] %v290
                %v292 = vld [vmem:[%s288 + $0x8] sm:%s281]
                %293 = vst [vmem:[%s289 + $0x4] sm:%s281] %v292
                %v294 = vld [vmem:[%s288 + $0x10] sm:%s281]
                %295 = vst [vmem:[%s289 + $0x8] sm:%s281] %v294
                %v296 = vld [vmem:[%s288 + $0x18] sm:%s281]
                %297 = vst [vmem:[%s289 + $0xc] sm:%s281] %v296
                %v298 = vld [vmem:[%s288 + $0x20] sm:%s281]
                %299 = vst [vmem:[%s289 + $0x10] sm:%s281] %v298
                %v300 = vld [vmem:[%s288 + $0x28] sm:%s281]
                %301 = vst [vmem:[%s289 + $0x14] sm:%s281] %v300
                %v302 = vld [vmem:[%s288 + $0x30] sm:%s281]
                %303 = vst [vmem:[%s289 + $0x18] sm:%s281] %v302
                %v304 = vld [vmem:[%s288 + $0x38] sm:%s281]
                %305 = vst [vmem:[%s289 + $0x1c] sm:%s281] %v304
                %v306 = vld [vmem:[%s288 + $0x40] sm:%s281]
                %307 = vst [vmem:[%s289 + $0x20] sm:%s281] %v306
                %v308 = vld [vmem:[%s288 + $0x48] sm:%s281]
                %309 = vst [vmem:[%s289 + $0x24] sm:%s281] %v308
                %v310 = vld [vmem:[%s288 + $0x50] sm:%s281]
                %311 = vst [vmem:[%s289 + $0x28] sm:%s281] %v310
                %v312 = vld [vmem:[%s288 + $0x58] sm:%s281]
                %313 = vst [vmem:[%s289 + $0x2c] sm:%s281] %v312
                %v314 = vld [vmem:[%s288 + $0x60] sm:%s281]
                %315 = vst [vmem:[%s289 + $0x30] sm:%s281] %v314
                %v316 = vld [vmem:[%s288 + $0x68] sm:%s281]
                %317 = vst [vmem:[%s289 + $0x34] sm:%s281] %v316
                %v318 = vld [vmem:[%s288 + $0x70] sm:%s281]
                %319 = vst [vmem:[%s289 + $0x38] sm:%s281] %v318
                %v320 = vld [vmem:[%s288 + $0x78] sm:%s281]
                %321 = vst [vmem:[%s289 + $0x3c] sm:%s281] %v320
                %v322 = vld [vmem:[%s288 + $0x80] sm:%s281]
                %323 = vst [vmem:[%s289 + $0x40] sm:%s281] %v322
                %v324 = vld [vmem:[%s288 + $0x88] sm:%s281]
                %325 = vst [vmem:[%s289 + $0x44] sm:%s281] %v324
                %v326 = vld [vmem:[%s288 + $0x90] sm:%s281]
                %327 = vst [vmem:[%s289 + $0x48] sm:%s281] %v326
                %v328 = vld [vmem:[%s288 + $0x98] sm:%s281]
                %329 = vst [vmem:[%s289 + $0x4c] sm:%s281] %v328
                %v330 = vld [vmem:[%s288 + $0xa0] sm:%s281]
                %331 = vst [vmem:[%s289 + $0x50] sm:%s281] %v330
                %v332 = vld [vmem:[%s288 + $0xa8] sm:%s281]
                %333 = vst [vmem:[%s289 + $0x54] sm:%s281] %v332
                %v334 = vld [vmem:[%s288 + $0xb0] sm:%s281]
                %335 = vst [vmem:[%s289 + $0x58] sm:%s281] %v334
                %v336 = vld [vmem:[%s288 + $0xb8] sm:%s281]
                %337 = vst [vmem:[%s289 + $0x5c] sm:%s281] %v336
                %v338 = vld [vmem:[%s288 + $0xc0] sm:%s281]
                %339 = vst [vmem:[%s289 + $0x60] sm:%s281] %v338
                %v340 = vld [vmem:[%s288 + $0xc8] sm:%s281]
                %341 = vst [vmem:[%s289 + $0x64] sm:%s281] %v340
                %v342 = vld [vmem:[%s288 + $0xd0] sm:%s281]
                %343 = vst [vmem:[%s289 + $0x68] sm:%s281] %v342
                %v344 = vld [vmem:[%s288 + $0xd8] sm:%s281]
                %345 = vst [vmem:[%s289 + $0x6c] sm:%s281] %v344
                %v346 = vld [vmem:[%s288 + $0xe0] sm:%s281]
                %347 = vst [vmem:[%s289 + $0x70] sm:%s281] %v346
                %v348 = vld [vmem:[%s288 + $0xe8] sm:%s281]
                %349 = vst [vmem:[%s289 + $0x74] sm:%s281] %v348
                %v350 = vld [vmem:[%s288 + $0xf0] sm:%s281]
                %351 = vst [vmem:[%s289 + $0x78] sm:%s281] %v350
                %v352 = vld [vmem:[%s288 + $0xf8] sm:%s281]
                %353 = vst [vmem:[%s289 + $0x7c] sm:%s281] %v352
                %v354 = vld [vmem:[%s288 + $0x100] sm:%s281]
                %355 = vst [vmem:[%s289 + $0x80] sm:%s281] %v354
                %v356 = vld [vmem:[%s288 + $0x108] sm:%s281]
                %357 = vst [vmem:[%s289 + $0x84] sm:%s281] %v356
                %v358 = vld [vmem:[%s288 + $0x110] sm:%s281]
                %359 = vst [vmem:[%s289 + $0x88] sm:%s281] %v358
                %v360 = vld [vmem:[%s288 + $0x118] sm:%s281]
                %361 = vst [vmem:[%s289 + $0x8c] sm:%s281] %v360
                %v362 = vld [vmem:[%s288 + $0x120] sm:%s281]
                %363 = vst [vmem:[%s289 + $0x90] sm:%s281] %v362
                %v364 = vld [vmem:[%s288 + $0x128] sm:%s281]
                %365 = vst [vmem:[%s289 + $0x94] sm:%s281] %v364
                %v366 = vld [vmem:[%s288 + $0x130] sm:%s281]
                %367 = vst [vmem:[%s289 + $0x98] sm:%s281] %v366
                %v368 = vld [vmem:[%s288 + $0x138] sm:%s281]
                %369 = vst [vmem:[%s289 + $0x9c] sm:%s281] %v368
                %v370 = vld [vmem:[%s288 + $0x140] sm:%s281]
                %371 = vst [vmem:[%s289 + $0xa0] sm:%s281] %v370
                %v372 = vld [vmem:[%s288 + $0x148] sm:%s281]
                %373 = vst [vmem:[%s289 + $0xa4] sm:%s281] %v372
                %v374 = vld [vmem:[%s288 + $0x150] sm:%s281]
                %375 = vst [vmem:[%s289 + $0xa8] sm:%s281] %v374
                %v376 = vld [vmem:[%s288 + $0x158] sm:%s281]
                %377 = vst [vmem:[%s289 + $0xac] sm:%s281] %v376
                %v378 = vld [vmem:[%s288 + $0x160] sm:%s281]
                %379 = vst [vmem:[%s289 + $0xb0] sm:%s281] %v378
                %v380 = vld [vmem:[%s288 + $0x168] sm:%s281]
                %381 = vst [vmem:[%s289 + $0xb4] sm:%s281] %v380
                %v382 = vld [vmem:[%s288 + $0x170] sm:%s281]
                %383 = vst [vmem:[%s289 + $0xb8] sm:%s281] %v382
                %v384 = vld [vmem:[%s288 + $0x178] sm:%s281]
                %385 = vst [vmem:[%s289 + $0xbc] sm:%s281] %v384
                %v386 = vld [vmem:[%s288 + $0x180] sm:%s281]
                %387 = vst [vmem:[%s289 + $0xc0] sm:%s281] %v386
                %v388 = vld [vmem:[%s288 + $0x188] sm:%s281]
                %389 = vst [vmem:[%s289 + $0xc4] sm:%s281] %v388
                %v390 = vld [vmem:[%s288 + $0x190] sm:%s281]
                %391 = vst [vmem:[%s289 + $0xc8] sm:%s281] %v390
                %v392 = vld [vmem:[%s288 + $0x198] sm:%s281]
                %393 = vst [vmem:[%s289 + $0xcc] sm:%s281] %v392
                %v394 = vld [vmem:[%s288 + $0x1a0] sm:%s281]
                %395 = vst [vmem:[%s289 + $0xd0] sm:%s281] %v394
                %v396 = vld [vmem:[%s288 + $0x1a8] sm:%s281]
                %397 = vst [vmem:[%s289 + $0xd4] sm:%s281] %v396
                %v398 = vld [vmem:[%s288 + $0x1b0] sm:%s281]
                %399 = vst [vmem:[%s289 + $0xd8] sm:%s281] %v398
                %v400 = vld [vmem:[%s288 + $0x1b8] sm:%s281]
                %401 = vst [vmem:[%s289 + $0xdc] sm:%s281] %v400
                %v402 = vld [vmem:[%s288 + $0x1c0] sm:%s281]
                %403 = vst [vmem:[%s289 + $0xe0] sm:%s281] %v402
                %v404 = vld [vmem:[%s288 + $0x1c8] sm:%s281]
                %405 = vst [vmem:[%s289 + $0xe4] sm:%s281] %v404
                %v406 = vld [vmem:[%s288 + $0x1d0] sm:%s281]
                %407 = vst [vmem:[%s289 + $0xe8] sm:%s281] %v406
                %v408 = vld [vmem:[%s288 + $0x1d8] sm:%s281]
                %409 = vst [vmem:[%s289 + $0xec] sm:%s281] %v408
                %v410 = vld [vmem:[%s288 + $0x1e0] sm:%s281]
                %411 = vst [vmem:[%s289 + $0xf0] sm:%s281] %v410
                %v412 = vld [vmem:[%s288 + $0x1e8] sm:%s281]
                %413 = vst [vmem:[%s289 + $0xf4] sm:%s281] %v412
                %v414 = vld [vmem:[%s288 + $0x1f0] sm:%s281]
                %415 = vst [vmem:[%s289 + $0xf8] sm:%s281] %v414
                %v416 = vld [vmem:[%s288 + $0x1f8] sm:%s281]
                %417 = vst [vmem:[%s289 + $0xfc] sm:%s281] %v416
              $region60: #{discriminator_forward.7} parent=54 // loop_footer
                %s287 = sadd.s32 1, %s283
              $region61: #{discriminator_forward.7} parent=54 // loop_footer_branch
                %282 = sbr.rel target = $region57
              $region62: #{discriminator_forward.7} parent=54 // loop_exit
                _
            $region55: #{discriminator_forward.7} parent=46 // pred_fallthru
              _
          $region47: #{discriminator_forward.7} parent=42 // pred_fallthru
            _
          %566 = vnop
        $region43: #{discriminator_forward.7} parent=15 // pred_fallthru
          _
        // Predicated region
        $region81: #{discriminator_forward.7} parent=15 // pred_check
          %p567 = pneg %p96
        $region82: #{discriminator_forward.7} parent=15 // pred_check_branch
          %569 = sbr.rel (%p567) target = $region84
        $region83: #{discriminator_forward.7} parent=15 // pred_region
          %p570 = scmp.lt.s32.totalorder %s17, 1
          %s571 = scalar_select %p570, %s17, 1
          %s572 = scalar_lea.vmem %s2, %s571
        $region84: #{discriminator_forward.7} parent=15 // pred_fallthru
          _
        // Predicated region
        $region85: #{discriminator_forward.7} parent=15 // pred_check
          %p573 = pneg %p122
        $region86: #{discriminator_forward.7} parent=15 // pred_check_branch
          %575 = sbr.rel (%p573) target = $region88
        $region87: #{discriminator_forward.7} parent=15 // pred_region
          %p576 = scmp.lt.s32.totalorder %s17, 1
          %s577 = scalar_select %p576, %s17, 1
          %s578 = scalar_lea.vmem %s3, %s577
        $region88: #{discriminator_forward.7} parent=15 // pred_fallthru
          _
      $region16: #{discriminator_forward.7} parent=5 // pred_fallthru
        _
      %p579 = scmp.le.s32.totalorder 1, %s10
      %p580 = scmp.lt.s32.totalorder %s10, 9
      %p581 = pnand %p579, %p580
      %p582 = pneg %p581
      // Predicated region
      $region89: #{discriminator_forward.7} parent=5 // pred_check
        _
      $region90: #{discriminator_forward.7} parent=5 // pred_check_branch
        %584 = sbr.rel (%p581) target = $region92
      $region91: #{discriminator_forward.7} parent=5 // pred_region
        %s585 = ssub.s32 %s10, 1
        %s586 = sand.u32 %s35, 1
        %s587 = sand.u32 %s35, 1
        %s588 = smul.addr %s587, 256
        %s589 = scalar_lea.vmem [#allocation3], %s588
        // Predicated region
        $region93: #{discriminator_forward.7} parent=91 // pred_check
          %p590 = pneg %p48
        $region94: #{discriminator_forward.7} parent=91 // pred_check_branch
          %592 = sbr.rel (%p590) target = $region96
        $region95: #{discriminator_forward.7} parent=91 // pred_region
          _
        $region96: #{discriminator_forward.7} parent=91 // pred_fallthru
          _
        %s593 = sand.u32 %s63, 1
        %s594 = sand.u32 %s63, 1
        %s595 = smul.addr %s594, 256
        %s596 = scalar_lea.vmem [#allocation4], %s595
        // Predicated region
        $region97: #{discriminator_forward.7} parent=91 // pred_check
          %p597 = pneg %p76
        $region98: #{discriminator_forward.7} parent=91 // pred_check_branch
          %599 = sbr.rel (%p597) target = $region100
        $region99: #{discriminator_forward.7} parent=91 // pred_region
          _
        $region100: #{discriminator_forward.7} parent=91 // pred_fallthru
          _
        %s600 = sand.u32 %s35, 1
        %s601 = sand.u32 %s35, 1
        %s602 = smul.addr %s601, 256
        %s603 = scalar_lea.vmem [#allocation3], %s602
        %p604 = pneg %p48
        %p605 = pneg %p45
        %s606 = sand.u32 %s63, 1
        %s607 = sand.u32 %s63, 1
        %s608 = smul.addr %s607, 256
        %s609 = scalar_lea.vmem [#allocation4], %s608
        %p610 = pneg %p76
        %p611 = pneg %p73
        %p612 = scmp.lt.s32.totalorder %s19, 1
        %s613 = scalar_select %p612, %s19, 1
        %s614 = scalar_lea.vmem %s2, %s613
        %p615 = pneg %p102
        %p616 = pneg %p99
        %p617 = scmp.lt.s32.totalorder %s19, 1
        %s618 = scalar_select %p617, %s19, 1
        %s619 = scalar_lea.vmem %s3, %s618
        %p620 = pneg %p128
        %p621 = pneg %p125
        %p622 = pneg %p154
        %p623 = pneg %p151
        %s624 = sand.u32 %s141, 1
        %s625 = sand.u32 %s141, 1
        %s626 = smul.addr %s625, 64
        %s627 = scalar_lea.vmem [#allocation5], %s626
        %s628 = smul.u32 4, %s20
        %s629 = smul.u32 64, %s20
        %p630 = scmp.lt.s32.totalorder %s19, 1
        %s631 = scalar_select %p630, %s19, 1
        %s632 = scalar_lea.vmem %s2, %s631
        %p633 = scmp.lt.s32.totalorder %s19, 1
        %s634 = scalar_select %p633, %s19, 1
        %s635 = scalar_lea.vmem %s3, %s634
        %p636 = scmp.eq.s32.totalorder %s20, 0
        // Predicated region
        $region101: #{discriminator_forward.7} parent=91 // pred_check
          %p637 = pneg %p636
        $region102: #{discriminator_forward.7} parent=91 // pred_check_branch
          %639 = sbr.rel (%p637) target = $region104
        $region103: #{discriminator_forward.7} parent=91 // pred_region
          %640 = vst [vmem:[#allocation2] sm:$0xff] 0.0
          %641 = vst [vmem:[#allocation2 + $0x8] sm:$0xff] 0.0
          %642 = vst [vmem:[#allocation2 + $0x10] sm:$0xff] 0.0
          %643 = vst [vmem:[#allocation2 + $0x18] sm:$0xff] 0.0
          %644 = vst [vmem:[#allocation2 + $0x20] sm:$0xff] 0.0
          %645 = vst [vmem:[#allocation2 + $0x28] sm:$0xff] 0.0
          %646 = vst [vmem:[#allocation2 + $0x30] sm:$0xff] 0.0
          %647 = vst [vmem:[#allocation2 + $0x38] sm:$0xff] 0.0
          %648 = vst [vmem:[#allocation2 + $0x40] sm:$0xff] 0.0
          %649 = vst [vmem:[#allocation2 + $0x48] sm:$0xff] 0.0
          %650 = vst [vmem:[#allocation2 + $0x50] sm:$0xff] 0.0
          %651 = vst [vmem:[#allocation2 + $0x58] sm:$0xff] 0.0
          %652 = vst [vmem:[#allocation2 + $0x60] sm:$0xff] 0.0
          %653 = vst [vmem:[#allocation2 + $0x68] sm:$0xff] 0.0
          %654 = vst [vmem:[#allocation2 + $0x70] sm:$0xff] 0.0
          %655 = vst [vmem:[#allocation2 + $0x78] sm:$0xff] 0.0
        $region104: #{discriminator_forward.7} parent=91 // pred_fallthru
          _
        %v656 = vld [vmem:[#allocation2] sm:$0xff]
        %v657 = vld [vmem:[#allocation2 + $0x8] sm:$0xff]
        %v658 = vld [vmem:[#allocation2 + $0x10] sm:$0xff]
        %v659 = vld [vmem:[#allocation2 + $0x18] sm:$0xff]
        %v660 = vld [vmem:[#allocation2 + $0x20] sm:$0xff]
        %v661 = vld [vmem:[#allocation2 + $0x28] sm:$0xff]
        %v662 = vld [vmem:[#allocation2 + $0x30] sm:$0xff]
        %v663 = vld [vmem:[#allocation2 + $0x38] sm:$0xff]
        %v664 = vld [vmem:[#allocation2 + $0x40] sm:$0xff]
        %v665 = vld [vmem:[#allocation2 + $0x48] sm:$0xff]
        %v666 = vld [vmem:[#allocation2 + $0x50] sm:$0xff]
        %v667 = vld [vmem:[#allocation2 + $0x58] sm:$0xff]
        %v668 = vld [vmem:[#allocation2 + $0x60] sm:$0xff]
        %v669 = vld [vmem:[#allocation2 + $0x68] sm:$0xff]
        %v670 = vld [vmem:[#allocation2 + $0x70] sm:$0xff]
        %v671 = vld [vmem:[#allocation2 + $0x78] sm:$0xff]
        %v672 = vld [vmem:[%s589] sm:$0xff]
        %v673 = vld [vmem:[%s589 + $0x8] sm:$0xff]
        %v674 = vld [vmem:[%s589 + $0x10] sm:$0xff]
        %v675 = vld [vmem:[%s589 + $0x18] sm:$0xff]
        %v676 = vld [vmem:[%s589 + $0x20] sm:$0xff]
        %v677 = vld [vmem:[%s589 + $0x28] sm:$0xff]
        %v678 = vld [vmem:[%s589 + $0x30] sm:$0xff]
        %v679 = vld [vmem:[%s589 + $0x38] sm:$0xff]
        %v680 = vld [vmem:[%s589 + $0x40] sm:$0xff]
        %v681 = vld [vmem:[%s589 + $0x48] sm:$0xff]
        %v682 = vld [vmem:[%s589 + $0x50] sm:$0xff]
        %v683 = vld [vmem:[%s589 + $0x58] sm:$0xff]
        %v684 = vld [vmem:[%s589 + $0x60] sm:$0xff]
        %v685 = vld [vmem:[%s589 + $0x68] sm:$0xff]
        %v686 = vld [vmem:[%s589 + $0x70] sm:$0xff]
        %v687 = vld [vmem:[%s589 + $0x78] sm:$0xff]
        %v688 = vld [vmem:[%s589 + $0x80] sm:$0xff]
        %v689 = vld [vmem:[%s589 + $0x88] sm:$0xff]
        %v690 = vld [vmem:[%s589 + $0x90] sm:$0xff]
        %v691 = vld [vmem:[%s589 + $0x98] sm:$0xff]
        %v692 = vld [vmem:[%s589 + $0xa0] sm:$0xff]
        %v693 = vld [vmem:[%s589 + $0xa8] sm:$0xff]
        %v694 = vld [vmem:[%s589 + $0xb0] sm:$0xff]
        %v695 = vld [vmem:[%s589 + $0xb8] sm:$0xff]
        %v696 = vld [vmem:[%s589 + $0xc0] sm:$0xff]
        %v697 = vld [vmem:[%s589 + $0xc8] sm:$0xff]
        %v698 = vld [vmem:[%s589 + $0xd0] sm:$0xff]
        %v699 = vld [vmem:[%s589 + $0xd8] sm:$0xff]
        %v700 = vld [vmem:[%s589 + $0xe0] sm:$0xff]
        %v701 = vld [vmem:[%s589 + $0xe8] sm:$0xff]
        %v702 = vld [vmem:[%s589 + $0xf0] sm:$0xff]
        %v703 = vld [vmem:[%s589 + $0xf8] sm:$0xff]
        %v704 = vld [vmem:[%s596] sm:$0xf]
        %v705 = vld [vmem:[%s596 + $0x4] sm:$0xf]
        %v706 = vld [vmem:[%s596 + $0x8] sm:$0xf]
        %v707 = vld [vmem:[%s596 + $0xc] sm:$0xf]
        %v708 = vld [vmem:[%s596 + $0x10] sm:$0xf]
        %v709 = vld [vmem:[%s596 + $0x14] sm:$0xf]
        %v710 = vld [vmem:[%s596 + $0x18] sm:$0xf]
        %v711 = vld [vmem:[%s596 + $0x1c] sm:$0xf]
        %v712 = vld [vmem:[%s596 + $0x20] sm:$0xf]
        %v713 = vld [vmem:[%s596 + $0x24] sm:$0xf]
        %v714 = vld [vmem:[%s596 + $0x28] sm:$0xf]
        %v715 = vld [vmem:[%s596 + $0x2c] sm:$0xf]
        %v716 = vld [vmem:[%s596 + $0x30] sm:$0xf]
        %v717 = vld [vmem:[%s596 + $0x34] sm:$0xf]
        %v718 = vld [vmem:[%s596 + $0x38] sm:$0xf]
        %v719 = vld [vmem:[%s596 + $0x3c] sm:$0xf]
        %v720 = vld [vmem:[%s596 + $0x40] sm:$0xf]
        %v721 = vld [vmem:[%s596 + $0x44] sm:$0xf]
        %v722 = vld [vmem:[%s596 + $0x48] sm:$0xf]
        %v723 = vld [vmem:[%s596 + $0x4c] sm:$0xf]
        %v724 = vld [vmem:[%s596 + $0x50] sm:$0xf]
        %v725 = vld [vmem:[%s596 + $0x54] sm:$0xf]
        %v726 = vld [vmem:[%s596 + $0x58] sm:$0xf]
        %v727 = vld [vmem:[%s596 + $0x5c] sm:$0xf]
        %v728 = vld [vmem:[%s596 + $0x60] sm:$0xf]
        %v729 = vld [vmem:[%s596 + $0x64] sm:$0xf]
        %v730 = vld [vmem:[%s596 + $0x68] sm:$0xf]
        %v731 = vld [vmem:[%s596 + $0x6c] sm:$0xf]
        %v732 = vld [vmem:[%s596 + $0x70] sm:$0xf]
        %v733 = vld [vmem:[%s596 + $0x74] sm:$0xf]
        %v734 = vld [vmem:[%s596 + $0x78] sm:$0xf]
        %v735 = vld [vmem:[%s596 + $0x7c] sm:$0xf]
        %v736 = vld [vmem:[%s596 + $0x80] sm:$0xf]
        %v737 = vld [vmem:[%s596 + $0x84] sm:$0xf]
        %v738 = vld [vmem:[%s596 + $0x88] sm:$0xf]
        %v739 = vld [vmem:[%s596 + $0x8c] sm:$0xf]
        %v740 = vld [vmem:[%s596 + $0x90] sm:$0xf]
        %v741 = vld [vmem:[%s596 + $0x94] sm:$0xf]
        %v742 = vld [vmem:[%s596 + $0x98] sm:$0xf]
        %v743 = vld [vmem:[%s596 + $0x9c] sm:$0xf]
        %v744 = vld [vmem:[%s596 + $0xa0] sm:$0xf]
        %v745 = vld [vmem:[%s596 + $0xa4] sm:$0xf]
        %v746 = vld [vmem:[%s596 + $0xa8] sm:$0xf]
        %v747 = vld [vmem:[%s596 + $0xac] sm:$0xf]
        %v748 = vld [vmem:[%s596 + $0xb0] sm:$0xf]
        %v749 = vld [vmem:[%s596 + $0xb4] sm:$0xf]
        %v750 = vld [vmem:[%s596 + $0xb8] sm:$0xf]
        %v751 = vld [vmem:[%s596 + $0xbc] sm:$0xf]
        %v752 = vld [vmem:[%s596 + $0xc0] sm:$0xf]
        %v753 = vld [vmem:[%s596 + $0xc4] sm:$0xf]
        %v754 = vld [vmem:[%s596 + $0xc8] sm:$0xf]
        %v755 = vld [vmem:[%s596 + $0xcc] sm:$0xf]
        %v756 = vld [vmem:[%s596 + $0xd0] sm:$0xf]
        %v757 = vld [vmem:[%s596 + $0xd4] sm:$0xf]
        %v758 = vld [vmem:[%s596 + $0xd8] sm:$0xf]
        %v759 = vld [vmem:[%s596 + $0xdc] sm:$0xf]
        %v760 = vld [vmem:[%s596 + $0xe0] sm:$0xf]
        %v761 = vld [vmem:[%s596 + $0xe4] sm:$0xf]
        %v762 = vld [vmem:[%s596 + $0xe8] sm:$0xf]
        %v763 = vld [vmem:[%s596 + $0xec] sm:$0xf]
        %v764 = vld [vmem:[%s596 + $0xf0] sm:$0xf]
        %v765 = vld [vmem:[%s596 + $0xf4] sm:$0xf]
        %v766 = vld [vmem:[%s596 + $0xf8] sm:$0xf]
        %v767 = vld [vmem:[%s596 + $0xfc] sm:$0xf]
        %v800 = vunpack.c.l.b16 %v672
        %v801 = vunpack.c.h.b16 %v672
        %v802 = vunpack.c.l.b16 %v673
        %v803 = vunpack.c.h.b16 %v673
        %v804 = vunpack.c.l.b16 %v674
        %v805 = vunpack.c.h.b16 %v674
        %v806 = vunpack.c.l.b16 %v675
        %v807 = vunpack.c.h.b16 %v675
        %v808 = vunpack.c.l.b16 %v676
        %v809 = vunpack.c.h.b16 %v676
        %v810 = vunpack.c.l.b16 %v677
        %v811 = vunpack.c.h.b16 %v677
        %v812 = vunpack.c.l.b16 %v678
        %v813 = vunpack.c.h.b16 %v678
        %v814 = vunpack.c.l.b16 %v679
        %v815 = vunpack.c.h.b16 %v679
        %v816 = vunpack.c.l.b16 %v680
        %v817 = vunpack.c.h.b16 %v680
        %v818 = vunpack.c.l.b16 %v681
        %v819 = vunpack.c.h.b16 %v681
        %v820 = vunpack.c.l.b16 %v682
        %v821 = vunpack.c.h.b16 %v682
        %v822 = vunpack.c.l.b16 %v683
        %v823 = vunpack.c.h.b16 %v683
        %v824 = vunpack.c.l.b16 %v684
        %v825 = vunpack.c.h.b16 %v684
        %v826 = vunpack.c.l.b16 %v685
        %v827 = vunpack.c.h.b16 %v685
        %v828 = vunpack.c.l.b16 %v686
        %v829 = vunpack.c.h.b16 %v686
        %v830 = vunpack.c.l.b16 %v687
        %v831 = vunpack.c.h.b16 %v687
        %v832 = vunpack.c.l.b16 %v688
        %v833 = vunpack.c.h.b16 %v688
        %v834 = vunpack.c.l.b16 %v689
        %v835 = vunpack.c.h.b16 %v689
        %v836 = vunpack.c.l.b16 %v690
        %v837 = vunpack.c.h.b16 %v690
        %v838 = vunpack.c.l.b16 %v691
        %v839 = vunpack.c.h.b16 %v691
        %v840 = vunpack.c.l.b16 %v692
        %v841 = vunpack.c.h.b16 %v692
        %v842 = vunpack.c.l.b16 %v693
        %v843 = vunpack.c.h.b16 %v693
        %v844 = vunpack.c.l.b16 %v694
        %v845 = vunpack.c.h.b16 %v694
        %v846 = vunpack.c.l.b16 %v695
        %v847 = vunpack.c.h.b16 %v695
        %v848 = vunpack.c.l.b16 %v696
        %v849 = vunpack.c.h.b16 %v696
        %v850 = vunpack.c.l.b16 %v697
        %v851 = vunpack.c.h.b16 %v697
        %v852 = vunpack.c.l.b16 %v698
        %v853 = vunpack.c.h.b16 %v698
        %v854 = vunpack.c.l.b16 %v699
        %v855 = vunpack.c.h.b16 %v699
        %v856 = vunpack.c.l.b16 %v700
        %v857 = vunpack.c.h.b16 %v700
        %v858 = vunpack.c.l.b16 %v701
        %v859 = vunpack.c.h.b16 %v701
        %v860 = vunpack.c.l.b16 %v702
        %v861 = vunpack.c.h.b16 %v702
        %v862 = vunpack.c.l.b16 %v703
        %v863 = vunpack.c.h.b16 %v703
        %v864 = vpack.c.b16 %v804, %v800
        %v865 = vpack.c.b16 %v805, %v801
        %v866 = vpack.c.b16 %v806, %v802
        %v867 = vpack.c.b16 %v807, %v803
        %v868 = vpack.c.b16 %v812, %v808
        %v869 = vpack.c.b16 %v813, %v809
        %v870 = vpack.c.b16 %v814, %v810
        %v871 = vpack.c.b16 %v815, %v811
        %v872 = vpack.c.b16 %v820, %v816
        %v873 = vpack.c.b16 %v821, %v817
        %v874 = vpack.c.b16 %v822, %v818
        %v875 = vpack.c.b16 %v823, %v819
        %v876 = vpack.c.b16 %v828, %v824
        %v877 = vpack.c.b16 %v829, %v825
        %v878 = vpack.c.b16 %v830, %v826
        %v879 = vpack.c.b16 %v831, %v827
        %v880 = vpack.c.b16 %v836, %v832
        %v881 = vpack.c.b16 %v837, %v833
        %v882 = vpack.c.b16 %v838, %v834
        %v883 = vpack.c.b16 %v839, %v835
        %v884 = vpack.c.b16 %v844, %v840
        %v885 = vpack.c.b16 %v845, %v841
        %v886 = vpack.c.b16 %v846, %v842
        %v887 = vpack.c.b16 %v847, %v843
        %v888 = vpack.c.b16 %v852, %v848
        %v889 = vpack.c.b16 %v853, %v849
        %v890 = vpack.c.b16 %v854, %v850
        %v891 = vpack.c.b16 %v855, %v851
        %v892 = vpack.c.b16 %v860, %v856
        %v893 = vpack.c.b16 %v861, %v857
        %v894 = vpack.c.b16 %v862, %v858
        %v895 = vpack.c.b16 %v863, %v859
        %v992 = vunpack.c.l.b16 %v704
        %v993 = vunpack.c.l.b16 %v705
        %v994 = vunpack.c.l.b16 %v706
        %v995 = vunpack.c.l.b16 %v707
        %v996 = vunpack.c.l.b16 %v708
        %v997 = vunpack.c.l.b16 %v709
        %v998 = vunpack.c.l.b16 %v710
        %v999 = vunpack.c.l.b16 %v711
        %v1000 = vunpack.c.l.b16 %v712
        %v1001 = vunpack.c.l.b16 %v713
        %v1002 = vunpack.c.l.b16 %v714
        %v1003 = vunpack.c.l.b16 %v715
        %v1004 = vunpack.c.l.b16 %v716
        %v1005 = vunpack.c.l.b16 %v717
        %v1006 = vunpack.c.l.b16 %v718
        %v1007 = vunpack.c.l.b16 %v719
        %v1008 = vunpack.c.l.b16 %v720
        %v1009 = vunpack.c.l.b16 %v721
        %v1010 = vunpack.c.l.b16 %v722
        %v1011 = vunpack.c.l.b16 %v723
        %v1012 = vunpack.c.l.b16 %v724
        %v1013 = vunpack.c.l.b16 %v725
        %v1014 = vunpack.c.l.b16 %v726
        %v1015 = vunpack.c.l.b16 %v727
        %v1016 = vunpack.c.l.b16 %v728
        %v1017 = vunpack.c.l.b16 %v729
        %v1018 = vunpack.c.l.b16 %v730
        %v1019 = vunpack.c.l.b16 %v731
        %v1020 = vunpack.c.l.b16 %v732
        %v1021 = vunpack.c.l.b16 %v733
        %v1022 = vunpack.c.l.b16 %v734
        %v1023 = vunpack.c.l.b16 %v735
        %v1024 = vunpack.c.l.b16 %v736
        %v1025 = vunpack.c.l.b16 %v737
        %v1026 = vunpack.c.l.b16 %v738
        %v1027 = vunpack.c.l.b16 %v739
        %v1028 = vunpack.c.l.b16 %v740
        %v1029 = vunpack.c.l.b16 %v741
        %v1030 = vunpack.c.l.b16 %v742
        %v1031 = vunpack.c.l.b16 %v743
        %v1032 = vunpack.c.l.b16 %v744
        %v1033 = vunpack.c.l.b16 %v745
        %v1034 = vunpack.c.l.b16 %v746
        %v1035 = vunpack.c.l.b16 %v747
        %v1036 = vunpack.c.l.b16 %v748
        %v1037 = vunpack.c.l.b16 %v749
        %v1038 = vunpack.c.l.b16 %v750
        %v1039 = vunpack.c.l.b16 %v751
        %v1040 = vunpack.c.l.b16 %v752
        %v1041 = vunpack.c.l.b16 %v753
        %v1042 = vunpack.c.l.b16 %v754
        %v1043 = vunpack.c.l.b16 %v755
        %v1044 = vunpack.c.l.b16 %v756
        %v1045 = vunpack.c.l.b16 %v757
        %v1046 = vunpack.c.l.b16 %v758
        %v1047 = vunpack.c.l.b16 %v759
        %v1048 = vunpack.c.l.b16 %v760
        %v1049 = vunpack.c.l.b16 %v761
        %v1050 = vunpack.c.l.b16 %v762
        %v1051 = vunpack.c.l.b16 %v763
        %v1052 = vunpack.c.l.b16 %v764
        %v1053 = vunpack.c.l.b16 %v765
        %v1054 = vunpack.c.l.b16 %v766
        %v1055 = vunpack.c.l.b16 %v767
        %v1056 = vpack.c.b16 %v993, %v992
        %v1057 = vpack.c.b16 %v995, %v994
        %v1058 = vpack.c.b16 %v997, %v996
        %v1059 = vpack.c.b16 %v999, %v998
        %v1060 = vpack.c.b16 %v1001, %v1000
        %v1061 = vpack.c.b16 %v1003, %v1002
        %v1062 = vpack.c.b16 %v1005, %v1004
        %v1063 = vpack.c.b16 %v1007, %v1006
        %v1064 = vpack.c.b16 %v1009, %v1008
        %v1065 = vpack.c.b16 %v1011, %v1010
        %v1066 = vpack.c.b16 %v1013, %v1012
        %v1067 = vpack.c.b16 %v1015, %v1014
        %v1068 = vpack.c.b16 %v1017, %v1016
        %v1069 = vpack.c.b16 %v1019, %v1018
        %v1070 = vpack.c.b16 %v1021, %v1020
        %v1071 = vpack.c.b16 %v1023, %v1022
        %v1072 = vpack.c.b16 %v1025, %v1024
        %v1073 = vpack.c.b16 %v1027, %v1026
        %v1074 = vpack.c.b16 %v1029, %v1028
        %v1075 = vpack.c.b16 %v1031, %v1030
        %v1076 = vpack.c.b16 %v1033, %v1032
        %v1077 = vpack.c.b16 %v1035, %v1034
        %v1078 = vpack.c.b16 %v1037, %v1036
        %v1079 = vpack.c.b16 %v1039, %v1038
        %v1080 = vpack.c.b16 %v1041, %v1040
        %v1081 = vpack.c.b16 %v1043, %v1042
        %v1082 = vpack.c.b16 %v1045, %v1044
        %v1083 = vpack.c.b16 %v1047, %v1046
        %v1084 = vpack.c.b16 %v1049, %v1048
        %v1085 = vpack.c.b16 %v1051, %v1050
        %v1086 = vpack.c.b16 %v1053, %v1052
        %v1087 = vpack.c.b16 %v1055, %v1054
        %1120 = vmatpush.bf16.msra.mxu0 %v1063
        %1121 = vmatpush.bf16.msra.mxu0 %v1062
        %1122 = vmatpush.bf16.msra.mxu0 %v1061
        %1123 = vmatpush.bf16.msra.mxu0 %v1060
        %1124 = vmatpush.bf16.msra.mxu0 %v1059
        %1125 = vmatpush.bf16.msra.mxu0 %v1058
        %1126 = vmatpush.bf16.msra.mxu0 %v1057
        %1127 = vmatpush.bf16.msra.mxu0 %v1056
        %1128 = vmatmul.bf16.gmra.mxu0 %v864
        %v1129 = vpop.f32.mrf.mxu0
        %v1130 = vadd.f32 0.0, %v1129
        %v1131 = vpop.f32.mrf.mxu0
        %v1132 = vadd.f32 0.0, %v1131
        %1133 = vmatmul.bf16.gmra.mxu0 %v868
        %v1134 = vpop.f32.mrf.mxu0
        %v1135 = vadd.f32 0.0, %v1134
        %v1136 = vpop.f32.mrf.mxu0
        %v1137 = vadd.f32 0.0, %v1136
        %1138 = vmatmul.bf16.gmra.mxu0 %v872
        %v1139 = vpop.f32.mrf.mxu0
        %v1140 = vadd.f32 0.0, %v1139
        %v1141 = vpop.f32.mrf.mxu0
        %v1142 = vadd.f32 0.0, %v1141
        %1143 = vmatmul.bf16.gmra.mxu0 %v876
        %v1144 = vpop.f32.mrf.mxu0
        %v1145 = vadd.f32 0.0, %v1144
        %v1146 = vpop.f32.mrf.mxu0
        %v1147 = vadd.f32 0.0, %v1146
        %1148 = vmatmul.bf16.gmra.mxu0 %v880
        %v1149 = vpop.f32.mrf.mxu0
        %v1150 = vadd.f32 0.0, %v1149
        %v1151 = vpop.f32.mrf.mxu0
        %v1152 = vadd.f32 0.0, %v1151
        %1153 = vmatmul.bf16.gmra.mxu0 %v884
        %v1154 = vpop.f32.mrf.mxu0
        %v1155 = vadd.f32 0.0, %v1154
        %v1156 = vpop.f32.mrf.mxu0
        %v1157 = vadd.f32 0.0, %v1156
        %1158 = vmatmul.bf16.gmra.mxu0 %v888
        %v1159 = vpop.f32.mrf.mxu0
        %v1160 = vadd.f32 0.0, %v1159
        %v1161 = vpop.f32.mrf.mxu0
        %v1162 = vadd.f32 0.0, %v1161
        %1163 = vmatmul.bf16.gmra.mxu0 %v892
        %v1164 = vpop.f32.mrf.mxu0
        %v1165 = vadd.f32 0.0, %v1164
        %v1166 = vpop.f32.mrf.mxu0
        %v1167 = vadd.f32 0.0, %v1166
        %1168 = vdwg.mxu0
        %1169 = vmatpush.bf16.msra.mxu0 %v1071
        %1170 = vmatpush.bf16.msra.mxu0 %v1070
        %1171 = vmatpush.bf16.msra.mxu0 %v1069
        %1172 = vmatpush.bf16.msra.mxu0 %v1068
        %1173 = vmatpush.bf16.msra.mxu0 %v1067
        %1174 = vmatpush.bf16.msra.mxu0 %v1066
        %1175 = vmatpush.bf16.msra.mxu0 %v1065
        %1176 = vmatpush.bf16.msra.mxu0 %v1064
        %1177 = vmatmul.bf16.gmra.mxu0 %v865
        %v1178 = vpop.f32.mrf.mxu0
        %v1179 = vadd.f32 %v1130, %v1178
        %v1180 = vpop.f32.mrf.mxu0
        %v1181 = vadd.f32 %v1132, %v1180
        %1182 = vmatmul.bf16.gmra.mxu0 %v869
        %v1183 = vpop.f32.mrf.mxu0
        %v1184 = vadd.f32 %v1135, %v1183
        %v1185 = vpop.f32.mrf.mxu0
        %v1186 = vadd.f32 %v1137, %v1185
        %1187 = vmatmul.bf16.gmra.mxu0 %v873
        %v1188 = vpop.f32.mrf.mxu0
        %v1189 = vadd.f32 %v1140, %v1188
        %v1190 = vpop.f32.mrf.mxu0
        %v1191 = vadd.f32 %v1142, %v1190
        %1192 = vmatmul.bf16.gmra.mxu0 %v877
        %v1193 = vpop.f32.mrf.mxu0
        %v1194 = vadd.f32 %v1145, %v1193
        %v1195 = vpop.f32.mrf.mxu0
        %v1196 = vadd.f32 %v1147, %v1195
        %1197 = vmatmul.bf16.gmra.mxu0 %v881
        %v1198 = vpop.f32.mrf.mxu0
        %v1199 = vadd.f32 %v1150, %v1198
        %v1200 = vpop.f32.mrf.mxu0
        %v1201 = vadd.f32 %v1152, %v1200
        %1202 = vmatmul.bf16.gmra.mxu0 %v885
        %v1203 = vpop.f32.mrf.mxu0
        %v1204 = vadd.f32 %v1155, %v1203
        %v1205 = vpop.f32.mrf.mxu0
        %v1206 = vadd.f32 %v1157, %v1205
        %1207 = vmatmul.bf16.gmra.mxu0 %v889
        %v1208 = vpop.f32.mrf.mxu0
        %v1209 = vadd.f32 %v1160, %v1208
        %v1210 = vpop.f32.mrf.mxu0
        %v1211 = vadd.f32 %v1162, %v1210
        %1212 = vmatmul.bf16.gmra.mxu0 %v893
        %v1213 = vpop.f32.mrf.mxu0
        %v1214 = vadd.f32 %v1165, %v1213
        %v1215 = vpop.f32.mrf.mxu0
        %v1216 = vadd.f32 %v1167, %v1215
        %1217 = vdwg.mxu0
        %1218 = vmatpush.bf16.msra.mxu0 %v1079
        %1219 = vmatpush.bf16.msra.mxu0 %v1078
        %1220 = vmatpush.bf16.msra.mxu0 %v1077
        %1221 = vmatpush.bf16.msra.mxu0 %v1076
        %1222 = vmatpush.bf16.msra.mxu0 %v1075
        %1223 = vmatpush.bf16.msra.mxu0 %v1074
        %1224 = vmatpush.bf16.msra.mxu0 %v1073
        %1225 = vmatpush.bf16.msra.mxu0 %v1072
        %1226 = vmatmul.bf16.gmra.mxu0 %v866
        %v1227 = vpop.f32.mrf.mxu0
        %v1228 = vadd.f32 %v1179, %v1227
        %v1229 = vpop.f32.mrf.mxu0
        %v1230 = vadd.f32 %v1181, %v1229
        %1231 = vmatmul.bf16.gmra.mxu0 %v870
        %v1232 = vpop.f32.mrf.mxu0
        %v1233 = vadd.f32 %v1184, %v1232
        %v1234 = vpop.f32.mrf.mxu0
        %v1235 = vadd.f32 %v1186, %v1234
        %1236 = vmatmul.bf16.gmra.mxu0 %v874
        %v1237 = vpop.f32.mrf.mxu0
        %v1238 = vadd.f32 %v1189, %v1237
        %v1239 = vpop.f32.mrf.mxu0
        %v1240 = vadd.f32 %v1191, %v1239
        %1241 = vmatmul.bf16.gmra.mxu0 %v878
        %v1242 = vpop.f32.mrf.mxu0
        %v1243 = vadd.f32 %v1194, %v1242
        %v1244 = vpop.f32.mrf.mxu0
        %v1245 = vadd.f32 %v1196, %v1244
        %1246 = vmatmul.bf16.gmra.mxu0 %v882
        %v1247 = vpop.f32.mrf.mxu0
        %v1248 = vadd.f32 %v1199, %v1247
        %v1249 = vpop.f32.mrf.mxu0
        %v1250 = vadd.f32 %v1201, %v1249
        %1251 = vmatmul.bf16.gmra.mxu0 %v886
        %v1252 = vpop.f32.mrf.mxu0
        %v1253 = vadd.f32 %v1204, %v1252
        %v1254 = vpop.f32.mrf.mxu0
        %v1255 = vadd.f32 %v1206, %v1254
        %1256 = vmatmul.bf16.gmra.mxu0 %v890
        %v1257 = vpop.f32.mrf.mxu0
        %v1258 = vadd.f32 %v1209, %v1257
        %v1259 = vpop.f32.mrf.mxu0
        %v1260 = vadd.f32 %v1211, %v1259
        %1261 = vmatmul.bf16.gmra.mxu0 %v894
        %v1262 = vpop.f32.mrf.mxu0
        %v1263 = vadd.f32 %v1214, %v1262
        %v1264 = vpop.f32.mrf.mxu0
        %v1265 = vadd.f32 %v1216, %v1264
        %1266 = vdwg.mxu0
        %1267 = vmatpush.bf16.msra.mxu0 %v1087
        %1268 = vmatpush.bf16.msra.mxu0 %v1086
        %1269 = vmatpush.bf16.msra.mxu0 %v1085
        %1270 = vmatpush.bf16.msra.mxu0 %v1084
        %1271 = vmatpush.bf16.msra.mxu0 %v1083
        %1272 = vmatpush.bf16.msra.mxu0 %v1082
        %1273 = vmatpush.bf16.msra.mxu0 %v1081
        %1274 = vmatpush.bf16.msra.mxu0 %v1080
        %1275 = vmatmul.bf16.gmra.mxu0 %v867
        %v1276 = vpop.f32.mrf.mxu0
        %v1277 = vadd.f32 %v1228, %v1276
        %v1278 = vpop.f32.mrf.mxu0
        %v1279 = vadd.f32 %v1230, %v1278
        %1280 = vmatmul.bf16.gmra.mxu0 %v871
        %v1281 = vpop.f32.mrf.mxu0
        %v1282 = vadd.f32 %v1233, %v1281
        %v1283 = vpop.f32.mrf.mxu0
        %v1284 = vadd.f32 %v1235, %v1283
        %1285 = vmatmul.bf16.gmra.mxu0 %v875
        %v1286 = vpop.f32.mrf.mxu0
        %v1287 = vadd.f32 %v1238, %v1286
        %v1288 = vpop.f32.mrf.mxu0
        %v1289 = vadd.f32 %v1240, %v1288
        %1290 = vmatmul.bf16.gmra.mxu0 %v879
        %v1291 = vpop.f32.mrf.mxu0
        %v1292 = vadd.f32 %v1243, %v1291
        %v1293 = vpop.f32.mrf.mxu0
        %v1294 = vadd.f32 %v1245, %v1293
        %1295 = vmatmul.bf16.gmra.mxu0 %v883
        %v1296 = vpop.f32.mrf.mxu0
        %v1297 = vadd.f32 %v1248, %v1296
        %v1298 = vpop.f32.mrf.mxu0
        %v1299 = vadd.f32 %v1250, %v1298
        %1300 = vmatmul.bf16.gmra.mxu0 %v887
        %v1301 = vpop.f32.mrf.mxu0
        %v1302 = vadd.f32 %v1253, %v1301
        %v1303 = vpop.f32.mrf.mxu0
        %v1304 = vadd.f32 %v1255, %v1303
        %1305 = vmatmul.bf16.gmra.mxu0 %v891
        %v1306 = vpop.f32.mrf.mxu0
        %v1307 = vadd.f32 %v1258, %v1306
        %v1308 = vpop.f32.mrf.mxu0
        %v1309 = vadd.f32 %v1260, %v1308
        %1310 = vmatmul.bf16.gmra.mxu0 %v895
        %v1311 = vpop.f32.mrf.mxu0
        %v1312 = vadd.f32 %v1263, %v1311
        %v1313 = vpop.f32.mrf.mxu0
        %v1314 = vadd.f32 %v1265, %v1313
        %1315 = vdwg.mxu0
        %v1316 = vadd.f32 %v656, %v1277
        %v1317 = vadd.f32 %v657, %v1279
        %v1318 = vadd.f32 %v658, %v1282
        %v1319 = vadd.f32 %v659, %v1284
        %v1320 = vadd.f32 %v660, %v1287
        %v1321 = vadd.f32 %v661, %v1289
        %v1322 = vadd.f32 %v662, %v1292
        %v1323 = vadd.f32 %v663, %v1294
        %v1324 = vadd.f32 %v664, %v1297
        %v1325 = vadd.f32 %v665, %v1299
        %v1326 = vadd.f32 %v666, %v1302
        %v1327 = vadd.f32 %v667, %v1304
        %v1328 = vadd.f32 %v668, %v1307
        %v1329 = vadd.f32 %v669, %v1309
        %v1330 = vadd.f32 %v670, %v1312
        %v1331 = vadd.f32 %v671, %v1314
        %1332 = vst [vmem:[#allocation2] sm:$0xff] %v1316
        %1333 = vst [vmem:[#allocation2 + $0x8] sm:$0xff] %v1317
        %1334 = vst [vmem:[#allocation2 + $0x10] sm:$0xff] %v1318
        %1335 = vst [vmem:[#allocation2 + $0x18] sm:$0xff] %v1319
        %1336 = vst [vmem:[#allocation2 + $0x20] sm:$0xff] %v1320
        %1337 = vst [vmem:[#allocation2 + $0x28] sm:$0xff] %v1321
        %1338 = vst [vmem:[#allocation2 + $0x30] sm:$0xff] %v1322
        %1339 = vst [vmem:[#allocation2 + $0x38] sm:$0xff] %v1323
        %1340 = vst [vmem:[#allocation2 + $0x40] sm:$0xff] %v1324
        %1341 = vst [vmem:[#allocation2 + $0x48] sm:$0xff] %v1325
        %1342 = vst [vmem:[#allocation2 + $0x50] sm:$0xff] %v1326
        %1343 = vst [vmem:[#allocation2 + $0x58] sm:$0xff] %v1327
        %1344 = vst [vmem:[#allocation2 + $0x60] sm:$0xff] %v1328
        %1345 = vst [vmem:[#allocation2 + $0x68] sm:$0xff] %v1329
        %1346 = vst [vmem:[#allocation2 + $0x70] sm:$0xff] %v1330
        %1347 = vst [vmem:[#allocation2 + $0x78] sm:$0xff] %v1331
        %p1348 = scmp.eq.s32.totalorder %s20, 3
        // Predicated region
        $region105: #{discriminator_forward.7} parent=91 // pred_check
          %p1349 = pneg %p1348
        $region106: #{discriminator_forward.7} parent=91 // pred_check_branch
          %1351 = sbr.rel (%p1349) target = $region108
        $region107: #{discriminator_forward.7} parent=91 // pred_region
          %v1352 = vld [vmem:[#allocation2] sm:$0xff]
          %v1353 = vld [vmem:[#allocation2 + $0x8] sm:$0xff]
          %v1354 = vld [vmem:[#allocation2 + $0x10] sm:$0xff]
          %v1355 = vld [vmem:[#allocation2 + $0x18] sm:$0xff]
          %v1356 = vld [vmem:[#allocation2 + $0x20] sm:$0xff]
          %v1357 = vld [vmem:[#allocation2 + $0x28] sm:$0xff]
          %v1358 = vld [vmem:[#allocation2 + $0x30] sm:$0xff]
          %v1359 = vld [vmem:[#allocation2 + $0x38] sm:$0xff]
          %v1360 = vld [vmem:[#allocation2 + $0x40] sm:$0xff]
          %v1361 = vld [vmem:[#allocation2 + $0x48] sm:$0xff]
          %v1362 = vld [vmem:[#allocation2 + $0x50] sm:$0xff]
          %v1363 = vld [vmem:[#allocation2 + $0x58] sm:$0xff]
          %v1364 = vld [vmem:[#allocation2 + $0x60] sm:$0xff]
          %v1365 = vld [vmem:[#allocation2 + $0x68] sm:$0xff]
          %v1366 = vld [vmem:[#allocation2 + $0x70] sm:$0xff]
          %v1367 = vld [vmem:[#allocation2 + $0x78] sm:$0xff]
          %v1368 = vadd.f32 %v1352, %v1353
          %v1369 = vadd.f32 %v1368, %v1354
          %v1370 = vadd.f32 %v1369, %v1355
          %v1371 = vadd.f32 %v1370, %v1356
          %v1372 = vadd.f32 %v1371, %v1357
          %v1373 = vadd.f32 %v1372, %v1358
          %v1374 = vadd.f32 %v1373, %v1359
          %v1375 = vadd.f32 %v1374, %v1360
          %v1376 = vadd.f32 %v1375, %v1361
          %v1377 = vadd.f32 %v1376, %v1362
          %v1378 = vadd.f32 %v1377, %v1363
          %v1379 = vadd.f32 %v1378, %v1364
          %v1380 = vadd.f32 %v1379, %v1365
          %v1381 = vadd.f32 %v1380, %v1366
          %v1382 = vadd.f32 %v1381, %v1367
          %v1383 = vrot.slane %v1382, 4
          %v1384 = vadd.f32 %v1382, %v1383
          %v1385 = vrot.slane %v1384, 2
          %v1386 = vadd.f32 %v1384, %v1385
          %v1387 = vrot.slane %v1386, 1
          %v1388 = vadd.f32 %v1386, %v1387
          %v1389 = vadd.f32 %v1388, 0.0
          %v1390 = vmul.f32 %v1389, 0.0078125
          %v1391 = vsub.f32 %v1352, %v1390
          %v1392 = vsub.f32 %v1353, %v1390
          %v1393 = vsub.f32 %v1354, %v1390
          %v1394 = vsub.f32 %v1355, %v1390
          %v1395 = vsub.f32 %v1356, %v1390
          %v1396 = vsub.f32 %v1357, %v1390
          %v1397 = vsub.f32 %v1358, %v1390
          %v1398 = vsub.f32 %v1359, %v1390
          %v1399 = vsub.f32 %v1360, %v1390
          %v1400 = vsub.f32 %v1361, %v1390
          %v1401 = vsub.f32 %v1362, %v1390
          %v1402 = vsub.f32 %v1363, %v1390
          %v1403 = vsub.f32 %v1364, %v1390
          %v1404 = vsub.f32 %v1365, %v1390
          %v1405 = vsub.f32 %v1366, %v1390
          %v1406 = vsub.f32 %v1367, %v1390
          %v1407 = vmul.f32 %v1391, %v1391
          %v1408 = vmul.f32 %v1392, %v1392
          %v1409 = vmul.f32 %v1393, %v1393
          %v1410 = vmul.f32 %v1394, %v1394
          %v1411 = vmul.f32 %v1395, %v1395
          %v1412 = vmul.f32 %v1396, %v1396
          %v1413 = vmul.f32 %v1397, %v1397
          %v1414 = vmul.f32 %v1398, %v1398
          %v1415 = vmul.f32 %v1399, %v1399
          %v1416 = vmul.f32 %v1400, %v1400
          %v1417 = vmul.f32 %v1401, %v1401
          %v1418 = vmul.f32 %v1402, %v1402
          %v1419 = vmul.f32 %v1403, %v1403
          %v1420 = vmul.f32 %v1404, %v1404
          %v1421 = vmul.f32 %v1405, %v1405
          %v1422 = vmul.f32 %v1406, %v1406
          %v1423 = vadd.f32 %v1407, %v1408
          %v1424 = vadd.f32 %v1423, %v1409
          %v1425 = vadd.f32 %v1424, %v1410
          %v1426 = vadd.f32 %v1425, %v1411
          %v1427 = vadd.f32 %v1426, %v1412
          %v1428 = vadd.f32 %v1427, %v1413
          %v1429 = vadd.f32 %v1428, %v1414
          %v1430 = vadd.f32 %v1429, %v1415
          %v1431 = vadd.f32 %v1430, %v1416
          %v1432 = vadd.f32 %v1431, %v1417
          %v1433 = vadd.f32 %v1432, %v1418
          %v1434 = vadd.f32 %v1433, %v1419
          %v1435 = vadd.f32 %v1434, %v1420
          %v1436 = vadd.f32 %v1435, %v1421
          %v1437 = vadd.f32 %v1436, %v1422
          %v1438 = vrot.slane %v1437, 4
          %v1439 = vadd.f32 %v1437, %v1438
          %v1440 = vrot.slane %v1439, 2
          %v1441 = vadd.f32 %v1439, %v1440
          %v1442 = vrot.slane %v1441, 1
          %v1443 = vadd.f32 %v1441, %v1442
          %v1444 = vadd.f32 %v1443, 0.0
          %v1445 = vmul.f32 %v1444, 0.0078125
          %v1446 = vld [vmem:[%s632] sm:$0x1]
          %v1447 = vadd.f32 %v1445, 1e-05
          %v1448 = vrsqrt.pop %v1447
          %v1449 = vmul.f32 %v1448, %v1447
          %v1450 = vmul.f32 %v1449, %v1448
          %v1451 = vmul.f32 0.5, %v1450
          %v1452 = vsub.f32 1.5, %v1451
          %v1453 = vmul.f32 %v1448, %v1452
          %vm1454 = vweird.f32 %v1447
          %vm1455 = vweird.f32 %v1448
          %vm1456 = vmor %vm1454, %vm1455
          %v1457 = vsel %vm1456, %v1448, %v1453
          %v1458 = vmul.f32 %v1446, %v1457
          %v1459 = vld [vmem:[%s635] sm:$0x1]
          %v1460 = vmul.f32 %v1390, %v1458
          %v1461 = vsub.f32 %v1459, %v1460
          %v1463 = vperm.slane %v1458, 0
          %v1465 = vmul.f32 %v1352, %v1463
          %v1466 = vmul.f32 %v1353, %v1463
          %v1467 = vmul.f32 %v1354, %v1463
          %v1468 = vmul.f32 %v1355, %v1463
          %v1469 = vmul.f32 %v1356, %v1463
          %v1470 = vmul.f32 %v1357, %v1463
          %v1471 = vmul.f32 %v1358, %v1463
          %v1472 = vmul.f32 %v1359, %v1463
          %v1473 = vmul.f32 %v1360, %v1463
          %v1474 = vmul.f32 %v1361, %v1463
          %v1475 = vmul.f32 %v1362, %v1463
          %v1476 = vmul.f32 %v1363, %v1463
          %v1477 = vmul.f32 %v1364, %v1463
          %v1478 = vmul.f32 %v1365, %v1463
          %v1479 = vmul.f32 %v1366, %v1463
          %v1480 = vmul.f32 %v1367, %v1463
          %v1482 = vperm.slane %v1461, 0
          %v1484 = vadd.f32 %v1465, %v1482
          %v1485 = vadd.f32 %v1466, %v1482
          %v1486 = vadd.f32 %v1467, %v1482
          %v1487 = vadd.f32 %v1468, %v1482
          %v1488 = vadd.f32 %v1469, %v1482
          %v1489 = vadd.f32 %v1470, %v1482
          %v1490 = vadd.f32 %v1471, %v1482
          %v1491 = vadd.f32 %v1472, %v1482
          %v1492 = vadd.f32 %v1473, %v1482
          %v1493 = vadd.f32 %v1474, %v1482
          %v1494 = vadd.f32 %v1475, %v1482
          %v1495 = vadd.f32 %v1476, %v1482
          %v1496 = vadd.f32 %v1477, %v1482
          %v1497 = vadd.f32 %v1478, %v1482
          %v1498 = vadd.f32 %v1479, %v1482
          %v1499 = vadd.f32 %v1480, %v1482
          %vm1500 = vcmp.gt.f32.partialorder %v1484, 0.0
          %vm1501 = vcmp.gt.f32.partialorder %v1485, 0.0
          %vm1502 = vcmp.gt.f32.partialorder %v1486, 0.0
          %vm1503 = vcmp.gt.f32.partialorder %v1487, 0.0
          %vm1504 = vcmp.gt.f32.partialorder %v1488, 0.0
          %vm1505 = vcmp.gt.f32.partialorder %v1489, 0.0
          %vm1506 = vcmp.gt.f32.partialorder %v1490, 0.0
          %vm1507 = vcmp.gt.f32.partialorder %v1491, 0.0
          %vm1508 = vcmp.gt.f32.partialorder %v1492, 0.0
          %vm1509 = vcmp.gt.f32.partialorder %v1493, 0.0
          %vm1510 = vcmp.gt.f32.partialorder %v1494, 0.0
          %vm1511 = vcmp.gt.f32.partialorder %v1495, 0.0
          %vm1512 = vcmp.gt.f32.partialorder %v1496, 0.0
          %vm1513 = vcmp.gt.f32.partialorder %v1497, 0.0
          %vm1514 = vcmp.gt.f32.partialorder %v1498, 0.0
          %vm1515 = vcmp.gt.f32.partialorder %v1499, 0.0
          %v1516 = vmul.f32 %v1484, 0.2
          %v1517 = vmul.f32 %v1485, 0.2
          %v1518 = vmul.f32 %v1486, 0.2
          %v1519 = vmul.f32 %v1487, 0.2
          %v1520 = vmul.f32 %v1488, 0.2
          %v1521 = vmul.f32 %v1489, 0.2
          %v1522 = vmul.f32 %v1490, 0.2
          %v1523 = vmul.f32 %v1491, 0.2
          %v1524 = vmul.f32 %v1492, 0.2
          %v1525 = vmul.f32 %v1493, 0.2
          %v1526 = vmul.f32 %v1494, 0.2
          %v1527 = vmul.f32 %v1495, 0.2
          %v1528 = vmul.f32 %v1496, 0.2
          %v1529 = vmul.f32 %v1497, 0.2
          %v1530 = vmul.f32 %v1498, 0.2
          %v1531 = vmul.f32 %v1499, 0.2
          %v1532 = vsel %vm1500, %v1484, %v1516
          %v1533 = vsel %vm1501, %v1485, %v1517
          %v1534 = vsel %vm1502, %v1486, %v1518
          %v1535 = vsel %vm1503, %v1487, %v1519
          %v1536 = vsel %vm1504, %v1488, %v1520
          %v1537 = vsel %vm1505, %v1489, %v1521
          %v1538 = vsel %vm1506, %v1490, %v1522
          %v1539 = vsel %vm1507, %v1491, %v1523
          %v1540 = vsel %vm1508, %v1492, %v1524
          %v1541 = vsel %vm1509, %v1493, %v1525
          %v1542 = vsel %vm1510, %v1494, %v1526
          %v1543 = vsel %vm1511, %v1495, %v1527
          %v1544 = vsel %vm1512, %v1496, %v1528
          %v1545 = vsel %vm1513, %v1497, %v1529
          %v1546 = vsel %vm1514, %v1498, %v1530
          %v1547 = vsel %vm1515, %v1499, %v1531
          %v1548 = vpack.c.bf16 %v1532, %v1532
          %v1549 = vpack.c.bf16 %v1533, %v1533
          %v1550 = vpack.c.bf16 %v1534, %v1534
          %v1551 = vpack.c.bf16 %v1535, %v1535
          %v1552 = vpack.c.bf16 %v1536, %v1536
          %v1553 = vpack.c.bf16 %v1537, %v1537
          %v1554 = vpack.c.bf16 %v1538, %v1538
          %v1555 = vpack.c.bf16 %v1539, %v1539
          %v1556 = vpack.c.bf16 %v1540, %v1540
          %v1557 = vpack.c.bf16 %v1541, %v1541
          %v1558 = vpack.c.bf16 %v1542, %v1542
          %v1559 = vpack.c.bf16 %v1543, %v1543
          %v1560 = vpack.c.bf16 %v1544, %v1544
          %v1561 = vpack.c.bf16 %v1545, %v1545
          %v1562 = vpack.c.bf16 %v1546, %v1546
          %v1563 = vpack.c.bf16 %v1547, %v1547
          %1564 = vst [vmem:[%s627] sm:$0xf] %v1548
          %1565 = vst [vmem:[%s627 + $0x4] sm:$0xf] %v1549
          %1566 = vst [vmem:[%s627 + $0x8] sm:$0xf] %v1550
          %1567 = vst [vmem:[%s627 + $0xc] sm:$0xf] %v1551
          %1568 = vst [vmem:[%s627 + $0x10] sm:$0xf] %v1552
          %1569 = vst [vmem:[%s627 + $0x14] sm:$0xf] %v1553
          %1570 = vst [vmem:[%s627 + $0x18] sm:$0xf] %v1554
          %1571 = vst [vmem:[%s627 + $0x1c] sm:$0xf] %v1555
          %1572 = vst [vmem:[%s627 + $0x20] sm:$0xf] %v1556
          %1573 = vst [vmem:[%s627 + $0x24] sm:$0xf] %v1557
          %1574 = vst [vmem:[%s627 + $0x28] sm:$0xf] %v1558
          %1575 = vst [vmem:[%s627 + $0x2c] sm:$0xf] %v1559
          %1576 = vst [vmem:[%s627 + $0x30] sm:$0xf] %v1560
          %1577 = vst [vmem:[%s627 + $0x34] sm:$0xf] %v1561
          %1578 = vst [vmem:[%s627 + $0x38] sm:$0xf] %v1562
          %1579 = vst [vmem:[%s627 + $0x3c] sm:$0xf] %v1563
        $region108: #{discriminator_forward.7} parent=91 // pred_fallthru
          _
        %s1580 = sand.u32 %s141, 1
        %s1581 = sand.u32 %s141, 1
        %s1582 = smul.addr %s1581, 64
        %s1583 = scalar_lea.vmem [#allocation5], %s1582
        // Predicated region
        $region109: #{discriminator_forward.7} parent=91 // pred_check
          %p1584 = pneg %p151
        $region110: #{discriminator_forward.7} parent=91 // pred_check_branch
          %1586 = sbr.rel (%p1584) target = $region112
        $region111: #{discriminator_forward.7} parent=91 // pred_region
          %s1587 = smul.addr %s19, 4
          %s1588 = scalar_lea.vmem %s4, %s1587
          // Predicated region
          $region113: #{discriminator_forward.7} parent=111 // pred_check
            _
          $region114: #{discriminator_forward.7} parent=111 // pred_check_branch
            %1590 = sbr.rel (0) target = $region116
          $region115: #{discriminator_forward.7} parent=111 // pred_region
            // Predicated region
            $region117: #{discriminator_forward.7} parent=115 // pred_check
              _
            $region118: #{discriminator_forward.7} parent=115 // pred_check_branch
              %1592 = sbr.rel target = $region120
            $region119: #{discriminator_forward.7} parent=115 // pred_region
              // Predicated region
              $region132: #{discriminator_forward.7} parent=119 // pred_check
                _
              $region133: #{discriminator_forward.7} parent=119 // pred_check_branch
                %1638 = sbr.rel (0) target = $region135
              $region134: #{discriminator_forward.7} parent=119 // pred_region
                loop: start=0, step=1, limit=1
                $region136: #{discriminator_forward.7} parent=134 // loop_pre_header
                  _
                $region137: #{discriminator_forward.7} parent=134 // loop_header
                  %s1640 = sphi 0, %s1644
                  %p1641 = scmp.ge.s32.totalorder %s1640, 1
                  %s1645 = sphi %s1583, %s1583
                  %s1646 = sphi %s1588, %s1588
                $region138: #{discriminator_forward.7} parent=134 // loop_header_branch
                  %1643 = sbr.rel (%p1641) target = $region142
                $region139: #{discriminator_forward.7} parent=134 // loop_body
                  _
                $region140: #{discriminator_forward.7} parent=134 // loop_footer
                  %s1644 = sadd.s32 1, %s1640
                $region141: #{discriminator_forward.7} parent=134 // loop_footer_branch
                  %1639 = sbr.rel target = $region137
                $region142: #{discriminator_forward.7} parent=134 // loop_exit
                  _
                %s1648 = ssub.s32 16, 1
                loop: start=0, step=1, limit=1
                $region143: #{discriminator_forward.7} parent=134 // loop_pre_header
                  _
                $region144: #{discriminator_forward.7} parent=134 // loop_header
                  %s1650 = sphi 0, %s1654
                  %p1651 = scmp.ge.s32.totalorder %s1650, 1
                  %s1655 = sphi %s1583, %s1583
                  %s1656 = sphi %s1588, %s1588
                $region145: #{discriminator_forward.7} parent=134 // loop_header_branch
                  %1653 = sbr.rel (%p1651) target = $region149
                $region146: #{discriminator_forward.7} parent=134 // loop_body
                  %v1657 = vld [vmem:[%s1655] sm:%s1648]
                  %1658 = vst [vmem:[%s1656] sm:%s1648] %v1657
                  %v1659 = vld [vmem:[%s1655 + $0x4] sm:%s1648]
                  %1660 = vst [vmem:[%s1656 + $0x8] sm:%s1648] %v1659
                  %v1661 = vld [vmem:[%s1655 + $0x8] sm:%s1648]
                  %1662 = vst [vmem:[%s1656 + $0x10] sm:%s1648] %v1661
                  %v1663 = vld [vmem:[%s1655 + $0xc] sm:%s1648]
                  %1664 = vst [vmem:[%s1656 + $0x18] sm:%s1648] %v1663
                  %v1665 = vld [vmem:[%s1655 + $0x10] sm:%s1648]
                  %1666 = vst [vmem:[%s1656 + $0x20] sm:%s1648] %v1665
                  %v1667 = vld [vmem:[%s1655 + $0x14] sm:%s1648]
                  %1668 = vst [vmem:[%s1656 + $0x28] sm:%s1648] %v1667
                  %v1669 = vld [vmem:[%s1655 + $0x18] sm:%s1648]
                  %1670 = vst [vmem:[%s1656 + $0x30] sm:%s1648] %v1669
                  %v1671 = vld [vmem:[%s1655 + $0x1c] sm:%s1648]
                  %1672 = vst [vmem:[%s1656 + $0x38] sm:%s1648] %v1671
                  %v1673 = vld [vmem:[%s1655 + $0x20] sm:%s1648]
                  %1674 = vst [vmem:[%s1656 + $0x40] sm:%s1648] %v1673
                  %v1675 = vld [vmem:[%s1655 + $0x24] sm:%s1648]
                  %1676 = vst [vmem:[%s1656 + $0x48] sm:%s1648] %v1675
                  %v1677 = vld [vmem:[%s1655 + $0x28] sm:%s1648]
                  %1678 = vst [vmem:[%s1656 + $0x50] sm:%s1648] %v1677
                  %v1679 = vld [vmem:[%s1655 + $0x2c] sm:%s1648]
                  %1680 = vst [vmem:[%s1656 + $0x58] sm:%s1648] %v1679
                  %v1681 = vld [vmem:[%s1655 + $0x30] sm:%s1648]
                  %1682 = vst [vmem:[%s1656 + $0x60] sm:%s1648] %v1681
                  %v1683 = vld [vmem:[%s1655 + $0x34] sm:%s1648]
                  %1684 = vst [vmem:[%s1656 + $0x68] sm:%s1648] %v1683
                  %v1685 = vld [vmem:[%s1655 + $0x38] sm:%s1648]
                  %1686 = vst [vmem:[%s1656 + $0x70] sm:%s1648] %v1685
                  %v1687 = vld [vmem:[%s1655 + $0x3c] sm:%s1648]
                  %1688 = vst [vmem:[%s1656 + $0x78] sm:%s1648] %v1687
                $region147: #{discriminator_forward.7} parent=134 // loop_footer
                  %s1654 = sadd.s32 1, %s1650
                $region148: #{discriminator_forward.7} parent=134 // loop_footer_branch
                  %1649 = sbr.rel target = $region144
                $region149: #{discriminator_forward.7} parent=134 // loop_exit
                  _
              $region135: #{discriminator_forward.7} parent=119 // pred_fallthru
                _
            $region120: #{discriminator_forward.7} parent=115 // pred_fallthru
              _
            // Predicated region
            $region121: #{discriminator_forward.7} parent=115 // pred_check
              _
            $region122: #{discriminator_forward.7} parent=115 // pred_check_branch
              %1594 = sbr.rel (0) target = $region124
            $region123: #{discriminator_forward.7} parent=115 // pred_region
              %s1596 = ssub.s32 16, 1
              loop: start=0, step=1, limit=1
              $region125: #{discriminator_forward.7} parent=123 // loop_pre_header
                _
              $region126: #{discriminator_forward.7} parent=123 // loop_header
                %s1598 = sphi 0, %s1602
                %p1599 = scmp.ge.s32.totalorder %s1598, 1
                %s1603 = sphi %s1583, %s1583
                %s1604 = sphi %s1588, %s1588
              $region127: #{discriminator_forward.7} parent=123 // loop_header_branch
                %1601 = sbr.rel (%p1599) target = $region131
              $region128: #{discriminator_forward.7} parent=123 // loop_body
                %v1605 = vld [vmem:[%s1603] sm:%s1596]
                %1606 = vst [vmem:[%s1604] sm:%s1596] %v1605
                %v1607 = vld [vmem:[%s1603 + $0x4] sm:%s1596]
                %1608 = vst [vmem:[%s1604 + $0x8] sm:%s1596] %v1607
                %v1609 = vld [vmem:[%s1603 + $0x8] sm:%s1596]
                %1610 = vst [vmem:[%s1604 + $0x10] sm:%s1596] %v1609
                %v1611 = vld [vmem:[%s1603 + $0xc] sm:%s1596]
                %1612 = vst [vmem:[%s1604 + $0x18] sm:%s1596] %v1611
                %v1613 = vld [vmem:[%s1603 + $0x10] sm:%s1596]
                %1614 = vst [vmem:[%s1604 + $0x20] sm:%s1596] %v1613
                %v1615 = vld [vmem:[%s1603 + $0x14] sm:%s1596]
                %1616 = vst [vmem:[%s1604 + $0x28] sm:%s1596] %v1615
                %v1617 = vld [vmem:[%s1603 + $0x18] sm:%s1596]
                %1618 = vst [vmem:[%s1604 + $0x30] sm:%s1596] %v1617
                %v1619 = vld [vmem:[%s1603 + $0x1c] sm:%s1596]
                %1620 = vst [vmem:[%s1604 + $0x38] sm:%s1596] %v1619
                %v1621 = vld [vmem:[%s1603 + $0x20] sm:%s1596]
                %1622 = vst [vmem:[%s1604 + $0x40] sm:%s1596] %v1621
                %v1623 = vld [vmem:[%s1603 + $0x24] sm:%s1596]
                %1624 = vst [vmem:[%s1604 + $0x48] sm:%s1596] %v1623
                %v1625 = vld [vmem:[%s1603 + $0x28] sm:%s1596]
                %1626 = vst [vmem:[%s1604 + $0x50] sm:%s1596] %v1625
                %v1627 = vld [vmem:[%s1603 + $0x2c] sm:%s1596]
                %1628 = vst [vmem:[%s1604 + $0x58] sm:%s1596] %v1627
                %v1629 = vld [vmem:[%s1603 + $0x30] sm:%s1596]
                %1630 = vst [vmem:[%s1604 + $0x60] sm:%s1596] %v1629
                %v1631 = vld [vmem:[%s1603 + $0x34] sm:%s1596]
                %1632 = vst [vmem:[%s1604 + $0x68] sm:%s1596] %v1631
                %v1633 = vld [vmem:[%s1603 + $0x38] sm:%s1596]
                %1634 = vst [vmem:[%s1604 + $0x70] sm:%s1596] %v1633
                %v1635 = vld [vmem:[%s1603 + $0x3c] sm:%s1596]
                %1636 = vst [vmem:[%s1604 + $0x78] sm:%s1596] %v1635
              $region129: #{discriminator_forward.7} parent=123 // loop_footer
                %s1602 = sadd.s32 1, %s1598
              $region130: #{discriminator_forward.7} parent=123 // loop_footer_branch
                %1597 = sbr.rel target = $region126
              $region131: #{discriminator_forward.7} parent=123 // loop_exit
                _
            $region124: #{discriminator_forward.7} parent=115 // pred_fallthru
              _
          $region116: #{discriminator_forward.7} parent=111 // pred_fallthru
            _
          %1689 = vnop
        $region112: #{discriminator_forward.7} parent=91 // pred_fallthru
          _
      $region92: #{discriminator_forward.7} parent=5 // pred_fallthru
        _
      %p1690 = scmp.le.s32.totalorder 2, %s10
      // Predicated region
      $region150: #{discriminator_forward.7} parent=5 // pred_check
        %p1691 = pneg %p1690
      $region151: #{discriminator_forward.7} parent=5 // pred_check_branch
        %1693 = sbr.rel (%p1691) target = $region153
      $region152: #{discriminator_forward.7} parent=5 // pred_region
        %s1694 = ssub.s32 %s10, 2
        // Predicated region
        $region154: #{discriminator_forward.7} parent=152 // pred_check
          %p1695 = pneg %p157
        $region155: #{discriminator_forward.7} parent=152 // pred_check_branch
          %1697 = sbr.rel (%p1695) target = $region157
        $region156: #{discriminator_forward.7} parent=152 // pred_region
          %s1698 = sand.u32 %s142, 1
          %s1699 = sand.u32 %s142, 1
          %s1700 = smul.addr %s1699, 64
          %s1701 = scalar_lea.vmem [#allocation5], %s1700
        $region157: #{discriminator_forward.7} parent=152 // pred_fallthru
          _
      $region153: #{discriminator_forward.7} parent=5 // pred_fallthru
        _
    $region6: #{discriminator_forward.7} parent=1 // loop_footer
      %s14 = sadd.s32 1, %s10
    $region7: #{discriminator_forward.7} parent=1 // loop_footer_branch
      %9 = sbr.rel target = $region3
    $region8: #{discriminator_forward.7} parent=1 // loop_exit
      _

// kernel: discriminator_forward.8
$region0: #{discriminator_forward.8}
  #allocation0 [shape = 'u32[]', space=smem, size = 0x4, offset = 0x4, fixed_abs, tag = 'smem constant byte address 0x4 - core index']
  #allocation1 [shape = 'u32[72,128]{1,0:T(1,128)}', space=vmem, size = 0x9000, scoped, tag = 'internal scratch']
  #allocation2 [shape = 'f32[32,128]{1,0:T(8,128)}', space=vmem, size = 0x4000, scoped, tag = 'scratch operand']
  %s0 = inlined_call_operand.vmem [shape: bf16[32,4096], index: 0, kind: input, shape index: {}]
  %s1 = inlined_call_operand.vmem [shape: bf16[4096,512], index: 1, kind: input, shape index: {}]
  %s2 = inlined_call_operand.vmem [shape: f32[1,512], index: 2, kind: input, shape index: {}]
  %s3 = inlined_call_operand.vmem [shape: f32[1,512], index: 3, kind: input, shape index: {}]
  %s4 = inlined_call_operand.vmem [shape: bf16[32,512], index: 4, kind: output, shape index: {}]
  %s5 = sld [smem:[#allocation0]]
  $region158: #{discriminator_forward.8} parent=0
    _
  %s7 = ssub.s32 1, %s5
  %s8 = scalar_select 0, %s7, %s5
  $region1: #{discriminator_forward.8} parent=0
    #allocation3 [shape = 'u8[65536]{0}', space=vmem, size = 0x10000, scoped, tag = 'input window, operand 0']
    #allocation4 [shape = 'u8[262144]{0}', space=vmem, size = 0x40000, scoped, tag = 'input window, operand 1']
    #allocation5 [shape = 'u8[16384]{0}', space=vmem, size = 0x4000, scoped, tag = 'output window, operand 0']
    loop: start=0, step=1, limit=34
    $region2: #{discriminator_forward.8} parent=1 // loop_pre_header
      _
    $region3: #{discriminator_forward.8} parent=1 // loop_header
      %s10 = sphi 0, %s14
      %p11 = scmp.ge.s32.totalorder %s10, 34
      %s17 = sphi 0, %s29
      %s18 = sphi 0, %s25
      %s19 = sphi 0, %s17
      %s20 = sphi 0, %s18
      %s21 = sphi 0, %s19
      %s22 = sphi 0, %s20
      %s32 = sphi 0, %s34
      %s35 = sphi 0, %s32
      %s36 = sphi 0, %s35
      %s52 = sphi 0, %s36
      %s60 = sphi 0, %s62
      %s63 = sphi 0, %s60
      %s64 = sphi 0, %s63
      %s80 = sphi 0, %s64
      %s86 = sphi 0, %s88
      %s89 = sphi 0, %s86
      %s90 = sphi 0, %s89
      %s106 = sphi 0, %s90
      %s112 = sphi 0, %s114
      %s115 = sphi 0, %s112
      %s116 = sphi 0, %s115
      %s132 = sphi 0, %s116
      %s138 = sphi 0, %s140
      %s141 = sphi 0, %s138
      %s142 = sphi 0, %s141
      %s158 = sphi 0, %s142
    $region4: #{discriminator_forward.8} parent=1 // loop_header_branch
      %13 = sbr.rel (%p11) target = $region8
    $region5: #{discriminator_forward.8} parent=1 // loop_body
      %s15 = ssub.s32 %s10, 1
      %s16 = ssub.s32 %s10, 2
      %s23 = sadd.s32 1, %s18
      %p24 = scmp.ge.s32.totalorder %s23, 8
      %s25 = scalar_select %p24, 0, %s23
      %s26 = sadd.s32 1, %s17
      %s27 = scalar_select %p24, %s26, %s17
      %p28 = scmp.ge.s32.totalorder %s27, 4
      %s29 = scalar_select %p28, 0, %s27
      %s30 = ssub.s32 %s18, %s25
      %p31 = scmp.eq.s32.totalorder %s30, 0
      %s33 = sadd.s32 %s32, 1
      %s34 = scalar_select %p31, %s32, %s33
      %p37 = pneg %p31
      %p38 = scmp.eq.s32.totalorder %s10, 31
      %p39 = por %p37, %p38
      %p40 = scmp.ne.s32.totalorder %s32, %s35
      %p41 = scmp.eq.s32.totalorder %s10, 0
      %p42 = por %p40, %p41
      %p43 = scmp.ne.s32.totalorder %s32, %s35
      %p44 = scmp.eq.s32.totalorder %s15, 31
      %p45 = por %p43, %p44
      %p46 = scmp.ne.s32.totalorder %s35, %s36
      %p47 = scmp.eq.s32.totalorder %s15, 0
      %p48 = por %p46, %p47
      %p49 = scmp.ne.s32.totalorder %s35, %s36
      %p50 = scmp.eq.s32.totalorder %s16, 31
      %p51 = por %p49, %p50
      %p53 = scmp.ne.s32.totalorder %s36, %s52
      %p54 = scmp.eq.s32.totalorder %s16, 0
      %p55 = por %p53, %p54
      %s56 = ssub.s32 %s18, %s25
      %s57 = ssub.s32 %s17, %s29
      %s58 = sor.u32 %s56, %s57
      %p59 = scmp.eq.s32.totalorder %s58, 0
      %s61 = sadd.s32 %s60, 1
      %s62 = scalar_select %p59, %s60, %s61
      %p65 = pneg %p59
      %p66 = scmp.eq.s32.totalorder %s10, 31
      %p67 = por %p65, %p66
      %p68 = scmp.ne.s32.totalorder %s60, %s63
      %p69 = scmp.eq.s32.totalorder %s10, 0
      %p70 = por %p68, %p69
      %p71 = scmp.ne.s32.totalorder %s60, %s63
      %p72 = scmp.eq.s32.totalorder %s15, 31
      %p73 = por %p71, %p72
      %p74 = scmp.ne.s32.totalorder %s63, %s64
      %p75 = scmp.eq.s32.totalorder %s15, 0
      %p76 = por %p74, %p75
      %p77 = scmp.ne.s32.totalorder %s63, %s64
      %p78 = scmp.eq.s32.totalorder %s16, 31
      %p79 = por %p77, %p78
      %p81 = scmp.ne.s32.totalorder %s64, %s80
      %p82 = scmp.eq.s32.totalorder %s16, 0
      %p83 = por %p81, %p82
      %s84 = ssub.s32 %s17, %s29
      %p85 = scmp.eq.s32.totalorder %s84, 0
      %s87 = sadd.s32 %s86, 1
      %s88 = scalar_select %p85, %s86, %s87
      %p91 = pneg %p85
      %p92 = scmp.eq.s32.totalorder %s10, 31
      %p93 = por %p91, %p92
      %p94 = scmp.ne.s32.totalorder %s86, %s89
      %p95 = scmp.eq.s32.totalorder %s10, 0
      %p96 = por %p94, %p95
      %p97 = scmp.ne.s32.totalorder %s86, %s89
      %p98 = scmp.eq.s32.totalorder %s15, 31
      %p99 = por %p97, %p98
      %p100 = scmp.ne.s32.totalorder %s89, %s90
      %p101 = scmp.eq.s32.totalorder %s15, 0
      %p102 = por %p100, %p101
      %p103 = scmp.ne.s32.totalorder %s89, %s90
      %p104 = scmp.eq.s32.totalorder %s16, 31
      %p105 = por %p103, %p104
      %p107 = scmp.ne.s32.totalorder %s90, %s106
      %p108 = scmp.eq.s32.totalorder %s16, 0
      %p109 = por %p107, %p108
      %s110 = ssub.s32 %s17, %s29
      %p111 = scmp.eq.s32.totalorder %s110, 0
      %s113 = sadd.s32 %s112, 1
      %s114 = scalar_select %p111, %s112, %s113
      %p117 = pneg %p111
      %p118 = scmp.eq.s32.totalorder %s10, 31
      %p119 = por %p117, %p118
      %p120 = scmp.ne.s32.totalorder %s112, %s115
      %p121 = scmp.eq.s32.totalorder %s10, 0
      %p122 = por %p120, %p121
      %p123 = scmp.ne.s32.totalorder %s112, %s115
      %p124 = scmp.eq.s32.totalorder %s15, 31
      %p125 = por %p123, %p124
      %p126 = scmp.ne.s32.totalorder %s115, %s116
      %p127 = scmp.eq.s32.totalorder %s15, 0
      %p128 = por %p126, %p127
      %p129 = scmp.ne.s32.totalorder %s115, %s116
      %p130 = scmp.eq.s32.totalorder %s16, 31
      %p131 = por %p129, %p130
      %p133 = scmp.ne.s32.totalorder %s116, %s132
      %p134 = scmp.eq.s32.totalorder %s16, 0
      %p135 = por %p133, %p134
      %s136 = ssub.s32 %s17, %s29
      %p137 = scmp.eq.s32.totalorder %s136, 0
      %s139 = sadd.s32 %s138, 1
      %s140 = scalar_select %p137, %s138, %s139
      %p143 = pneg %p137
      %p144 = scmp.eq.s32.totalorder %s10, 31
      %p145 = por %p143, %p144
      %p146 = scmp.ne.s32.totalorder %s138, %s141
      %p147 = scmp.eq.s32.totalorder %s10, 0
      %p148 = por %p146, %p147
      %p149 = scmp.ne.s32.totalorder %s138, %s141
      %p150 = scmp.eq.s32.totalorder %s15, 31
      %p151 = por %p149, %p150
      %p152 = scmp.ne.s32.totalorder %s141, %s142
      %p153 = scmp.eq.s32.totalorder %s15, 0
      %p154 = por %p152, %p153
      %p155 = scmp.ne.s32.totalorder %s141, %s142
      %p156 = scmp.eq.s32.totalorder %s16, 31
      %p157 = por %p155, %p156
      %p159 = scmp.ne.s32.totalorder %s142, %s158
      %p160 = scmp.eq.s32.totalorder %s16, 0
      %p161 = por %p159, %p160
      %p162 = scmp.le.s32.totalorder 1, %s10
      %p163 = scmp.lt.s32.totalorder %s10, 33
      %p164 = pnand %p162, %p163
      %p165 = pneg %p164
      // Predicated region
      $region9: #{discriminator_forward.8} parent=5 // pred_check
        _
      $region10: #{discriminator_forward.8} parent=5 // pred_check_branch
        %167 = sbr.rel (%p164) target = $region12
      $region11: #{discriminator_forward.8} parent=5 // pred_region
        %s168 = ssub.s32 %s10, 1
      $region12: #{discriminator_forward.8} parent=5 // pred_fallthru
        _
      %p169 = scmp.lt.s32.totalorder %s10, 32
      // Predicated region
      $region13: #{discriminator_forward.8} parent=5 // pred_check
        %p170 = pneg %p169
      $region14: #{discriminator_forward.8} parent=5 // pred_check_branch
        %172 = sbr.rel (%p170) target = $region16
      $region15: #{discriminator_forward.8} parent=5 // pred_region
        // Predicated region
        $region17: #{discriminator_forward.8} parent=15 // pred_check
          %p173 = pneg %p42
        $region18: #{discriminator_forward.8} parent=15 // pred_check_branch
          %175 = sbr.rel (%p173) target = $region20
        $region19: #{discriminator_forward.8} parent=15 // pred_region
          %s176 = sand.u32 %s32, 1
          %s177 = sand.u32 %s32, 1
          %s178 = smul.addr %s177, 64
          %s179 = scalar_lea.vmem [#allocation3], %s178
          %s180 = smul.u32 4, %s18
          %s181 = smul.addr %s180, 4
          %s182 = scalar_lea.vmem %s0, %s181
          // Predicated region
          $region21: #{discriminator_forward.8} parent=19 // pred_check
            _
          $region22: #{discriminator_forward.8} parent=19 // pred_check_branch
            %184 = sbr.rel (0) target = $region24
          $region23: #{discriminator_forward.8} parent=19 // pred_region
            // Predicated region
            $region25: #{discriminator_forward.8} parent=23 // pred_check
              _
            $region26: #{discriminator_forward.8} parent=23 // pred_check_branch
              %186 = sbr.rel (0) target = $region28
            $region27: #{discriminator_forward.8} parent=23 // pred_region
              loop: start=0, step=1, limit=1
              $region29: #{discriminator_forward.8} parent=27 // loop_pre_header
                _
              $region30: #{discriminator_forward.8} parent=27 // loop_header
                %s188 = sphi 0, %s192
                %p189 = scmp.ge.s32.totalorder %s188, 1
                %s193 = sphi %s182, %s182
                %s194 = sphi %s179, %s179
              $region31: #{discriminator_forward.8} parent=27 // loop_header_branch
                %191 = sbr.rel (%p189) target = $region35
              $region32: #{discriminator_forward.8} parent=27 // loop_body
                %v195 = vld [vmem:[%s193] sm:$0xff]
                %196 = vst [vmem:[%s194] sm:$0xff] %v195
                %v197 = vld [vmem:[%s193 + $0x8] sm:$0xff]
                %198 = vst [vmem:[%s194 + $0x8] sm:$0xff] %v197
                %v199 = vld [vmem:[%s193 + $0x80] sm:$0xff]
                %200 = vst [vmem:[%s194 + $0x10] sm:$0xff] %v199
                %v201 = vld [vmem:[%s193 + $0x88] sm:$0xff]
                %202 = vst [vmem:[%s194 + $0x18] sm:$0xff] %v201
                %v203 = vld [vmem:[%s193 + $0x100] sm:$0xff]
                %204 = vst [vmem:[%s194 + $0x20] sm:$0xff] %v203
                %v205 = vld [vmem:[%s193 + $0x108] sm:$0xff]
                %206 = vst [vmem:[%s194 + $0x28] sm:$0xff] %v205
                %v207 = vld [vmem:[%s193 + $0x180] sm:$0xff]
                %208 = vst [vmem:[%s194 + $0x30] sm:$0xff] %v207
                %v209 = vld [vmem:[%s193 + $0x188] sm:$0xff]
                %210 = vst [vmem:[%s194 + $0x38] sm:$0xff] %v209
              $region33: #{discriminator_forward.8} parent=27 // loop_footer
                %s192 = sadd.s32 1, %s188
              $region34: #{discriminator_forward.8} parent=27 // loop_footer_branch
                %187 = sbr.rel target = $region30
              $region35: #{discriminator_forward.8} parent=27 // loop_exit
                _
            $region28: #{discriminator_forward.8} parent=23 // pred_fallthru
              _
            // Predicated region
            $region36: #{discriminator_forward.8} parent=23 // pred_check
              _
            $region37: #{discriminator_forward.8} parent=23 // pred_check_branch
              %212 = sbr.rel target = $region39
            $region38: #{discriminator_forward.8} parent=23 // pred_region
              _
            $region39: #{discriminator_forward.8} parent=23 // pred_fallthru
              _
          $region24: #{discriminator_forward.8} parent=19 // pred_fallthru
            _
          %213 = vnop
        $region20: #{discriminator_forward.8} parent=15 // pred_fallthru
          _
        // Predicated region
        $region40: #{discriminator_forward.8} parent=15 // pred_check
          %p214 = pneg %p70
        $region41: #{discriminator_forward.8} parent=15 // pred_check_branch
          %216 = sbr.rel (%p214) target = $region43
        $region42: #{discriminator_forward.8} parent=15 // pred_region
          %s217 = sand.u32 %s60, 1
          %s218 = sand.u32 %s60, 1
          %s219 = smul.addr %s218, 256
          %s220 = scalar_lea.vmem [#allocation4], %s219
          %s221 = smul.u32 64, %s18
          %s222 = smul.addr %s221, 4
          %s223 = sadd.s32 %s17, %s222
          %s224 = smul.addr %s223, 4
          %s225 = scalar_lea.vmem %s1, %s224
          // Predicated region
          $region44: #{discriminator_forward.8} parent=42 // pred_check
            _
          $region45: #{discriminator_forward.8} parent=42 // pred_check_branch
            %227 = sbr.rel (0) target = $region47
          $region46: #{discriminator_forward.8} parent=42 // pred_region
            // Predicated region
            $region48: #{discriminator_forward.8} parent=46 // pred_check
              _
            $region49: #{discriminator_forward.8} parent=46 // pred_check_branch
              %229 = sbr.rel target = $region51
            $region50: #{discriminator_forward.8} parent=46 // pred_region
              // Predicated region
              $region63: #{discriminator_forward.8} parent=50 // pred_check
                _
              $region64: #{discriminator_forward.8} parent=50 // pred_check_branch
                %371 = sbr.rel (0) target = $region66
              $region65: #{discriminator_forward.8} parent=50 // pred_region
                loop: start=0, step=1, limit=1
                $region67: #{discriminator_forward.8} parent=65 // loop_pre_header
                  _
                $region68: #{discriminator_forward.8} parent=65 // loop_header
                  %s373 = sphi 0, %s377
                  %p374 = scmp.ge.s32.totalorder %s373, 1
                  %s378 = sphi %s225, %s225
                  %s379 = sphi %s220, %s220
                $region69: #{discriminator_forward.8} parent=65 // loop_header_branch
                  %376 = sbr.rel (%p374) target = $region73
                $region70: #{discriminator_forward.8} parent=65 // loop_body
                  _
                $region71: #{discriminator_forward.8} parent=65 // loop_footer
                  %s377 = sadd.s32 1, %s373
                $region72: #{discriminator_forward.8} parent=65 // loop_footer_branch
                  %372 = sbr.rel target = $region68
                $region73: #{discriminator_forward.8} parent=65 // loop_exit
                  _
                %s381 = ssub.s32 16, 1
                loop: start=0, step=1, limit=1
                $region74: #{discriminator_forward.8} parent=65 // loop_pre_header
                  _
                $region75: #{discriminator_forward.8} parent=65 // loop_header
                  %s383 = sphi 0, %s387
                  %p384 = scmp.ge.s32.totalorder %s383, 1
                  %s388 = sphi %s225, %s225
                  %s389 = sphi %s220, %s220
                $region76: #{discriminator_forward.8} parent=65 // loop_header_branch
                  %386 = sbr.rel (%p384) target = $region80
                $region77: #{discriminator_forward.8} parent=65 // loop_body
                  %v390 = vld [vmem:[%s388] sm:%s381]
                  %391 = vst [vmem:[%s389] sm:%s381] %v390
                  %v392 = vld [vmem:[%s388 + $0x10] sm:%s381]
                  %393 = vst [vmem:[%s389 + $0x4] sm:%s381] %v392
                  %v394 = vld [vmem:[%s388 + $0x20] sm:%s381]
                  %395 = vst [vmem:[%s389 + $0x8] sm:%s381] %v394
                  %v396 = vld [vmem:[%s388 + $0x30] sm:%s381]
                  %397 = vst [vmem:[%s389 + $0xc] sm:%s381] %v396
                  %v398 = vld [vmem:[%s388 + $0x40] sm:%s381]
                  %399 = vst [vmem:[%s389 + $0x10] sm:%s381] %v398
                  %v400 = vld [vmem:[%s388 + $0x50] sm:%s381]
                  %401 = vst [vmem:[%s389 + $0x14] sm:%s381] %v400
                  %v402 = vld [vmem:[%s388 + $0x60] sm:%s381]
                  %403 = vst [vmem:[%s389 + $0x18] sm:%s381] %v402
                  %v404 = vld [vmem:[%s388 + $0x70] sm:%s381]
                  %405 = vst [vmem:[%s389 + $0x1c] sm:%s381] %v404
                  %v406 = vld [vmem:[%s388 + $0x80] sm:%s381]
                  %407 = vst [vmem:[%s389 + $0x20] sm:%s381] %v406
                  %v408 = vld [vmem:[%s388 + $0x90] sm:%s381]
                  %409 = vst [vmem:[%s389 + $0x24] sm:%s381] %v408
                  %v410 = vld [vmem:[%s388 + $0xa0] sm:%s381]
                  %411 = vst [vmem:[%s389 + $0x28] sm:%s381] %v410
                  %v412 = vld [vmem:[%s388 + $0xb0] sm:%s381]
                  %413 = vst [vmem:[%s389 + $0x2c] sm:%s381] %v412
                  %v414 = vld [vmem:[%s388 + $0xc0] sm:%s381]
                  %415 = vst [vmem:[%s389 + $0x30] sm:%s381] %v414
                  %v416 = vld [vmem:[%s388 + $0xd0] sm:%s381]
                  %417 = vst [vmem:[%s389 + $0x34] sm:%s381] %v416
                  %v418 = vld [vmem:[%s388 + $0xe0] sm:%s381]
                  %419 = vst [vmem:[%s389 + $0x38] sm:%s381] %v418
                  %v420 = vld [vmem:[%s388 + $0xf0] sm:%s381]
                  %421 = vst [vmem:[%s389 + $0x3c] sm:%s381] %v420
                  %v422 = vld [vmem:[%s388 + $0x100] sm:%s381]
                  %423 = vst [vmem:[%s389 + $0x40] sm:%s381] %v422
                  %v424 = vld [vmem:[%s388 + $0x110] sm:%s381]
                  %425 = vst [vmem:[%s389 + $0x44] sm:%s381] %v424
                  %v426 = vld [vmem:[%s388 + $0x120] sm:%s381]
                  %427 = vst [vmem:[%s389 + $0x48] sm:%s381] %v426
                  %v428 = vld [vmem:[%s388 + $0x130] sm:%s381]
                  %429 = vst [vmem:[%s389 + $0x4c] sm:%s381] %v428
                  %v430 = vld [vmem:[%s388 + $0x140] sm:%s381]
                  %431 = vst [vmem:[%s389 + $0x50] sm:%s381] %v430
                  %v432 = vld [vmem:[%s388 + $0x150] sm:%s381]
                  %433 = vst [vmem:[%s389 + $0x54] sm:%s381] %v432
                  %v434 = vld [vmem:[%s388 + $0x160] sm:%s381]
                  %435 = vst [vmem:[%s389 + $0x58] sm:%s381] %v434
                  %v436 = vld [vmem:[%s388 + $0x170] sm:%s381]
                  %437 = vst [vmem:[%s389 + $0x5c] sm:%s381] %v436
                  %v438 = vld [vmem:[%s388 + $0x180] sm:%s381]
                  %439 = vst [vmem:[%s389 + $0x60] sm:%s381] %v438
                  %v440 = vld [vmem:[%s388 + $0x190] sm:%s381]
                  %441 = vst [vmem:[%s389 + $0x64] sm:%s381] %v440
                  %v442 = vld [vmem:[%s388 + $0x1a0] sm:%s381]
                  %443 = vst [vmem:[%s389 + $0x68] sm:%s381] %v442
                  %v444 = vld [vmem:[%s388 + $0x1b0] sm:%s381]
                  %445 = vst [vmem:[%s389 + $0x6c] sm:%s381] %v444
                  %v446 = vld [vmem:[%s388 + $0x1c0] sm:%s381]
                  %447 = vst [vmem:[%s389 + $0x70] sm:%s381] %v446
                  %v448 = vld [vmem:[%s388 + $0x1d0] sm:%s381]
                  %449 = vst [vmem:[%s389 + $0x74] sm:%s381] %v448
                  %v450 = vld [vmem:[%s388 + $0x1e0] sm:%s381]
                  %451 = vst [vmem:[%s389 + $0x78] sm:%s381] %v450
                  %v452 = vld [vmem:[%s388 + $0x1f0] sm:%s381]
                  %453 = vst [vmem:[%s389 + $0x7c] sm:%s381] %v452
                  %v454 = vld [vmem:[%s388 + $0x200] sm:%s381]
                  %455 = vst [vmem:[%s389 + $0x80] sm:%s381] %v454
                  %v456 = vld [vmem:[%s388 + $0x210] sm:%s381]
                  %457 = vst [vmem:[%s389 + $0x84] sm:%s381] %v456
                  %v458 = vld [vmem:[%s388 + $0x220] sm:%s381]
                  %459 = vst [vmem:[%s389 + $0x88] sm:%s381] %v458
                  %v460 = vld [vmem:[%s388 + $0x230] sm:%s381]
                  %461 = vst [vmem:[%s389 + $0x8c] sm:%s381] %v460
                  %v462 = vld [vmem:[%s388 + $0x240] sm:%s381]
                  %463 = vst [vmem:[%s389 + $0x90] sm:%s381] %v462
                  %v464 = vld [vmem:[%s388 + $0x250] sm:%s381]
                  %465 = vst [vmem:[%s389 + $0x94] sm:%s381] %v464
                  %v466 = vld [vmem:[%s388 + $0x260] sm:%s381]
                  %467 = vst [vmem:[%s389 + $0x98] sm:%s381] %v466
                  %v468 = vld [vmem:[%s388 + $0x270] sm:%s381]
                  %469 = vst [vmem:[%s389 + $0x9c] sm:%s381] %v468
                  %v470 = vld [vmem:[%s388 + $0x280] sm:%s381]
                  %471 = vst [vmem:[%s389 + $0xa0] sm:%s381] %v470
                  %v472 = vld [vmem:[%s388 + $0x290] sm:%s381]
                  %473 = vst [vmem:[%s389 + $0xa4] sm:%s381] %v472
                  %v474 = vld [vmem:[%s388 + $0x2a0] sm:%s381]
                  %475 = vst [vmem:[%s389 + $0xa8] sm:%s381] %v474
                  %v476 = vld [vmem:[%s388 + $0x2b0] sm:%s381]
                  %477 = vst [vmem:[%s389 + $0xac] sm:%s381] %v476
                  %v478 = vld [vmem:[%s388 + $0x2c0] sm:%s381]
                  %479 = vst [vmem:[%s389 + $0xb0] sm:%s381] %v478
                  %v480 = vld [vmem:[%s388 + $0x2d0] sm:%s381]
                  %481 = vst [vmem:[%s389 + $0xb4] sm:%s381] %v480
                  %v482 = vld [vmem:[%s388 + $0x2e0] sm:%s381]
                  %483 = vst [vmem:[%s389 + $0xb8] sm:%s381] %v482
                  %v484 = vld [vmem:[%s388 + $0x2f0] sm:%s381]
                  %485 = vst [vmem:[%s389 + $0xbc] sm:%s381] %v484
                  %v486 = vld [vmem:[%s388 + $0x300] sm:%s381]
                  %487 = vst [vmem:[%s389 + $0xc0] sm:%s381] %v486
                  %v488 = vld [vmem:[%s388 + $0x310] sm:%s381]
                  %489 = vst [vmem:[%s389 + $0xc4] sm:%s381] %v488
                  %v490 = vld [vmem:[%s388 + $0x320] sm:%s381]
                  %491 = vst [vmem:[%s389 + $0xc8] sm:%s381] %v490
                  %v492 = vld [vmem:[%s388 + $0x330] sm:%s381]
                  %493 = vst [vmem:[%s389 + $0xcc] sm:%s381] %v492
                  %v494 = vld [vmem:[%s388 + $0x340] sm:%s381]
                  %495 = vst [vmem:[%s389 + $0xd0] sm:%s381] %v494
                  %v496 = vld [vmem:[%s388 + $0x350] sm:%s381]
                  %497 = vst [vmem:[%s389 + $0xd4] sm:%s381] %v496
                  %v498 = vld [vmem:[%s388 + $0x360] sm:%s381]
                  %499 = vst [vmem:[%s389 + $0xd8] sm:%s381] %v498
                  %v500 = vld [vmem:[%s388 + $0x370] sm:%s381]
                  %501 = vst [vmem:[%s389 + $0xdc] sm:%s381] %v500
                  %v502 = vld [vmem:[%s388 + $0x380] sm:%s381]
                  %503 = vst [vmem:[%s389 + $0xe0] sm:%s381] %v502
                  %v504 = vld [vmem:[%s388 + $0x390] sm:%s381]
                  %505 = vst [vmem:[%s389 + $0xe4] sm:%s381] %v504
                  %v506 = vld [vmem:[%s388 + $0x3a0] sm:%s381]
                  %507 = vst [vmem:[%s389 + $0xe8] sm:%s381] %v506
                  %v508 = vld [vmem:[%s388 + $0x3b0] sm:%s381]
                  %509 = vst [vmem:[%s389 + $0xec] sm:%s381] %v508
                  %v510 = vld [vmem:[%s388 + $0x3c0] sm:%s381]
                  %511 = vst [vmem:[%s389 + $0xf0] sm:%s381] %v510
                  %v512 = vld [vmem:[%s388 + $0x3d0] sm:%s381]
                  %513 = vst [vmem:[%s389 + $0xf4] sm:%s381] %v512
                  %v514 = vld [vmem:[%s388 + $0x3e0] sm:%s381]
                  %515 = vst [vmem:[%s389 + $0xf8] sm:%s381] %v514
                  %v516 = vld [vmem:[%s388 + $0x3f0] sm:%s381]
                  %517 = vst [vmem:[%s389 + $0xfc] sm:%s381] %v516
                $region78: #{discriminator_forward.8} parent=65 // loop_footer
                  %s387 = sadd.s32 1, %s383
                $region79: #{discriminator_forward.8} parent=65 // loop_footer_branch
                  %382 = sbr.rel target = $region75
                $region80: #{discriminator_forward.8} parent=65 // loop_exit
                  _
              $region66: #{discriminator_forward.8} parent=50 // pred_fallthru
                _
            $region51: #{discriminator_forward.8} parent=46 // pred_fallthru
              _
            // Predicated region
            $region52: #{discriminator_forward.8} parent=46 // pred_check
              _
            $region53: #{discriminator_forward.8} parent=46 // pred_check_branch
              %231 = sbr.rel (0) target = $region55
            $region54: #{discriminator_forward.8} parent=46 // pred_region
              %s233 = ssub.s32 16, 1
              loop: start=0, step=1, limit=1
              $region56: #{discriminator_forward.8} parent=54 // loop_pre_header
                _
              $region57: #{discriminator_forward.8} parent=54 // loop_header
                %s235 = sphi 0, %s239
                %p236 = scmp.ge.s32.totalorder %s235, 1
                %s240 = sphi %s225, %s225
                %s241 = sphi %s220, %s220
              $region58: #{discriminator_forward.8} parent=54 // loop_header_branch
                %238 = sbr.rel (%p236) target = $region62
              $region59: #{discriminator_forward.8} parent=54 // loop_body
                %v242 = vld [vmem:[%s240] sm:%s233]
                %243 = vst [vmem:[%s241] sm:%s233] %v242
                %v244 = vld [vmem:[%s240 + $0x10] sm:%s233]
                %245 = vst [vmem:[%s241 + $0x4] sm:%s233] %v244
                %v246 = vld [vmem:[%s240 + $0x20] sm:%s233]
                %247 = vst [vmem:[%s241 + $0x8] sm:%s233] %v246
                %v248 = vld [vmem:[%s240 + $0x30] sm:%s233]
                %249 = vst [vmem:[%s241 + $0xc] sm:%s233] %v248
                %v250 = vld [vmem:[%s240 + $0x40] sm:%s233]
                %251 = vst [vmem:[%s241 + $0x10] sm:%s233] %v250
                %v252 = vld [vmem:[%s240 + $0x50] sm:%s233]
                %253 = vst [vmem:[%s241 + $0x14] sm:%s233] %v252
                %v254 = vld [vmem:[%s240 + $0x60] sm:%s233]
                %255 = vst [vmem:[%s241 + $0x18] sm:%s233] %v254
                %v256 = vld [vmem:[%s240 + $0x70] sm:%s233]
                %257 = vst [vmem:[%s241 + $0x1c] sm:%s233] %v256
                %v258 = vld [vmem:[%s240 + $0x80] sm:%s233]
                %259 = vst [vmem:[%s241 + $0x20] sm:%s233] %v258
                %v260 = vld [vmem:[%s240 + $0x90] sm:%s233]
                %261 = vst [vmem:[%s241 + $0x24] sm:%s233] %v260
                %v262 = vld [vmem:[%s240 + $0xa0] sm:%s233]
                %263 = vst [vmem:[%s241 + $0x28] sm:%s233] %v262
                %v264 = vld [vmem:[%s240 + $0xb0] sm:%s233]
                %265 = vst [vmem:[%s241 + $0x2c] sm:%s233] %v264
                %v266 = vld [vmem:[%s240 + $0xc0] sm:%s233]
                %267 = vst [vmem:[%s241 + $0x30] sm:%s233] %v266
                %v268 = vld [vmem:[%s240 + $0xd0] sm:%s233]
                %269 = vst [vmem:[%s241 + $0x34] sm:%s233] %v268
                %v270 = vld [vmem:[%s240 + $0xe0] sm:%s233]
                %271 = vst [vmem:[%s241 + $0x38] sm:%s233] %v270
                %v272 = vld [vmem:[%s240 + $0xf0] sm:%s233]
                %273 = vst [vmem:[%s241 + $0x3c] sm:%s233] %v272
                %v274 = vld [vmem:[%s240 + $0x100] sm:%s233]
                %275 = vst [vmem:[%s241 + $0x40] sm:%s233] %v274
                %v276 = vld [vmem:[%s240 + $0x110] sm:%s233]
                %277 = vst [vmem:[%s241 + $0x44] sm:%s233] %v276
                %v278 = vld [vmem:[%s240 + $0x120] sm:%s233]
                %279 = vst [vmem:[%s241 + $0x48] sm:%s233] %v278
                %v280 = vld [vmem:[%s240 + $0x130] sm:%s233]
                %281 = vst [vmem:[%s241 + $0x4c] sm:%s233] %v280
                %v282 = vld [vmem:[%s240 + $0x140] sm:%s233]
                %283 = vst [vmem:[%s241 + $0x50] sm:%s233] %v282
                %v284 = vld [vmem:[%s240 + $0x150] sm:%s233]
                %285 = vst [vmem:[%s241 + $0x54] sm:%s233] %v284
                %v286 = vld [vmem:[%s240 + $0x160] sm:%s233]
                %287 = vst [vmem:[%s241 + $0x58] sm:%s233] %v286
                %v288 = vld [vmem:[%s240 + $0x170] sm:%s233]
                %289 = vst [vmem:[%s241 + $0x5c] sm:%s233] %v288
                %v290 = vld [vmem:[%s240 + $0x180] sm:%s233]
                %291 = vst [vmem:[%s241 + $0x60] sm:%s233] %v290
                %v292 = vld [vmem:[%s240 + $0x190] sm:%s233]
                %293 = vst [vmem:[%s241 + $0x64] sm:%s233] %v292
                %v294 = vld [vmem:[%s240 + $0x1a0] sm:%s233]
                %295 = vst [vmem:[%s241 + $0x68] sm:%s233] %v294
                %v296 = vld [vmem:[%s240 + $0x1b0] sm:%s233]
                %297 = vst [vmem:[%s241 + $0x6c] sm:%s233] %v296
                %v298 = vld [vmem:[%s240 + $0x1c0] sm:%s233]
                %299 = vst [vmem:[%s241 + $0x70] sm:%s233] %v298
                %v300 = vld [vmem:[%s240 + $0x1d0] sm:%s233]
                %301 = vst [vmem:[%s241 + $0x74] sm:%s233] %v300
                %v302 = vld [vmem:[%s240 + $0x1e0] sm:%s233]
                %303 = vst [vmem:[%s241 + $0x78] sm:%s233] %v302
                %v304 = vld [vmem:[%s240 + $0x1f0] sm:%s233]
                %305 = vst [vmem:[%s241 + $0x7c] sm:%s233] %v304
                %v306 = vld [vmem:[%s240 + $0x200] sm:%s233]
                %307 = vst [vmem:[%s241 + $0x80] sm:%s233] %v306
                %v308 = vld [vmem:[%s240 + $0x210] sm:%s233]
                %309 = vst [vmem:[%s241 + $0x84] sm:%s233] %v308
                %v310 = vld [vmem:[%s240 + $0x220] sm:%s233]
                %311 = vst [vmem:[%s241 + $0x88] sm:%s233] %v310
                %v312 = vld [vmem:[%s240 + $0x230] sm:%s233]
                %313 = vst [vmem:[%s241 + $0x8c] sm:%s233] %v312
                %v314 = vld [vmem:[%s240 + $0x240] sm:%s233]
                %315 = vst [vmem:[%s241 + $0x90] sm:%s233] %v314
                %v316 = vld [vmem:[%s240 + $0x250] sm:%s233]
                %317 = vst [vmem:[%s241 + $0x94] sm:%s233] %v316
                %v318 = vld [vmem:[%s240 + $0x260] sm:%s233]
                %319 = vst [vmem:[%s241 + $0x98] sm:%s233] %v318
                %v320 = vld [vmem:[%s240 + $0x270] sm:%s233]
                %321 = vst [vmem:[%s241 + $0x9c] sm:%s233] %v320
                %v322 = vld [vmem:[%s240 + $0x280] sm:%s233]
                %323 = vst [vmem:[%s241 + $0xa0] sm:%s233] %v322
                %v324 = vld [vmem:[%s240 + $0x290] sm:%s233]
                %325 = vst [vmem:[%s241 + $0xa4] sm:%s233] %v324
                %v326 = vld [vmem:[%s240 + $0x2a0] sm:%s233]
                %327 = vst [vmem:[%s241 + $0xa8] sm:%s233] %v326
                %v328 = vld [vmem:[%s240 + $0x2b0] sm:%s233]
                %329 = vst [vmem:[%s241 + $0xac] sm:%s233] %v328
                %v330 = vld [vmem:[%s240 + $0x2c0] sm:%s233]
                %331 = vst [vmem:[%s241 + $0xb0] sm:%s233] %v330
                %v332 = vld [vmem:[%s240 + $0x2d0] sm:%s233]
                %333 = vst [vmem:[%s241 + $0xb4] sm:%s233] %v332
                %v334 = vld [vmem:[%s240 + $0x2e0] sm:%s233]
                %335 = vst [vmem:[%s241 + $0xb8] sm:%s233] %v334
                %v336 = vld [vmem:[%s240 + $0x2f0] sm:%s233]
                %337 = vst [vmem:[%s241 + $0xbc] sm:%s233] %v336
                %v338 = vld [vmem:[%s240 + $0x300] sm:%s233]
                %339 = vst [vmem:[%s241 + $0xc0] sm:%s233] %v338
                %v340 = vld [vmem:[%s240 + $0x310] sm:%s233]
                %341 = vst [vmem:[%s241 + $0xc4] sm:%s233] %v340
                %v342 = vld [vmem:[%s240 + $0x320] sm:%s233]
                %343 = vst [vmem:[%s241 + $0xc8] sm:%s233] %v342
                %v344 = vld [vmem:[%s240 + $0x330] sm:%s233]
                %345 = vst [vmem:[%s241 + $0xcc] sm:%s233] %v344
                %v346 = vld [vmem:[%s240 + $0x340] sm:%s233]
                %347 = vst [vmem:[%s241 + $0xd0] sm:%s233] %v346
                %v348 = vld [vmem:[%s240 + $0x350] sm:%s233]
                %349 = vst [vmem:[%s241 + $0xd4] sm:%s233] %v348
                %v350 = vld [vmem:[%s240 + $0x360] sm:%s233]
                %351 = vst [vmem:[%s241 + $0xd8] sm:%s233] %v350
                %v352 = vld [vmem:[%s240 + $0x370] sm:%s233]
                %353 = vst [vmem:[%s241 + $0xdc] sm:%s233] %v352
                %v354 = vld [vmem:[%s240 + $0x380] sm:%s233]
                %355 = vst [vmem:[%s241 + $0xe0] sm:%s233] %v354
                %v356 = vld [vmem:[%s240 + $0x390] sm:%s233]
                %357 = vst [vmem:[%s241 + $0xe4] sm:%s233] %v356
                %v358 = vld [vmem:[%s240 + $0x3a0] sm:%s233]
                %359 = vst [vmem:[%s241 + $0xe8] sm:%s233] %v358
                %v360 = vld [vmem:[%s240 + $0x3b0] sm:%s233]
                %361 = vst [vmem:[%s241 + $0xec] sm:%s233] %v360
                %v362 = vld [vmem:[%s240 + $0x3c0] sm:%s233]
                %363 = vst [vmem:[%s241 + $0xf0] sm:%s233] %v362
                %v364 = vld [vmem:[%s240 + $0x3d0] sm:%s233]
                %365 = vst [vmem:[%s241 + $0xf4] sm:%s233] %v364
                %v366 = vld [vmem:[%s240 + $0x3e0] sm:%s233]
                %367 = vst [vmem:[%s241 + $0xf8] sm:%s233] %v366
                %v368 = vld [vmem:[%s240 + $0x3f0] sm:%s233]
                %369 = vst [vmem:[%s241 + $0xfc] sm:%s233] %v368
              $region60: #{discriminator_forward.8} parent=54 // loop_footer
                %s239 = sadd.s32 1, %s235
              $region61: #{discriminator_forward.8} parent=54 // loop_footer_branch
                %234 = sbr.rel target = $region57
              $region62: #{discriminator_forward.8} parent=54 // loop_exit
                _
            $region55: #{discriminator_forward.8} parent=46 // pred_fallthru
              _
          $region47: #{discriminator_forward.8} parent=42 // pred_fallthru
            _
          %518 = vnop
        $region43: #{discriminator_forward.8} parent=15 // pred_fallthru
          _
        // Predicated region
        $region81: #{discriminator_forward.8} parent=15 // pred_check
          %p519 = pneg %p96
        $region82: #{discriminator_forward.8} parent=15 // pred_check_branch
          %521 = sbr.rel (%p519) target = $region84
        $region83: #{discriminator_forward.8} parent=15 // pred_region
          %p522 = scmp.lt.s32.totalorder %s17, 3
          %s523 = scalar_select %p522, %s17, 3
          %s524 = scalar_lea.vmem %s2, %s523
        $region84: #{discriminator_forward.8} parent=15 // pred_fallthru
          _
        // Predicated region
        $region85: #{discriminator_forward.8} parent=15 // pred_check
          %p525 = pneg %p122
        $region86: #{discriminator_forward.8} parent=15 // pred_check_branch
          %527 = sbr.rel (%p525) target = $region88
        $region87: #{discriminator_forward.8} parent=15 // pred_region
          %p528 = scmp.lt.s32.totalorder %s17, 3
          %s529 = scalar_select %p528, %s17, 3
          %s530 = scalar_lea.vmem %s3, %s529
        $region88: #{discriminator_forward.8} parent=15 // pred_fallthru
          _
      $region16: #{discriminator_forward.8} parent=5 // pred_fallthru
        _
      %p531 = scmp.le.s32.totalorder 1, %s10
      %p532 = scmp.lt.s32.totalorder %s10, 33
      %p533 = pnand %p531, %p532
      %p534 = pneg %p533
      // Predicated region
      $region89: #{discriminator_forward.8} parent=5 // pred_check
        _
      $region90: #{discriminator_forward.8} parent=5 // pred_check_branch
        %536 = sbr.rel (%p533) target = $region92
      $region91: #{discriminator_forward.8} parent=5 // pred_region
        %s537 = ssub.s32 %s10, 1
        %s538 = sand.u32 %s35, 1
        %s539 = sand.u32 %s35, 1
        %s540 = smul.addr %s539, 64
        %s541 = scalar_lea.vmem [#allocation3], %s540
        // Predicated region
        $region93: #{discriminator_forward.8} parent=91 // pred_check
          %p542 = pneg %p48
        $region94: #{discriminator_forward.8} parent=91 // pred_check_branch
          %544 = sbr.rel (%p542) target = $region96
        $region95: #{discriminator_forward.8} parent=91 // pred_region
          _
        $region96: #{discriminator_forward.8} parent=91 // pred_fallthru
          _
        %s545 = sand.u32 %s63, 1
        %s546 = sand.u32 %s63, 1
        %s547 = smul.addr %s546, 256
        %s548 = scalar_lea.vmem [#allocation4], %s547
        // Predicated region
        $region97: #{discriminator_forward.8} parent=91 // pred_check
          %p549 = pneg %p76
        $region98: #{discriminator_forward.8} parent=91 // pred_check_branch
          %551 = sbr.rel (%p549) target = $region100
        $region99: #{discriminator_forward.8} parent=91 // pred_region
          _
        $region100: #{discriminator_forward.8} parent=91 // pred_fallthru
          _
        %s552 = sand.u32 %s35, 1
        %s553 = sand.u32 %s35, 1
        %s554 = smul.addr %s553, 64
        %s555 = scalar_lea.vmem [#allocation3], %s554
        %p556 = pneg %p48
        %p557 = pneg %p45
        %s558 = sand.u32 %s63, 1
        %s559 = sand.u32 %s63, 1
        %s560 = smul.addr %s559, 256
        %s561 = scalar_lea.vmem [#allocation4], %s560
        %p562 = pneg %p76
        %p563 = pneg %p73
        %p564 = scmp.lt.s32.totalorder %s19, 3
        %s565 = scalar_select %p564, %s19, 3
        %s566 = scalar_lea.vmem %s2, %s565
        %p567 = pneg %p102
        %p568 = pneg %p99
        %p569 = scmp.lt.s32.totalorder %s19, 3
        %s570 = scalar_select %p569, %s19, 3
        %s571 = scalar_lea.vmem %s3, %s570
        %p572 = pneg %p128
        %p573 = pneg %p125
        %p574 = pneg %p154
        %p575 = pneg %p151
        %s576 = sand.u32 %s141, 1
        %s577 = sand.u32 %s141, 1
        %s578 = smul.addr %s577, 16
        %s579 = scalar_lea.vmem [#allocation5], %s578
        %s580 = smul.u32 4, %s20
        %s581 = smul.u32 64, %s20
        %p582 = scmp.lt.s32.totalorder %s19, 3
        %s583 = scalar_select %p582, %s19, 3
        %s584 = scalar_lea.vmem %s2, %s583
        %p585 = scmp.lt.s32.totalorder %s19, 3
        %s586 = scalar_select %p585, %s19, 3
        %s587 = scalar_lea.vmem %s3, %s586
        %p588 = scmp.eq.s32.totalorder %s20, 0
        // Predicated region
        $region101: #{discriminator_forward.8} parent=91 // pred_check
          %p589 = pneg %p588
        $region102: #{discriminator_forward.8} parent=91 // pred_check_branch
          %591 = sbr.rel (%p589) target = $region104
        $region103: #{discriminator_forward.8} parent=91 // pred_region
          %592 = vst [vmem:[#allocation2] sm:$0xff] 0.0
          %593 = vst [vmem:[#allocation2 + $0x8] sm:$0xff] 0.0
          %594 = vst [vmem:[#allocation2 + $0x10] sm:$0xff] 0.0
          %595 = vst [vmem:[#allocation2 + $0x18] sm:$0xff] 0.0
        $region104: #{discriminator_forward.8} parent=91 // pred_fallthru
          _
        %v596 = vld [vmem:[#allocation2] sm:$0xff]
        %v597 = vld [vmem:[#allocation2 + $0x8] sm:$0xff]
        %v598 = vld [vmem:[#allocation2 + $0x10] sm:$0xff]
        %v599 = vld [vmem:[#allocation2 + $0x18] sm:$0xff]
        %v600 = vld [vmem:[%s541] sm:$0xff]
        %v601 = vld [vmem:[%s541 + $0x8] sm:$0xff]
        %v602 = vld [vmem:[%s541 + $0x10] sm:$0xff]
        %v603 = vld [vmem:[%s541 + $0x18] sm:$0xff]
        %v604 = vld [vmem:[%s541 + $0x20] sm:$0xff]
        %v605 = vld [vmem:[%s541 + $0x28] sm:$0xff]
        %v606 = vld [vmem:[%s541 + $0x30] sm:$0xff]
        %v607 = vld [vmem:[%s541 + $0x38] sm:$0xff]
        %v608 = vld [vmem:[%s548] sm:$0xf]
        %v609 = vld [vmem:[%s548 + $0x4] sm:$0xf]
        %v610 = vld [vmem:[%s548 + $0x8] sm:$0xf]
        %v611 = vld [vmem:[%s548 + $0xc] sm:$0xf]
        %v612 = vld [vmem:[%s548 + $0x10] sm:$0xf]
        %v613 = vld [vmem:[%s548 + $0x14] sm:$0xf]
        %v614 = vld [vmem:[%s548 + $0x18] sm:$0xf]
        %v615 = vld [vmem:[%s548 + $0x1c] sm:$0xf]
        %v616 = vld [vmem:[%s548 + $0x20] sm:$0xf]
        %v617 = vld [vmem:[%s548 + $0x24] sm:$0xf]
        %v618 = vld [vmem:[%s548 + $0x28] sm:$0xf]
        %v619 = vld [vmem:[%s548 + $0x2c] sm:$0xf]
        %v620 = vld [vmem:[%s548 + $0x30] sm:$0xf]
        %v621 = vld [vmem:[%s548 + $0x34] sm:$0xf]
        %v622 = vld [vmem:[%s548 + $0x38] sm:$0xf]
        %v623 = vld [vmem:[%s548 + $0x3c] sm:$0xf]
        %v624 = vld [vmem:[%s548 + $0x40] sm:$0xf]
        %v625 = vld [vmem:[%s548 + $0x44] sm:$0xf]
        %v626 = vld [vmem:[%s548 + $0x48] sm:$0xf]
        %v627 = vld [vmem:[%s548 + $0x4c] sm:$0xf]
        %v628 = vld [vmem:[%s548 + $0x50] sm:$0xf]
        %v629 = vld [vmem:[%s548 + $0x54] sm:$0xf]
        %v630 = vld [vmem:[%s548 + $0x58] sm:$0xf]
        %v631 = vld [vmem:[%s548 + $0x5c] sm:$0xf]
        %v632 = vld [vmem:[%s548 + $0x60] sm:$0xf]
        %v633 = vld [vmem:[%s548 + $0x64] sm:$0xf]
        %v634 = vld [vmem:[%s548 + $0x68] sm:$0xf]
        %v635 = vld [vmem:[%s548 + $0x6c] sm:$0xf]
        %v636 = vld [vmem:[%s548 + $0x70] sm:$0xf]
        %v637 = vld [vmem:[%s548 + $0x74] sm:$0xf]
        %v638 = vld [vmem:[%s548 + $0x78] sm:$0xf]
        %v639 = vld [vmem:[%s548 + $0x7c] sm:$0xf]
        %v640 = vld [vmem:[%s548 + $0x80] sm:$0xf]
        %v641 = vld [vmem:[%s548 + $0x84] sm:$0xf]
        %v642 = vld [vmem:[%s548 + $0x88] sm:$0xf]
        %v643 = vld [vmem:[%s548 + $0x8c] sm:$0xf]
        %v644 = vld [vmem:[%s548 + $0x90] sm:$0xf]
        %v645 = vld [vmem:[%s548 + $0x94] sm:$0xf]
        %v646 = vld [vmem:[%s548 + $0x98] sm:$0xf]
        %v647 = vld [vmem:[%s548 + $0x9c] sm:$0xf]
        %v648 = vld [vmem:[%s548 + $0xa0] sm:$0xf]
        %v649 = vld [vmem:[%s548 + $0xa4] sm:$0xf]
        %v650 = vld [vmem:[%s548 + $0xa8] sm:$0xf]
        %v651 = vld [vmem:[%s548 + $0xac] sm:$0xf]
        %v652 = vld [vmem:[%s548 + $0xb0] sm:$0xf]
        %v653 = vld [vmem:[%s548 + $0xb4] sm:$0xf]
        %v654 = vld [vmem:[%s548 + $0xb8] sm:$0xf]
        %v655 = vld [vmem:[%s548 + $0xbc] sm:$0xf]
        %v656 = vld [vmem:[%s548 + $0xc0] sm:$0xf]
        %v657 = vld [vmem:[%s548 + $0xc4] sm:$0xf]
        %v658 = vld [vmem:[%s548 + $0xc8] sm:$0xf]
        %v659 = vld [vmem:[%s548 + $0xcc] sm:$0xf]
        %v660 = vld [vmem:[%s548 + $0xd0] sm:$0xf]
        %v661 = vld [vmem:[%s548 + $0xd4] sm:$0xf]
        %v662 = vld [vmem:[%s548 + $0xd8] sm:$0xf]
        %v663 = vld [vmem:[%s548 + $0xdc] sm:$0xf]
        %v664 = vld [vmem:[%s548 + $0xe0] sm:$0xf]
        %v665 = vld [vmem:[%s548 + $0xe4] sm:$0xf]
        %v666 = vld [vmem:[%s548 + $0xe8] sm:$0xf]
        %v667 = vld [vmem:[%s548 + $0xec] sm:$0xf]
        %v668 = vld [vmem:[%s548 + $0xf0] sm:$0xf]
        %v669 = vld [vmem:[%s548 + $0xf4] sm:$0xf]
        %v670 = vld [vmem:[%s548 + $0xf8] sm:$0xf]
        %v671 = vld [vmem:[%s548 + $0xfc] sm:$0xf]
        %v680 = vunpack.c.l.b16 %v600
        %v681 = vunpack.c.h.b16 %v600
        %v682 = vunpack.c.l.b16 %v601
        %v683 = vunpack.c.h.b16 %v601
        %v684 = vunpack.c.l.b16 %v602
        %v685 = vunpack.c.h.b16 %v602
        %v686 = vunpack.c.l.b16 %v603
        %v687 = vunpack.c.h.b16 %v603
        %v688 = vunpack.c.l.b16 %v604
        %v689 = vunpack.c.h.b16 %v604
        %v690 = vunpack.c.l.b16 %v605
        %v691 = vunpack.c.h.b16 %v605
        %v692 = vunpack.c.l.b16 %v606
        %v693 = vunpack.c.h.b16 %v606
        %v694 = vunpack.c.l.b16 %v607
        %v695 = vunpack.c.h.b16 %v607
        %v696 = vpack.c.b16 %v684, %v680
        %v697 = vpack.c.b16 %v685, %v681
        %v698 = vpack.c.b16 %v686, %v682
        %v699 = vpack.c.b16 %v687, %v683
        %v700 = vpack.c.b16 %v692, %v688
        %v701 = vpack.c.b16 %v693, %v689
        %v702 = vpack.c.b16 %v694, %v690
        %v703 = vpack.c.b16 %v695, %v691
        %v776 = vunpack.c.l.b16 %v608
        %v777 = vunpack.c.l.b16 %v609
        %v778 = vunpack.c.l.b16 %v610
        %v779 = vunpack.c.l.b16 %v611
        %v780 = vunpack.c.l.b16 %v612
        %v781 = vunpack.c.l.b16 %v613
        %v782 = vunpack.c.l.b16 %v614
        %v783 = vunpack.c.l.b16 %v615
        %v784 = vunpack.c.l.b16 %v616
        %v785 = vunpack.c.l.b16 %v617
        %v786 = vunpack.c.l.b16 %v618
        %v787 = vunpack.c.l.b16 %v619
        %v788 = vunpack.c.l.b16 %v620
        %v789 = vunpack.c.l.b16 %v621
        %v790 = vunpack.c.l.b16 %v622
        %v791 = vunpack.c.l.b16 %v623
        %v792 = vunpack.c.l.b16 %v624
        %v793 = vunpack.c.l.b16 %v625
        %v794 = vunpack.c.l.b16 %v626
        %v795 = vunpack.c.l.b16 %v627
        %v796 = vunpack.c.l.b16 %v628
        %v797 = vunpack.c.l.b16 %v629
        %v798 = vunpack.c.l.b16 %v630
        %v799 = vunpack.c.l.b16 %v631
        %v800 = vunpack.c.l.b16 %v632
        %v801 = vunpack.c.l.b16 %v633
        %v802 = vunpack.c.l.b16 %v634
        %v803 = vunpack.c.l.b16 %v635
        %v804 = vunpack.c.l.b16 %v636
        %v805 = vunpack.c.l.b16 %v637
        %v806 = vunpack.c.l.b16 %v638
        %v807 = vunpack.c.l.b16 %v639
        %v808 = vunpack.c.l.b16 %v640
        %v809 = vunpack.c.l.b16 %v641
        %v810 = vunpack.c.l.b16 %v642
        %v811 = vunpack.c.l.b16 %v643
        %v812 = vunpack.c.l.b16 %v644
        %v813 = vunpack.c.l.b16 %v645
        %v814 = vunpack.c.l.b16 %v646
        %v815 = vunpack.c.l.b16 %v647
        %v816 = vunpack.c.l.b16 %v648
        %v817 = vunpack.c.l.b16 %v649
        %v818 = vunpack.c.l.b16 %v650
        %v819 = vunpack.c.l.b16 %v651
        %v820 = vunpack.c.l.b16 %v652
        %v821 = vunpack.c.l.b16 %v653
        %v822 = vunpack.c.l.b16 %v654
        %v823 = vunpack.c.l.b16 %v655
        %v824 = vunpack.c.l.b16 %v656
        %v825 = vunpack.c.l.b16 %v657
        %v826 = vunpack.c.l.b16 %v658
        %v827 = vunpack.c.l.b16 %v659
        %v828 = vunpack.c.l.b16 %v660
        %v829 = vunpack.c.l.b16 %v661
        %v830 = vunpack.c.l.b16 %v662
        %v831 = vunpack.c.l.b16 %v663
        %v832 = vunpack.c.l.b16 %v664
        %v833 = vunpack.c.l.b16 %v665
        %v834 = vunpack.c.l.b16 %v666
        %v835 = vunpack.c.l.b16 %v667
        %v836 = vunpack.c.l.b16 %v668
        %v837 = vunpack.c.l.b16 %v669
        %v838 = vunpack.c.l.b16 %v670
        %v839 = vunpack.c.l.b16 %v671
        %v840 = vpack.c.b16 %v777, %v776
        %v841 = vpack.c.b16 %v779, %v778
        %v842 = vpack.c.b16 %v781, %v780
        %v843 = vpack.c.b16 %v783, %v782
        %v844 = vpack.c.b16 %v785, %v784
        %v845 = vpack.c.b16 %v787, %v786
        %v846 = vpack.c.b16 %v789, %v788
        %v847 = vpack.c.b16 %v791, %v790
        %v848 = vpack.c.b16 %v793, %v792
        %v849 = vpack.c.b16 %v795, %v794
        %v850 = vpack.c.b16 %v797, %v796
        %v851 = vpack.c.b16 %v799, %v798
        %v852 = vpack.c.b16 %v801, %v800
        %v853 = vpack.c.b16 %v803, %v802
        %v854 = vpack.c.b16 %v805, %v804
        %v855 = vpack.c.b16 %v807, %v806
        %v856 = vpack.c.b16 %v809, %v808
        %v857 = vpack.c.b16 %v811, %v810
        %v858 = vpack.c.b16 %v813, %v812
        %v859 = vpack.c.b16 %v815, %v814
        %v860 = vpack.c.b16 %v817, %v816
        %v861 = vpack.c.b16 %v819, %v818
        %v862 = vpack.c.b16 %v821, %v820
        %v863 = vpack.c.b16 %v823, %v822
        %v864 = vpack.c.b16 %v825, %v824
        %v865 = vpack.c.b16 %v827, %v826
        %v866 = vpack.c.b16 %v829, %v828
        %v867 = vpack.c.b16 %v831, %v830
        %v868 = vpack.c.b16 %v833, %v832
        %v869 = vpack.c.b16 %v835, %v834
        %v870 = vpack.c.b16 %v837, %v836
        %v871 = vpack.c.b16 %v839, %v838
        %904 = vmatpush.bf16.msra.mxu0 %v847
        %905 = vmatpush.bf16.msra.mxu0 %v846
        %906 = vmatpush.bf16.msra.mxu0 %v845
        %907 = vmatpush.bf16.msra.mxu0 %v844
        %908 = vmatpush.bf16.msra.mxu0 %v843
        %909 = vmatpush.bf16.msra.mxu0 %v842
        %910 = vmatpush.bf16.msra.mxu0 %v841
        %911 = vmatpush.bf16.msra.mxu0 %v840
        %912 = vmatmul.bf16.gmra.mxu0 %v696
        %v913 = vpop.f32.mrf.mxu0
        %v914 = vadd.f32 0.0, %v913
        %v915 = vpop.f32.mrf.mxu0
        %v916 = vadd.f32 0.0, %v915
        %917 = vmatmul.bf16.gmra.mxu0 %v700
        %v918 = vpop.f32.mrf.mxu0
        %v919 = vadd.f32 0.0, %v918
        %v920 = vpop.f32.mrf.mxu0
        %v921 = vadd.f32 0.0, %v920
        %922 = vdwg.mxu0
        %923 = vmatpush.bf16.msra.mxu0 %v855
        %924 = vmatpush.bf16.msra.mxu0 %v854
        %925 = vmatpush.bf16.msra.mxu0 %v853
        %926 = vmatpush.bf16.msra.mxu0 %v852
        %927 = vmatpush.bf16.msra.mxu0 %v851
        %928 = vmatpush.bf16.msra.mxu0 %v850
        %929 = vmatpush.bf16.msra.mxu0 %v849
        %930 = vmatpush.bf16.msra.mxu0 %v848
        %931 = vmatmul.bf16.gmra.mxu0 %v697
        %v932 = vpop.f32.mrf.mxu0
        %v933 = vadd.f32 %v914, %v932
        %v934 = vpop.f32.mrf.mxu0
        %v935 = vadd.f32 %v916, %v934
        %936 = vmatmul.bf16.gmra.mxu0 %v701
        %v937 = vpop.f32.mrf.mxu0
        %v938 = vadd.f32 %v919, %v937
        %v939 = vpop.f32.mrf.mxu0
        %v940 = vadd.f32 %v921, %v939
        %941 = vdwg.mxu0
        %942 = vmatpush.bf16.msra.mxu0 %v863
        %943 = vmatpush.bf16.msra.mxu0 %v862
        %944 = vmatpush.bf16.msra.mxu0 %v861
        %945 = vmatpush.bf16.msra.mxu0 %v860
        %946 = vmatpush.bf16.msra.mxu0 %v859
        %947 = vmatpush.bf16.msra.mxu0 %v858
        %948 = vmatpush.bf16.msra.mxu0 %v857
        %949 = vmatpush.bf16.msra.mxu0 %v856
        %950 = vmatmul.bf16.gmra.mxu0 %v698
        %v951 = vpop.f32.mrf.mxu0
        %v952 = vadd.f32 %v933, %v951
        %v953 = vpop.f32.mrf.mxu0
        %v954 = vadd.f32 %v935, %v953
        %955 = vmatmul.bf16.gmra.mxu0 %v702
        %v956 = vpop.f32.mrf.mxu0
        %v957 = vadd.f32 %v938, %v956
        %v958 = vpop.f32.mrf.mxu0
        %v959 = vadd.f32 %v940, %v958
        %960 = vdwg.mxu0
        %961 = vmatpush.bf16.msra.mxu0 %v871
        %962 = vmatpush.bf16.msra.mxu0 %v870
        %963 = vmatpush.bf16.msra.mxu0 %v869
        %964 = vmatpush.bf16.msra.mxu0 %v868
        %965 = vmatpush.bf16.msra.mxu0 %v867
        %966 = vmatpush.bf16.msra.mxu0 %v866
        %967 = vmatpush.bf16.msra.mxu0 %v865
        %968 = vmatpush.bf16.msra.mxu0 %v864
        %969 = vmatmul.bf16.gmra.mxu0 %v699
        %v970 = vpop.f32.mrf.mxu0
        %v971 = vadd.f32 %v952, %v970
        %v972 = vpop.f32.mrf.mxu0
        %v973 = vadd.f32 %v954, %v972
        %974 = vmatmul.bf16.gmra.mxu0 %v703
        %v975 = vpop.f32.mrf.mxu0
        %v976 = vadd.f32 %v957, %v975
        %v977 = vpop.f32.mrf.mxu0
        %v978 = vadd.f32 %v959, %v977
        %979 = vdwg.mxu0
        %v980 = vadd.f32 %v596, %v971
        %v981 = vadd.f32 %v597, %v973
        %v982 = vadd.f32 %v598, %v976
        %v983 = vadd.f32 %v599, %v978
        %984 = vst [vmem:[#allocation2] sm:$0xff] %v980
        %985 = vst [vmem:[#allocation2 + $0x8] sm:$0xff] %v981
        %986 = vst [vmem:[#allocation2 + $0x10] sm:$0xff] %v982
        %987 = vst [vmem:[#allocation2 + $0x18] sm:$0xff] %v983
        %p988 = scmp.eq.s32.totalorder %s20, 7
        // Predicated region
        $region105: #{discriminator_forward.8} parent=91 // pred_check
          %p989 = pneg %p988
        $region106: #{discriminator_forward.8} parent=91 // pred_check_branch
          %991 = sbr.rel (%p989) target = $region108
        $region107: #{discriminator_forward.8} parent=91 // pred_region
          %v992 = vld [vmem:[#allocation2] sm:$0xff]
          %v993 = vld [vmem:[#allocation2 + $0x8] sm:$0xff]
          %v994 = vld [vmem:[#allocation2 + $0x10] sm:$0xff]
          %v995 = vld [vmem:[#allocation2 + $0x18] sm:$0xff]
          %v996 = vadd.f32 %v992, %v993
          %v997 = vadd.f32 %v996, %v994
          %v998 = vadd.f32 %v997, %v995
          %v999 = vrot.slane %v998, 4
          %v1000 = vadd.f32 %v998, %v999
          %v1001 = vrot.slane %v1000, 2
          %v1002 = vadd.f32 %v1000, %v1001
          %v1003 = vrot.slane %v1002, 1
          %v1004 = vadd.f32 %v1002, %v1003
          %v1005 = vadd.f32 %v1004, 0.0
          %v1006 = vmul.f32 %v1005, 0.03125
          %v1007 = vsub.f32 %v992, %v1006
          %v1008 = vsub.f32 %v993, %v1006
          %v1009 = vsub.f32 %v994, %v1006
          %v1010 = vsub.f32 %v995, %v1006
          %v1011 = vmul.f32 %v1007, %v1007
          %v1012 = vmul.f32 %v1008, %v1008
          %v1013 = vmul.f32 %v1009, %v1009
          %v1014 = vmul.f32 %v1010, %v1010
          %v1015 = vadd.f32 %v1011, %v1012
          %v1016 = vadd.f32 %v1015, %v1013
          %v1017 = vadd.f32 %v1016, %v1014
          %v1018 = vrot.slane %v1017, 4
          %v1019 = vadd.f32 %v1017, %v1018
          %v1020 = vrot.slane %v1019, 2
          %v1021 = vadd.f32 %v1019, %v1020
          %v1022 = vrot.slane %v1021, 1
          %v1023 = vadd.f32 %v1021, %v1022
          %v1024 = vadd.f32 %v1023, 0.0
          %v1025 = vmul.f32 %v1024, 0.03125
          %v1026 = vld [vmem:[%s584] sm:$0x1]
          %v1027 = vadd.f32 %v1025, 1e-05
          %v1028 = vrsqrt.pop %v1027
          %v1029 = vmul.f32 %v1028, %v1027
          %v1030 = vmul.f32 %v1029, %v1028
          %v1031 = vmul.f32 0.5, %v1030
          %v1032 = vsub.f32 1.5, %v1031
          %v1033 = vmul.f32 %v1028, %v1032
          %vm1034 = vweird.f32 %v1027
          %vm1035 = vweird.f32 %v1028
          %vm1036 = vmor %vm1034, %vm1035
          %v1037 = vsel %vm1036, %v1028, %v1033
          %v1038 = vmul.f32 %v1026, %v1037
          %v1039 = vld [vmem:[%s587] sm:$0x1]
          %v1040 = vmul.f32 %v1006, %v1038
          %v1041 = vsub.f32 %v1039, %v1040
          %v1043 = vperm.slane %v1038, 0
          %v1045 = vmul.f32 %v992, %v1043
          %v1046 = vmul.f32 %v993, %v1043
          %v1047 = vmul.f32 %v994, %v1043
          %v1048 = vmul.f32 %v995, %v1043
          %v1050 = vperm.slane %v1041, 0
          %v1052 = vadd.f32 %v1045, %v1050
          %v1053 = vadd.f32 %v1046, %v1050
          %v1054 = vadd.f32 %v1047, %v1050
          %v1055 = vadd.f32 %v1048, %v1050
          %vm1056 = vcmp.gt.f32.partialorder %v1052, 0.0
          %vm1057 = vcmp.gt.f32.partialorder %v1053, 0.0
          %vm1058 = vcmp.gt.f32.partialorder %v1054, 0.0
          %vm1059 = vcmp.gt.f32.partialorder %v1055, 0.0
          %v1060 = vmul.f32 %v1052, 0.2
          %v1061 = vmul.f32 %v1053, 0.2
          %v1062 = vmul.f32 %v1054, 0.2
          %v1063 = vmul.f32 %v1055, 0.2
          %v1064 = vsel %vm1056, %v1052, %v1060
          %v1065 = vsel %vm1057, %v1053, %v1061
          %v1066 = vsel %vm1058, %v1054, %v1062
          %v1067 = vsel %vm1059, %v1055, %v1063
          %v1068 = vpack.c.bf16 %v1064, %v1064
          %v1069 = vpack.c.bf16 %v1065, %v1065
          %v1070 = vpack.c.bf16 %v1066, %v1066
          %v1071 = vpack.c.bf16 %v1067, %v1067
          %1072 = vst [vmem:[%s579] sm:$0xf] %v1068
          %1073 = vst [vmem:[%s579 + $0x4] sm:$0xf] %v1069
          %1074 = vst [vmem:[%s579 + $0x8] sm:$0xf] %v1070
          %1075 = vst [vmem:[%s579 + $0xc] sm:$0xf] %v1071
        $region108: #{discriminator_forward.8} parent=91 // pred_fallthru
          _
        %s1076 = sand.u32 %s141, 1
        %s1077 = sand.u32 %s141, 1
        %s1078 = smul.addr %s1077, 16
        %s1079 = scalar_lea.vmem [#allocation5], %s1078
        // Predicated region
        $region109: #{discriminator_forward.8} parent=91 // pred_check
          %p1080 = pneg %p151
        $region110: #{discriminator_forward.8} parent=91 // pred_check_branch
          %1082 = sbr.rel (%p1080) target = $region112
        $region111: #{discriminator_forward.8} parent=91 // pred_region
          %s1083 = smul.addr %s19, 4
          %s1084 = scalar_lea.vmem %s4, %s1083
          // Predicated region
          $region113: #{discriminator_forward.8} parent=111 // pred_check
            _
          $region114: #{discriminator_forward.8} parent=111 // pred_check_branch
            %1086 = sbr.rel (0) target = $region116
          $region115: #{discriminator_forward.8} parent=111 // pred_region
            // Predicated region
            $region117: #{discriminator_forward.8} parent=115 // pred_check
              _
            $region118: #{discriminator_forward.8} parent=115 // pred_check_branch
              %1088 = sbr.rel target = $region120
            $region119: #{discriminator_forward.8} parent=115 // pred_region
              // Predicated region
              $region132: #{discriminator_forward.8} parent=119 // pred_check
                _
              $region133: #{discriminator_forward.8} parent=119 // pred_check_branch
                %1110 = sbr.rel (0) target = $region135
              $region134: #{discriminator_forward.8} parent=119 // pred_region
                loop: start=0, step=1, limit=1
                $region136: #{discriminator_forward.8} parent=134 // loop_pre_header
                  _
                $region137: #{discriminator_forward.8} parent=134 // loop_header
                  %s1112 = sphi 0, %s1116
                  %p1113 = scmp.ge.s32.totalorder %s1112, 1
                  %s1117 = sphi %s1079, %s1079
                  %s1118 = sphi %s1084, %s1084
                $region138: #{discriminator_forward.8} parent=134 // loop_header_branch
                  %1115 = sbr.rel (%p1113) target = $region142
                $region139: #{discriminator_forward.8} parent=134 // loop_body
                  _
                $region140: #{discriminator_forward.8} parent=134 // loop_footer
                  %s1116 = sadd.s32 1, %s1112
                $region141: #{discriminator_forward.8} parent=134 // loop_footer_branch
                  %1111 = sbr.rel target = $region137
                $region142: #{discriminator_forward.8} parent=134 // loop_exit
                  _
                %s1120 = ssub.s32 16, 1
                loop: start=0, step=1, limit=1
                $region143: #{discriminator_forward.8} parent=134 // loop_pre_header
                  _
                $region144: #{discriminator_forward.8} parent=134 // loop_header
                  %s1122 = sphi 0, %s1126
                  %p1123 = scmp.ge.s32.totalorder %s1122, 1
                  %s1127 = sphi %s1079, %s1079
                  %s1128 = sphi %s1084, %s1084
                $region145: #{discriminator_forward.8} parent=134 // loop_header_branch
                  %1125 = sbr.rel (%p1123) target = $region149
                $region146: #{discriminator_forward.8} parent=134 // loop_body
                  %v1129 = vld [vmem:[%s1127] sm:%s1120]
                  %1130 = vst [vmem:[%s1128] sm:%s1120] %v1129
                  %v1131 = vld [vmem:[%s1127 + $0x4] sm:%s1120]
                  %1132 = vst [vmem:[%s1128 + $0x10] sm:%s1120] %v1131
                  %v1133 = vld [vmem:[%s1127 + $0x8] sm:%s1120]
                  %1134 = vst [vmem:[%s1128 + $0x20] sm:%s1120] %v1133
                  %v1135 = vld [vmem:[%s1127 + $0xc] sm:%s1120]
                  %1136 = vst [vmem:[%s1128 + $0x30] sm:%s1120] %v1135
                $region147: #{discriminator_forward.8} parent=134 // loop_footer
                  %s1126 = sadd.s32 1, %s1122
                $region148: #{discriminator_forward.8} parent=134 // loop_footer_branch
                  %1121 = sbr.rel target = $region144
                $region149: #{discriminator_forward.8} parent=134 // loop_exit
                  _
              $region135: #{discriminator_forward.8} parent=119 // pred_fallthru
                _
            $region120: #{discriminator_forward.8} parent=115 // pred_fallthru
              _
            // Predicated region
            $region121: #{discriminator_forward.8} parent=115 // pred_check
              _
            $region122: #{discriminator_forward.8} parent=115 // pred_check_branch
              %1090 = sbr.rel (0) target = $region124
            $region123: #{discriminator_forward.8} parent=115 // pred_region
              %s1092 = ssub.s32 16, 1
              loop: start=0, step=1, limit=1
              $region125: #{discriminator_forward.8} parent=123 // loop_pre_header
                _
              $region126: #{discriminator_forward.8} parent=123 // loop_header
                %s1094 = sphi 0, %s1098
                %p1095 = scmp.ge.s32.totalorder %s1094, 1
                %s1099 = sphi %s1079, %s1079
                %s1100 = sphi %s1084, %s1084
              $region127: #{discriminator_forward.8} parent=123 // loop_header_branch
                %1097 = sbr.rel (%p1095) target = $region131
              $region128: #{discriminator_forward.8} parent=123 // loop_body
                %v1101 = vld [vmem:[%s1099] sm:%s1092]
                %1102 = vst [vmem:[%s1100] sm:%s1092] %v1101
                %v1103 = vld [vmem:[%s1099 + $0x4] sm:%s1092]
                %1104 = vst [vmem:[%s1100 + $0x10] sm:%s1092] %v1103
                %v1105 = vld [vmem:[%s1099 + $0x8] sm:%s1092]
                %1106 = vst [vmem:[%s1100 + $0x20] sm:%s1092] %v1105
                %v1107 = vld [vmem:[%s1099 + $0xc] sm:%s1092]
                %1108 = vst [vmem:[%s1100 + $0x30] sm:%s1092] %v1107
              $region129: #{discriminator_forward.8} parent=123 // loop_footer
                %s1098 = sadd.s32 1, %s1094
              $region130: #{discriminator_forward.8} parent=123 // loop_footer_branch
                %1093 = sbr.rel target = $region126
              $region131: #{discriminator_forward.8} parent=123 // loop_exit
                _
            $region124: #{discriminator_forward.8} parent=115 // pred_fallthru
              _
          $region116: #{discriminator_forward.8} parent=111 // pred_fallthru
            _
          %1137 = vnop
        $region112: #{discriminator_forward.8} parent=91 // pred_fallthru
          _
      $region92: #{discriminator_forward.8} parent=5 // pred_fallthru
        _
      %p1138 = scmp.le.s32.totalorder 2, %s10
      // Predicated region
      $region150: #{discriminator_forward.8} parent=5 // pred_check
        %p1139 = pneg %p1138
      $region151: #{discriminator_forward.8} parent=5 // pred_check_branch
        %1141 = sbr.rel (%p1139) target = $region153
      $region152: #{discriminator_forward.8} parent=5 // pred_region
        %s1142 = ssub.s32 %s10, 2
        // Predicated region
        $region154: #{discriminator_forward.8} parent=152 // pred_check
          %p1143 = pneg %p157
        $region155: #{discriminator_forward.8} parent=152 // pred_check_branch
          %1145 = sbr.rel (%p1143) target = $region157
        $region156: #{discriminator_forward.8} parent=152 // pred_region
          %s1146 = sand.u32 %s142, 1
          %s1147 = sand.u32 %s142, 1
          %s1148 = smul.addr %s1147, 16
          %s1149 = scalar_lea.vmem [#allocation5], %s1148
        $region157: #{discriminator_forward.8} parent=152 // pred_fallthru
          _
      $region153: #{discriminator_forward.8} parent=5 // pred_fallthru
        _
    $region6: #{discriminator_forward.8} parent=1 // loop_footer
      %s14 = sadd.s32 1, %s10
    $region7: #{discriminator_forward.8} parent=1 // loop_footer_branch
      %9 = sbr.rel target = $region3
    $region8: #{discriminator_forward.8} parent=1 // loop_exit
      _

// kernel: discriminator_forward.9
$region0: #{discriminator_forward.9}
  #allocation0 [shape = 'u32[]', space=smem, size = 0x4, offset = 0x4, fixed_abs, tag = 'smem constant byte address 0x4 - core index']
  #allocation1 [shape = 'u32[72,128]{1,0:T(1,128)}', space=vmem, size = 0x9000, scoped, tag = 'internal scratch']
  %s0 = inlined_call_operand.vmem [shape: bf16[2,8192], index: 0, kind: input, shape index: {}]
  %s1 = inlined_call_operand.vmem [shape: bf16[1,8192], index: 1, kind: input, shape index: {}]
  %s2 = inlined_call_operand.vmem [shape: f32[2,1], index: 2, kind: output, shape index: {}]
  %s3 = sld [smem:[#allocation0]]
  $region18: #{discriminator_forward.9} parent=0
    _
  %s5 = ssub.s32 1, %s3
  %s6 = scalar_select 0, %s5, %s3
  // Predicated region
  $region2: #{discriminator_forward.9} parent=0 // pred_check
    _
  $region3: #{discriminator_forward.9} parent=0 // pred_check_branch
    %8 = sbr.rel (0) target = $region5
  $region4: #{discriminator_forward.9} parent=0 // pred_region
    _
  $region5: #{discriminator_forward.9} parent=0 // pred_fallthru
    _
  // Predicated region
  $region6: #{discriminator_forward.9} parent=0 // pred_check
    _
  $region7: #{discriminator_forward.9} parent=0 // pred_check_branch
    %10 = sbr.rel (0) target = $region9
  $region8: #{discriminator_forward.9} parent=0 // pred_region
    _
  $region9: #{discriminator_forward.9} parent=0 // pred_fallthru
    _
  %v11 = vld [vmem:[%s0] sm:$0xff]
  %v12 = vld [vmem:[%s0 + $0x8] sm:$0xff]
  %v13 = vld [vmem:[%s0 + $0x10] sm:$0xff]
  %v14 = vld [vmem:[%s0 + $0x18] sm:$0xff]
  %v15 = vld [vmem:[%s0 + $0x20] sm:$0xff]
  %v16 = vld [vmem:[%s0 + $0x28] sm:$0xff]
  %v17 = vld [vmem:[%s0 + $0x30] sm:$0xff]
  %v18 = vld [vmem:[%s0 + $0x38] sm:$0xff]
  %v19 = vunpack.c.l.bf16 %v11
  %v20 = vunpack.c.h.bf16 %v11
  %v21 = vunpack.c.l.bf16 %v12
  %v22 = vunpack.c.h.bf16 %v12
  %v23 = vunpack.c.l.bf16 %v13
  %v24 = vunpack.c.h.bf16 %v13
  %v25 = vunpack.c.l.bf16 %v14
  %v26 = vunpack.c.h.bf16 %v14
  %v27 = vunpack.c.l.bf16 %v15
  %v28 = vunpack.c.h.bf16 %v15
  %v29 = vunpack.c.l.bf16 %v16
  %v30 = vunpack.c.h.bf16 %v16
  %v31 = vunpack.c.l.bf16 %v17
  %v32 = vunpack.c.h.bf16 %v17
  %v33 = vunpack.c.l.bf16 %v18
  %v34 = vunpack.c.h.bf16 %v18
  %v35 = vld [vmem:[%s1] sm:$0xff]
  %v36 = vld [vmem:[%s1 + $0x8] sm:$0xff]
  %v37 = vld [vmem:[%s1 + $0x10] sm:$0xff]
  %v38 = vld [vmem:[%s1 + $0x18] sm:$0xff]
  %v39 = vld [vmem:[%s1 + $0x20] sm:$0xff]
  %v40 = vld [vmem:[%s1 + $0x28] sm:$0xff]
  %v41 = vld [vmem:[%s1 + $0x30] sm:$0xff]
  %v42 = vld [vmem:[%s1 + $0x38] sm:$0xff]
  %v43 = vunpack.c.l.bf16 %v35
  %v44 = vunpack.c.h.bf16 %v35
  %v45 = vunpack.c.l.bf16 %v36
  %v46 = vunpack.c.h.bf16 %v36
  %v47 = vunpack.c.l.bf16 %v37
  %v48 = vunpack.c.h.bf16 %v37
  %v49 = vunpack.c.l.bf16 %v38
  %v50 = vunpack.c.h.bf16 %v38
  %v51 = vunpack.c.l.bf16 %v39
  %v52 = vunpack.c.h.bf16 %v39
  %v53 = vunpack.c.l.bf16 %v40
  %v54 = vunpack.c.h.bf16 %v40
  %v55 = vunpack.c.l.bf16 %v41
  %v56 = vunpack.c.h.bf16 %v41
  %v57 = vunpack.c.l.bf16 %v42
  %v58 = vunpack.c.h.bf16 %v42
  %v75 = vperm.slane %v43, 0
  %v76 = vperm.slane %v43, 2
  %v77 = vperm.slane %v43, 4
  %v78 = vperm.slane %v43, 6
  %v79 = vperm.slane %v44, 0
  %v80 = vperm.slane %v44, 2
  %v81 = vperm.slane %v44, 4
  %v82 = vperm.slane %v44, 6
  %v83 = vperm.slane %v45, 0
  %v84 = vperm.slane %v45, 2
  %v85 = vperm.slane %v45, 4
  %v86 = vperm.slane %v45, 6
  %v87 = vperm.slane %v46, 0
  %v88 = vperm.slane %v46, 2
  %v89 = vperm.slane %v46, 4
  %v90 = vperm.slane %v46, 6
  %v91 = vperm.slane %v47, 0
  %v92 = vperm.slane %v47, 2
  %v93 = vperm.slane %v47, 4
  %v94 = vperm.slane %v47, 6
  %v95 = vperm.slane %v48, 0
  %v96 = vperm.slane %v48, 2
  %v97 = vperm.slane %v48, 4
  %v98 = vperm.slane %v48, 6
  %v99 = vperm.slane %v49, 0
  %v100 = vperm.slane %v49, 2
  %v101 = vperm.slane %v49, 4
  %v102 = vperm.slane %v49, 6
  %v103 = vperm.slane %v50, 0
  %v104 = vperm.slane %v50, 2
  %v105 = vperm.slane %v50, 4
  %v106 = vperm.slane %v50, 6
  %v107 = vperm.slane %v51, 0
  %v108 = vperm.slane %v51, 2
  %v109 = vperm.slane %v51, 4
  %v110 = vperm.slane %v51, 6
  %v111 = vperm.slane %v52, 0
  %v112 = vperm.slane %v52, 2
  %v113 = vperm.slane %v52, 4
  %v114 = vperm.slane %v52, 6
  %v115 = vperm.slane %v53, 0
  %v116 = vperm.slane %v53, 2
  %v117 = vperm.slane %v53, 4
  %v118 = vperm.slane %v53, 6
  %v119 = vperm.slane %v54, 0
  %v120 = vperm.slane %v54, 2
  %v121 = vperm.slane %v54, 4
  %v122 = vperm.slane %v54, 6
  %v123 = vperm.slane %v55, 0
  %v124 = vperm.slane %v55, 2
  %v125 = vperm.slane %v55, 4
  %v126 = vperm.slane %v55, 6
  %v127 = vperm.slane %v56, 0
  %v128 = vperm.slane %v56, 2
  %v129 = vperm.slane %v56, 4
  %v130 = vperm.slane %v56, 6
  %v131 = vperm.slane %v57, 0
  %v132 = vperm.slane %v57, 2
  %v133 = vperm.slane %v57, 4
  %v134 = vperm.slane %v57, 6
  %v135 = vperm.slane %v58, 0
  %v136 = vperm.slane %v58, 2
  %v137 = vperm.slane %v58, 4
  %v138 = vperm.slane %v58, 6
  %v203 = vperm.slane %v75, 0
  %v204 = vperm.slane %v76, 0
  %v205 = vperm.slane %v77, 0
  %v206 = vperm.slane %v78, 0
  %v207 = vperm.slane %v79, 0
  %v208 = vperm.slane %v80, 0
  %v209 = vperm.slane %v81, 0
  %v210 = vperm.slane %v82, 0
  %v211 = vperm.slane %v83, 0
  %v212 = vperm.slane %v84, 0
  %v213 = vperm.slane %v85, 0
  %v214 = vperm.slane %v86, 0
  %v215 = vperm.slane %v87, 0
  %v216 = vperm.slane %v88, 0
  %v217 = vperm.slane %v89, 0
  %v218 = vperm.slane %v90, 0
  %v219 = vperm.slane %v91, 0
  %v220 = vperm.slane %v92, 0
  %v221 = vperm.slane %v93, 0
  %v222 = vperm.slane %v94, 0
  %v223 = vperm.slane %v95, 0
  %v224 = vperm.slane %v96, 0
  %v225 = vperm.slane %v97, 0
  %v226 = vperm.slane %v98, 0
  %v227 = vperm.slane %v99, 0
  %v228 = vperm.slane %v100, 0
  %v229 = vperm.slane %v101, 0
  %v230 = vperm.slane %v102, 0
  %v231 = vperm.slane %v103, 0
  %v232 = vperm.slane %v104, 0
  %v233 = vperm.slane %v105, 0
  %v234 = vperm.slane %v106, 0
  %v235 = vperm.slane %v107, 0
  %v236 = vperm.slane %v108, 0
  %v237 = vperm.slane %v109, 0
  %v238 = vperm.slane %v110, 0
  %v239 = vperm.slane %v111, 0
  %v240 = vperm.slane %v112, 0
  %v241 = vperm.slane %v113, 0
  %v242 = vperm.slane %v114, 0
  %v243 = vperm.slane %v115, 0
  %v244 = vperm.slane %v116, 0
  %v245 = vperm.slane %v117, 0
  %v246 = vperm.slane %v118, 0
  %v247 = vperm.slane %v119, 0
  %v248 = vperm.slane %v120, 0
  %v249 = vperm.slane %v121, 0
  %v250 = vperm.slane %v122, 0
  %v251 = vperm.slane %v123, 0
  %v252 = vperm.slane %v124, 0
  %v253 = vperm.slane %v125, 0
  %v254 = vperm.slane %v126, 0
  %v255 = vperm.slane %v127, 0
  %v256 = vperm.slane %v128, 0
  %v257 = vperm.slane %v129, 0
  %v258 = vperm.slane %v130, 0
  %v259 = vperm.slane %v131, 0
  %v260 = vperm.slane %v132, 0
  %v261 = vperm.slane %v133, 0
  %v262 = vperm.slane %v134, 0
  %v263 = vperm.slane %v135, 0
  %v264 = vperm.slane %v136, 0
  %v265 = vperm.slane %v137, 0
  %v266 = vperm.slane %v138, 0
  %v331 = vrot.slane %v204, 6
  %v332 = vrot.slane %v205, 4
  %v333 = vrot.slane %v206, 2
  %v334 = vrot.slane %v208, 6
  %v335 = vrot.slane %v209, 4
  %v336 = vrot.slane %v210, 2
  %v337 = vrot.slane %v212, 6
  %v338 = vrot.slane %v213, 4
  %v339 = vrot.slane %v214, 2
  %v340 = vrot.slane %v216, 6
  %v341 = vrot.slane %v217, 4
  %v342 = vrot.slane %v218, 2
  %v343 = vrot.slane %v220, 6
  %v344 = vrot.slane %v221, 4
  %v345 = vrot.slane %v222, 2
  %v346 = vrot.slane %v224, 6
  %v347 = vrot.slane %v225, 4
  %v348 = vrot.slane %v226, 2
  %v349 = vrot.slane %v228, 6
  %v350 = vrot.slane %v229, 4
  %v351 = vrot.slane %v230, 2
  %v352 = vrot.slane %v232, 6
  %v353 = vrot.slane %v233, 4
  %v354 = vrot.slane %v234, 2
  %v355 = vrot.slane %v236, 6
  %v356 = vrot.slane %v237, 4
  %v357 = vrot.slane %v238, 2
  %v358 = vrot.slane %v240, 6
  %v359 = vrot.slane %v241, 4
  %v360 = vrot.slane %v242, 2
  %v361 = vrot.slane %v244, 6
  %v362 = vrot.slane %v245, 4
  %v363 = vrot.slane %v246, 2
  %v364 = vrot.slane %v248, 6
  %v365 = vrot.slane %v249, 4
  %v366 = vrot.slane %v250, 2
  %v367 = vrot.slane %v252, 6
  %v368 = vrot.slane %v253, 4
  %v369 = vrot.slane %v254, 2
  %v370 = vrot.slane %v256, 6
  %v371 = vrot.slane %v257, 4
  %v372 = vrot.slane %v258, 2
  %v373 = vrot.slane %v260, 6
  %v374 = vrot.slane %v261, 4
  %v375 = vrot.slane %v262, 2
  %v376 = vrot.slane %v264, 6
  %v377 = vrot.slane %v265, 4
  %v378 = vrot.slane %v266, 2
  %vm379 = vcmask 1041408
  %v380 = vsel %vm379, %v203, %v331
  %vm381 = vcmask 1045508
  %v382 = vsel %vm381, %v332, %v333
  %vm383 = vcmask 1043456
  %v384 = vsel %vm383, %v380, %v382
  %v385 = vsel %vm379, %v207, %v334
  %v386 = vsel %vm381, %v335, %v336
  %v387 = vsel %vm383, %v385, %v386
  %v388 = vsel %vm379, %v211, %v337
  %v389 = vsel %vm381, %v338, %v339
  %v390 = vsel %vm383, %v388, %v389
  %v391 = vsel %vm379, %v215, %v340
  %v392 = vsel %vm381, %v341, %v342
  %v393 = vsel %vm383, %v391, %v392
  %v394 = vsel %vm379, %v219, %v343
  %v395 = vsel %vm381, %v344, %v345
  %v396 = vsel %vm383, %v394, %v395
  %v397 = vsel %vm379, %v223, %v346
  %v398 = vsel %vm381, %v347, %v348
  %v399 = vsel %vm383, %v397, %v398
  %v400 = vsel %vm379, %v227, %v349
  %v401 = vsel %vm381, %v350, %v351
  %v402 = vsel %vm383, %v400, %v401
  %v403 = vsel %vm379, %v231, %v352
  %v404 = vsel %vm381, %v353, %v354
  %v405 = vsel %vm383, %v403, %v404
  %v406 = vsel %vm379, %v235, %v355
  %v407 = vsel %vm381, %v356, %v357
  %v408 = vsel %vm383, %v406, %v407
  %v409 = vsel %vm379, %v239, %v358
  %v410 = vsel %vm381, %v359, %v360
  %v411 = vsel %vm383, %v409, %v410
  %v412 = vsel %vm379, %v243, %v361
  %v413 = vsel %vm381, %v362, %v363
  %v414 = vsel %vm383, %v412, %v413
  %v415 = vsel %vm379, %v247, %v364
  %v416 = vsel %vm381, %v365, %v366
  %v417 = vsel %vm383, %v415, %v416
  %v418 = vsel %vm379, %v251, %v367
  %v419 = vsel %vm381, %v368, %v369
  %v420 = vsel %vm383, %v418, %v419
  %v421 = vsel %vm379, %v255, %v370
  %v422 = vsel %vm381, %v371, %v372
  %v423 = vsel %vm383, %v421, %v422
  %v424 = vsel %vm379, %v259, %v373
  %v425 = vsel %vm381, %v374, %v375
  %v426 = vsel %vm383, %v424, %v425
  %v427 = vsel %vm379, %v263, %v376
  %v428 = vsel %vm381, %v377, %v378
  %v429 = vsel %vm383, %v427, %v428
  %v446 = vmul.f32 %v19, %v384
  %v447 = vmul.f32 %v20, %v387
  %v448 = vmul.f32 %v21, %v390
  %v449 = vmul.f32 %v22, %v393
  %v450 = vmul.f32 %v23, %v396
  %v451 = vmul.f32 %v24, %v399
  %v452 = vmul.f32 %v25, %v402
  %v453 = vmul.f32 %v26, %v405
  %v454 = vmul.f32 %v27, %v408
  %v455 = vmul.f32 %v28, %v411
  %v456 = vmul.f32 %v29, %v414
  %v457 = vmul.f32 %v30, %v417
  %v458 = vmul.f32 %v31, %v420
  %v459 = vmul.f32 %v32, %v423
  %v460 = vmul.f32 %v33, %v426
  %v461 = vmul.f32 %v34, %v429
  %478 = vst [vmem:[#allocation1] ss:$4 sm:$0xff] %v446
  %s479 = scalar_lea.vmem [#allocation1], 32
  %480 = vst [vmem:[%s479] ss:$4 sm:$0xff] %v447
  %v481 = vld.sshfl [vmem:[#allocation1] sm:$0xff pattern:$0x73625140]
  %v482 = vld.sshfl [vmem:[#allocation1 + $0x8] sm:$0xff pattern:$0x73625140]
  %v483 = vld.sshfl [vmem:[#allocation1 + $0x10] sm:$0xff pattern:$0x73625140]
  %v484 = vld.sshfl [vmem:[#allocation1 + $0x18] sm:$0xff pattern:$0x73625140]
  %v485 = vld.sshfl [vmem:[#allocation1 + $0x20] sm:$0xff pattern:$0x73625140]
  %v486 = vld.sshfl [vmem:[#allocation1 + $0x28] sm:$0xff pattern:$0x73625140]
  %v487 = vld.sshfl [vmem:[#allocation1 + $0x30] sm:$0xff pattern:$0x73625140]
  %v488 = vld.sshfl [vmem:[#allocation1 + $0x38] sm:$0xff pattern:$0x73625140]
  %489 = vst [vmem:[#allocation1] ss:$4 sm:$0xff] %v448
  %490 = vst [vmem:[%s479] ss:$4 sm:$0xff] %v449
  %v491 = vld.sshfl [vmem:[#allocation1] sm:$0xff pattern:$0x73625140]
  %v492 = vld.sshfl [vmem:[#allocation1 + $0x8] sm:$0xff pattern:$0x73625140]
  %v493 = vld.sshfl [vmem:[#allocation1 + $0x10] sm:$0xff pattern:$0x73625140]
  %v494 = vld.sshfl [vmem:[#allocation1 + $0x18] sm:$0xff pattern:$0x73625140]
  %v495 = vld.sshfl [vmem:[#allocation1 + $0x20] sm:$0xff pattern:$0x73625140]
  %v496 = vld.sshfl [vmem:[#allocation1 + $0x28] sm:$0xff pattern:$0x73625140]
  %v497 = vld.sshfl [vmem:[#allocation1 + $0x30] sm:$0xff pattern:$0x73625140]
  %v498 = vld.sshfl [vmem:[#allocation1 + $0x38] sm:$0xff pattern:$0x73625140]
  %499 = vst [vmem:[#allocation1] ss:$4 sm:$0xff] %v450
  %500 = vst [vmem:[%s479] ss:$4 sm:$0xff] %v451
  %v501 = vld.sshfl [vmem:[#allocation1] sm:$0xff pattern:$0x73625140]
  %v502 = vld.sshfl [vmem:[#allocation1 + $0x8] sm:$0xff pattern:$0x73625140]
  %v503 = vld.sshfl [vmem:[#allocation1 + $0x10] sm:$0xff pattern:$0x73625140]
  %v504 = vld.sshfl [vmem:[#allocation1 + $0x18] sm:$0xff pattern:$0x73625140]
  %v505 = vld.sshfl [vmem:[#allocation1 + $0x20] sm:$0xff pattern:$0x73625140]
  %v506 = vld.sshfl [vmem:[#allocation1 + $0x28] sm:$0xff pattern:$0x73625140]
  %v507 = vld.sshfl [vmem:[#allocation1 + $0x30] sm:$0xff pattern:$0x73625140]
  %v508 = vld.sshfl [vmem:[#allocation1 + $0x38] sm:$0xff pattern:$0x73625140]
  %509 = vst [vmem:[#allocation1] ss:$4 sm:$0xff] %v452
  %510 = vst [vmem:[%s479] ss:$4 sm:$0xff] %v453
  %v511 = vld.sshfl [vmem:[#allocation1] sm:$0xff pattern:$0x73625140]
  %v512 = vld.sshfl [vmem:[#allocation1 + $0x8] sm:$0xff pattern:$0x73625140]
  %v513 = vld.sshfl [vmem:[#allocation1 + $0x10] sm:$0xff pattern:$0x73625140]
  %v514 = vld.sshfl [vmem:[#allocation1 + $0x18] sm:$0xff pattern:$0x73625140]
  %v515 = vld.sshfl [vmem:[#allocation1 + $0x20] sm:$0xff pattern:$0x73625140]
  %v516 = vld.sshfl [vmem:[#allocation1 + $0x28] sm:$0xff pattern:$0x73625140]
  %v517 = vld.sshfl [vmem:[#allocation1 + $0x30] sm:$0xff pattern:$0x73625140]
  %v518 = vld.sshfl [vmem:[#allocation1 + $0x38] sm:$0xff pattern:$0x73625140]
  %519 = vst [vmem:[#allocation1] ss:$4 sm:$0xff] %v454
  %520 = vst [vmem:[%s479] ss:$4 sm:$0xff] %v455
  %v521 = vld.sshfl [vmem:[#allocation1] sm:$0xff pattern:$0x73625140]
  %v522 = vld.sshfl [vmem:[#allocation1 + $0x8] sm:$0xff pattern:$0x73625140]
  %v523 = vld.sshfl [vmem:[#allocation1 + $0x10] sm:$0xff pattern:$0x73625140]
  %v524 = vld.sshfl [vmem:[#allocation1 + $0x18] sm:$0xff pattern:$0x73625140]
  %v525 = vld.sshfl [vmem:[#allocation1 + $0x20] sm:$0xff pattern:$0x73625140]
  %v526 = vld.sshfl [vmem:[#allocation1 + $0x28] sm:$0xff pattern:$0x73625140]
  %v527 = vld.sshfl [vmem:[#allocation1 + $0x30] sm:$0xff pattern:$0x73625140]
  %v528 = vld.sshfl [vmem:[#allocation1 + $0x38] sm:$0xff pattern:$0x73625140]
  %529 = vst [vmem:[#allocation1] ss:$4 sm:$0xff] %v456
  %530 = vst [vmem:[%s479] ss:$4 sm:$0xff] %v457
  %v531 = vld.sshfl [vmem:[#allocation1] sm:$0xff pattern:$0x73625140]
  %v532 = vld.sshfl [vmem:[#allocation1 + $0x8] sm:$0xff pattern:$0x73625140]
  %v533 = vld.sshfl [vmem:[#allocation1 + $0x10] sm:$0xff pattern:$0x73625140]
  %v534 = vld.sshfl [vmem:[#allocation1 + $0x18] sm:$0xff pattern:$0x73625140]
  %v535 = vld.sshfl [vmem:[#allocation1 + $0x20] sm:$0xff pattern:$0x73625140]
  %v536 = vld.sshfl [vmem:[#allocation1 + $0x28] sm:$0xff pattern:$0x73625140]
  %v537 = vld.sshfl [vmem:[#allocation1 + $0x30] sm:$0xff pattern:$0x73625140]
  %v538 = vld.sshfl [vmem:[#allocation1 + $0x38] sm:$0xff pattern:$0x73625140]
  %539 = vst [vmem:[#allocation1] ss:$4 sm:$0xff] %v458
  %540 = vst [vmem:[%s479] ss:$4 sm:$0xff] %v459
  %v541 = vld.sshfl [vmem:[#allocation1] sm:$0xff pattern:$0x73625140]
  %v542 = vld.sshfl [vmem:[#allocation1 + $0x8] sm:$0xff pattern:$0x73625140]
  %v543 = vld.sshfl [vmem:[#allocation1 + $0x10] sm:$0xff pattern:$0x73625140]
  %v544 = vld.sshfl [vmem:[#allocation1 + $0x18] sm:$0xff pattern:$0x73625140]
  %v545 = vld.sshfl [vmem:[#allocation1 + $0x20] sm:$0xff pattern:$0x73625140]
  %v546 = vld.sshfl [vmem:[#allocation1 + $0x28] sm:$0xff pattern:$0x73625140]
  %v547 = vld.sshfl [vmem:[#allocation1 + $0x30] sm:$0xff pattern:$0x73625140]
  %v548 = vld.sshfl [vmem:[#allocation1 + $0x38] sm:$0xff pattern:$0x73625140]
  %549 = vst [vmem:[#allocation1] ss:$4 sm:$0xff] %v460
  %550 = vst [vmem:[%s479] ss:$4 sm:$0xff] %v461
  %v551 = vld.sshfl [vmem:[#allocation1] sm:$0xff pattern:$0x73625140]
  %v552 = vld.sshfl [vmem:[#allocation1 + $0x8] sm:$0xff pattern:$0x73625140]
  %v553 = vld.sshfl [vmem:[#allocation1 + $0x10] sm:$0xff pattern:$0x73625140]
  %v554 = vld.sshfl [vmem:[#allocation1 + $0x18] sm:$0xff pattern:$0x73625140]
  %v555 = vld.sshfl [vmem:[#allocation1 + $0x20] sm:$0xff pattern:$0x73625140]
  %v556 = vld.sshfl [vmem:[#allocation1 + $0x28] sm:$0xff pattern:$0x73625140]
  %v557 = vld.sshfl [vmem:[#allocation1 + $0x30] sm:$0xff pattern:$0x73625140]
  %v558 = vld.sshfl [vmem:[#allocation1 + $0x38] sm:$0xff pattern:$0x73625140]
  %v623 = vsel %vm379, %v481, 0.0
  %v624 = vsel %vm379, %v482, 0.0
  %v625 = vadd.f32 %v623, %v624
  %v626 = vsel %vm379, %v483, 0.0
  %v627 = vadd.f32 %v625, %v626
  %v628 = vsel %vm379, %v484, 0.0
  %v629 = vadd.f32 %v627, %v628
  %v630 = vsel %vm379, %v485, 0.0
  %v631 = vadd.f32 %v629, %v630
  %v632 = vsel %vm379, %v486, 0.0
  %v633 = vadd.f32 %v631, %v632
  %v634 = vsel %vm379, %v487, 0.0
  %v635 = vadd.f32 %v633, %v634
  %v636 = vsel %vm379, %v488, 0.0
  %v637 = vadd.f32 %v635, %v636
  %v638 = vsel %vm379, %v491, 0.0
  %v639 = vadd.f32 %v637, %v638
  %v640 = vsel %vm379, %v492, 0.0
  %v641 = vadd.f32 %v639, %v640
  %v642 = vsel %vm379, %v493, 0.0
  %v643 = vadd.f32 %v641, %v642
  %v644 = vsel %vm379, %v494, 0.0
  %v645 = vadd.f32 %v643, %v644
  %v646 = vsel %vm379, %v495, 0.0
  %v647 = vadd.f32 %v645, %v646
  %v648 = vsel %vm379, %v496, 0.0
  %v649 = vadd.f32 %v647, %v648
  %v650 = vsel %vm379, %v497, 0.0
  %v651 = vadd.f32 %v649, %v650
  %v652 = vsel %vm379, %v498, 0.0
  %v653 = vadd.f32 %v651, %v652
  %v654 = vsel %vm379, %v501, 0.0
  %v655 = vadd.f32 %v653, %v654
  %v656 = vsel %vm379, %v502, 0.0
  %v657 = vadd.f32 %v655, %v656
  %v658 = vsel %vm379, %v503, 0.0
  %v659 = vadd.f32 %v657, %v658
  %v660 = vsel %vm379, %v504, 0.0
  %v661 = vadd.f32 %v659, %v660
  %v662 = vsel %vm379, %v505, 0.0
  %v663 = vadd.f32 %v661, %v662
  %v664 = vsel %vm379, %v506, 0.0
  %v665 = vadd.f32 %v663, %v664
  %v666 = vsel %vm379, %v507, 0.0
  %v667 = vadd.f32 %v665, %v666
  %v668 = vsel %vm379, %v508, 0.0
  %v669 = vadd.f32 %v667, %v668
  %v670 = vsel %vm379, %v511, 0.0
  %v671 = vadd.f32 %v669, %v670
  %v672 = vsel %vm379, %v512, 0.0
  %v673 = vadd.f32 %v671, %v672
  %v674 = vsel %vm379, %v513, 0.0
  %v675 = vadd.f32 %v673, %v674
  %v676 = vsel %vm379, %v514, 0.0
  %v677 = vadd.f32 %v675, %v676
  %v678 = vsel %vm379, %v515, 0.0
  %v679 = vadd.f32 %v677, %v678
  %v680 = vsel %vm379, %v516, 0.0
  %v681 = vadd.f32 %v679, %v680
  %v682 = vsel %vm379, %v517, 0.0
  %v683 = vadd.f32 %v681, %v682
  %v684 = vsel %vm379, %v518, 0.0
  %v685 = vadd.f32 %v683, %v684
  %v686 = vsel %vm379, %v521, 0.0
  %v687 = vadd.f32 %v685, %v686
  %v688 = vsel %vm379, %v522, 0.0
  %v689 = vadd.f32 %v687, %v688
  %v690 = vsel %vm379, %v523, 0.0
  %v691 = vadd.f32 %v689, %v690
  %v692 = vsel %vm379, %v524, 0.0
  %v693 = vadd.f32 %v691, %v692
  %v694 = vsel %vm379, %v525, 0.0
  %v695 = vadd.f32 %v693, %v694
  %v696 = vsel %vm379, %v526, 0.0
  %v697 = vadd.f32 %v695, %v696
  %v698 = vsel %vm379, %v527, 0.0
  %v699 = vadd.f32 %v697, %v698
  %v700 = vsel %vm379, %v528, 0.0
  %v701 = vadd.f32 %v699, %v700
  %v702 = vsel %vm379, %v531, 0.0
  %v703 = vadd.f32 %v701, %v702
  %v704 = vsel %vm379, %v532, 0.0
  %v705 = vadd.f32 %v703, %v704
  %v706 = vsel %vm379, %v533, 0.0
  %v707 = vadd.f32 %v705, %v706
  %v708 = vsel %vm379, %v534, 0.0
  %v709 = vadd.f32 %v707, %v708
  %v710 = vsel %vm379, %v535, 0.0
  %v711 = vadd.f32 %v709, %v710
  %v712 = vsel %vm379, %v536, 0.0
  %v713 = vadd.f32 %v711, %v712
  %v714 = vsel %vm379, %v537, 0.0
  %v715 = vadd.f32 %v713, %v714
  %v716 = vsel %vm379, %v538, 0.0
  %v717 = vadd.f32 %v715, %v716
  %v718 = vsel %vm379, %v541, 0.0
  %v719 = vadd.f32 %v717, %v718
  %v720 = vsel %vm379, %v542, 0.0
  %v721 = vadd.f32 %v719, %v720
  %v722 = vsel %vm379, %v543, 0.0
  %v723 = vadd.f32 %v721, %v722
  %v724 = vsel %vm379, %v544, 0.0
  %v725 = vadd.f32 %v723, %v724
  %v726 = vsel %vm379, %v545, 0.0
  %v727 = vadd.f32 %v725, %v726
  %v728 = vsel %vm379, %v546, 0.0
  %v729 = vadd.f32 %v727, %v728
  %v730 = vsel %vm379, %v547, 0.0
  %v731 = vadd.f32 %v729, %v730
  %v732 = vsel %vm379, %v548, 0.0
  %v733 = vadd.f32 %v731, %v732
  %v734 = vsel %vm379, %v551, 0.0
  %v735 = vadd.f32 %v733, %v734
  %v736 = vsel %vm379, %v552, 0.0
  %v737 = vadd.f32 %v735, %v736
  %v738 = vsel %vm379, %v553, 0.0
  %v739 = vadd.f32 %v737, %v738
  %v740 = vsel %vm379, %v554, 0.0
  %v741 = vadd.f32 %v739, %v740
  %v742 = vsel %vm379, %v555, 0.0
  %v743 = vadd.f32 %v741, %v742
  %v744 = vsel %vm379, %v556, 0.0
  %v745 = vadd.f32 %v743, %v744
  %v746 = vsel %vm379, %v557, 0.0
  %v747 = vadd.f32 %v745, %v746
  %v748 = vsel %vm379, %v558, 0.0
  %v749 = vadd.f32 %v747, %v748
  %750 = vadd.xlane.f32.xlu0 %v749
  %v751 = vpop.xlane.xlu0 %750
  %v752 = vsub.f32 0.0, %v751
  %v753 = vmul.f32 %v752, 1.442695
  %v754 = vpow.pop %v753
  %v755 = vadd.f32 %v754, 1.0
  %v756 = vrcp.pop %v755
  %v757 = vmul.f32 %v755, %v756
  %v758 = vsub.f32 1.0, %v757
  %v759 = vmul.f32 %v756, %v758
  %v760 = vadd.f32 %v756, %v759
  %vm761 = vweird.f32 %v755
  %vm762 = vweird.f32 %v756
  %vm763 = vmor %vm761, %vm762
  %v764 = vsel %vm763, %v756, %v760
  %v765 = vand.u32 2147483647, %v755
  %vm766 = vcmp.eq.f32.partialorder %v765, 8.507059e+37
  %v767 = vand.u32 %v755, 2147483648
  %v768 = vor.u32 1.1754944e-38, %v767
  %v769 = vsel %vm766, %v768, %v764
  %v770 = vmul.f32 1.0, %v769
  %vm771 = vcmask 1024
  %772 = vst.msk [vmem:[%s2] sm:$0x3] %vm771, %v770
  // Predicated region
  $region10: #{discriminator_forward.9} parent=0 // pred_check
    _
  $region11: #{discriminator_forward.9} parent=0 // pred_check_branch
    %774 = sbr.rel (0) target = $region13
  $region12: #{discriminator_forward.9} parent=0 // pred_region
    _
  $region13: #{discriminator_forward.9} parent=0 // pred_fallthru
    _
  // Predicated region
  $region14: #{discriminator_forward.9} parent=0 // pred_check
    _
  $region15: #{discriminator_forward.9} parent=0 // pred_check_branch
    %776 = sbr.rel (0) target = $region17
  $region16: #{discriminator_forward.9} parent=0 // pred_region
    _
  $region17: #{discriminator_forward.9} parent=0 // pred_fallthru
    _

</llo_original>
